<compile_context>
chip_gen: v5e
topology: v5e:2x2
jax: 0.10.0
libtpu: 0.0.40
codegen_flags: <defaults>
</compile_context>

<pallas_src>
import functools

import jax
import jax.numpy as jnp
from jax import lax
from jax.experimental import pallas as pl
from jax.experimental.pallas import tpu as pltpu


# ----------------------------------------------------------------------------- config helpers

def _hw_config():
    """(point-tile cap, vmem_limit_bytes) derived from the chip's VMEM capacity."""
    try:
        cap = int(pltpu.get_tpu_info().vmem_capacity_bytes)
    except Exception:
        cap = None
    if cap is not None and cap >= 100 * 1024 * 1024:   # v5e / v6e: 128 MiB VMEM
        return 512, 96 * 1024 * 1024
    return 256, 48 * 1024 * 1024                        # v7x (64 MiB / TC) or unknown


def _cparams(vmem_limit, *dim_sem):
    return pltpu.CompilerParams(dimension_semantics=dim_sem,
                                vmem_limit_bytes=vmem_limit)


def _choose_tile(n, cap):
    if n <= cap:
        return n
    for t in (cap, 512, 256, 128, 64, 32, 16, 8):
        if t <= cap and n % t == 0:
            return t
    return n


def _round_up(x, m):
    return ((x + m - 1) // m) * m


def _pad_last(x, to):
    c = x.shape[-1]
    if c >= to:
        return x
    return jnp.pad(x, [(0, 0)] * (x.ndim - 1) + [(0, to - c)])


# ----------------------------------------------------------------------------- gather-support probe

_GATHER_OK = None


def _gather_supported():
    """Probe whether Mosaic lowers an in-kernel dynamic row gather (jnp.take, axis=0)."""
    global _GATHER_OK
    if _GATHER_OK is not None:
        return _GATHER_OK

    def kern(x_ref, i_ref, o_ref):
        idx = i_ref[...][:, 0]                       # (M,) int32, mirrors real usage
        o_ref[...] = jnp.take(x_ref[...], idx, axis=0)

    ok = True
    try:
        for c in (8, 128):                           # smallest / full-lane channel widths used
            x = jnp.arange(128 * c, dtype=jnp.float32).reshape(128, c)
            idx = (jnp.arange(320, dtype=jnp.int32) % 128).reshape(320, 1)
            out = pl.pallas_call(
                kern, out_shape=jax.ShapeDtypeStruct((320, c), jnp.float32))(x, idx)
            jax.block_until_ready(out)
    except Exception:
        ok = False
    _GATHER_OK = ok
    return ok


# ----------------------------------------------------------------------------- kernels

def _edge_fused_kernel(x_full_ref, x_tile_ref, k2_ref, wd_ref, wc_ref, s_ref, t_ref,
                       o_ref, *, K, LOWB, gather_ok):
    """Fused kNN + neighbor gather + edge conv for one (batch, point-tile)."""
    N = x_full_ref.shape[1]
    TN = x_tile_ref.shape[1]

    xf = x_full_ref[0].astype(jnp.float32)            # (N, C)  keys / gather source
    ctr = x_tile_ref[0]                               # (TN, C) centers (query tile)
    ctrf = ctr.astype(jnp.float32)

    # --- pairwise (negative squared) distances, f32 --------------------------------
    g = lax.dot_general(ctrf, xf, (((1,), (1,)), ((), ())),
                        preferred_element_type=jnp.float32)          # (TN, N) = q @ k^T
    q2 = jnp.sum(ctrf * ctrf, axis=-1, keepdims=True)                # (TN, 1)
    d = 2.0 * g - q2 - k2_ref[0]                                     # torch: -xx - inner - xx^T

    # --- packed top-k: one max-reduce + one masked rewrite per neighbor ------------
    # key = order-preserving int32 view of d, low LOWB bits replaced by the column
    # index (ties / sub-quantum differences break toward the larger index).
    bits = pltpu.bitcast(d, jnp.int32)
    key = jnp.where(bits < 0, bits ^ jnp.int32(2 ** 31 - 1), bits)
    col = lax.broadcasted_iota(jnp.int32, d.shape, 1)
    low = jnp.int32((1 << LOWB) - 1)
    hi_mask = jnp.int32(-(1 << LOWB))
    packed = (key & hi_mask) | col
    minval = jnp.int32(-(2 ** 31))
    idx_cols = []
    for _ in range(K):
        m = jnp.max(packed, axis=-1, keepdims=True)                  # (TN, 1) packed max
        idx_cols.append(m & low)                                     # argmax column
        packed = jnp.where(packed == m, minval, packed)              # remove exactly that key

    # --- gather neighbors (stays in VMEM) + one big edge-conv matmul ---------------
    if gather_ok:
        idx_flat = jnp.concatenate(idx_cols, axis=0)                 # (K*TN, 1) neighbor-major
        nb = jnp.take(xf, idx_flat[:, 0], axis=0).astype(wd_ref.dtype)   # (K*TN, C)
        y = jnp.dot(nb, wd_ref[...], preferred_element_type=jnp.float32)  # (K*TN, Cout)
        y = y.reshape(K, TN, -1)
        ymax = jnp.max(y, axis=0)
        ymin = jnp.min(y, axis=0)
    else:
        # TODO(synk): Mosaic build without dynamic row-gather lowering -> exact
        # one-hot MXU gather per neighbor (more FLOPs, bounded VMEM).
        xfw = xf.astype(wd_ref.dtype)
        coln = lax.broadcasted_iota(jnp.int32, (TN, N), 1)
        ymax = ymin = None
        for j in range(K):
            oh = (coln == idx_cols[j]).astype(wd_ref.dtype)          # (TN, N) one-hot rows
            nb_j = jnp.dot(oh, xfw, preferred_element_type=jnp.float32)
            y_j = jnp.dot(nb_j.astype(wd_ref.dtype), wd_ref[...],
                          preferred_element_type=jnp.float32)        # (TN, Cout)
            ymax = y_j if ymax is None else jnp.maximum(ymax, y_j)
            ymin = y_j if ymin is None else jnp.minimum(ymin, y_j)

    # center term with folded weights: (nb - ctr)@Wd + ctr@Wc == nb@Wd + ctr@(Wc - Wd)
    ctr_term = jnp.dot(ctr.astype(wc_ref.dtype), wc_ref[...],
                       preferred_element_type=jnp.float32)           # (TN, Cout)

    # BN + LeakyReLU hoisted past the neighbor max (exact: per-channel max/min select
    # on the sign of the folded BN scale, since s*z+t then LReLU is monotone in z).
    s = s_ref[...]
    t = t_ref[...]
    z = jnp.where(s > 0, ymax, ymin) + ctr_term
    z = z * s + t
    o_ref[0] = jnp.where(z > 0, z, 0.2 * z).astype(o_ref.dtype)


def _conv5_max_kernel(x1_ref, x2_ref, x3_ref, x4_ref, w_ref, s_ref, t_ref, o_ref):
    # conv5 over cat(x1..x4) as ONE 512-deep contraction, fused with the global max;
    # cross-tile max accumulates in the resident output block (N axis = "arbitrary").
    @pl.when(pl.program_id(1) == 0)
    def _():
        o_ref[0] = jnp.full(o_ref.shape[1:], -jnp.inf, o_ref.dtype)

    xcat = jnp.concatenate([x1_ref[0], x2_ref[0], x3_ref[0], x4_ref[0]], axis=-1)
    y = jnp.dot(xcat, w_ref[...], preferred_element_type=jnp.float32)
    y = y * s_ref[...] + t_ref[...]
    y = jnp.where(y > 0, y, 0.2 * y)
    o_ref[0] = jnp.maximum(o_ref[0], jnp.max(y, axis=0, keepdims=True))


def _conv67_kernel(x1_ref, x2_ref, x3_ref, x4_ref, g_ref,
                   w6_ref, s6_ref, t6_ref, w7_ref, s7_ref, t7_ref, o_ref):
    # Fused conv6 + conv7: x1..x4 feed conv6 as a single 512-deep contraction; the
    # global feature's conv6 contribution arrives pre-multiplied as a per-batch bias.
    xcat = jnp.concatenate([x1_ref[0], x2_ref[0], x3_ref[0], x4_ref[0]], axis=-1)
    h = g_ref[0] + jnp.dot(xcat, w6_ref[...], preferred_element_type=jnp.float32)
    h = h * s6_ref[...] + t6_ref[...]
    h = jnp.where(h > 0, h, 0.2 * h)                                 # (TN, 512) f32
    y = jnp.dot(h.astype(w7_ref.dtype), w7_ref[...],
                preferred_element_type=jnp.float32)
    y = y * s7_ref[...] + t7_ref[...]
    o_ref[0] = jnp.where(y > 0, y, 0.2 * y)                          # (TN, c_dim_pad) f32


# ----------------------------------------------------------------------------- wrappers

def edge_block(x, sq, layer, k, tn, vmem, gather_ok):
    # x: (B, N, C); sq: (B, 1, N) f32 per-point squared norms -> (B, N, Cout) bf16
    B, N, C = x.shape
    Cout = layer['wd'].shape[1]
    lowb = max(1, (N - 1).bit_length())
    kern = functools.partial(_edge_fused_kernel, K=k, LOWB=lowb, gather_ok=gather_ok)
    return pl.pallas_call(
        kern,
        out_shape=jax.ShapeDtypeStruct((B, N, Cout), jnp.bfloat16),
        grid=(B, N // tn),
        in_specs=[pl.BlockSpec((1, N, C), lambda b, n: (b, 0, 0)),    # full cloud (keys+gather)
                  pl.BlockSpec((1, tn, C), lambda b, n: (b, n, 0)),   # query/center tile
                  pl.BlockSpec((1, 1, N), lambda b, n: (b, 0, 0)),    # key squared norms
                  pl.BlockSpec((C, Cout), lambda b, n: (0, 0)),
                  pl.BlockSpec((C, Cout), lambda b, n: (0, 0)),
                  pl.BlockSpec((1, Cout), lambda b, n: (0, 0)),
                  pl.BlockSpec((1, Cout), lambda b, n: (0, 0))],
        out_specs=pl.BlockSpec((1, tn, Cout), lambda b, n: (b, n, 0)),
        compiler_params=_cparams(vmem, "parallel", "parallel"),
    )(x, x, sq, layer['wd'], layer['wc'], layer['scale'], layer['shift'])


def conv5_global_max(x1, x2, x3, x4, pr, tn, vmem):
    # x1..x4: (B, N, Ci) bf16 -> (B, 1, feat_dim) f32  (conv5 + BN + LReLU + max over N)
    B, N, _ = x1.shape
    F = pr['w'].shape[1]
    xs = (x1, x2, x3, x4)
    in_specs = ([pl.BlockSpec((1, tn, xx.shape[-1]), lambda b, n: (b, n, 0)) for xx in xs]
                + [pl.BlockSpec(pr['w'].shape, lambda b, n: (0, 0)),
                   pl.BlockSpec((1, F), lambda b, n: (0, 0)),
                   pl.BlockSpec((1, F), lambda b, n: (0, 0))])
    return pl.pallas_call(
        _conv5_max_kernel,
        out_shape=jax.ShapeDtypeStruct((B, 1, F), jnp.float32),
        grid=(B, N // tn),
        in_specs=in_specs,
        out_specs=pl.BlockSpec((1, 1, F), lambda b, n: (b, 0, 0)),
        compiler_params=_cparams(vmem, "parallel", "arbitrary"),
    )(*xs, pr['w'], pr['scale'], pr['shift'])


def conv67_fused(x1, x2, x3, x4, bias6, p6, p7, tn, vmem):
    # -> (B, N, c_dim_pad) f32, lane-dense (c_dim padded up to a multiple of 128)
    B, N, _ = x1.shape
    h6 = p6['w'].shape[1]
    cpd = p7['w'].shape[1]
    xs = (x1, x2, x3, x4)
    in_specs = ([pl.BlockSpec((1, tn, xx.shape[-1]), lambda b, n: (b, n, 0)) for xx in xs]
                + [pl.BlockSpec((1, 1, h6), lambda b, n: (b, 0, 0)),
                   pl.BlockSpec(p6['w'].shape, lambda b, n: (0, 0)),
                   pl.BlockSpec((1, h6), lambda b, n: (0, 0)),
                   pl.BlockSpec((1, h6), lambda b, n: (0, 0)),
                   pl.BlockSpec(p7['w'].shape, lambda b, n: (0, 0)),
                   pl.BlockSpec((1, cpd), lambda b, n: (0, 0)),
                   pl.BlockSpec((1, cpd), lambda b, n: (0, 0))])
    return pl.pallas_call(
        _conv67_kernel,
        out_shape=jax.ShapeDtypeStruct((B, N, cpd), jnp.float32),
        grid=(B, N // tn),
        in_specs=in_specs,
        out_specs=pl.BlockSpec((1, tn, cpd), lambda b, n: (b, n, 0)),
        compiler_params=_cparams(vmem, "parallel", "parallel"),
    )(*xs, bias6, p6['w'], p6['scale'], p6['shift'], p7['w'], p7['scale'], p7['shift'])


# ----------------------------------------------------------------------------- glue (plain JAX)

def _sqnorm(x):
    x32 = x.astype(jnp.float32)
    return jnp.sum(x32 * x32, axis=-1)[:, None, :]     # (B, 1, N) f32


def dgcnn_encoder_forward(p, params, k):
    B, N, _ = p.shape
    cap, vmem = _hw_config()
    tn = _choose_tile(N, cap)
    gather_ok = _gather_supported()

    e = params['edge']
    x0 = _pad_last(p, e[0]['wd'].shape[0])              # pad 3 -> 8 channels (layer 1)
    x1 = edge_block(x0, _sqnorm(x0), e[0], k, tn, vmem, gather_ok)   # (B, N, 64)  bf16
    x2 = edge_block(x1, _sqnorm(x1), e[1], k, tn, vmem, gather_ok)   # (B, N, 64)  bf16
    x3 = edge_block(x2, _sqnorm(x2), e[2], k, tn, vmem, gather_ok)   # (B, N, 128) bf16
    x4 = edge_block(x3, _sqnorm(x3), e[3], k, tn, vmem, gather_ok)   # (B, N, 256) bf16

    xg = conv5_global_max(x1, x2, x3, x4, params['conv5'], tn, vmem)  # (B, 1, F) f32
    # conv6 contribution of the point-constant global feature -> per-batch bias (tiny).
    bias6 = jnp.matmul(xg, params['conv6']['wg'])                     # (B, 1, 512) f32
    c = conv67_fused(x1, x2, x3, x4, bias6, params['conv6'], params['conv7'], tn, vmem)
    return c                                # (B, N, c_dim_pad) == torch output.permute(0,2,1) padded


def normalize_coordinate(p, padding=0.1, plane='xz'):
    if plane == 'xz':
        xy = p[..., jnp.array([0, 2])]
    elif plane == 'xy':
        xy = p[..., jnp.array([0, 1])]
    else:
        xy = p[..., jnp.array([1, 2])]
    xy_new = xy / (1 + padding + 10e-4) + 0.5           # constants match reference impl
    return jnp.clip(xy_new, 0.0, 1.0 - 10e-6)


def coordinate2index(x, reso):
    xi = (x * reso).astype(jnp.int32)
    return xi[:, :, 0] + reso * xi[:, :, 1]             # (B, T)


def scatter_mean_plane(c_bct, index_bt, reso2):
    # TODO(synk): scatter_mean rasterization is a data-dependent scatter; kept in plain JAX.
    def per_b(cb, ib):
        sums = jnp.zeros((cb.shape[0], reso2), cb.dtype).at[:, ib].add(cb)
        cnt = jnp.zeros((reso2,), cb.dtype).at[ib].add(1.0)
        return sums / jnp.maximum(cnt, 1.0)[None, :]
    return jax.vmap(per_b)(c_bct, index_bt)


def dgcnn_cls_forward(p, params, k, c_dim, reso_plane=8, padding=0.1):
    c = dgcnn_encoder_forward(p, params, k)[..., :c_dim]   # drop lane padding -> (B, T, c_dim)
    xy = normalize_coordinate(p, padding=padding, plane='xz')
    index = coordinate2index(xy, reso_plane)
    c_t = jnp.transpose(c, (0, 2, 1))                       # (B, c_dim, T)
    fea_plane = scatter_mean_plane(c_t, index, reso_plane ** 2)
    fea_plane = fea_plane.reshape(p.shape[0], c_dim, reso_plane, reso_plane)
    return {'xz': fea_plane}


# ----------------------------------------------------------------------------- params

def _fold_bn(gamma, beta, mean, var, eps=1e-5):
    scale = gamma / jnp.sqrt(var + eps)
    shift = beta - mean * scale
    return scale[None, :], shift[None, :]


def init_params(key, feat_dim, c_dim):
    bf16 = jnp.bfloat16

    def conv_bn(kk, cin, cout):
        k1, k2, k3 = jax.random.split(kk, 3)
        w = jax.random.normal(k1, (cin, cout), jnp.float32) * 0.1
        gamma = jax.random.uniform(k2, (cout,), jnp.float32, 0.8, 1.2)
        beta = jax.random.normal(k3, (cout,), jnp.float32) * 0.05
        scale, shift = _fold_bn(gamma, beta, jnp.zeros((cout,), jnp.float32),
                                jnp.ones((cout,), jnp.float32))
        return w, scale, shift

    keys = jax.random.split(key, 7)
    params = {'edge': []}
    # Edge convs: original (2*Cin, Cout) weight, rows [0:Cin] act on (nb - ctr), rows
    # [Cin:2Cin] on ctr (torch cat order).  Fold: ctr weight becomes Wc - Wd so the
    # kernel computes nb@Wd + ctr@(Wc - Wd) with no per-neighbor subtract.
    for i, (cin, cout) in enumerate([(3, 64), (64, 64), (64, 128), (128, 256)]):
        w, s, t = conv_bn(keys[i], 2 * cin, cout)
        wd = w[:cin]
        wc_eff = w[cin:] - wd
        cpad = max(cin, 8)
        if cpad != cin:
            wd = jnp.pad(wd, ((0, cpad - cin), (0, 0)))
            wc_eff = jnp.pad(wc_eff, ((0, cpad - cin), (0, 0)))
        params['edge'].append(dict(wd=wd.astype(bf16), wc=wc_eff.astype(bf16),
                                   scale=s, shift=t))
    # conv5: rows ordered x1 | x2 | x3 | x4 (matches torch cat and the in-kernel concat).
    w5, s5, t5 = conv_bn(keys[4], 512, feat_dim)
    params['conv5'] = dict(w=w5.astype(bf16), scale=s5, shift=t5)
    # conv6: rows [0:F] = global feature (applied as a bias), then x1..x4.
    f = feat_dim
    w6, s6, t6 = conv_bn(keys[5], f + 512, 512)
    params['conv6'] = dict(wg=w6[:f], w=w6[f:].astype(bf16), scale=s6, shift=t6)
    # conv7, padded to a lane-dense output width (multiple of 128).
    w7, s7, t7 = conv_bn(keys[6], 512, c_dim)
    cpd = _round_up(c_dim, 128)
    if cpd != c_dim:
        w7 = jnp.pad(w7, ((0, 0), (0, cpd - c_dim)))
        s7 = jnp.pad(s7, ((0, 0), (0, cpd - c_dim)))
        t7 = jnp.pad(t7, ((0, 0), (0, cpd - c_dim)))
    params['conv7'] = dict(w=w7.astype(bf16), scale=s7, shift=t7)
    return params


# ----------------------------------------------------------------------------- main

if __name__ == "__main__":
    B, T, D = 2, 16, 3
    K = 4
    FEAT_DIM, C_DIM, RESO = 64, 32, 8

    key = jax.random.PRNGKey(0)
    kp, kw = jax.random.split(key)
    p = jax.random.uniform(kp, (B, T, D), jnp.float32, minval=-0.5, maxval=0.5)
    params = init_params(kw, FEAT_DIM, C_DIM)

    _gather_supported()   # resolve the in-kernel gather path outside of jit tracing

    fwd = jax.jit(functools.partial(dgcnn_cls_forward, k=K, c_dim=C_DIM, reso_plane=RESO))
    fea = fwd(p, params)
    jax.block_until_ready(fea['xz'])
    assert fea['xz'].shape == (B, C_DIM, RESO, RESO)
    assert bool(jnp.all(jnp.isfinite(fea['xz'])))
    print("KERNEL_OK")
</pallas_src>

<mosaic_0001>
module attributes {stable_mosaic.version = 11 : i64} {
  func.func @_edge_fused_kernel(%arg0: i32, %arg1: i32, %arg2: memref<1x16x64xbf16, #tpu.memory_space<vmem>>, %arg3: memref<1x16x64xbf16, #tpu.memory_space<vmem>>, %arg4: memref<1x1x16xf32, #tpu.memory_space<vmem>>, %arg5: memref<64x64xbf16, #tpu.memory_space<vmem>>, %arg6: memref<64x64xbf16, #tpu.memory_space<vmem>>, %arg7: memref<1x64xf32, #tpu.memory_space<vmem>>, %arg8: memref<1x64xf32, #tpu.memory_space<vmem>>, %arg9: memref<1x16x64xbf16, #tpu.memory_space<vmem>>) attributes {dimension_semantics = [#tpu.dimension_semantics<parallel>, #tpu.dimension_semantics<parallel>], iteration_bounds = array<i64: 2, 1>, scalar_prefetch = 0 : i64, scratch_operands = 0 : i64, tpu.core_type = #tpu.core_type<tc>, window_params = [{transform_indices = @transform_0, window_bounds = array<i64: 1, 16, 64>}, {transform_indices = @transform_1, window_bounds = array<i64: 1, 16, 64>}, {transform_indices = @transform_2, window_bounds = array<i64: 1, 1, 16>}, {pipeline_mode = #tpu.pipeline_mode<synchronous>, transform_indices = @transform_3, window_bounds = array<i64: 64, 64>}, {pipeline_mode = #tpu.pipeline_mode<synchronous>, transform_indices = @transform_4, window_bounds = array<i64: 64, 64>}, {pipeline_mode = #tpu.pipeline_mode<synchronous>, transform_indices = @transform_5, window_bounds = array<i64: 1, 64>}, {pipeline_mode = #tpu.pipeline_mode<synchronous>, transform_indices = @transform_6, window_bounds = array<i64: 1, 64>}, {transform_indices = @transform_7, window_bounds = array<i64: 1, 16, 64>}]} {
    %c0 = arith.constant 0 : index
    %c0_0 = arith.constant 0 : index
    %c0_1 = arith.constant 0 : index
    %0 = vector.load %arg2[%c0, %c0_0, %c0_1] : memref<1x16x64xbf16, #tpu.memory_space<vmem>>, vector<1x16x64xbf16>
    %1 = vector.shape_cast %0 : vector<1x16x64xbf16> to vector<16x64xbf16>
    %2 = arith.extf %1 : vector<16x64xbf16> to vector<16x64xf32>
    %c0_2 = arith.constant 0 : index
    %c0_3 = arith.constant 0 : index
    %c0_4 = arith.constant 0 : index
    %3 = vector.load %arg3[%c0_2, %c0_3, %c0_4] : memref<1x16x64xbf16, #tpu.memory_space<vmem>>, vector<1x16x64xbf16>
    %4 = vector.shape_cast %3 : vector<1x16x64xbf16> to vector<16x64xbf16>
    %5 = arith.extf %4 : vector<16x64xbf16> to vector<16x64xf32>
    %cst = arith.constant dense<0.000000e+00> : vector<16x16xf32>
    %6 = tpu.matmul %5, %2, %cst {dimension_numbers = #tpu.dot_dimension_numbers<[1], [1], [0], [0], [0, 0, 1, 0], [], []>} : vector<16x64xf32>, vector<16x64xf32>, vector<16x16xf32> -> vector<16x16xf32>
    %7 = arith.mulf %5, %5 : vector<16x64xf32>
    %cst_5 = arith.constant dense<0.000000e+00> : vector<16xf32>
    %8 = vector.multi_reduction <add>, %7, %cst_5 [1] : vector<16x64xf32> to vector<16xf32>
    %9 = vector.shape_cast %8 : vector<16xf32> to vector<16x1xf32>
    %cst_6 = arith.constant 2.000000e+00 : f32
    %10 = vector.broadcast %cst_6 : f32 to vector<16x16xf32>
    %11 = arith.mulf %10, %6 : vector<16x16xf32>
    %12 = vector.broadcast %9 : vector<16x1xf32> to vector<16x16xf32>
    %13 = arith.subf %11, %12 : vector<16x16xf32>
    %c0_7 = arith.constant 0 : index
    %c0_8 = arith.constant 0 : index
    %c0_9 = arith.constant 0 : index
    %14 = vector.load %arg4[%c0_7, %c0_8, %c0_9] : memref<1x1x16xf32, #tpu.memory_space<vmem>>, vector<1x1x16xf32>
    %15 = vector.shape_cast %14 : vector<1x1x16xf32> to vector<1x16xf32>
    %16 = vector.broadcast %15 : vector<1x16xf32> to vector<16x16xf32>
    %17 = arith.subf %13, %16 : vector<16x16xf32>
    %18 = tpu.bitcast %17 : vector<16x16xf32> -> vector<16x16xi32>
    %c0_i32 = arith.constant 0 : i32
    %19 = vector.broadcast %c0_i32 : i32 to vector<16x16xi32>
    %20 = arith.cmpi slt, %18, %19 : vector<16x16xi32>
    %c2147483647_i32 = arith.constant 2147483647 : i32
    %21 = vector.broadcast %c2147483647_i32 : i32 to vector<16x16xi32>
    %22 = arith.xori %18, %21 : vector<16x16xi32>
    %23 = arith.select %20, %22, %18 : vector<16x16xi1>, vector<16x16xi32>
    %24 = tpu.iota {dimensions = array<i32: 1>} : vector<16x16xi32>
    %c-16_i32 = arith.constant -16 : i32
    %25 = vector.broadcast %c-16_i32 : i32 to vector<16x16xi32>
    %26 = arith.andi %23, %25 : vector<16x16xi32>
    %27 = arith.ori %26, %24 : vector<16x16xi32>
    %cst_10 = arith.constant dense<-2147483648> : vector<16xi32>
    %28 = vector.multi_reduction <maxsi>, %27, %cst_10 [1] : vector<16x16xi32> to vector<16xi32>
    %29 = vector.shape_cast %28 : vector<16xi32> to vector<16x1xi32>
    %c15_i32 = arith.constant 15 : i32
    %30 = vector.broadcast %c15_i32 : i32 to vector<16x1xi32>
    %31 = arith.andi %29, %30 : vector<16x1xi32>
    %32 = vector.broadcast %29 : vector<16x1xi32> to vector<16x16xi32>
    %33 = arith.cmpi eq, %27, %32 : vector<16x16xi32>
    %c-2147483648_i32 = arith.constant -2147483648 : i32
    %34 = vector.broadcast %c-2147483648_i32 : i32 to vector<16x16xi32>
    %35 = arith.select %33, %34, %27 : vector<16x16xi1>, vector<16x16xi32>
    %cst_11 = arith.constant dense<-2147483648> : vector<16xi32>
    %36 = vector.multi_reduction <maxsi>, %35, %cst_11 [1] : vector<16x16xi32> to vector<16xi32>
    %37 = vector.shape_cast %36 : vector<16xi32> to vector<16x1xi32>
    %c15_i32_12 = arith.constant 15 : i32
    %38 = vector.broadcast %c15_i32_12 : i32 to vector<16x1xi32>
    %39 = arith.andi %37, %38 : vector<16x1xi32>
    %40 = vector.broadcast %37 : vector<16x1xi32> to vector<16x16xi32>
    %41 = arith.cmpi eq, %35, %40 : vector<16x16xi32>
    %c-2147483648_i32_13 = arith.constant -2147483648 : i32
    %42 = vector.broadcast %c-2147483648_i32_13 : i32 to vector<16x16xi32>
    %43 = arith.select %41, %42, %35 : vector<16x16xi1>, vector<16x16xi32>
    %cst_14 = arith.constant dense<-2147483648> : vector<16xi32>
    %44 = vector.multi_reduction <maxsi>, %43, %cst_14 [1] : vector<16x16xi32> to vector<16xi32>
    %45 = vector.shape_cast %44 : vector<16xi32> to vector<16x1xi32>
    %c15_i32_15 = arith.constant 15 : i32
    %46 = vector.broadcast %c15_i32_15 : i32 to vector<16x1xi32>
    %47 = arith.andi %45, %46 : vector<16x1xi32>
    %48 = vector.broadcast %45 : vector<16x1xi32> to vector<16x16xi32>
    %49 = arith.cmpi eq, %43, %48 : vector<16x16xi32>
    %c-2147483648_i32_16 = arith.constant -2147483648 : i32
    %50 = vector.broadcast %c-2147483648_i32_16 : i32 to vector<16x16xi32>
    %51 = arith.select %49, %50, %43 : vector<16x16xi1>, vector<16x16xi32>
    %cst_17 = arith.constant dense<-2147483648> : vector<16xi32>
    %52 = vector.multi_reduction <maxsi>, %51, %cst_17 [1] : vector<16x16xi32> to vector<16xi32>
    %53 = vector.shape_cast %52 : vector<16xi32> to vector<16x1xi32>
    %c15_i32_18 = arith.constant 15 : i32
    %54 = vector.broadcast %c15_i32_18 : i32 to vector<16x1xi32>
    %55 = arith.andi %53, %54 : vector<16x1xi32>
    %56 = arith.truncf %2 : vector<16x64xf32> to vector<16x64xbf16>
    %57 = tpu.iota {dimensions = array<i32: 1>} : vector<16x16xi32>
    %58 = vector.broadcast %31 : vector<16x1xi32> to vector<16x16xi32>
    %59 = arith.cmpi eq, %57, %58 : vector<16x16xi32>
    %60 = arith.extui %59 : vector<16x16xi1> to vector<16x16xi32>
    %61 = arith.sitofp %60 : vector<16x16xi32> to vector<16x16xf32>
    %62 = arith.truncf %61 : vector<16x16xf32> to vector<16x16xbf16>
    %cst_19 = arith.constant dense<0.000000e+00> : vector<16x64xf32>
    %63 = tpu.matmul %62, %56, %cst_19 {dimension_numbers = #tpu.dot_dimension_numbers<[1], [0], [0], [1], [0, 0, 1, 1], [], []>} : vector<16x16xbf16>, vector<16x64xbf16>, vector<16x64xf32> -> vector<16x64xf32>
    %64 = arith.truncf %63 : vector<16x64xf32> to vector<16x64xbf16>
    %c0_20 = arith.constant 0 : index
    %c0_21 = arith.constant 0 : index
    %65 = vector.load %arg5[%c0_20, %c0_21] : memref<64x64xbf16, #tpu.memory_space<vmem>>, vector<64x64xbf16>
    %cst_22 = arith.constant dense<0.000000e+00> : vector<16x64xf32>
    %66 = tpu.matmul %64, %65, %cst_22 {dimension_numbers = #tpu.dot_dimension_numbers<[1], [0], [0], [1], [0, 0, 1, 1], [], []>} : vector<16x64xbf16>, vector<64x64xbf16>, vector<16x64xf32> -> vector<16x64xf32>
    %67 = vector.broadcast %39 : vector<16x1xi32> to vector<16x16xi32>
    %68 = arith.cmpi eq, %57, %67 : vector<16x16xi32>
    %69 = arith.extui %68 : vector<16x16xi1> to vector<16x16xi32>
    %70 = arith.sitofp %69 : vector<16x16xi32> to vector<16x16xf32>
    %71 = arith.truncf %70 : vector<16x16xf32> to vector<16x16xbf16>
    %cst_23 = arith.constant dense<0.000000e+00> : vector<16x64xf32>
    %72 = tpu.matmul %71, %56, %cst_23 {dimension_numbers = #tpu.dot_dimension_numbers<[1], [0], [0], [1], [0, 0, 1, 1], [], []>} : vector<16x16xbf16>, vector<16x64xbf16>, vector<16x64xf32> -> vector<16x64xf32>
    %73 = arith.truncf %72 : vector<16x64xf32> to vector<16x64xbf16>
    %c0_24 = arith.constant 0 : index
    %c0_25 = arith.constant 0 : index
    %74 = vector.load %arg5[%c0_24, %c0_25] : memref<64x64xbf16, #tpu.memory_space<vmem>>, vector<64x64xbf16>
    %cst_26 = arith.constant dense<0.000000e+00> : vector<16x64xf32>
    %75 = tpu.matmul %73, %74, %cst_26 {dimension_numbers = #tpu.dot_dimension_numbers<[1], [0], [0], [1], [0, 0, 1, 1], [], []>} : vector<16x64xbf16>, vector<64x64xbf16>, vector<16x64xf32> -> vector<16x64xf32>
    %76 = arith.maximumf %66, %75 : vector<16x64xf32>
    %77 = arith.minimumf %66, %75 : vector<16x64xf32>
    %78 = vector.broadcast %47 : vector<16x1xi32> to vector<16x16xi32>
    %79 = arith.cmpi eq, %57, %78 : vector<16x16xi32>
    %80 = arith.extui %79 : vector<16x16xi1> to vector<16x16xi32>
    %81 = arith.sitofp %80 : vector<16x16xi32> to vector<16x16xf32>
    %82 = arith.truncf %81 : vector<16x16xf32> to vector<16x16xbf16>
    %cst_27 = arith.constant dense<0.000000e+00> : vector<16x64xf32>
    %83 = tpu.matmul %82, %56, %cst_27 {dimension_numbers = #tpu.dot_dimension_numbers<[1], [0], [0], [1], [0, 0, 1, 1], [], []>} : vector<16x16xbf16>, vector<16x64xbf16>, vector<16x64xf32> -> vector<16x64xf32>
    %84 = arith.truncf %83 : vector<16x64xf32> to vector<16x64xbf16>
    %c0_28 = arith.constant 0 : index
    %c0_29 = arith.constant 0 : index
    %85 = vector.load %arg5[%c0_28, %c0_29] : memref<64x64xbf16, #tpu.memory_space<vmem>>, vector<64x64xbf16>
    %cst_30 = arith.constant dense<0.000000e+00> : vector<16x64xf32>
    %86 = tpu.matmul %84, %85, %cst_30 {dimension_numbers = #tpu.dot_dimension_numbers<[1], [0], [0], [1], [0, 0, 1, 1], [], []>} : vector<16x64xbf16>, vector<64x64xbf16>, vector<16x64xf32> -> vector<16x64xf32>
    %87 = arith.maximumf %76, %86 : vector<16x64xf32>
    %88 = arith.minimumf %77, %86 : vector<16x64xf32>
    %89 = vector.broadcast %55 : vector<16x1xi32> to vector<16x16xi32>
    %90 = arith.cmpi eq, %57, %89 : vector<16x16xi32>
    %91 = arith.extui %90 : vector<16x16xi1> to vector<16x16xi32>
    %92 = arith.sitofp %91 : vector<16x16xi32> to vector<16x16xf32>
    %93 = arith.truncf %92 : vector<16x16xf32> to vector<16x16xbf16>
    %cst_31 = arith.constant dense<0.000000e+00> : vector<16x64xf32>
    %94 = tpu.matmul %93, %56, %cst_31 {dimension_numbers = #tpu.dot_dimension_numbers<[1], [0], [0], [1], [0, 0, 1, 1], [], []>} : vector<16x16xbf16>, vector<16x64xbf16>, vector<16x64xf32> -> vector<16x64xf32>
    %95 = arith.truncf %94 : vector<16x64xf32> to vector<16x64xbf16>
    %c0_32 = arith.constant 0 : index
    %c0_33 = arith.constant 0 : index
    %96 = vector.load %arg5[%c0_32, %c0_33] : memref<64x64xbf16, #tpu.memory_space<vmem>>, vector<64x64xbf16>
    %cst_34 = arith.constant dense<0.000000e+00> : vector<16x64xf32>
    %97 = tpu.matmul %95, %96, %cst_34 {dimension_numbers = #tpu.dot_dimension_numbers<[1], [0], [0], [1], [0, 0, 1, 1], [], []>} : vector<16x64xbf16>, vector<64x64xbf16>, vector<16x64xf32> -> vector<16x64xf32>
    %98 = arith.maximumf %87, %97 : vector<16x64xf32>
    %99 = arith.minimumf %88, %97 : vector<16x64xf32>
    %c0_35 = arith.constant 0 : index
    %c0_36 = arith.constant 0 : index
    %100 = vector.load %arg6[%c0_35, %c0_36] : memref<64x64xbf16, #tpu.memory_space<vmem>>, vector<64x64xbf16>
    %cst_37 = arith.constant dense<0.000000e+00> : vector<16x64xf32>
    %101 = tpu.matmul %4, %100, %cst_37 {dimension_numbers = #tpu.dot_dimension_numbers<[1], [0], [0], [1], [0, 0, 1, 1], [], []>} : vector<16x64xbf16>, vector<64x64xbf16>, vector<16x64xf32> -> vector<16x64xf32>
    %c0_38 = arith.constant 0 : index
    %c0_39 = arith.constant 0 : index
    %102 = vector.load %arg7[%c0_38, %c0_39] : memref<1x64xf32, #tpu.memory_space<vmem>>, vector<1x64xf32>
    %c0_40 = arith.constant 0 : index
    %c0_41 = arith.constant 0 : index
    %103 = vector.load %arg8[%c0_40, %c0_41] : memref<1x64xf32, #tpu.memory_space<vmem>>, vector<1x64xf32>
    %cst_42 = arith.constant 0.000000e+00 : f32
    %104 = vector.broadcast %cst_42 : f32 to vector<1x64xf32>
    %105 = arith.cmpf ogt, %102, %104 : vector<1x64xf32>
    %106 = vector.shape_cast %105 : vector<1x64xi1> to vector<1x64xi1>
    %107 = vector.broadcast %106 : vector<1x64xi1> to vector<16x64xi1>
    %108 = arith.select %107, %98, %99 : vector<16x64xi1>, vector<16x64xf32>
    %109 = arith.addf %108, %101 : vector<16x64xf32>
    %110 = vector.broadcast %102 : vector<1x64xf32> to vector<16x64xf32>
    %111 = arith.mulf %109, %110 : vector<16x64xf32>
    %112 = vector.broadcast %103 : vector<1x64xf32> to vector<16x64xf32>
    %113 = arith.addf %111, %112 : vector<16x64xf32>
    %cst_43 = arith.constant 0.000000e+00 : f32
    %114 = vector.broadcast %cst_43 : f32 to vector<16x64xf32>
    %115 = arith.cmpf ogt, %113, %114 : vector<16x64xf32>
    %cst_44 = arith.constant 2.000000e-01 : f32
    %116 = vector.broadcast %cst_44 : f32 to vector<16x64xf32>
    %117 = arith.mulf %116, %113 : vector<16x64xf32>
    %118 = arith.select %115, %113, %117 : vector<16x64xi1>, vector<16x64xf32>
    %119 = arith.truncf %118 : vector<16x64xf32> to vector<16x64xbf16>
    %c0_45 = arith.constant 0 : index
    %c0_46 = arith.constant 0 : index
    %c0_47 = arith.constant 0 : index
    %120 = vector.load %arg9[%c0_45, %c0_46, %c0_47] : memref<1x16x64xbf16, #tpu.memory_space<vmem>>, vector<1x16x64xbf16>
    %121 = vector.shape_cast %120 : vector<1x16x64xbf16> to vector<16x64xbf16>
    %122 = vector.shape_cast %119 : vector<16x64xbf16> to vector<1x16x64xbf16>
    tpu.vector_store %arg9[%c0_45, %c0_46, %c0_47], %122 {strides = array<i32>} : memref<1x16x64xbf16, #tpu.memory_space<vmem>>, vector<1x16x64xbf16>,
    return
  }
  func.func @transform_0(%arg0: i32, %arg1: i32) -> (i32, i32, i32) {
    %c0_i32 = arith.constant 0 : i32
    %c0_i32_0 = arith.constant 0 : i32
    %c0_i32_1 = arith.constant 0 : i32
    return %arg0, %c0_i32, %c0_i32_0 : i32, i32, i32
  }
  func.func @transform_1(%arg0: i32, %arg1: i32) -> (i32, i32, i32) {
    %c0_i32 = arith.constant 0 : i32
    %c0_i32_0 = arith.constant 0 : i32
    return %arg0, %arg1, %c0_i32 : i32, i32, i32
  }
  func.func @transform_2(%arg0: i32, %arg1: i32) -> (i32, i32, i32) {
    %c0_i32 = arith.constant 0 : i32
    %c0_i32_0 = arith.constant 0 : i32
    %c0_i32_1 = arith.constant 0 : i32
    return %arg0, %c0_i32, %c0_i32_0 : i32, i32, i32
  }
  func.func @transform_3(%arg0: i32, %arg1: i32) -> (i32, i32) {
    %c0_i32 = arith.constant 0 : i32
    %c0_i32_0 = arith.constant 0 : i32
    %c0_i32_1 = arith.constant 0 : i32
    return %c0_i32, %c0_i32_0 : i32, i32
  }
  func.func @transform_4(%arg0: i32, %arg1: i32) -> (i32, i32) {
    %c0_i32 = arith.constant 0 : i32
    %c0_i32_0 = arith.constant 0 : i32
    %c0_i32_1 = arith.constant 0 : i32
    return %c0_i32, %c0_i32_0 : i32, i32
  }
  func.func @transform_5(%arg0: i32, %arg1: i32) -> (i32, i32) {
    %c0_i32 = arith.constant 0 : i32
    %c0_i32_0 = arith.constant 0 : i32
    %c0_i32_1 = arith.constant 0 : i32
    return %c0_i32, %c0_i32_0 : i32, i32
  }
  func.func @transform_6(%arg0: i32, %arg1: i32) -> (i32, i32) {
    %c0_i32 = arith.constant 0 : i32
    %c0_i32_0 = arith.constant 0 : i32
    %c0_i32_1 = arith.constant 0 : i32
    return %c0_i32, %c0_i32_0 : i32, i32
  }
  func.func @transform_7(%arg0: i32, %arg1: i32) -> (i32, i32, i32) {
    %c0_i32 = arith.constant 0 : i32
    %c0_i32_0 = arith.constant 0 : i32
    return %arg0, %arg1, %c0_i32 : i32, i32, i32
  }
}

module attributes {stable_mosaic.version = 11 : i64} {
  func.func @_edge_fused_kernel(%arg0: i32, %arg1: i32, %arg2: memref<1x16x8xf32, #tpu.memory_space<vmem>>, %arg3: memref<1x16x8xf32, #tpu.memory_space<vmem>>, %arg4: memref<1x1x16xf32, #tpu.memory_space<vmem>>, %arg5: memref<8x64xbf16, #tpu.memory_space<vmem>>, %arg6: memref<8x64xbf16, #tpu.memory_space<vmem>>, %arg7: memref<1x64xf32, #tpu.memory_space<vmem>>, %arg8: memref<1x64xf32, #tpu.memory_space<vmem>>, %arg9: memref<1x16x64xbf16, #tpu.memory_space<vmem>>) attributes {dimension_semantics = [#tpu.dimension_semantics<parallel>, #tpu.dimension_semantics<parallel>], iteration_bounds = array<i64: 2, 1>, scalar_prefetch = 0 : i64, scratch_operands = 0 : i64, tpu.core_type = #tpu.core_type<tc>, window_params = [{transform_indices = @transform_0, window_bounds = array<i64: 1, 16, 8>}, {transform_indices = @transform_1, window_bounds = array<i64: 1, 16, 8>}, {transform_indices = @transform_2, window_bounds = array<i64: 1, 1, 16>}, {pipeline_mode = #tpu.pipeline_mode<synchronous>, transform_indices = @transform_3, window_bounds = array<i64: 8, 64>}, {pipeline_mode = #tpu.pipeline_mode<synchronous>, transform_indices = @transform_4, window_bounds = array<i64: 8, 64>}, {pipeline_mode = #tpu.pipeline_mode<synchronous>, transform_indices = @transform_5, window_bounds = array<i64: 1, 64>}, {pipeline_mode = #tpu.pipeline_mode<synchronous>, transform_indices = @transform_6, window_bounds = array<i64: 1, 64>}, {transform_indices = @transform_7, window_bounds = array<i64: 1, 16, 64>}]} {
    %c0 = arith.constant 0 : index
    %c0_0 = arith.constant 0 : index
    %c0_1 = arith.constant 0 : index
    %0 = vector.load %arg2[%c0, %c0_0, %c0_1] : memref<1x16x8xf32, #tpu.memory_space<vmem>>, vector<1x16x8xf32>
    %1 = vector.shape_cast %0 : vector<1x16x8xf32> to vector<16x8xf32>
    %c0_2 = arith.constant 0 : index
    %c0_3 = arith.constant 0 : index
    %c0_4 = arith.constant 0 : index
    %2 = vector.load %arg3[%c0_2, %c0_3, %c0_4] : memref<1x16x8xf32, #tpu.memory_space<vmem>>, vector<1x16x8xf32>
    %3 = vector.shape_cast %2 : vector<1x16x8xf32> to vector<16x8xf32>
    %cst = arith.constant dense<0.000000e+00> : vector<16x16xf32>
    %4 = tpu.matmul %3, %1, %cst {dimension_numbers = #tpu.dot_dimension_numbers<[1], [1], [0], [0], [0, 0, 1, 0], [], []>} : vector<16x8xf32>, vector<16x8xf32>, vector<16x16xf32> -> vector<16x16xf32>
    %5 = arith.mulf %3, %3 : vector<16x8xf32>
    %cst_5 = arith.constant dense<0.000000e+00> : vector<16xf32>
    %6 = vector.multi_reduction <add>, %5, %cst_5 [1] : vector<16x8xf32> to vector<16xf32>
    %7 = vector.shape_cast %6 : vector<16xf32> to vector<16x1xf32>
    %cst_6 = arith.constant 2.000000e+00 : f32
    %8 = vector.broadcast %cst_6 : f32 to vector<16x16xf32>
    %9 = arith.mulf %8, %4 : vector<16x16xf32>
    %10 = vector.broadcast %7 : vector<16x1xf32> to vector<16x16xf32>
    %11 = arith.subf %9, %10 : vector<16x16xf32>
    %c0_7 = arith.constant 0 : index
    %c0_8 = arith.constant 0 : index
    %c0_9 = arith.constant 0 : index
    %12 = vector.load %arg4[%c0_7, %c0_8, %c0_9] : memref<1x1x16xf32, #tpu.memory_space<vmem>>, vector<1x1x16xf32>
    %13 = vector.shape_cast %12 : vector<1x1x16xf32> to vector<1x16xf32>
    %14 = vector.broadcast %13 : vector<1x16xf32> to vector<16x16xf32>
    %15 = arith.subf %11, %14 : vector<16x16xf32>
    %16 = tpu.bitcast %15 : vector<16x16xf32> -> vector<16x16xi32>
    %c0_i32 = arith.constant 0 : i32
    %17 = vector.broadcast %c0_i32 : i32 to vector<16x16xi32>
    %18 = arith.cmpi slt, %16, %17 : vector<16x16xi32>
    %c2147483647_i32 = arith.constant 2147483647 : i32
    %19 = vector.broadcast %c2147483647_i32 : i32 to vector<16x16xi32>
    %20 = arith.xori %16, %19 : vector<16x16xi32>
    %21 = arith.select %18, %20, %16 : vector<16x16xi1>, vector<16x16xi32>
    %22 = tpu.iota {dimensions = array<i32: 1>} : vector<16x16xi32>
    %c-16_i32 = arith.constant -16 : i32
    %23 = vector.broadcast %c-16_i32 : i32 to vector<16x16xi32>
    %24 = arith.andi %21, %23 : vector<16x16xi32>
    %25 = arith.ori %24, %22 : vector<16x16xi32>
    %cst_10 = arith.constant dense<-2147483648> : vector<16xi32>
    %26 = vector.multi_reduction <maxsi>, %25, %cst_10 [1] : vector<16x16xi32> to vector<16xi32>
    %27 = vector.shape_cast %26 : vector<16xi32> to vector<16x1xi32>
    %c15_i32 = arith.constant 15 : i32
    %28 = vector.broadcast %c15_i32 : i32 to vector<16x1xi32>
    %29 = arith.andi %27, %28 : vector<16x1xi32>
    %30 = vector.broadcast %27 : vector<16x1xi32> to vector<16x16xi32>
    %31 = arith.cmpi eq, %25, %30 : vector<16x16xi32>
    %c-2147483648_i32 = arith.constant -2147483648 : i32
    %32 = vector.broadcast %c-2147483648_i32 : i32 to vector<16x16xi32>
    %33 = arith.select %31, %32, %25 : vector<16x16xi1>, vector<16x16xi32>
    %cst_11 = arith.constant dense<-2147483648> : vector<16xi32>
    %34 = vector.multi_reduction <maxsi>, %33, %cst_11 [1] : vector<16x16xi32> to vector<16xi32>
    %35 = vector.shape_cast %34 : vector<16xi32> to vector<16x1xi32>
    %c15_i32_12 = arith.constant 15 : i32
    %36 = vector.broadcast %c15_i32_12 : i32 to vector<16x1xi32>
    %37 = arith.andi %35, %36 : vector<16x1xi32>
    %38 = vector.broadcast %35 : vector<16x1xi32> to vector<16x16xi32>
    %39 = arith.cmpi eq, %33, %38 : vector<16x16xi32>
    %c-2147483648_i32_13 = arith.constant -2147483648 : i32
    %40 = vector.broadcast %c-2147483648_i32_13 : i32 to vector<16x16xi32>
    %41 = arith.select %39, %40, %33 : vector<16x16xi1>, vector<16x16xi32>
    %cst_14 = arith.constant dense<-2147483648> : vector<16xi32>
    %42 = vector.multi_reduction <maxsi>, %41, %cst_14 [1] : vector<16x16xi32> to vector<16xi32>
    %43 = vector.shape_cast %42 : vector<16xi32> to vector<16x1xi32>
    %c15_i32_15 = arith.constant 15 : i32
    %44 = vector.broadcast %c15_i32_15 : i32 to vector<16x1xi32>
    %45 = arith.andi %43, %44 : vector<16x1xi32>
    %46 = vector.broadcast %43 : vector<16x1xi32> to vector<16x16xi32>
    %47 = arith.cmpi eq, %41, %46 : vector<16x16xi32>
    %c-2147483648_i32_16 = arith.constant -2147483648 : i32
    %48 = vector.broadcast %c-2147483648_i32_16 : i32 to vector<16x16xi32>
    %49 = arith.select %47, %48, %41 : vector<16x16xi1>, vector<16x16xi32>
    %cst_17 = arith.constant dense<-2147483648> : vector<16xi32>
    %50 = vector.multi_reduction <maxsi>, %49, %cst_17 [1] : vector<16x16xi32> to vector<16xi32>
    %51 = vector.shape_cast %50 : vector<16xi32> to vector<16x1xi32>
    %c15_i32_18 = arith.constant 15 : i32
    %52 = vector.broadcast %c15_i32_18 : i32 to vector<16x1xi32>
    %53 = arith.andi %51, %52 : vector<16x1xi32>
    %54 = arith.truncf %1 : vector<16x8xf32> to vector<16x8xbf16>
    %55 = tpu.iota {dimensions = array<i32: 1>} : vector<16x16xi32>
    %56 = vector.broadcast %29 : vector<16x1xi32> to vector<16x16xi32>
    %57 = arith.cmpi eq, %55, %56 : vector<16x16xi32>
    %58 = arith.extui %57 : vector<16x16xi1> to vector<16x16xi32>
    %59 = arith.sitofp %58 : vector<16x16xi32> to vector<16x16xf32>
    %60 = arith.truncf %59 : vector<16x16xf32> to vector<16x16xbf16>
    %cst_19 = arith.constant dense<0.000000e+00> : vector<16x8xf32>
    %61 = tpu.matmul %60, %54, %cst_19 {dimension_numbers = #tpu.dot_dimension_numbers<[1], [0], [0], [1], [0, 0, 1, 1], [], []>} : vector<16x16xbf16>, vector<16x8xbf16>, vector<16x8xf32> -> vector<16x8xf32>
    %62 = arith.truncf %61 : vector<16x8xf32> to vector<16x8xbf16>
    %c0_20 = arith.constant 0 : index
    %c0_21 = arith.constant 0 : index
    %63 = vector.load %arg5[%c0_20, %c0_21] : memref<8x64xbf16, #tpu.memory_space<vmem>>, vector<8x64xbf16>
    %cst_22 = arith.constant dense<0.000000e+00> : vector<16x64xf32>
    %64 = tpu.matmul %62, %63, %cst_22 {dimension_numbers = #tpu.dot_dimension_numbers<[1], [0], [0], [1], [0, 0, 1, 1], [], []>} : vector<16x8xbf16>, vector<8x64xbf16>, vector<16x64xf32> -> vector<16x64xf32>
    %65 = vector.broadcast %37 : vector<16x1xi32> to vector<16x16xi32>
    %66 = arith.cmpi eq, %55, %65 : vector<16x16xi32>
    %67 = arith.extui %66 : vector<16x16xi1> to vector<16x16xi32>
    %68 = arith.sitofp %67 : vector<16x16xi32> to vector<16x16xf32>
    %69 = arith.truncf %68 : vector<16x16xf32> to vector<16x16xbf16>
    %cst_23 = arith.constant dense<0.000000e+00> : vector<16x8xf32>
    %70 = tpu.matmul %69, %54, %cst_23 {dimension_numbers = #tpu.dot_dimension_numbers<[1], [0], [0], [1], [0, 0, 1, 1], [], []>} : vector<16x16xbf16>, vector<16x8xbf16>, vector<16x8xf32> -> vector<16x8xf32>
    %71 = arith.truncf %70 : vector<16x8xf32> to vector<16x8xbf16>
    %c0_24 = arith.constant 0 : index
    %c0_25 = arith.constant 0 : index
    %72 = vector.load %arg5[%c0_24, %c0_25] : memref<8x64xbf16, #tpu.memory_space<vmem>>, vector<8x64xbf16>
    %cst_26 = arith.constant dense<0.000000e+00> : vector<16x64xf32>
    %73 = tpu.matmul %71, %72, %cst_26 {dimension_numbers = #tpu.dot_dimension_numbers<[1], [0], [0], [1], [0, 0, 1, 1], [], []>} : vector<16x8xbf16>, vector<8x64xbf16>, vector<16x64xf32> -> vector<16x64xf32>
    %74 = arith.maximumf %64, %73 : vector<16x64xf32>
    %75 = arith.minimumf %64, %73 : vector<16x64xf32>
    %76 = vector.broadcast %45 : vector<16x1xi32> to vector<16x16xi32>
    %77 = arith.cmpi eq, %55, %76 : vector<16x16xi32>
    %78 = arith.extui %77 : vector<16x16xi1> to vector<16x16xi32>
    %79 = arith.sitofp %78 : vector<16x16xi32> to vector<16x16xf32>
    %80 = arith.truncf %79 : vector<16x16xf32> to vector<16x16xbf16>
    %cst_27 = arith.constant dense<0.000000e+00> : vector<16x8xf32>
    %81 = tpu.matmul %80, %54, %cst_27 {dimension_numbers = #tpu.dot_dimension_numbers<[1], [0], [0], [1], [0, 0, 1, 1], [], []>} : vector<16x16xbf16>, vector<16x8xbf16>, vector<16x8xf32> -> vector<16x8xf32>
    %82 = arith.truncf %81 : vector<16x8xf32> to vector<16x8xbf16>
    %c0_28 = arith.constant 0 : index
    %c0_29 = arith.constant 0 : index
    %83 = vector.load %arg5[%c0_28, %c0_29] : memref<8x64xbf16, #tpu.memory_space<vmem>>, vector<8x64xbf16>
    %cst_30 = arith.constant dense<0.000000e+00> : vector<16x64xf32>
    %84 = tpu.matmul %82, %83, %cst_30 {dimension_numbers = #tpu.dot_dimension_numbers<[1], [0], [0], [1], [0, 0, 1, 1], [], []>} : vector<16x8xbf16>, vector<8x64xbf16>, vector<16x64xf32> -> vector<16x64xf32>
    %85 = arith.maximumf %74, %84 : vector<16x64xf32>
    %86 = arith.minimumf %75, %84 : vector<16x64xf32>
    %87 = vector.broadcast %53 : vector<16x1xi32> to vector<16x16xi32>
    %88 = arith.cmpi eq, %55, %87 : vector<16x16xi32>
    %89 = arith.extui %88 : vector<16x16xi1> to vector<16x16xi32>
    %90 = arith.sitofp %89 : vector<16x16xi32> to vector<16x16xf32>
    %91 = arith.truncf %90 : vector<16x16xf32> to vector<16x16xbf16>
    %cst_31 = arith.constant dense<0.000000e+00> : vector<16x8xf32>
    %92 = tpu.matmul %91, %54, %cst_31 {dimension_numbers = #tpu.dot_dimension_numbers<[1], [0], [0], [1], [0, 0, 1, 1], [], []>} : vector<16x16xbf16>, vector<16x8xbf16>, vector<16x8xf32> -> vector<16x8xf32>
    %93 = arith.truncf %92 : vector<16x8xf32> to vector<16x8xbf16>
    %c0_32 = arith.constant 0 : index
    %c0_33 = arith.constant 0 : index
    %94 = vector.load %arg5[%c0_32, %c0_33] : memref<8x64xbf16, #tpu.memory_space<vmem>>, vector<8x64xbf16>
    %cst_34 = arith.constant dense<0.000000e+00> : vector<16x64xf32>
    %95 = tpu.matmul %93, %94, %cst_34 {dimension_numbers = #tpu.dot_dimension_numbers<[1], [0], [0], [1], [0, 0, 1, 1], [], []>} : vector<16x8xbf16>, vector<8x64xbf16>, vector<16x64xf32> -> vector<16x64xf32>
    %96 = arith.maximumf %85, %95 : vector<16x64xf32>
    %97 = arith.minimumf %86, %95 : vector<16x64xf32>
    %98 = arith.truncf %3 : vector<16x8xf32> to vector<16x8xbf16>
    %c0_35 = arith.constant 0 : index
    %c0_36 = arith.constant 0 : index
    %99 = vector.load %arg6[%c0_35, %c0_36] : memref<8x64xbf16, #tpu.memory_space<vmem>>, vector<8x64xbf16>
    %cst_37 = arith.constant dense<0.000000e+00> : vector<16x64xf32>
    %100 = tpu.matmul %98, %99, %cst_37 {dimension_numbers = #tpu.dot_dimension_numbers<[1], [0], [0], [1], [0, 0, 1, 1], [], []>} : vector<16x8xbf16>, vector<8x64xbf16>, vector<16x64xf32> -> vector<16x64xf32>
    %c0_38 = arith.constant 0 : index
    %c0_39 = arith.constant 0 : index
    %101 = vector.load %arg7[%c0_38, %c0_39] : memref<1x64xf32, #tpu.memory_space<vmem>>, vector<1x64xf32>
    %c0_40 = arith.constant 0 : index
    %c0_41 = arith.constant 0 : index
    %102 = vector.load %arg8[%c0_40, %c0_41] : memref<1x64xf32, #tpu.memory_space<vmem>>, vector<1x64xf32>
    %cst_42 = arith.constant 0.000000e+00 : f32
    %103 = vector.broadcast %cst_42 : f32 to vector<1x64xf32>
    %104 = arith.cmpf ogt, %101, %103 : vector<1x64xf32>
    %105 = vector.shape_cast %104 : vector<1x64xi1> to vector<1x64xi1>
    %106 = vector.broadcast %105 : vector<1x64xi1> to vector<16x64xi1>
    %107 = arith.select %106, %96, %97 : vector<16x64xi1>, vector<16x64xf32>
    %108 = arith.addf %107, %100 : vector<16x64xf32>
    %109 = vector.broadcast %101 : vector<1x64xf32> to vector<16x64xf32>
    %110 = arith.mulf %108, %109 : vector<16x64xf32>
    %111 = vector.broadcast %102 : vector<1x64xf32> to vector<16x64xf32>
    %112 = arith.addf %110, %111 : vector<16x64xf32>
    %cst_43 = arith.constant 0.000000e+00 : f32
    %113 = vector.broadcast %cst_43 : f32 to vector<16x64xf32>
    %114 = arith.cmpf ogt, %112, %113 : vector<16x64xf32>
    %cst_44 = arith.constant 2.000000e-01 : f32
    %115 = vector.broadcast %cst_44 : f32 to vector<16x64xf32>
    %116 = arith.mulf %115, %112 : vector<16x64xf32>
    %117 = arith.select %114, %112, %116 : vector<16x64xi1>, vector<16x64xf32>
    %118 = arith.truncf %117 : vector<16x64xf32> to vector<16x64xbf16>
    %c0_45 = arith.constant 0 : index
    %c0_46 = arith.constant 0 : index
    %c0_47 = arith.constant 0 : index
    %119 = vector.load %arg9[%c0_45, %c0_46, %c0_47] : memref<1x16x64xbf16, #tpu.memory_space<vmem>>, vector<1x16x64xbf16>
    %120 = vector.shape_cast %119 : vector<1x16x64xbf16> to vector<16x64xbf16>
    %121 = vector.shape_cast %118 : vector<16x64xbf16> to vector<1x16x64xbf16>
    tpu.vector_store %arg9[%c0_45, %c0_46, %c0_47], %121 {strides = array<i32>} : memref<1x16x64xbf16, #tpu.memory_space<vmem>>, vector<1x16x64xbf16>,
    return
  }
  func.func @transform_0(%arg0: i32, %arg1: i32) -> (i32, i32, i32) {
    %c0_i32 = arith.constant 0 : i32
    %c0_i32_0 = arith.constant 0 : i32
    %c0_i32_1 = arith.constant 0 : i32
    return %arg0, %c0_i32, %c0_i32_0 : i32, i32, i32
  }
  func.func @transform_1(%arg0: i32, %arg1: i32) -> (i32, i32, i32) {
    %c0_i32 = arith.constant 0 : i32
    %c0_i32_0 = arith.constant 0 : i32
    return %arg0, %arg1, %c0_i32 : i32, i32, i32
  }
  func.func @transform_2(%arg0: i32, %arg1: i32) -> (i32, i32, i32) {
    %c0_i32 = arith.constant 0 : i32
    %c0_i32_0 = arith.constant 0 : i32
    %c0_i32_1 = arith.constant 0 : i32
    return %arg0, %c0_i32, %c0_i32_0 : i32, i32, i32
  }
  func.func @transform_3(%arg0: i32, %arg1: i32) -> (i32, i32) {
    %c0_i32 = arith.constant 0 : i32
    %c0_i32_0 = arith.constant 0 : i32
    %c0_i32_1 = arith.constant 0 : i32
    return %c0_i32, %c0_i32_0 : i32, i32
  }
  func.func @transform_4(%arg0: i32, %arg1: i32) -> (i32, i32) {
    %c0_i32 = arith.constant 0 : i32
    %c0_i32_0 = arith.constant 0 : i32
    %c0_i32_1 = arith.constant 0 : i32
    return %c0_i32, %c0_i32_0 : i32, i32
  }
  func.func @transform_5(%arg0: i32, %arg1: i32) -> (i32, i32) {
    %c0_i32 = arith.constant 0 : i32
    %c0_i32_0 = arith.constant 0 : i32
    %c0_i32_1 = arith.constant 0 : i32
    return %c0_i32, %c0_i32_0 : i32, i32
  }
  func.func @transform_6(%arg0: i32, %arg1: i32) -> (i32, i32) {
    %c0_i32 = arith.constant 0 : i32
    %c0_i32_0 = arith.constant 0 : i32
    %c0_i32_1 = arith.constant 0 : i32
    return %c0_i32, %c0_i32_0 : i32, i32
  }
  func.func @transform_7(%arg0: i32, %arg1: i32) -> (i32, i32, i32) {
    %c0_i32 = arith.constant 0 : i32
    %c0_i32_0 = arith.constant 0 : i32
    return %arg0, %arg1, %c0_i32 : i32, i32, i32
  }
}

module attributes {stable_mosaic.version = 11 : i64} {
  func.func @_edge_fused_kernel(%arg0: i32, %arg1: i32, %arg2: memref<1x16x64xbf16, #tpu.memory_space<vmem>>, %arg3: memref<1x16x64xbf16, #tpu.memory_space<vmem>>, %arg4: memref<1x1x16xf32, #tpu.memory_space<vmem>>, %arg5: memref<64x128xbf16, #tpu.memory_space<vmem>>, %arg6: memref<64x128xbf16, #tpu.memory_space<vmem>>, %arg7: memref<1x128xf32, #tpu.memory_space<vmem>>, %arg8: memref<1x128xf32, #tpu.memory_space<vmem>>, %arg9: memref<1x16x128xbf16, #tpu.memory_space<vmem>>) attributes {dimension_semantics = [#tpu.dimension_semantics<parallel>, #tpu.dimension_semantics<parallel>], iteration_bounds = array<i64: 2, 1>, scalar_prefetch = 0 : i64, scratch_operands = 0 : i64, tpu.core_type = #tpu.core_type<tc>, window_params = [{transform_indices = @transform_0, window_bounds = array<i64: 1, 16, 64>}, {transform_indices = @transform_1, window_bounds = array<i64: 1, 16, 64>}, {transform_indices = @transform_2, window_bounds = array<i64: 1, 1, 16>}, {pipeline_mode = #tpu.pipeline_mode<synchronous>, transform_indices = @transform_3, window_bounds = array<i64: 64, 128>}, {pipeline_mode = #tpu.pipeline_mode<synchronous>, transform_indices = @transform_4, window_bounds = array<i64: 64, 128>}, {pipeline_mode = #tpu.pipeline_mode<synchronous>, transform_indices = @transform_5, window_bounds = array<i64: 1, 128>}, {pipeline_mode = #tpu.pipeline_mode<synchronous>, transform_indices = @transform_6, window_bounds = array<i64: 1, 128>}, {transform_indices = @transform_7, window_bounds = array<i64: 1, 16, 128>}]} {
    %c0 = arith.constant 0 : index
    %c0_0 = arith.constant 0 : index
    %c0_1 = arith.constant 0 : index
    %0 = vector.load %arg2[%c0, %c0_0, %c0_1] : memref<1x16x64xbf16, #tpu.memory_space<vmem>>, vector<1x16x64xbf16>
    %1 = vector.shape_cast %0 : vector<1x16x64xbf16> to vector<16x64xbf16>
    %2 = arith.extf %1 : vector<16x64xbf16> to vector<16x64xf32>
    %c0_2 = arith.constant 0 : index
    %c0_3 = arith.constant 0 : index
    %c0_4 = arith.constant 0 : index
    %3 = vector.load %arg3[%c0_2, %c0_3, %c0_4] : memref<1x16x64xbf16, #tpu.memory_space<vmem>>, vector<1x16x64xbf16>
    %4 = vector.shape_cast %3 : vector<1x16x64xbf16> to vector<16x64xbf16>
    %5 = arith.extf %4 : vector<16x64xbf16> to vector<16x64xf32>
    %cst = arith.constant dense<0.000000e+00> : vector<16x16xf32>
    %6 = tpu.matmul %5, %2, %cst {dimension_numbers = #tpu.dot_dimension_numbers<[1], [1], [0], [0], [0, 0, 1, 0], [], []>} : vector<16x64xf32>, vector<16x64xf32>, vector<16x16xf32> -> vector<16x16xf32>
    %7 = arith.mulf %5, %5 : vector<16x64xf32>
    %cst_5 = arith.constant dense<0.000000e+00> : vector<16xf32>
    %8 = vector.multi_reduction <add>, %7, %cst_5 [1] : vector<16x64xf32> to vector<16xf32>
    %9 = vector.shape_cast %8 : vector<16xf32> to vector<16x1xf32>
    %cst_6 = arith.constant 2.000000e+00 : f32
    %10 = vector.broadcast %cst_6 : f32 to vector<16x16xf32>
    %11 = arith.mulf %10, %6 : vector<16x16xf32>
    %12 = vector.broadcast %9 : vector<16x1xf32> to vector<16x16xf32>
    %13 = arith.subf %11, %12 : vector<16x16xf32>
    %c0_7 = arith.constant 0 : index
    %c0_8 = arith.constant 0 : index
    %c0_9 = arith.constant 0 : index
    %14 = vector.load %arg4[%c0_7, %c0_8, %c0_9] : memref<1x1x16xf32, #tpu.memory_space<vmem>>, vector<1x1x16xf32>
    %15 = vector.shape_cast %14 : vector<1x1x16xf32> to vector<1x16xf32>
    %16 = vector.broadcast %15 : vector<1x16xf32> to vector<16x16xf32>
    %17 = arith.subf %13, %16 : vector<16x16xf32>
    %18 = tpu.bitcast %17 : vector<16x16xf32> -> vector<16x16xi32>
    %c0_i32 = arith.constant 0 : i32
    %19 = vector.broadcast %c0_i32 : i32 to vector<16x16xi32>
    %20 = arith.cmpi slt, %18, %19 : vector<16x16xi32>
    %c2147483647_i32 = arith.constant 2147483647 : i32
    %21 = vector.broadcast %c2147483647_i32 : i32 to vector<16x16xi32>
    %22 = arith.xori %18, %21 : vector<16x16xi32>
    %23 = arith.select %20, %22, %18 : vector<16x16xi1>, vector<16x16xi32>
    %24 = tpu.iota {dimensions = array<i32: 1>} : vector<16x16xi32>
    %c-16_i32 = arith.constant -16 : i32
    %25 = vector.broadcast %c-16_i32 : i32 to vector<16x16xi32>
    %26 = arith.andi %23, %25 : vector<16x16xi32>
    %27 = arith.ori %26, %24 : vector<16x16xi32>
    %cst_10 = arith.constant dense<-2147483648> : vector<16xi32>
    %28 = vector.multi_reduction <maxsi>, %27, %cst_10 [1] : vector<16x16xi32> to vector<16xi32>
    %29 = vector.shape_cast %28 : vector<16xi32> to vector<16x1xi32>
    %c15_i32 = arith.constant 15 : i32
    %30 = vector.broadcast %c15_i32 : i32 to vector<16x1xi32>
    %31 = arith.andi %29, %30 : vector<16x1xi32>
    %32 = vector.broadcast %29 : vector<16x1xi32> to vector<16x16xi32>
    %33 = arith.cmpi eq, %27, %32 : vector<16x16xi32>
    %c-2147483648_i32 = arith.constant -2147483648 : i32
    %34 = vector.broadcast %c-2147483648_i32 : i32 to vector<16x16xi32>
    %35 = arith.select %33, %34, %27 : vector<16x16xi1>, vector<16x16xi32>
    %cst_11 = arith.constant dense<-2147483648> : vector<16xi32>
    %36 = vector.multi_reduction <maxsi>, %35, %cst_11 [1] : vector<16x16xi32> to vector<16xi32>
    %37 = vector.shape_cast %36 : vector<16xi32> to vector<16x1xi32>
    %c15_i32_12 = arith.constant 15 : i32
    %38 = vector.broadcast %c15_i32_12 : i32 to vector<16x1xi32>
    %39 = arith.andi %37, %38 : vector<16x1xi32>
    %40 = vector.broadcast %37 : vector<16x1xi32> to vector<16x16xi32>
    %41 = arith.cmpi eq, %35, %40 : vector<16x16xi32>
    %c-2147483648_i32_13 = arith.constant -2147483648 : i32
    %42 = vector.broadcast %c-2147483648_i32_13 : i32 to vector<16x16xi32>
    %43 = arith.select %41, %42, %35 : vector<16x16xi1>, vector<16x16xi32>
    %cst_14 = arith.constant dense<-2147483648> : vector<16xi32>
    %44 = vector.multi_reduction <maxsi>, %43, %cst_14 [1] : vector<16x16xi32> to vector<16xi32>
    %45 = vector.shape_cast %44 : vector<16xi32> to vector<16x1xi32>
    %c15_i32_15 = arith.constant 15 : i32
    %46 = vector.broadcast %c15_i32_15 : i32 to vector<16x1xi32>
    %47 = arith.andi %45, %46 : vector<16x1xi32>
    %48 = vector.broadcast %45 : vector<16x1xi32> to vector<16x16xi32>
    %49 = arith.cmpi eq, %43, %48 : vector<16x16xi32>
    %c-2147483648_i32_16 = arith.constant -2147483648 : i32
    %50 = vector.broadcast %c-2147483648_i32_16 : i32 to vector<16x16xi32>
    %51 = arith.select %49, %50, %43 : vector<16x16xi1>, vector<16x16xi32>
    %cst_17 = arith.constant dense<-2147483648> : vector<16xi32>
    %52 = vector.multi_reduction <maxsi>, %51, %cst_17 [1] : vector<16x16xi32> to vector<16xi32>
    %53 = vector.shape_cast %52 : vector<16xi32> to vector<16x1xi32>
    %c15_i32_18 = arith.constant 15 : i32
    %54 = vector.broadcast %c15_i32_18 : i32 to vector<16x1xi32>
    %55 = arith.andi %53, %54 : vector<16x1xi32>
    %56 = arith.truncf %2 : vector<16x64xf32> to vector<16x64xbf16>
    %57 = tpu.iota {dimensions = array<i32: 1>} : vector<16x16xi32>
    %58 = vector.broadcast %31 : vector<16x1xi32> to vector<16x16xi32>
    %59 = arith.cmpi eq, %57, %58 : vector<16x16xi32>
    %60 = arith.extui %59 : vector<16x16xi1> to vector<16x16xi32>
    %61 = arith.sitofp %60 : vector<16x16xi32> to vector<16x16xf32>
    %62 = arith.truncf %61 : vector<16x16xf32> to vector<16x16xbf16>
    %cst_19 = arith.constant dense<0.000000e+00> : vector<16x64xf32>
    %63 = tpu.matmul %62, %56, %cst_19 {dimension_numbers = #tpu.dot_dimension_numbers<[1], [0], [0], [1], [0, 0, 1, 1], [], []>} : vector<16x16xbf16>, vector<16x64xbf16>, vector<16x64xf32> -> vector<16x64xf32>
    %64 = arith.truncf %63 : vector<16x64xf32> to vector<16x64xbf16>
    %c0_20 = arith.constant 0 : index
    %c0_21 = arith.constant 0 : index
    %65 = vector.load %arg5[%c0_20, %c0_21] : memref<64x128xbf16, #tpu.memory_space<vmem>>, vector<64x128xbf16>
    %cst_22 = arith.constant dense<0.000000e+00> : vector<16x128xf32>
    %66 = tpu.matmul %64, %65, %cst_22 {dimension_numbers = #tpu.dot_dimension_numbers<[1], [0], [0], [1], [0, 0, 1, 1], [], []>} : vector<16x64xbf16>, vector<64x128xbf16>, vector<16x128xf32> -> vector<16x128xf32>
    %67 = vector.broadcast %39 : vector<16x1xi32> to vector<16x16xi32>
    %68 = arith.cmpi eq, %57, %67 : vector<16x16xi32>
    %69 = arith.extui %68 : vector<16x16xi1> to vector<16x16xi32>
    %70 = arith.sitofp %69 : vector<16x16xi32> to vector<16x16xf32>
    %71 = arith.truncf %70 : vector<16x16xf32> to vector<16x16xbf16>
    %cst_23 = arith.constant dense<0.000000e+00> : vector<16x64xf32>
    %72 = tpu.matmul %71, %56, %cst_23 {dimension_numbers = #tpu.dot_dimension_numbers<[1], [0], [0], [1], [0, 0, 1, 1], [], []>} : vector<16x16xbf16>, vector<16x64xbf16>, vector<16x64xf32> -> vector<16x64xf32>
    %73 = arith.truncf %72 : vector<16x64xf32> to vector<16x64xbf16>
    %c0_24 = arith.constant 0 : index
    %c0_25 = arith.constant 0 : index
    %74 = vector.load %arg5[%c0_24, %c0_25] : memref<64x128xbf16, #tpu.memory_space<vmem>>, vector<64x128xbf16>
    %cst_26 = arith.constant dense<0.000000e+00> : vector<16x128xf32>
    %75 = tpu.matmul %73, %74, %cst_26 {dimension_numbers = #tpu.dot_dimension_numbers<[1], [0], [0], [1], [0, 0, 1, 1], [], []>} : vector<16x64xbf16>, vector<64x128xbf16>, vector<16x128xf32> -> vector<16x128xf32>
    %76 = arith.maximumf %66, %75 : vector<16x128xf32>
    %77 = arith.minimumf %66, %75 : vector<16x128xf32>
    %78 = vector.broadcast %47 : vector<16x1xi32> to vector<16x16xi32>
    %79 = arith.cmpi eq, %57, %78 : vector<16x16xi32>
    %80 = arith.extui %79 : vector<16x16xi1> to vector<16x16xi32>
    %81 = arith.sitofp %80 : vector<16x16xi32> to vector<16x16xf32>
    %82 = arith.truncf %81 : vector<16x16xf32> to vector<16x16xbf16>
    %cst_27 = arith.constant dense<0.000000e+00> : vector<16x64xf32>
    %83 = tpu.matmul %82, %56, %cst_27 {dimension_numbers = #tpu.dot_dimension_numbers<[1], [0], [0], [1], [0, 0, 1, 1], [], []>} : vector<16x16xbf16>, vector<16x64xbf16>, vector<16x64xf32> -> vector<16x64xf32>
    %84 = arith.truncf %83 : vector<16x64xf32> to vector<16x64xbf16>
    %c0_28 = arith.constant 0 : index
    %c0_29 = arith.constant 0 : index
    %85 = vector.load %arg5[%c0_28, %c0_29] : memref<64x128xbf16, #tpu.memory_space<vmem>>, vector<64x128xbf16>
    %cst_30 = arith.constant dense<0.000000e+00> : vector<16x128xf32>
    %86 = tpu.matmul %84, %85, %cst_30 {dimension_numbers = #tpu.dot_dimension_numbers<[1], [0], [0], [1], [0, 0, 1, 1], [], []>} : vector<16x64xbf16>, vector<64x128xbf16>, vector<16x128xf32> -> vector<16x128xf32>
    %87 = arith.maximumf %76, %86 : vector<16x128xf32>
    %88 = arith.minimumf %77, %86 : vector<16x128xf32>
    %89 = vector.broadcast %55 : vector<16x1xi32> to vector<16x16xi32>
    %90 = arith.cmpi eq, %57, %89 : vector<16x16xi32>
    %91 = arith.extui %90 : vector<16x16xi1> to vector<16x16xi32>
    %92 = arith.sitofp %91 : vector<16x16xi32> to vector<16x16xf32>
    %93 = arith.truncf %92 : vector<16x16xf32> to vector<16x16xbf16>
    %cst_31 = arith.constant dense<0.000000e+00> : vector<16x64xf32>
    %94 = tpu.matmul %93, %56, %cst_31 {dimension_numbers = #tpu.dot_dimension_numbers<[1], [0], [0], [1], [0, 0, 1, 1], [], []>} : vector<16x16xbf16>, vector<16x64xbf16>, vector<16x64xf32> -> vector<16x64xf32>
    %95 = arith.truncf %94 : vector<16x64xf32> to vector<16x64xbf16>
    %c0_32 = arith.constant 0 : index
    %c0_33 = arith.constant 0 : index
    %96 = vector.load %arg5[%c0_32, %c0_33] : memref<64x128xbf16, #tpu.memory_space<vmem>>, vector<64x128xbf16>
    %cst_34 = arith.constant dense<0.000000e+00> : vector<16x128xf32>
    %97 = tpu.matmul %95, %96, %cst_34 {dimension_numbers = #tpu.dot_dimension_numbers<[1], [0], [0], [1], [0, 0, 1, 1], [], []>} : vector<16x64xbf16>, vector<64x128xbf16>, vector<16x128xf32> -> vector<16x128xf32>
    %98 = arith.maximumf %87, %97 : vector<16x128xf32>
    %99 = arith.minimumf %88, %97 : vector<16x128xf32>
    %c0_35 = arith.constant 0 : index
    %c0_36 = arith.constant 0 : index
    %100 = vector.load %arg6[%c0_35, %c0_36] : memref<64x128xbf16, #tpu.memory_space<vmem>>, vector<64x128xbf16>
    %cst_37 = arith.constant dense<0.000000e+00> : vector<16x128xf32>
    %101 = tpu.matmul %4, %100, %cst_37 {dimension_numbers = #tpu.dot_dimension_numbers<[1], [0], [0], [1], [0, 0, 1, 1], [], []>} : vector<16x64xbf16>, vector<64x128xbf16>, vector<16x128xf32> -> vector<16x128xf32>
    %c0_38 = arith.constant 0 : index
    %c0_39 = arith.constant 0 : index
    %102 = vector.load %arg7[%c0_38, %c0_39] : memref<1x128xf32, #tpu.memory_space<vmem>>, vector<1x128xf32>
    %c0_40 = arith.constant 0 : index
    %c0_41 = arith.constant 0 : index
    %103 = vector.load %arg8[%c0_40, %c0_41] : memref<1x128xf32, #tpu.memory_space<vmem>>, vector<1x128xf32>
    %cst_42 = arith.constant 0.000000e+00 : f32
    %104 = vector.broadcast %cst_42 : f32 to vector<1x128xf32>
    %105 = arith.cmpf ogt, %102, %104 : vector<1x128xf32>
    %106 = vector.shape_cast %105 : vector<1x128xi1> to vector<1x128xi1>
    %107 = vector.broadcast %106 : vector<1x128xi1> to vector<16x128xi1>
    %108 = arith.select %107, %98, %99 : vector<16x128xi1>, vector<16x128xf32>
    %109 = arith.addf %108, %101 : vector<16x128xf32>
    %110 = vector.broadcast %102 : vector<1x128xf32> to vector<16x128xf32>
    %111 = arith.mulf %109, %110 : vector<16x128xf32>
    %112 = vector.broadcast %103 : vector<1x128xf32> to vector<16x128xf32>
    %113 = arith.addf %111, %112 : vector<16x128xf32>
    %cst_43 = arith.constant 0.000000e+00 : f32
    %114 = vector.broadcast %cst_43 : f32 to vector<16x128xf32>
    %115 = arith.cmpf ogt, %113, %114 : vector<16x128xf32>
    %cst_44 = arith.constant 2.000000e-01 : f32
    %116 = vector.broadcast %cst_44 : f32 to vector<16x128xf32>
    %117 = arith.mulf %116, %113 : vector<16x128xf32>
    %118 = arith.select %115, %113, %117 : vector<16x128xi1>, vector<16x128xf32>
    %119 = arith.truncf %118 : vector<16x128xf32> to vector<16x128xbf16>
    %c0_45 = arith.constant 0 : index
    %c0_46 = arith.constant 0 : index
    %c0_47 = arith.constant 0 : index
    %120 = vector.load %arg9[%c0_45, %c0_46, %c0_47] : memref<1x16x128xbf16, #tpu.memory_space<vmem>>, vector<1x16x128xbf16>
    %121 = vector.shape_cast %120 : vector<1x16x128xbf16> to vector<16x128xbf16>
    %122 = vector.shape_cast %119 : vector<16x128xbf16> to vector<1x16x128xbf16>
    tpu.vector_store %arg9[%c0_45, %c0_46, %c0_47], %122 {strides = array<i32>} : memref<1x16x128xbf16, #tpu.memory_space<vmem>>, vector<1x16x128xbf16>,
    return
  }
  func.func @transform_0(%arg0: i32, %arg1: i32) -> (i32, i32, i32) {
    %c0_i32 = arith.constant 0 : i32
    %c0_i32_0 = arith.constant 0 : i32
    %c0_i32_1 = arith.constant 0 : i32
    return %arg0, %c0_i32, %c0_i32_0 : i32, i32, i32
  }
  func.func @transform_1(%arg0: i32, %arg1: i32) -> (i32, i32, i32) {
    %c0_i32 = arith.constant 0 : i32
    %c0_i32_0 = arith.constant 0 : i32
    return %arg0, %arg1, %c0_i32 : i32, i32, i32
  }
  func.func @transform_2(%arg0: i32, %arg1: i32) -> (i32, i32, i32) {
    %c0_i32 = arith.constant 0 : i32
    %c0_i32_0 = arith.constant 0 : i32
    %c0_i32_1 = arith.constant 0 : i32
    return %arg0, %c0_i32, %c0_i32_0 : i32, i32, i32
  }
  func.func @transform_3(%arg0: i32, %arg1: i32) -> (i32, i32) {
    %c0_i32 = arith.constant 0 : i32
    %c0_i32_0 = arith.constant 0 : i32
    %c0_i32_1 = arith.constant 0 : i32
    return %c0_i32, %c0_i32_0 : i32, i32
  }
  func.func @transform_4(%arg0: i32, %arg1: i32) -> (i32, i32) {
    %c0_i32 = arith.constant 0 : i32
    %c0_i32_0 = arith.constant 0 : i32
    %c0_i32_1 = arith.constant 0 : i32
    return %c0_i32, %c0_i32_0 : i32, i32
  }
  func.func @transform_5(%arg0: i32, %arg1: i32) -> (i32, i32) {
    %c0_i32 = arith.constant 0 : i32
    %c0_i32_0 = arith.constant 0 : i32
    %c0_i32_1 = arith.constant 0 : i32
    return %c0_i32, %c0_i32_0 : i32, i32
  }
  func.func @transform_6(%arg0: i32, %arg1: i32) -> (i32, i32) {
    %c0_i32 = arith.constant 0 : i32
    %c0_i32_0 = arith.constant 0 : i32
    %c0_i32_1 = arith.constant 0 : i32
    return %c0_i32, %c0_i32_0 : i32, i32
  }
  func.func @transform_7(%arg0: i32, %arg1: i32) -> (i32, i32, i32) {
    %c0_i32 = arith.constant 0 : i32
    %c0_i32_0 = arith.constant 0 : i32
    return %arg0, %arg1, %c0_i32 : i32, i32, i32
  }
}

module attributes {stable_mosaic.version = 11 : i64} {
  func.func @_edge_fused_kernel(%arg0: i32, %arg1: i32, %arg2: memref<1x16x128xbf16, #tpu.memory_space<vmem>>, %arg3: memref<1x16x128xbf16, #tpu.memory_space<vmem>>, %arg4: memref<1x1x16xf32, #tpu.memory_space<vmem>>, %arg5: memref<128x256xbf16, #tpu.memory_space<vmem>>, %arg6: memref<128x256xbf16, #tpu.memory_space<vmem>>, %arg7: memref<1x256xf32, #tpu.memory_space<vmem>>, %arg8: memref<1x256xf32, #tpu.memory_space<vmem>>, %arg9: memref<1x16x256xbf16, #tpu.memory_space<vmem>>) attributes {dimension_semantics = [#tpu.dimension_semantics<parallel>, #tpu.dimension_semantics<parallel>], iteration_bounds = array<i64: 2, 1>, scalar_prefetch = 0 : i64, scratch_operands = 0 : i64, tpu.core_type = #tpu.core_type<tc>, window_params = [{transform_indices = @transform_0, window_bounds = array<i64: 1, 16, 128>}, {transform_indices = @transform_1, window_bounds = array<i64: 1, 16, 128>}, {transform_indices = @transform_2, window_bounds = array<i64: 1, 1, 16>}, {pipeline_mode = #tpu.pipeline_mode<synchronous>, transform_indices = @transform_3, window_bounds = array<i64: 128, 256>}, {pipeline_mode = #tpu.pipeline_mode<synchronous>, transform_indices = @transform_4, window_bounds = array<i64: 128, 256>}, {pipeline_mode = #tpu.pipeline_mode<synchronous>, transform_indices = @transform_5, window_bounds = array<i64: 1, 256>}, {pipeline_mode = #tpu.pipeline_mode<synchronous>, transform_indices = @transform_6, window_bounds = array<i64: 1, 256>}, {transform_indices = @transform_7, window_bounds = array<i64: 1, 16, 256>}]} {
    %c0 = arith.constant 0 : index
    %c0_0 = arith.constant 0 : index
    %c0_1 = arith.constant 0 : index
    %0 = vector.load %arg2[%c0, %c0_0, %c0_1] : memref<1x16x128xbf16, #tpu.memory_space<vmem>>, vector<1x16x128xbf16>
    %1 = vector.shape_cast %0 : vector<1x16x128xbf16> to vector<16x128xbf16>
    %2 = arith.extf %1 : vector<16x128xbf16> to vector<16x128xf32>
    %c0_2 = arith.constant 0 : index
    %c0_3 = arith.constant 0 : index
    %c0_4 = arith.constant 0 : index
    %3 = vector.load %arg3[%c0_2, %c0_3, %c0_4] : memref<1x16x128xbf16, #tpu.memory_space<vmem>>, vector<1x16x128xbf16>
    %4 = vector.shape_cast %3 : vector<1x16x128xbf16> to vector<16x128xbf16>
    %5 = arith.extf %4 : vector<16x128xbf16> to vector<16x128xf32>
    %cst = arith.constant dense<0.000000e+00> : vector<16x16xf32>
    %6 = tpu.matmul %5, %2, %cst {dimension_numbers = #tpu.dot_dimension_numbers<[1], [1], [0], [0], [0, 0, 1, 0], [], []>} : vector<16x128xf32>, vector<16x128xf32>, vector<16x16xf32> -> vector<16x16xf32>
    %7 = arith.mulf %5, %5 : vector<16x128xf32>
    %cst_5 = arith.constant dense<0.000000e+00> : vector<16xf32>
    %8 = vector.multi_reduction <add>, %7, %cst_5 [1] : vector<16x128xf32> to vector<16xf32>
    %9 = vector.shape_cast %8 : vector<16xf32> to vector<16x1xf32>
    %cst_6 = arith.constant 2.000000e+00 : f32
    %10 = vector.broadcast %cst_6 : f32 to vector<16x16xf32>
    %11 = arith.mulf %10, %6 : vector<16x16xf32>
    %12 = vector.broadcast %9 : vector<16x1xf32> to vector<16x16xf32>
    %13 = arith.subf %11, %12 : vector<16x16xf32>
    %c0_7 = arith.constant 0 : index
    %c0_8 = arith.constant 0 : index
    %c0_9 = arith.constant 0 : index
    %14 = vector.load %arg4[%c0_7, %c0_8, %c0_9] : memref<1x1x16xf32, #tpu.memory_space<vmem>>, vector<1x1x16xf32>
    %15 = vector.shape_cast %14 : vector<1x1x16xf32> to vector<1x16xf32>
    %16 = vector.broadcast %15 : vector<1x16xf32> to vector<16x16xf32>
    %17 = arith.subf %13, %16 : vector<16x16xf32>
    %18 = tpu.bitcast %17 : vector<16x16xf32> -> vector<16x16xi32>
    %c0_i32 = arith.constant 0 : i32
    %19 = vector.broadcast %c0_i32 : i32 to vector<16x16xi32>
    %20 = arith.cmpi slt, %18, %19 : vector<16x16xi32>
    %c2147483647_i32 = arith.constant 2147483647 : i32
    %21 = vector.broadcast %c2147483647_i32 : i32 to vector<16x16xi32>
    %22 = arith.xori %18, %21 : vector<16x16xi32>
    %23 = arith.select %20, %22, %18 : vector<16x16xi1>, vector<16x16xi32>
    %24 = tpu.iota {dimensions = array<i32: 1>} : vector<16x16xi32>
    %c-16_i32 = arith.constant -16 : i32
    %25 = vector.broadcast %c-16_i32 : i32 to vector<16x16xi32>
    %26 = arith.andi %23, %25 : vector<16x16xi32>
    %27 = arith.ori %26, %24 : vector<16x16xi32>
    %cst_10 = arith.constant dense<-2147483648> : vector<16xi32>
    %28 = vector.multi_reduction <maxsi>, %27, %cst_10 [1] : vector<16x16xi32> to vector<16xi32>
    %29 = vector.shape_cast %28 : vector<16xi32> to vector<16x1xi32>
    %c15_i32 = arith.constant 15 : i32
    %30 = vector.broadcast %c15_i32 : i32 to vector<16x1xi32>
    %31 = arith.andi %29, %30 : vector<16x1xi32>
    %32 = vector.broadcast %29 : vector<16x1xi32> to vector<16x16xi32>
    %33 = arith.cmpi eq, %27, %32 : vector<16x16xi32>
    %c-2147483648_i32 = arith.constant -2147483648 : i32
    %34 = vector.broadcast %c-2147483648_i32 : i32 to vector<16x16xi32>
    %35 = arith.select %33, %34, %27 : vector<16x16xi1>, vector<16x16xi32>
    %cst_11 = arith.constant dense<-2147483648> : vector<16xi32>
    %36 = vector.multi_reduction <maxsi>, %35, %cst_11 [1] : vector<16x16xi32> to vector<16xi32>
    %37 = vector.shape_cast %36 : vector<16xi32> to vector<16x1xi32>
    %c15_i32_12 = arith.constant 15 : i32
    %38 = vector.broadcast %c15_i32_12 : i32 to vector<16x1xi32>
    %39 = arith.andi %37, %38 : vector<16x1xi32>
    %40 = vector.broadcast %37 : vector<16x1xi32> to vector<16x16xi32>
    %41 = arith.cmpi eq, %35, %40 : vector<16x16xi32>
    %c-2147483648_i32_13 = arith.constant -2147483648 : i32
    %42 = vector.broadcast %c-2147483648_i32_13 : i32 to vector<16x16xi32>
    %43 = arith.select %41, %42, %35 : vector<16x16xi1>, vector<16x16xi32>
    %cst_14 = arith.constant dense<-2147483648> : vector<16xi32>
    %44 = vector.multi_reduction <maxsi>, %43, %cst_14 [1] : vector<16x16xi32> to vector<16xi32>
    %45 = vector.shape_cast %44 : vector<16xi32> to vector<16x1xi32>
    %c15_i32_15 = arith.constant 15 : i32
    %46 = vector.broadcast %c15_i32_15 : i32 to vector<16x1xi32>
    %47 = arith.andi %45, %46 : vector<16x1xi32>
    %48 = vector.broadcast %45 : vector<16x1xi32> to vector<16x16xi32>
    %49 = arith.cmpi eq, %43, %48 : vector<16x16xi32>
    %c-2147483648_i32_16 = arith.constant -2147483648 : i32
    %50 = vector.broadcast %c-2147483648_i32_16 : i32 to vector<16x16xi32>
    %51 = arith.select %49, %50, %43 : vector<16x16xi1>, vector<16x16xi32>
    %cst_17 = arith.constant dense<-2147483648> : vector<16xi32>
    %52 = vector.multi_reduction <maxsi>, %51, %cst_17 [1] : vector<16x16xi32> to vector<16xi32>
    %53 = vector.shape_cast %52 : vector<16xi32> to vector<16x1xi32>
    %c15_i32_18 = arith.constant 15 : i32
    %54 = vector.broadcast %c15_i32_18 : i32 to vector<16x1xi32>
    %55 = arith.andi %53, %54 : vector<16x1xi32>
    %56 = arith.truncf %2 : vector<16x128xf32> to vector<16x128xbf16>
    %57 = tpu.iota {dimensions = array<i32: 1>} : vector<16x16xi32>
    %58 = vector.broadcast %31 : vector<16x1xi32> to vector<16x16xi32>
    %59 = arith.cmpi eq, %57, %58 : vector<16x16xi32>
    %60 = arith.extui %59 : vector<16x16xi1> to vector<16x16xi32>
    %61 = arith.sitofp %60 : vector<16x16xi32> to vector<16x16xf32>
    %62 = arith.truncf %61 : vector<16x16xf32> to vector<16x16xbf16>
    %cst_19 = arith.constant dense<0.000000e+00> : vector<16x128xf32>
    %63 = tpu.matmul %62, %56, %cst_19 {dimension_numbers = #tpu.dot_dimension_numbers<[1], [0], [0], [1], [0, 0, 1, 1], [], []>} : vector<16x16xbf16>, vector<16x128xbf16>, vector<16x128xf32> -> vector<16x128xf32>
    %64 = arith.truncf %63 : vector<16x128xf32> to vector<16x128xbf16>
    %c0_20 = arith.constant 0 : index
    %c0_21 = arith.constant 0 : index
    %65 = vector.load %arg5[%c0_20, %c0_21] : memref<128x256xbf16, #tpu.memory_space<vmem>>, vector<128x256xbf16>
    %cst_22 = arith.constant dense<0.000000e+00> : vector<16x256xf32>
    %66 = tpu.matmul %64, %65, %cst_22 {dimension_numbers = #tpu.dot_dimension_numbers<[1], [0], [0], [1], [0, 0, 1, 1], [], []>} : vector<16x128xbf16>, vector<128x256xbf16>, vector<16x256xf32> -> vector<16x256xf32>
    %67 = vector.broadcast %39 : vector<16x1xi32> to vector<16x16xi32>
    %68 = arith.cmpi eq, %57, %67 : vector<16x16xi32>
    %69 = arith.extui %68 : vector<16x16xi1> to vector<16x16xi32>
    %70 = arith.sitofp %69 : vector<16x16xi32> to vector<16x16xf32>
    %71 = arith.truncf %70 : vector<16x16xf32> to vector<16x16xbf16>
    %cst_23 = arith.constant dense<0.000000e+00> : vector<16x128xf32>
    %72 = tpu.matmul %71, %56, %cst_23 {dimension_numbers = #tpu.dot_dimension_numbers<[1], [0], [0], [1], [0, 0, 1, 1], [], []>} : vector<16x16xbf16>, vector<16x128xbf16>, vector<16x128xf32> -> vector<16x128xf32>
    %73 = arith.truncf %72 : vector<16x128xf32> to vector<16x128xbf16>
    %c0_24 = arith.constant 0 : index
    %c0_25 = arith.constant 0 : index
    %74 = vector.load %arg5[%c0_24, %c0_25] : memref<128x256xbf16, #tpu.memory_space<vmem>>, vector<128x256xbf16>
    %cst_26 = arith.constant dense<0.000000e+00> : vector<16x256xf32>
    %75 = tpu.matmul %73, %74, %cst_26 {dimension_numbers = #tpu.dot_dimension_numbers<[1], [0], [0], [1], [0, 0, 1, 1], [], []>} : vector<16x128xbf16>, vector<128x256xbf16>, vector<16x256xf32> -> vector<16x256xf32>
    %76 = arith.maximumf %66, %75 : vector<16x256xf32>
    %77 = arith.minimumf %66, %75 : vector<16x256xf32>
    %78 = vector.broadcast %47 : vector<16x1xi32> to vector<16x16xi32>
    %79 = arith.cmpi eq, %57, %78 : vector<16x16xi32>
    %80 = arith.extui %79 : vector<16x16xi1> to vector<16x16xi32>
    %81 = arith.sitofp %80 : vector<16x16xi32> to vector<16x16xf32>
    %82 = arith.truncf %81 : vector<16x16xf32> to vector<16x16xbf16>
    %cst_27 = arith.constant dense<0.000000e+00> : vector<16x128xf32>
    %83 = tpu.matmul %82, %56, %cst_27 {dimension_numbers = #tpu.dot_dimension_numbers<[1], [0], [0], [1], [0, 0, 1, 1], [], []>} : vector<16x16xbf16>, vector<16x128xbf16>, vector<16x128xf32> -> vector<16x128xf32>
    %84 = arith.truncf %83 : vector<16x128xf32> to vector<16x128xbf16>
    %c0_28 = arith.constant 0 : index
    %c0_29 = arith.constant 0 : index
    %85 = vector.load %arg5[%c0_28, %c0_29] : memref<128x256xbf16, #tpu.memory_space<vmem>>, vector<128x256xbf16>
    %cst_30 = arith.constant dense<0.000000e+00> : vector<16x256xf32>
    %86 = tpu.matmul %84, %85, %cst_30 {dimension_numbers = #tpu.dot_dimension_numbers<[1], [0], [0], [1], [0, 0, 1, 1], [], []>} : vector<16x128xbf16>, vector<128x256xbf16>, vector<16x256xf32> -> vector<16x256xf32>
    %87 = arith.maximumf %76, %86 : vector<16x256xf32>
    %88 = arith.minimumf %77, %86 : vector<16x256xf32>
    %89 = vector.broadcast %55 : vector<16x1xi32> to vector<16x16xi32>
    %90 = arith.cmpi eq, %57, %89 : vector<16x16xi32>
    %91 = arith.extui %90 : vector<16x16xi1> to vector<16x16xi32>
    %92 = arith.sitofp %91 : vector<16x16xi32> to vector<16x16xf32>
    %93 = arith.truncf %92 : vector<16x16xf32> to vector<16x16xbf16>
    %cst_31 = arith.constant dense<0.000000e+00> : vector<16x128xf32>
    %94 = tpu.matmul %93, %56, %cst_31 {dimension_numbers = #tpu.dot_dimension_numbers<[1], [0], [0], [1], [0, 0, 1, 1], [], []>} : vector<16x16xbf16>, vector<16x128xbf16>, vector<16x128xf32> -> vector<16x128xf32>
    %95 = arith.truncf %94 : vector<16x128xf32> to vector<16x128xbf16>
    %c0_32 = arith.constant 0 : index
    %c0_33 = arith.constant 0 : index
    %96 = vector.load %arg5[%c0_32, %c0_33] : memref<128x256xbf16, #tpu.memory_space<vmem>>, vector<128x256xbf16>
    %cst_34 = arith.constant dense<0.000000e+00> : vector<16x256xf32>
    %97 = tpu.matmul %95, %96, %cst_34 {dimension_numbers = #tpu.dot_dimension_numbers<[1], [0], [0], [1], [0, 0, 1, 1], [], []>} : vector<16x128xbf16>, vector<128x256xbf16>, vector<16x256xf32> -> vector<16x256xf32>
    %98 = arith.maximumf %87, %97 : vector<16x256xf32>
    %99 = arith.minimumf %88, %97 : vector<16x256xf32>
    %c0_35 = arith.constant 0 : index
    %c0_36 = arith.constant 0 : index
    %100 = vector.load %arg6[%c0_35, %c0_36] : memref<128x256xbf16, #tpu.memory_space<vmem>>, vector<128x256xbf16>
    %cst_37 = arith.constant dense<0.000000e+00> : vector<16x256xf32>
    %101 = tpu.matmul %4, %100, %cst_37 {dimension_numbers = #tpu.dot_dimension_numbers<[1], [0], [0], [1], [0, 0, 1, 1], [], []>} : vector<16x128xbf16>, vector<128x256xbf16>, vector<16x256xf32> -> vector<16x256xf32>
    %c0_38 = arith.constant 0 : index
    %c0_39 = arith.constant 0 : index
    %102 = vector.load %arg7[%c0_38, %c0_39] : memref<1x256xf32, #tpu.memory_space<vmem>>, vector<1x256xf32>
    %c0_40 = arith.constant 0 : index
    %c0_41 = arith.constant 0 : index
    %103 = vector.load %arg8[%c0_40, %c0_41] : memref<1x256xf32, #tpu.memory_space<vmem>>, vector<1x256xf32>
    %cst_42 = arith.constant 0.000000e+00 : f32
    %104 = vector.broadcast %cst_42 : f32 to vector<1x256xf32>
    %105 = arith.cmpf ogt, %102, %104 : vector<1x256xf32>
    %106 = vector.shape_cast %105 : vector<1x256xi1> to vector<1x256xi1>
    %107 = vector.broadcast %106 : vector<1x256xi1> to vector<16x256xi1>
    %108 = arith.select %107, %98, %99 : vector<16x256xi1>, vector<16x256xf32>
    %109 = arith.addf %108, %101 : vector<16x256xf32>
    %110 = vector.broadcast %102 : vector<1x256xf32> to vector<16x256xf32>
    %111 = arith.mulf %109, %110 : vector<16x256xf32>
    %112 = vector.broadcast %103 : vector<1x256xf32> to vector<16x256xf32>
    %113 = arith.addf %111, %112 : vector<16x256xf32>
    %cst_43 = arith.constant 0.000000e+00 : f32
    %114 = vector.broadcast %cst_43 : f32 to vector<16x256xf32>
    %115 = arith.cmpf ogt, %113, %114 : vector<16x256xf32>
    %cst_44 = arith.constant 2.000000e-01 : f32
    %116 = vector.broadcast %cst_44 : f32 to vector<16x256xf32>
    %117 = arith.mulf %116, %113 : vector<16x256xf32>
    %118 = arith.select %115, %113, %117 : vector<16x256xi1>, vector<16x256xf32>
    %119 = arith.truncf %118 : vector<16x256xf32> to vector<16x256xbf16>
    %c0_45 = arith.constant 0 : index
    %c0_46 = arith.constant 0 : index
    %c0_47 = arith.constant 0 : index
    %120 = vector.load %arg9[%c0_45, %c0_46, %c0_47] : memref<1x16x256xbf16, #tpu.memory_space<vmem>>, vector<1x16x256xbf16>
    %121 = vector.shape_cast %120 : vector<1x16x256xbf16> to vector<16x256xbf16>
    %122 = vector.shape_cast %119 : vector<16x256xbf16> to vector<1x16x256xbf16>
    tpu.vector_store %arg9[%c0_45, %c0_46, %c0_47], %122 {strides = array<i32>} : memref<1x16x256xbf16, #tpu.memory_space<vmem>>, vector<1x16x256xbf16>,
    return
  }
  func.func @transform_0(%arg0: i32, %arg1: i32) -> (i32, i32, i32) {
    %c0_i32 = arith.constant 0 : i32
    %c0_i32_0 = arith.constant 0 : i32
    %c0_i32_1 = arith.constant 0 : i32
    return %arg0, %c0_i32, %c0_i32_0 : i32, i32, i32
  }
  func.func @transform_1(%arg0: i32, %arg1: i32) -> (i32, i32, i32) {
    %c0_i32 = arith.constant 0 : i32
    %c0_i32_0 = arith.constant 0 : i32
    return %arg0, %arg1, %c0_i32 : i32, i32, i32
  }
  func.func @transform_2(%arg0: i32, %arg1: i32) -> (i32, i32, i32) {
    %c0_i32 = arith.constant 0 : i32
    %c0_i32_0 = arith.constant 0 : i32
    %c0_i32_1 = arith.constant 0 : i32
    return %arg0, %c0_i32, %c0_i32_0 : i32, i32, i32
  }
  func.func @transform_3(%arg0: i32, %arg1: i32) -> (i32, i32) {
    %c0_i32 = arith.constant 0 : i32
    %c0_i32_0 = arith.constant 0 : i32
    %c0_i32_1 = arith.constant 0 : i32
    return %c0_i32, %c0_i32_0 : i32, i32
  }
  func.func @transform_4(%arg0: i32, %arg1: i32) -> (i32, i32) {
    %c0_i32 = arith.constant 0 : i32
    %c0_i32_0 = arith.constant 0 : i32
    %c0_i32_1 = arith.constant 0 : i32
    return %c0_i32, %c0_i32_0 : i32, i32
  }
  func.func @transform_5(%arg0: i32, %arg1: i32) -> (i32, i32) {
    %c0_i32 = arith.constant 0 : i32
    %c0_i32_0 = arith.constant 0 : i32
    %c0_i32_1 = arith.constant 0 : i32
    return %c0_i32, %c0_i32_0 : i32, i32
  }
  func.func @transform_6(%arg0: i32, %arg1: i32) -> (i32, i32) {
    %c0_i32 = arith.constant 0 : i32
    %c0_i32_0 = arith.constant 0 : i32
    %c0_i32_1 = arith.constant 0 : i32
    return %c0_i32, %c0_i32_0 : i32, i32
  }
  func.func @transform_7(%arg0: i32, %arg1: i32) -> (i32, i32, i32) {
    %c0_i32 = arith.constant 0 : i32
    %c0_i32_0 = arith.constant 0 : i32
    return %arg0, %arg1, %c0_i32 : i32, i32, i32
  }
}

module attributes {stable_mosaic.version = 11 : i64} {
  func.func @_conv5_max_kernel(%arg0: i32, %arg1: i32, %arg2: memref<1x16x64xbf16, #tpu.memory_space<vmem>>, %arg3: memref<1x16x64xbf16, #tpu.memory_space<vmem>>, %arg4: memref<1x16x128xbf16, #tpu.memory_space<vmem>>, %arg5: memref<1x16x256xbf16, #tpu.memory_space<vmem>>, %arg6: memref<512x64xbf16, #tpu.memory_space<vmem>>, %arg7: memref<1x64xf32, #tpu.memory_space<vmem>>, %arg8: memref<1x64xf32, #tpu.memory_space<vmem>>, %arg9: memref<1x1x64xf32, #tpu.memory_space<vmem>>) attributes {dimension_semantics = [#tpu.dimension_semantics<parallel>, #tpu.dimension_semantics<arbitrary>], iteration_bounds = array<i64: 2, 1>, scalar_prefetch = 0 : i64, scratch_operands = 0 : i64, tpu.core_type = #tpu.core_type<tc>, window_params = [{transform_indices = @transform_0, window_bounds = array<i64: 1, 16, 64>}, {transform_indices = @transform_1, window_bounds = array<i64: 1, 16, 64>}, {transform_indices = @transform_2, window_bounds = array<i64: 1, 16, 128>}, {transform_indices = @transform_3, window_bounds = array<i64: 1, 16, 256>}, {pipeline_mode = #tpu.pipeline_mode<synchronous>, transform_indices = @transform_4, window_bounds = array<i64: 512, 64>}, {pipeline_mode = #tpu.pipeline_mode<synchronous>, transform_indices = @transform_5, window_bounds = array<i64: 1, 64>}, {pipeline_mode = #tpu.pipeline_mode<synchronous>, transform_indices = @transform_6, window_bounds = array<i64: 1, 64>}, {transform_indices = @transform_7, window_bounds = array<i64: 1, 1, 64>}]} {
    %c0_i32 = arith.constant 0 : i32
    %0 = arith.cmpi eq, %arg1, %c0_i32 : i32
    %1 = arith.extui %0 : i1 to i32
    %c0_i32_0 = arith.constant 0 : i32
    %2 = arith.cmpi ne, %1, %c0_i32_0 : i32
    scf.if %2 {
      %cst_27 = arith.constant 0xFF800000 : f32
      %33 = vector.broadcast %cst_27 : f32 to vector<1x64xf32>
      %c0_28 = arith.constant 0 : index
      %c0_29 = arith.constant 0 : index
      %c0_30 = arith.constant 0 : index
      %34 = vector.load %arg9[%c0_28, %c0_29, %c0_30] : memref<1x1x64xf32, #tpu.memory_space<vmem>>, vector<1x1x64xf32>
      %35 = vector.shape_cast %34 : vector<1x1x64xf32> to vector<1x64xf32>
      %36 = vector.shape_cast %33 : vector<1x64xf32> to vector<1x1x64xf32>
      tpu.vector_store %arg9[%c0_28, %c0_29, %c0_30], %36 {strides = array<i32>} : memref<1x1x64xf32, #tpu.memory_space<vmem>>, vector<1x1x64xf32>,
    } else {
    }
    %c0 = arith.constant 0 : index
    %c0_1 = arith.constant 0 : index
    %c0_2 = arith.constant 0 : index
    %3 = vector.load %arg2[%c0, %c0_1, %c0_2] : memref<1x16x64xbf16, #tpu.memory_space<vmem>>, vector<1x16x64xbf16>
    %4 = vector.shape_cast %3 : vector<1x16x64xbf16> to vector<16x64xbf16>
    %c0_3 = arith.constant 0 : index
    %c0_4 = arith.constant 0 : index
    %c0_5 = arith.constant 0 : index
    %5 = vector.load %arg3[%c0_3, %c0_4, %c0_5] : memref<1x16x64xbf16, #tpu.memory_space<vmem>>, vector<1x16x64xbf16>
    %6 = vector.shape_cast %5 : vector<1x16x64xbf16> to vector<16x64xbf16>
    %c0_6 = arith.constant 0 : index
    %c0_7 = arith.constant 0 : index
    %c0_8 = arith.constant 0 : index
    %7 = vector.load %arg4[%c0_6, %c0_7, %c0_8] : memref<1x16x128xbf16, #tpu.memory_space<vmem>>, vector<1x16x128xbf16>
    %8 = vector.shape_cast %7 : vector<1x16x128xbf16> to vector<16x128xbf16>
    %c0_9 = arith.constant 0 : index
    %c0_10 = arith.constant 0 : index
    %c0_11 = arith.constant 0 : index
    %9 = vector.load %arg5[%c0_9, %c0_10, %c0_11] : memref<1x16x256xbf16, #tpu.memory_space<vmem>>, vector<1x16x256xbf16>
    %10 = vector.shape_cast %9 : vector<1x16x256xbf16> to vector<16x256xbf16>
    %11 = tpu.concatenate %4, %6, %8, %10 in 1 : vector<16x64xbf16>, vector<16x64xbf16>, vector<16x128xbf16>, vector<16x256xbf16> -> vector<16x512xbf16>
    %c0_12 = arith.constant 0 : index
    %c0_13 = arith.constant 0 : index
    %12 = vector.load %arg6[%c0_12, %c0_13] : memref<512x64xbf16, #tpu.memory_space<vmem>>, vector<512x64xbf16>
    %cst = arith.constant dense<0.000000e+00> : vector<16x64xf32>
    %13 = tpu.matmul %11, %12, %cst {dimension_numbers = #tpu.dot_dimension_numbers<[1], [0], [0], [1], [0, 0, 1, 1], [], []>} : vector<16x512xbf16>, vector<512x64xbf16>, vector<16x64xf32> -> vector<16x64xf32>
    %c0_14 = arith.constant 0 : index
    %c0_15 = arith.constant 0 : index
    %14 = vector.load %arg7[%c0_14, %c0_15] : memref<1x64xf32, #tpu.memory_space<vmem>>, vector<1x64xf32>
    %15 = vector.broadcast %14 : vector<1x64xf32> to vector<16x64xf32>
    %16 = arith.mulf %13, %15 : vector<16x64xf32>
    %c0_16 = arith.constant 0 : index
    %c0_17 = arith.constant 0 : index
    %17 = vector.load %arg8[%c0_16, %c0_17] : memref<1x64xf32, #tpu.memory_space<vmem>>, vector<1x64xf32>
    %18 = vector.broadcast %17 : vector<1x64xf32> to vector<16x64xf32>
    %19 = arith.addf %16, %18 : vector<16x64xf32>
    %cst_18 = arith.constant 0.000000e+00 : f32
    %20 = vector.broadcast %cst_18 : f32 to vector<16x64xf32>
    %21 = arith.cmpf ogt, %19, %20 : vector<16x64xf32>
    %cst_19 = arith.constant 2.000000e-01 : f32
    %22 = vector.broadcast %cst_19 : f32 to vector<16x64xf32>
    %23 = arith.mulf %22, %19 : vector<16x64xf32>
    %24 = arith.select %21, %19, %23 : vector<16x64xi1>, vector<16x64xf32>
    %c0_20 = arith.constant 0 : index
    %c0_21 = arith.constant 0 : index
    %c0_22 = arith.constant 0 : index
    %25 = vector.load %arg9[%c0_20, %c0_21, %c0_22] : memref<1x1x64xf32, #tpu.memory_space<vmem>>, vector<1x1x64xf32>
    %26 = vector.shape_cast %25 : vector<1x1x64xf32> to vector<1x64xf32>
    %cst_23 = arith.constant dense<0xFF800000> : vector<64xf32>
    %27 = vector.multi_reduction <maximumf>, %24, %cst_23 [0] : vector<16x64xf32> to vector<64xf32>
    %28 = vector.shape_cast %27 : vector<64xf32> to vector<1x64xf32>
    %29 = arith.maximumf %26, %28 : vector<1x64xf32>
    %c0_24 = arith.constant 0 : index
    %c0_25 = arith.constant 0 : index
    %c0_26 = arith.constant 0 : index
    %30 = vector.load %arg9[%c0_24, %c0_25, %c0_26] : memref<1x1x64xf32, #tpu.memory_space<vmem>>, vector<1x1x64xf32>
    %31 = vector.shape_cast %30 : vector<1x1x64xf32> to vector<1x64xf32>
    %32 = vector.shape_cast %29 : vector<1x64xf32> to vector<1x1x64xf32>
    tpu.vector_store %arg9[%c0_24, %c0_25, %c0_26], %32 {strides = array<i32>} : memref<1x1x64xf32, #tpu.memory_space<vmem>>, vector<1x1x64xf32>,
    return
  }
  func.func @transform_0(%arg0: i32, %arg1: i32) -> (i32, i32, i32) {
    %c0_i32 = arith.constant 0 : i32
    %c0_i32_0 = arith.constant 0 : i32
    return %arg0, %arg1, %c0_i32 : i32, i32, i32
  }
  func.func @transform_1(%arg0: i32, %arg1: i32) -> (i32, i32, i32) {
    %c0_i32 = arith.constant 0 : i32
    %c0_i32_0 = arith.constant 0 : i32
    return %arg0, %arg1, %c0_i32 : i32, i32, i32
  }
  func.func @transform_2(%arg0: i32, %arg1: i32) -> (i32, i32, i32) {
    %c0_i32 = arith.constant 0 : i32
    %c0_i32_0 = arith.constant 0 : i32
    return %arg0, %arg1, %c0_i32 : i32, i32, i32
  }
  func.func @transform_3(%arg0: i32, %arg1: i32) -> (i32, i32, i32) {
    %c0_i32 = arith.constant 0 : i32
    %c0_i32_0 = arith.constant 0 : i32
    return %arg0, %arg1, %c0_i32 : i32, i32, i32
  }
  func.func @transform_4(%arg0: i32, %arg1: i32) -> (i32, i32) {
    %c0_i32 = arith.constant 0 : i32
    %c0_i32_0 = arith.constant 0 : i32
    %c0_i32_1 = arith.constant 0 : i32
    return %c0_i32, %c0_i32_0 : i32, i32
  }
  func.func @transform_5(%arg0: i32, %arg1: i32) -> (i32, i32) {
    %c0_i32 = arith.constant 0 : i32
    %c0_i32_0 = arith.constant 0 : i32
    %c0_i32_1 = arith.constant 0 : i32
    return %c0_i32, %c0_i32_0 : i32, i32
  }
  func.func @transform_6(%arg0: i32, %arg1: i32) -> (i32, i32) {
    %c0_i32 = arith.constant 0 : i32
    %c0_i32_0 = arith.constant 0 : i32
    %c0_i32_1 = arith.constant 0 : i32
    return %c0_i32, %c0_i32_0 : i32, i32
  }
  func.func @transform_7(%arg0: i32, %arg1: i32) -> (i32, i32, i32) {
    %c0_i32 = arith.constant 0 : i32
    %c0_i32_0 = arith.constant 0 : i32
    %c0_i32_1 = arith.constant 0 : i32
    return %arg0, %c0_i32, %c0_i32_0 : i32, i32, i32
  }
}

module attributes {stable_mosaic.version = 11 : i64} {
  func.func @_conv67_kernel(%arg0: i32, %arg1: i32, %arg2: memref<1x16x64xbf16, #tpu.memory_space<vmem>>, %arg3: memref<1x16x64xbf16, #tpu.memory_space<vmem>>, %arg4: memref<1x16x128xbf16, #tpu.memory_space<vmem>>, %arg5: memref<1x16x256xbf16, #tpu.memory_space<vmem>>, %arg6: memref<1x1x512xf32, #tpu.memory_space<vmem>>, %arg7: memref<512x512xbf16, #tpu.memory_space<vmem>>, %arg8: memref<1x512xf32, #tpu.memory_space<vmem>>, %arg9: memref<1x512xf32, #tpu.memory_space<vmem>>, %arg10: memref<512x128xbf16, #tpu.memory_space<vmem>>, %arg11: memref<1x128xf32, #tpu.memory_space<vmem>>, %arg12: memref<1x128xf32, #tpu.memory_space<vmem>>, %arg13: memref<1x16x128xf32, #tpu.memory_space<vmem>>) attributes {dimension_semantics = [#tpu.dimension_semantics<parallel>, #tpu.dimension_semantics<parallel>], iteration_bounds = array<i64: 2, 1>, scalar_prefetch = 0 : i64, scratch_operands = 0 : i64, tpu.core_type = #tpu.core_type<tc>, window_params = [{transform_indices = @transform_0, window_bounds = array<i64: 1, 16, 64>}, {transform_indices = @transform_1, window_bounds = array<i64: 1, 16, 64>}, {transform_indices = @transform_2, window_bounds = array<i64: 1, 16, 128>}, {transform_indices = @transform_3, window_bounds = array<i64: 1, 16, 256>}, {transform_indices = @transform_4, window_bounds = array<i64: 1, 1, 512>}, {pipeline_mode = #tpu.pipeline_mode<synchronous>, transform_indices = @transform_5, window_bounds = array<i64: 512, 512>}, {pipeline_mode = #tpu.pipeline_mode<synchronous>, transform_indices = @transform_6, window_bounds = array<i64: 1, 512>}, {pipeline_mode = #tpu.pipeline_mode<synchronous>, transform_indices = @transform_7, window_bounds = array<i64: 1, 512>}, {pipeline_mode = #tpu.pipeline_mode<synchronous>, transform_indices = @transform_8, window_bounds = array<i64: 512, 128>}, {pipeline_mode = #tpu.pipeline_mode<synchronous>, transform_indices = @transform_9, window_bounds = array<i64: 1, 128>}, {pipeline_mode = #tpu.pipeline_mode<synchronous>, transform_indices = @transform_10, window_bounds = array<i64: 1, 128>}, {transform_indices = @transform_11, window_bounds = array<i64: 1, 16, 128>}]} {
    %c0 = arith.constant 0 : index
    %c0_0 = arith.constant 0 : index
    %c0_1 = arith.constant 0 : index
    %0 = vector.load %arg2[%c0, %c0_0, %c0_1] : memref<1x16x64xbf16, #tpu.memory_space<vmem>>, vector<1x16x64xbf16>
    %1 = vector.shape_cast %0 : vector<1x16x64xbf16> to vector<16x64xbf16>
    %c0_2 = arith.constant 0 : index
    %c0_3 = arith.constant 0 : index
    %c0_4 = arith.constant 0 : index
    %2 = vector.load %arg3[%c0_2, %c0_3, %c0_4] : memref<1x16x64xbf16, #tpu.memory_space<vmem>>, vector<1x16x64xbf16>
    %3 = vector.shape_cast %2 : vector<1x16x64xbf16> to vector<16x64xbf16>
    %c0_5 = arith.constant 0 : index
    %c0_6 = arith.constant 0 : index
    %c0_7 = arith.constant 0 : index
    %4 = vector.load %arg4[%c0_5, %c0_6, %c0_7] : memref<1x16x128xbf16, #tpu.memory_space<vmem>>, vector<1x16x128xbf16>
    %5 = vector.shape_cast %4 : vector<1x16x128xbf16> to vector<16x128xbf16>
    %c0_8 = arith.constant 0 : index
    %c0_9 = arith.constant 0 : index
    %c0_10 = arith.constant 0 : index
    %6 = vector.load %arg5[%c0_8, %c0_9, %c0_10] : memref<1x16x256xbf16, #tpu.memory_space<vmem>>, vector<1x16x256xbf16>
    %7 = vector.shape_cast %6 : vector<1x16x256xbf16> to vector<16x256xbf16>
    %8 = tpu.concatenate %1, %3, %5, %7 in 1 : vector<16x64xbf16>, vector<16x64xbf16>, vector<16x128xbf16>, vector<16x256xbf16> -> vector<16x512xbf16>
    %c0_11 = arith.constant 0 : index
    %c0_12 = arith.constant 0 : index
    %c0_13 = arith.constant 0 : index
    %9 = vector.load %arg6[%c0_11, %c0_12, %c0_13] : memref<1x1x512xf32, #tpu.memory_space<vmem>>, vector<1x1x512xf32>
    %10 = vector.shape_cast %9 : vector<1x1x512xf32> to vector<1x512xf32>
    %c0_14 = arith.constant 0 : index
    %c0_15 = arith.constant 0 : index
    %11 = vector.load %arg7[%c0_14, %c0_15] : memref<512x512xbf16, #tpu.memory_space<vmem>>, vector<512x512xbf16>
    %cst = arith.constant dense<0.000000e+00> : vector<16x512xf32>
    %12 = tpu.matmul %8, %11, %cst {dimension_numbers = #tpu.dot_dimension_numbers<[1], [0], [0], [1], [0, 0, 1, 1], [], []>} : vector<16x512xbf16>, vector<512x512xbf16>, vector<16x512xf32> -> vector<16x512xf32>
    %13 = vector.broadcast %10 : vector<1x512xf32> to vector<16x512xf32>
    %14 = arith.addf %13, %12 : vector<16x512xf32>
    %c0_16 = arith.constant 0 : index
    %c0_17 = arith.constant 0 : index
    %15 = vector.load %arg8[%c0_16, %c0_17] : memref<1x512xf32, #tpu.memory_space<vmem>>, vector<1x512xf32>
    %16 = vector.broadcast %15 : vector<1x512xf32> to vector<16x512xf32>
    %17 = arith.mulf %14, %16 : vector<16x512xf32>
    %c0_18 = arith.constant 0 : index
    %c0_19 = arith.constant 0 : index
    %18 = vector.load %arg9[%c0_18, %c0_19] : memref<1x512xf32, #tpu.memory_space<vmem>>, vector<1x512xf32>
    %19 = vector.broadcast %18 : vector<1x512xf32> to vector<16x512xf32>
    %20 = arith.addf %17, %19 : vector<16x512xf32>
    %cst_20 = arith.constant 0.000000e+00 : f32
    %21 = vector.broadcast %cst_20 : f32 to vector<16x512xf32>
    %22 = arith.cmpf ogt, %20, %21 : vector<16x512xf32>
    %cst_21 = arith.constant 2.000000e-01 : f32
    %23 = vector.broadcast %cst_21 : f32 to vector<16x512xf32>
    %24 = arith.mulf %23, %20 : vector<16x512xf32>
    %25 = arith.select %22, %20, %24 : vector<16x512xi1>, vector<16x512xf32>
    %26 = arith.truncf %25 : vector<16x512xf32> to vector<16x512xbf16>
    %c0_22 = arith.constant 0 : index
    %c0_23 = arith.constant 0 : index
    %27 = vector.load %arg10[%c0_22, %c0_23] : memref<512x128xbf16, #tpu.memory_space<vmem>>, vector<512x128xbf16>
    %cst_24 = arith.constant dense<0.000000e+00> : vector<16x128xf32>
    %28 = tpu.matmul %26, %27, %cst_24 {dimension_numbers = #tpu.dot_dimension_numbers<[1], [0], [0], [1], [0, 0, 1, 1], [], []>} : vector<16x512xbf16>, vector<512x128xbf16>, vector<16x128xf32> -> vector<16x128xf32>
    %c0_25 = arith.constant 0 : index
    %c0_26 = arith.constant 0 : index
    %29 = vector.load %arg11[%c0_25, %c0_26] : memref<1x128xf32, #tpu.memory_space<vmem>>, vector<1x128xf32>
    %30 = vector.broadcast %29 : vector<1x128xf32> to vector<16x128xf32>
    %31 = arith.mulf %28, %30 : vector<16x128xf32>
    %c0_27 = arith.constant 0 : index
    %c0_28 = arith.constant 0 : index
    %32 = vector.load %arg12[%c0_27, %c0_28] : memref<1x128xf32, #tpu.memory_space<vmem>>, vector<1x128xf32>
    %33 = vector.broadcast %32 : vector<1x128xf32> to vector<16x128xf32>
    %34 = arith.addf %31, %33 : vector<16x128xf32>
    %cst_29 = arith.constant 0.000000e+00 : f32
    %35 = vector.broadcast %cst_29 : f32 to vector<16x128xf32>
    %36 = arith.cmpf ogt, %34, %35 : vector<16x128xf32>
    %cst_30 = arith.constant 2.000000e-01 : f32
    %37 = vector.broadcast %cst_30 : f32 to vector<16x128xf32>
    %38 = arith.mulf %37, %34 : vector<16x128xf32>
    %39 = arith.select %36, %34, %38 : vector<16x128xi1>, vector<16x128xf32>
    %c0_31 = arith.constant 0 : index
    %c0_32 = arith.constant 0 : index
    %c0_33 = arith.constant 0 : index
    %40 = vector.load %arg13[%c0_31, %c0_32, %c0_33] : memref<1x16x128xf32, #tpu.memory_space<vmem>>, vector<1x16x128xf32>
    %41 = vector.shape_cast %40 : vector<1x16x128xf32> to vector<16x128xf32>
    %42 = vector.shape_cast %39 : vector<16x128xf32> to vector<1x16x128xf32>
    tpu.vector_store %arg13[%c0_31, %c0_32, %c0_33], %42 {strides = array<i32>} : memref<1x16x128xf32, #tpu.memory_space<vmem>>, vector<1x16x128xf32>,
    return
  }
  func.func @transform_0(%arg0: i32, %arg1: i32) -> (i32, i32, i32) {
    %c0_i32 = arith.constant 0 : i32
    %c0_i32_0 = arith.constant 0 : i32
    return %arg0, %arg1, %c0_i32 : i32, i32, i32
  }
  func.func @transform_1(%arg0: i32, %arg1: i32) -> (i32, i32, i32) {
    %c0_i32 = arith.constant 0 : i32
    %c0_i32_0 = arith.constant 0 : i32
    return %arg0, %arg1, %c0_i32 : i32, i32, i32
  }
  func.func @transform_2(%arg0: i32, %arg1: i32) -> (i32, i32, i32) {
    %c0_i32 = arith.constant 0 : i32
    %c0_i32_0 = arith.constant 0 : i32
    return %arg0, %arg1, %c0_i32 : i32, i32, i32
  }
  func.func @transform_3(%arg0: i32, %arg1: i32) -> (i32, i32, i32) {
    %c0_i32 = arith.constant 0 : i32
    %c0_i32_0 = arith.constant 0 : i32
    return %arg0, %arg1, %c0_i32 : i32, i32, i32
  }
  func.func @transform_4(%arg0: i32, %arg1: i32) -> (i32, i32, i32) {
    %c0_i32 = arith.constant 0 : i32
    %c0_i32_0 = arith.constant 0 : i32
    %c0_i32_1 = arith.constant 0 : i32
    return %arg0, %c0_i32, %c0_i32_0 : i32, i32, i32
  }
  func.func @transform_5(%arg0: i32, %arg1: i32) -> (i32, i32) {
    %c0_i32 = arith.constant 0 : i32
    %c0_i32_0 = arith.constant 0 : i32
    %c0_i32_1 = arith.constant 0 : i32
    return %c0_i32, %c0_i32_0 : i32, i32
  }
  func.func @transform_6(%arg0: i32, %arg1: i32) -> (i32, i32) {
    %c0_i32 = arith.constant 0 : i32
    %c0_i32_0 = arith.constant 0 : i32
    %c0_i32_1 = arith.constant 0 : i32
    return %c0_i32, %c0_i32_0 : i32, i32
  }
  func.func @transform_7(%arg0: i32, %arg1: i32) -> (i32, i32) {
    %c0_i32 = arith.constant 0 : i32
    %c0_i32_0 = arith.constant 0 : i32
    %c0_i32_1 = arith.constant 0 : i32
    return %c0_i32, %c0_i32_0 : i32, i32
  }
  func.func @transform_8(%arg0: i32, %arg1: i32) -> (i32, i32) {
    %c0_i32 = arith.constant 0 : i32
    %c0_i32_0 = arith.constant 0 : i32
    %c0_i32_1 = arith.constant 0 : i32
    return %c0_i32, %c0_i32_0 : i32, i32
  }
  func.func @transform_9(%arg0: i32, %arg1: i32) -> (i32, i32) {
    %c0_i32 = arith.constant 0 : i32
    %c0_i32_0 = arith.constant 0 : i32
    %c0_i32_1 = arith.constant 0 : i32
    return %c0_i32, %c0_i32_0 : i32, i32
  }
  func.func @transform_10(%arg0: i32, %arg1: i32) -> (i32, i32) {
    %c0_i32 = arith.constant 0 : i32
    %c0_i32_0 = arith.constant 0 : i32
    %c0_i32_1 = arith.constant 0 : i32
    return %c0_i32, %c0_i32_0 : i32, i32
  }
  func.func @transform_11(%arg0: i32, %arg1: i32) -> (i32, i32, i32) {
    %c0_i32 = arith.constant 0 : i32
    %c0_i32_0 = arith.constant 0 : i32
    return %arg0, %arg1, %c0_i32 : i32, i32, i32
  }
}

</mosaic_0001>

<llo_original>
// kernel: dgcnn_cls_forward.7
$region0: #{dgcnn_cls_forward.7}
  #allocation0 [shape = 'u32[]', space=smem, size = 0x4, offset = 0x4, fixed_abs, tag = 'smem constant byte address 0x4 - core index']
  #allocation1 [shape = 'u32[72,128]{1,0:T(1,128)}', space=vmem, size = 0x9000, scoped, tag = 'internal scratch']
  %s0 = inlined_call_operand.vmem [shape: bf16[2,16,64], index: 0, kind: input, shape index: {}, may-alias: {0,1}]
  %s1 = inlined_call_operand.vmem [shape: bf16[2,16,64], index: 1, kind: input, shape index: {}, may-alias: {0,1}]
  %s2 = inlined_call_operand.vmem [shape: f32[2,1,16], index: 2, kind: input, shape index: {}]
  %s3 = inlined_call_operand.vmem [shape: bf16[64,64], index: 3, kind: input, shape index: {}]
  %s4 = inlined_call_operand.hbm [shape: bf16[64,64], index: 4, kind: input, shape index: {}]
  %s5 = inlined_call_operand.vmem [shape: f32[1,64], index: 5, kind: input, shape index: {}]
  %s6 = inlined_call_operand.vmem [shape: f32[1,64], index: 6, kind: input, shape index: {}]
  %s7 = inlined_call_operand.vmem [shape: bf16[2,16,64], index: 7, kind: output, shape index: {}]
  %s8 = sld [smem:[#allocation0]]
  $region65: #{dgcnn_cls_forward.7} parent=0
    _
  %s10 = ssub.s32 1, %s8
  %s11 = scalar_select 0, %s10, %s8
  $region1: #{dgcnn_cls_forward.7} parent=0
    #allocation2 [shape = 'u8[16384]{0}', space=vmem, size = 0x4000, scoped, tag = 'input window, operand 4, single buffered']
    #allocation3 [shape = 's32[2]{0}', space=sflag, size = 0x8, scoped, tag = 'scoped memory for dgcnn_cls_forward.7']
    %12 = vsyncpa [#allocation3], 0
    loop: start=0, step=1, limit=4
    $region2: #{dgcnn_cls_forward.7} parent=1 // loop_pre_header
      _
    $region3: #{dgcnn_cls_forward.7} parent=1 // loop_header
      %s14 = sphi 0, %s18
      %p15 = scmp.ge.s32.totalorder %s14, 4
      %s21 = sphi 0, %s33
      %s22 = sphi 0, %s29
      %s23 = sphi 0, %s21
      %s24 = sphi 0, %s22
      %s25 = sphi 0, %s23
      %s26 = sphi 0, %s24
      %s36 = sphi 0, %s38
      %s39 = sphi 0, %s36
      %s40 = sphi 0, %s39
      %s56 = sphi 0, %s40
      %s64 = sphi 0, %s66
      %s67 = sphi 0, %s64
      %s68 = sphi 0, %s67
      %s84 = sphi 0, %s68
      %s90 = sphi 0, %s92
      %s93 = sphi 0, %s90
      %s94 = sphi 0, %s93
      %s110 = sphi 0, %s94
      %s114 = sphi 0, %s114
      %s116 = sphi 0, %s114
      %s117 = sphi 0, %s116
      %s131 = sphi 0, %s117
      %s135 = sphi 0, %s135
      %s137 = sphi 0, %s135
      %s138 = sphi 0, %s137
      %s152 = sphi 0, %s138
      %s156 = sphi 0, %s156
      %s158 = sphi 0, %s156
      %s159 = sphi 0, %s158
      %s173 = sphi 0, %s159
      %s177 = sphi 0, %s177
      %s179 = sphi 0, %s177
      %s180 = sphi 0, %s179
      %s194 = sphi 0, %s180
      %s202 = sphi 0, %s204
      %s205 = sphi 0, %s202
      %s206 = sphi 0, %s205
      %s222 = sphi 0, %s206
    $region4: #{dgcnn_cls_forward.7} parent=1 // loop_header_branch
      %17 = sbr.rel (%p15) target = $region8
    $region5: #{dgcnn_cls_forward.7} parent=1 // loop_body
      %s19 = ssub.s32 %s14, 1
      %s20 = ssub.s32 %s14, 2
      %s27 = sadd.s32 1, %s22
      %p28 = scmp.ge.s32.totalorder %s27, 1
      %s29 = scalar_select %p28, 0, %s27
      %s30 = sadd.s32 1, %s21
      %s31 = scalar_select %p28, %s30, %s21
      %p32 = scmp.ge.s32.totalorder %s31, 2
      %s33 = scalar_select %p32, 0, %s31
      %s34 = ssub.s32 %s21, %s33
      %p35 = scmp.eq.s32.totalorder %s34, 0
      %s37 = sadd.s32 %s36, 1
      %s38 = scalar_select %p35, %s36, %s37
      %p41 = pneg %p35
      %p42 = scmp.eq.s32.totalorder %s14, 1
      %p43 = por %p41, %p42
      %p44 = scmp.ne.s32.totalorder %s36, %s39
      %p45 = scmp.eq.s32.totalorder %s14, 0
      %p46 = por %p44, %p45
      %p47 = scmp.ne.s32.totalorder %s36, %s39
      %p48 = scmp.eq.s32.totalorder %s19, 1
      %p49 = por %p47, %p48
      %p50 = scmp.ne.s32.totalorder %s39, %s40
      %p51 = scmp.eq.s32.totalorder %s19, 0
      %p52 = por %p50, %p51
      %p53 = scmp.ne.s32.totalorder %s39, %s40
      %p54 = scmp.eq.s32.totalorder %s20, 1
      %p55 = por %p53, %p54
      %p57 = scmp.ne.s32.totalorder %s40, %s56
      %p58 = scmp.eq.s32.totalorder %s20, 0
      %p59 = por %p57, %p58
      %s60 = ssub.s32 %s21, %s33
      %s61 = ssub.s32 %s22, %s29
      %s62 = sor.u32 %s60, %s61
      %p63 = scmp.eq.s32.totalorder %s62, 0
      %s65 = sadd.s32 %s64, 1
      %s66 = scalar_select %p63, %s64, %s65
      %p69 = pneg %p63
      %p70 = scmp.eq.s32.totalorder %s14, 1
      %p71 = por %p69, %p70
      %p72 = scmp.ne.s32.totalorder %s64, %s67
      %p73 = scmp.eq.s32.totalorder %s14, 0
      %p74 = por %p72, %p73
      %p75 = scmp.ne.s32.totalorder %s64, %s67
      %p76 = scmp.eq.s32.totalorder %s19, 1
      %p77 = por %p75, %p76
      %p78 = scmp.ne.s32.totalorder %s67, %s68
      %p79 = scmp.eq.s32.totalorder %s19, 0
      %p80 = por %p78, %p79
      %p81 = scmp.ne.s32.totalorder %s67, %s68
      %p82 = scmp.eq.s32.totalorder %s20, 1
      %p83 = por %p81, %p82
      %p85 = scmp.ne.s32.totalorder %s68, %s84
      %p86 = scmp.eq.s32.totalorder %s20, 0
      %p87 = por %p85, %p86
      %s88 = ssub.s32 %s21, %s33
      %p89 = scmp.eq.s32.totalorder %s88, 0
      %s91 = sadd.s32 %s90, 1
      %s92 = scalar_select %p89, %s90, %s91
      %p95 = pneg %p89
      %p96 = scmp.eq.s32.totalorder %s14, 1
      %p97 = por %p95, %p96
      %p98 = scmp.ne.s32.totalorder %s90, %s93
      %p99 = scmp.eq.s32.totalorder %s14, 0
      %p100 = por %p98, %p99
      %p101 = scmp.ne.s32.totalorder %s90, %s93
      %p102 = scmp.eq.s32.totalorder %s19, 1
      %p103 = por %p101, %p102
      %p104 = scmp.ne.s32.totalorder %s93, %s94
      %p105 = scmp.eq.s32.totalorder %s19, 0
      %p106 = por %p104, %p105
      %p107 = scmp.ne.s32.totalorder %s93, %s94
      %p108 = scmp.eq.s32.totalorder %s20, 1
      %p109 = por %p107, %p108
      %p111 = scmp.ne.s32.totalorder %s94, %s110
      %p112 = scmp.eq.s32.totalorder %s20, 0
      %p113 = por %p111, %p112
      %s115 = sadd.s32 %s114, 1
      %p118 = scmp.eq.s32.totalorder %s14, 1
      %p119 = scmp.ne.s32.totalorder %s114, %s116
      %p120 = scmp.eq.s32.totalorder %s14, 0
      %p121 = por %p119, %p120
      %p122 = scmp.ne.s32.totalorder %s114, %s116
      %p123 = scmp.eq.s32.totalorder %s19, 1
      %p124 = por %p122, %p123
      %p125 = scmp.ne.s32.totalorder %s116, %s117
      %p126 = scmp.eq.s32.totalorder %s19, 0
      %p127 = por %p125, %p126
      %p128 = scmp.ne.s32.totalorder %s116, %s117
      %p129 = scmp.eq.s32.totalorder %s20, 1
      %p130 = por %p128, %p129
      %p132 = scmp.ne.s32.totalorder %s117, %s131
      %p133 = scmp.eq.s32.totalorder %s20, 0
      %p134 = por %p132, %p133
      %s136 = sadd.s32 %s135, 1
      %p139 = scmp.eq.s32.totalorder %s14, 1
      %p140 = scmp.ne.s32.totalorder %s135, %s137
      %p141 = scmp.eq.s32.totalorder %s14, 0
      %p142 = por %p140, %p141
      %p143 = scmp.ne.s32.totalorder %s135, %s137
      %p144 = scmp.eq.s32.totalorder %s19, 1
      %p145 = por %p143, %p144
      %p146 = scmp.ne.s32.totalorder %s137, %s138
      %p147 = scmp.eq.s32.totalorder %s19, 0
      %p148 = por %p146, %p147
      %p149 = scmp.ne.s32.totalorder %s137, %s138
      %p150 = scmp.eq.s32.totalorder %s20, 1
      %p151 = por %p149, %p150
      %p153 = scmp.ne.s32.totalorder %s138, %s152
      %p154 = scmp.eq.s32.totalorder %s20, 0
      %p155 = por %p153, %p154
      %s157 = sadd.s32 %s156, 1
      %p160 = scmp.eq.s32.totalorder %s14, 1
      %p161 = scmp.ne.s32.totalorder %s156, %s158
      %p162 = scmp.eq.s32.totalorder %s14, 0
      %p163 = por %p161, %p162
      %p164 = scmp.ne.s32.totalorder %s156, %s158
      %p165 = scmp.eq.s32.totalorder %s19, 1
      %p166 = por %p164, %p165
      %p167 = scmp.ne.s32.totalorder %s158, %s159
      %p168 = scmp.eq.s32.totalorder %s19, 0
      %p169 = por %p167, %p168
      %p170 = scmp.ne.s32.totalorder %s158, %s159
      %p171 = scmp.eq.s32.totalorder %s20, 1
      %p172 = por %p170, %p171
      %p174 = scmp.ne.s32.totalorder %s159, %s173
      %p175 = scmp.eq.s32.totalorder %s20, 0
      %p176 = por %p174, %p175
      %s178 = sadd.s32 %s177, 1
      %p181 = scmp.eq.s32.totalorder %s14, 1
      %p182 = scmp.ne.s32.totalorder %s177, %s179
      %p183 = scmp.eq.s32.totalorder %s14, 0
      %p184 = por %p182, %p183
      %p185 = scmp.ne.s32.totalorder %s177, %s179
      %p186 = scmp.eq.s32.totalorder %s19, 1
      %p187 = por %p185, %p186
      %p188 = scmp.ne.s32.totalorder %s179, %s180
      %p189 = scmp.eq.s32.totalorder %s19, 0
      %p190 = por %p188, %p189
      %p191 = scmp.ne.s32.totalorder %s179, %s180
      %p192 = scmp.eq.s32.totalorder %s20, 1
      %p193 = por %p191, %p192
      %p195 = scmp.ne.s32.totalorder %s180, %s194
      %p196 = scmp.eq.s32.totalorder %s20, 0
      %p197 = por %p195, %p196
      %s198 = ssub.s32 %s21, %s33
      %s199 = ssub.s32 %s22, %s29
      %s200 = sor.u32 %s198, %s199
      %p201 = scmp.eq.s32.totalorder %s200, 0
      %s203 = sadd.s32 %s202, 1
      %s204 = scalar_select %p201, %s202, %s203
      %p207 = pneg %p201
      %p208 = scmp.eq.s32.totalorder %s14, 1
      %p209 = por %p207, %p208
      %p210 = scmp.ne.s32.totalorder %s202, %s205
      %p211 = scmp.eq.s32.totalorder %s14, 0
      %p212 = por %p210, %p211
      %p213 = scmp.ne.s32.totalorder %s202, %s205
      %p214 = scmp.eq.s32.totalorder %s19, 1
      %p215 = por %p213, %p214
      %p216 = scmp.ne.s32.totalorder %s205, %s206
      %p217 = scmp.eq.s32.totalorder %s19, 0
      %p218 = por %p216, %p217
      %p219 = scmp.ne.s32.totalorder %s205, %s206
      %p220 = scmp.eq.s32.totalorder %s20, 1
      %p221 = por %p219, %p220
      %p223 = scmp.ne.s32.totalorder %s206, %s222
      %p224 = scmp.eq.s32.totalorder %s20, 0
      %p225 = por %p223, %p224
      %p226 = scmp.le.s32.totalorder 1, %s14
      %p227 = scmp.lt.s32.totalorder %s14, 3
      %p228 = pnand %p226, %p227
      %p229 = pneg %p228
      // Predicated region
      $region9: #{dgcnn_cls_forward.7} parent=5 // pred_check
        _
      $region10: #{dgcnn_cls_forward.7} parent=5 // pred_check_branch
        %231 = sbr.rel (%p228) target = $region12
      $region11: #{dgcnn_cls_forward.7} parent=5 // pred_region
        %s232 = ssub.s32 %s14, 1
        // Predicated region
        $region13: #{dgcnn_cls_forward.7} parent=11 // pred_check
          %p233 = pneg %p127
        $region14: #{dgcnn_cls_forward.7} parent=11 // pred_check_branch
          %235 = sbr.rel (%p233) target = $region16
        $region15: #{dgcnn_cls_forward.7} parent=11 // pred_region
          _
        $region16: #{dgcnn_cls_forward.7} parent=11 // pred_fallthru
          _
        // Predicated region
        $region17: #{dgcnn_cls_forward.7} parent=11 // pred_check
          %p236 = pneg %p148
        $region18: #{dgcnn_cls_forward.7} parent=11 // pred_check_branch
          %238 = sbr.rel (%p236) target = $region20
        $region19: #{dgcnn_cls_forward.7} parent=11 // pred_region
          %240 = vsyncadd [#allocation3], 0
          %s241 = sshll.u32 %s4, 4
          %s242 = int_to_ptr.hbm [resolvable:$true] %s241
          %s243 = sshll.u32 [#allocation2], 4
          %s244 = int_to_ptr.vmem [resolvable:$true] %s243
          %249 = dma.hbm_to_vmem [thread:$0]  %s242, 512, %s244, [#allocation3], 64, 64, 4
        $region20: #{dgcnn_cls_forward.7} parent=11 // pred_fallthru
          _
        // Predicated region
        $region21: #{dgcnn_cls_forward.7} parent=11 // pred_check
          %p250 = pneg %p169
        $region22: #{dgcnn_cls_forward.7} parent=11 // pred_check_branch
          %252 = sbr.rel (%p250) target = $region24
        $region23: #{dgcnn_cls_forward.7} parent=11 // pred_region
          _
        $region24: #{dgcnn_cls_forward.7} parent=11 // pred_fallthru
          _
        // Predicated region
        $region25: #{dgcnn_cls_forward.7} parent=11 // pred_check
          %p253 = pneg %p190
        $region26: #{dgcnn_cls_forward.7} parent=11 // pred_check_branch
          %255 = sbr.rel (%p253) target = $region28
        $region27: #{dgcnn_cls_forward.7} parent=11 // pred_region
          _
        $region28: #{dgcnn_cls_forward.7} parent=11 // pred_fallthru
          _
      $region12: #{dgcnn_cls_forward.7} parent=5 // pred_fallthru
        _
      %p256 = scmp.lt.s32.totalorder %s14, 2
      // Predicated region
      $region29: #{dgcnn_cls_forward.7} parent=5 // pred_check
        %p257 = pneg %p256
      $region30: #{dgcnn_cls_forward.7} parent=5 // pred_check_branch
        %259 = sbr.rel (%p257) target = $region32
      $region31: #{dgcnn_cls_forward.7} parent=5 // pred_region
        // Predicated region
        $region33: #{dgcnn_cls_forward.7} parent=31 // pred_check
          %p260 = pneg %p46
        $region34: #{dgcnn_cls_forward.7} parent=31 // pred_check_branch
          %262 = sbr.rel (%p260) target = $region36
        $region35: #{dgcnn_cls_forward.7} parent=31 // pred_region
          %p263 = scmp.lt.s32.totalorder %s21, 1
          %s264 = scalar_select %p263, %s21, 1
          %s265 = smul.addr %s264, 2
          %s266 = smul.addr %s265, 4
          %s267 = scalar_lea.vmem %s0, %s266
        $region36: #{dgcnn_cls_forward.7} parent=31 // pred_fallthru
          _
        // Predicated region
        $region37: #{dgcnn_cls_forward.7} parent=31 // pred_check
          %p268 = pneg %p74
        $region38: #{dgcnn_cls_forward.7} parent=31 // pred_check_branch
          %270 = sbr.rel (%p268) target = $region40
        $region39: #{dgcnn_cls_forward.7} parent=31 // pred_region
          %s271 = smul.u32 2, %s22
          %p272 = scmp.lt.s32.totalorder %s21, 1
          %s273 = scalar_select %p272, %s21, 1
          %p274 = scmp.lt.s32.totalorder %s271, 1
          %s275 = scalar_select %p274, %s271, 1
          %s276 = smul.addr %s273, 2
          %s277 = sadd.s32 %s275, %s276
          %s278 = smul.addr %s277, 4
          %s279 = scalar_lea.vmem %s1, %s278
          %s280 = smul.u32 2, %s22
        $region40: #{dgcnn_cls_forward.7} parent=31 // pred_fallthru
          _
        // Predicated region
        $region41: #{dgcnn_cls_forward.7} parent=31 // pred_check
          %p281 = pneg %p100
        $region42: #{dgcnn_cls_forward.7} parent=31 // pred_check_branch
          %283 = sbr.rel (%p281) target = $region44
        $region43: #{dgcnn_cls_forward.7} parent=31 // pred_region
          %p284 = scmp.lt.s32.totalorder %s21, 1
          %s285 = scalar_select %p284, %s21, 1
          %s286 = scalar_lea.vmem %s2, %s285
        $region44: #{dgcnn_cls_forward.7} parent=31 // pred_fallthru
          _
      $region32: #{dgcnn_cls_forward.7} parent=5 // pred_fallthru
        _
      %p287 = scmp.le.s32.totalorder 1, %s14
      %p288 = scmp.lt.s32.totalorder %s14, 3
      %p289 = pnand %p287, %p288
      %p290 = pneg %p289
      // Predicated region
      $region45: #{dgcnn_cls_forward.7} parent=5 // pred_check
        _
      $region46: #{dgcnn_cls_forward.7} parent=5 // pred_check_branch
        %292 = sbr.rel (%p289) target = $region48
      $region47: #{dgcnn_cls_forward.7} parent=5 // pred_region
        %s293 = ssub.s32 %s14, 1
        // Predicated region
        $region49: #{dgcnn_cls_forward.7} parent=47 // pred_check
          %p294 = pneg %p148
        $region50: #{dgcnn_cls_forward.7} parent=47 // pred_check_branch
          %296 = sbr.rel (%p294) target = $region52
        $region51: #{dgcnn_cls_forward.7} parent=47 // pred_region
          %298 = dma.done [#allocation3], 512
        $region52: #{dgcnn_cls_forward.7} parent=47 // pred_fallthru
          _
        %p299 = scmp.lt.s32.totalorder %s23, 1
        %s300 = scalar_select %p299, %s23, 1
        %s301 = smul.addr %s300, 2
        %s302 = smul.addr %s301, 4
        %s303 = scalar_lea.vmem %s0, %s302
        %p304 = pneg %p52
        %p305 = pneg %p49
        %s306 = smul.u32 2, %s24
        %p307 = scmp.lt.s32.totalorder %s23, 1
        %s308 = scalar_select %p307, %s23, 1
        %p309 = scmp.lt.s32.totalorder %s306, 1
        %s310 = scalar_select %p309, %s306, 1
        %s311 = smul.addr %s308, 2
        %s312 = sadd.s32 %s310, %s311
        %s313 = smul.addr %s312, 4
        %s314 = scalar_lea.vmem %s1, %s313
        %p315 = pneg %p80
        %p316 = pneg %p77
        %p317 = scmp.lt.s32.totalorder %s23, 1
        %s318 = scalar_select %p317, %s23, 1
        %s319 = scalar_lea.vmem %s2, %s318
        %p320 = pneg %p106
        %p321 = pneg %p103
        %p322 = pneg %p127
        %p323 = pneg %p124
        %p324 = pneg %p148
        %p325 = pneg %p145
        %p326 = pneg %p169
        %p327 = pneg %p166
        %p328 = pneg %p190
        %p329 = pneg %p187
        %p330 = pneg %p218
        %p331 = pneg %p215
        %s332 = smul.u32 2, %s24
        %p333 = scmp.lt.s32.totalorder %s23, 1
        %s334 = scalar_select %p333, %s23, 1
        %p335 = scmp.lt.s32.totalorder %s332, 1
        %s336 = scalar_select %p335, %s332, 1
        %s337 = smul.addr %s334, 2
        %s338 = sadd.s32 %s336, %s337
        %s339 = smul.addr %s338, 4
        %s340 = scalar_lea.vmem %s7, %s339
        %p341 = scmp.lt.s32.totalorder %s23, 1
        %s342 = scalar_select %p341, %s23, 1
        %s343 = smul.addr %s342, 2
        %s344 = smul.addr %s343, 4
        %s345 = scalar_lea.vmem %s0, %s344
        %s346 = smul.u32 2, %s24
        %p347 = scmp.lt.s32.totalorder %s23, 1
        %s348 = scalar_select %p347, %s23, 1
        %p349 = scmp.lt.s32.totalorder %s346, 1
        %s350 = scalar_select %p349, %s346, 1
        %s351 = smul.addr %s348, 2
        %s352 = sadd.s32 %s350, %s351
        %s353 = smul.addr %s352, 4
        %s354 = scalar_lea.vmem %s1, %s353
        %s355 = smul.u32 2, %s24
        %p356 = scmp.lt.s32.totalorder %s23, 1
        %s357 = scalar_select %p356, %s23, 1
        %s358 = scalar_lea.vmem %s2, %s357
        %s359 = smul.u32 2, %s24
        %p360 = scmp.lt.s32.totalorder %s23, 1
        %s361 = scalar_select %p360, %s23, 1
        %p362 = scmp.lt.s32.totalorder %s359, 1
        %s363 = scalar_select %p362, %s359, 1
        %s364 = smul.addr %s361, 2
        %s365 = sadd.s32 %s363, %s364
        %s366 = smul.addr %s365, 4
        %s367 = scalar_lea.vmem %s7, %s366
        %s368 = smul.u32 2, %s24
        %v370 = vld [vmem:[%s345] sm:$0xf]
        %v371 = vld [vmem:[%s345 + $0x4] sm:$0xf]
        %v372 = vunpack.c.l.bf16 %v370
        %v373 = vunpack.c.l.bf16 %v371
        %v374 = vld [vmem:[%s354] sm:$0xf]
        %v375 = vld [vmem:[%s354 + $0x4] sm:$0xf]
        %v376 = vunpack.c.l.bf16 %v374
        %v377 = vunpack.c.l.bf16 %v375
        %vm378 = vcmask 523264
        %v380 = vsel %vm378, %v376, 0
        %v383 = vsel %vm378, %v377, 0
        %v386 = vsel %vm378, %v372, 0
        %v389 = vsel %vm378, %v373, 0
        %391 = vmatpush.xpose.msra.mxu0 0.0
        %392 = vmatpush.xpose.msra.mxu0 0.0
        %393 = vmatpush.xpose.msra.mxu0 0.0
        %394 = vmatpush.xpose.msra.mxu0 0.0
        %395 = vmatpush.xpose.msra.mxu0 0.0
        %396 = vmatpush.xpose.msra.mxu0 0.0
        %397 = vmatpush.xpose.msra.mxu0 0.0
        %398 = vmatpush.xpose.msra.mxu0 0.0
        %399 = vmatpush.xpose.msra.mxu0 0.0
        %400 = vmatpush.xpose.msra.mxu0 0.0
        %401 = vmatpush.xpose.msra.mxu0 0.0
        %402 = vmatpush.xpose.msra.mxu0 0.0
        %403 = vmatpush.xpose.msra.mxu0 0.0
        %404 = vmatpush.xpose.msra.mxu0 0.0
        %405 = vmatpush.xpose.msra.mxu0 %v389
        %406 = vmatpush.xpose.msra.mxu0 %v386
        %407 = vmatmul.f32.gmra.mxu0 %v380
        %v408 = vpop.f32.mrf.mxu0
        %v409 = vadd.f32 0.0, %v408
        %410 = vmatmul.f32.gmra.mxu0 %v383
        %v411 = vpop.f32.mrf.mxu0
        %v412 = vadd.f32 0.0, %v411
        %413 = vdwg.mxu0
        %v414 = vmul.f32 %v376, %v376
        %v415 = vmul.f32 %v377, %v377
        %v416 = vsel %vm378, %v414, 0.0
        %417 = vadd.xlane.f32.xlu0 %v416
        %v418 = vpop.xlane.xlu0 %417
        %v419 = vsel %vm378, %v415, 0.0
        %420 = vadd.xlane.f32.xlu0 %v419
        %v421 = vpop.xlane.xlu0 %420
        %v422 = vmul.f32 %v409, 2.0
        %v423 = vmul.f32 %v412, 2.0
        %v424 = vsub.f32 %v422, %v418
        %v425 = vsub.f32 %v423, %v421
        %v426 = vld [vmem:[%s358] sm:$0x1]
        %v428 = vperm.slane %v426, 0
        %v430 = vsub.f32 %v424, %v428
        %v431 = vsub.f32 %v425, %v428
        %vm434 = vcmp.lt.s32.totalorder %v430, 0
        %vm435 = vcmp.lt.s32.totalorder %v431, 0
        %v436 = vxor.u32 %v430, 2147483647
        %v437 = vxor.u32 %v431, 2147483647
        %v438 = vsel %vm434, %v436, %v430
        %v439 = vsel %vm435, %v437, %v431
        %v440 = vlaneseq
        %v441 = vand.u32 %v440, 127
        %v442 = vand.u32 %v438, 4294967280
        %v443 = vand.u32 %v439, 4294967280
        %v444 = vor.u32 %v442, %v441
        %v445 = vor.u32 %v443, %v441
        %vm446 = vcmask 130048
        %v447 = vsel %vm446, %v444, 2147483648
        %v448 = vand.u32 %v447, 65535
        %v449 = vshra.s32 %v447, 16
        %v450 = vcvt.s32.f32 %v448
        %v451 = vcvt.s32.f32 %v449
        %452 = vmax.xlane.f32.xlu0 %v451
        %v453 = vpop.xlane.xlu0 %452
        %vm454 = vcmp.eq.f32.partialorder %v451, %v453
        %v455 = vsel %vm454, %v450, -inf
        %456 = vmax.xlane.f32.xlu0 %v455
        %v457 = vpop.xlane.xlu0 %456
        %v458 = vcvt.f32.s32 %v457
        %v459 = vcvt.f32.s32 %v453
        %v460 = vshll.u32 %v459, 16
        %v461 = vadd.s32 %v460, %v458
        %v462 = vsel %vm446, %v445, 2147483648
        %v463 = vand.u32 %v462, 65535
        %v464 = vshra.s32 %v462, 16
        %v465 = vcvt.s32.f32 %v463
        %v466 = vcvt.s32.f32 %v464
        %467 = vmax.xlane.f32.xlu0 %v466
        %v468 = vpop.xlane.xlu0 %467
        %vm469 = vcmp.eq.f32.partialorder %v466, %v468
        %v470 = vsel %vm469, %v465, -inf
        %471 = vmax.xlane.f32.xlu0 %v470
        %v472 = vpop.xlane.xlu0 %471
        %v473 = vcvt.f32.s32 %v472
        %v474 = vcvt.f32.s32 %v468
        %v475 = vshll.u32 %v474, 16
        %v476 = vadd.s32 %v475, %v473
        %v477 = vand.u32 %v461, 15
        %v478 = vand.u32 %v476, 15
        %vm479 = vcmp.eq.s32.totalorder %v444, %v461
        %vm480 = vcmp.eq.s32.totalorder %v445, %v476
        %v481 = vsel %vm479, 2147483648, %v444
        %v482 = vsel %vm480, 2147483648, %v445
        %v483 = vsel %vm446, %v481, 2147483648
        %v484 = vand.u32 %v483, 65535
        %v485 = vshra.s32 %v483, 16
        %v486 = vcvt.s32.f32 %v484
        %v487 = vcvt.s32.f32 %v485
        %488 = vmax.xlane.f32.xlu0 %v487
        %v489 = vpop.xlane.xlu0 %488
        %vm490 = vcmp.eq.f32.partialorder %v487, %v489
        %v491 = vsel %vm490, %v486, -inf
        %492 = vmax.xlane.f32.xlu0 %v491
        %v493 = vpop.xlane.xlu0 %492
        %v494 = vcvt.f32.s32 %v493
        %v495 = vcvt.f32.s32 %v489
        %v496 = vshll.u32 %v495, 16
        %v497 = vadd.s32 %v496, %v494
        %v498 = vsel %vm446, %v482, 2147483648
        %v499 = vand.u32 %v498, 65535
        %v500 = vshra.s32 %v498, 16
        %v501 = vcvt.s32.f32 %v499
        %v502 = vcvt.s32.f32 %v500
        %503 = vmax.xlane.f32.xlu0 %v502
        %v504 = vpop.xlane.xlu0 %503
        %vm505 = vcmp.eq.f32.partialorder %v502, %v504
        %v506 = vsel %vm505, %v501, -inf
        %507 = vmax.xlane.f32.xlu0 %v506
        %v508 = vpop.xlane.xlu0 %507
        %v509 = vcvt.f32.s32 %v508
        %v510 = vcvt.f32.s32 %v504
        %v511 = vshll.u32 %v510, 16
        %v512 = vadd.s32 %v511, %v509
        %v513 = vand.u32 %v497, 15
        %v514 = vand.u32 %v512, 15
        %vm515 = vcmp.eq.s32.totalorder %v481, %v497
        %vm516 = vcmp.eq.s32.totalorder %v482, %v512
        %v517 = vsel %vm515, 2147483648, %v481
        %v518 = vsel %vm516, 2147483648, %v482
        %v519 = vsel %vm446, %v517, 2147483648
        %v520 = vand.u32 %v519, 65535
        %v521 = vshra.s32 %v519, 16
        %v522 = vcvt.s32.f32 %v520
        %v523 = vcvt.s32.f32 %v521
        %524 = vmax.xlane.f32.xlu0 %v523
        %v525 = vpop.xlane.xlu0 %524
        %vm526 = vcmp.eq.f32.partialorder %v523, %v525
        %v527 = vsel %vm526, %v522, -inf
        %528 = vmax.xlane.f32.xlu0 %v527
        %v529 = vpop.xlane.xlu0 %528
        %v530 = vcvt.f32.s32 %v529
        %v531 = vcvt.f32.s32 %v525
        %v532 = vshll.u32 %v531, 16
        %v533 = vadd.s32 %v532, %v530
        %v534 = vsel %vm446, %v518, 2147483648
        %v535 = vand.u32 %v534, 65535
        %v536 = vshra.s32 %v534, 16
        %v537 = vcvt.s32.f32 %v535
        %v538 = vcvt.s32.f32 %v536
        %539 = vmax.xlane.f32.xlu0 %v538
        %v540 = vpop.xlane.xlu0 %539
        %vm541 = vcmp.eq.f32.partialorder %v538, %v540
        %v542 = vsel %vm541, %v537, -inf
        %543 = vmax.xlane.f32.xlu0 %v542
        %v544 = vpop.xlane.xlu0 %543
        %v545 = vcvt.f32.s32 %v544
        %v546 = vcvt.f32.s32 %v540
        %v547 = vshll.u32 %v546, 16
        %v548 = vadd.s32 %v547, %v545
        %v549 = vand.u32 %v533, 15
        %v550 = vand.u32 %v548, 15
        %vm551 = vcmp.eq.s32.totalorder %v517, %v533
        %vm552 = vcmp.eq.s32.totalorder %v518, %v548
        %v553 = vsel %vm551, 2147483648, %v517
        %v554 = vsel %vm552, 2147483648, %v518
        %v555 = vsel %vm446, %v553, 2147483648
        %v556 = vand.u32 %v555, 65535
        %v557 = vshra.s32 %v555, 16
        %v558 = vcvt.s32.f32 %v556
        %v559 = vcvt.s32.f32 %v557
        %560 = vmax.xlane.f32.xlu0 %v559
        %v561 = vpop.xlane.xlu0 %560
        %vm562 = vcmp.eq.f32.partialorder %v559, %v561
        %v563 = vsel %vm562, %v558, -inf
        %564 = vmax.xlane.f32.xlu0 %v563
        %v565 = vpop.xlane.xlu0 %564
        %v566 = vcvt.f32.s32 %v565
        %v567 = vcvt.f32.s32 %v561
        %v568 = vshll.u32 %v567, 16
        %v569 = vadd.s32 %v568, %v566
        %v570 = vsel %vm446, %v554, 2147483648
        %v571 = vand.u32 %v570, 65535
        %v572 = vshra.s32 %v570, 16
        %v573 = vcvt.s32.f32 %v571
        %v574 = vcvt.s32.f32 %v572
        %575 = vmax.xlane.f32.xlu0 %v574
        %v576 = vpop.xlane.xlu0 %575
        %vm577 = vcmp.eq.f32.partialorder %v574, %v576
        %v578 = vsel %vm577, %v573, -inf
        %579 = vmax.xlane.f32.xlu0 %v578
        %v580 = vpop.xlane.xlu0 %579
        %v581 = vcvt.f32.s32 %v580
        %v582 = vcvt.f32.s32 %v576
        %v583 = vshll.u32 %v582, 16
        %v584 = vadd.s32 %v583, %v581
        %v585 = vand.u32 %v569, 15
        %v586 = vand.u32 %v584, 15
        %vm587 = vcmp.eq.s32.totalorder %v441, %v477
        %vm588 = vcmp.eq.s32.totalorder %v441, %v478
        %v589 = vsel %vm587, 1, 0
        %v590 = vsel %vm588, 1, 0
        %v591 = vcvt.s32.f32 %v589
        %v592 = vcvt.s32.f32 %v590
        %v593 = vpack.c.bf16 %v592, %v591
        %v596 = vunpack.c.l.b16 %v370
        %v597 = vunpack.c.l.b16 %v371
        %v598 = vpack.c.b16 %v597, %v596
        %v601 = vsel %vm446, %v593, 0
        %603 = vmatpush.bf16.msra.mxu0 0
        %604 = vmatpush.bf16.msra.mxu0 0
        %605 = vmatpush.bf16.msra.mxu0 0
        %606 = vmatpush.bf16.msra.mxu0 0
        %607 = vmatpush.bf16.msra.mxu0 0
        %608 = vmatpush.bf16.msra.mxu0 0
        %609 = vmatpush.bf16.msra.mxu0 0
        %610 = vmatpush.bf16.msra.mxu0 %v598
        %611 = vmatmul.bf16.gmra.mxu0 %v601
        %v612 = vpop.f32.mrf.mxu0
        %v613 = vadd.f32 0.0, %v612
        %v614 = vpop.f32.mrf.mxu0
        %v615 = vadd.f32 0.0, %v614
        %616 = vdwg.mxu0
        %v617 = vpack.c.bf16 %v615, %v613
        %v618 = vld [vmem:[%s3] sm:$0xf]
        %v619 = vld [vmem:[%s3 + $0x4] sm:$0xf]
        %v620 = vld [vmem:[%s3 + $0x8] sm:$0xf]
        %v621 = vld [vmem:[%s3 + $0xc] sm:$0xf]
        %v622 = vld [vmem:[%s3 + $0x10] sm:$0xf]
        %v623 = vld [vmem:[%s3 + $0x14] sm:$0xf]
        %v624 = vld [vmem:[%s3 + $0x18] sm:$0xf]
        %v625 = vld [vmem:[%s3 + $0x1c] sm:$0xf]
        %v634 = vunpack.c.l.b16 %v618
        %v635 = vunpack.c.l.b16 %v619
        %v636 = vunpack.c.l.b16 %v620
        %v637 = vunpack.c.l.b16 %v621
        %v638 = vunpack.c.l.b16 %v622
        %v639 = vunpack.c.l.b16 %v623
        %v640 = vunpack.c.l.b16 %v624
        %v641 = vunpack.c.l.b16 %v625
        %v642 = vpack.c.b16 %v635, %v634
        %v643 = vpack.c.b16 %v637, %v636
        %v644 = vpack.c.b16 %v639, %v638
        %v645 = vpack.c.b16 %v641, %v640
        %v651 = vsel %vm378, %v617, 0
        %653 = vmatpush.bf16.msra.mxu0 0
        %654 = vmatpush.bf16.msra.mxu0 0
        %655 = vmatpush.bf16.msra.mxu0 0
        %656 = vmatpush.bf16.msra.mxu0 0
        %657 = vmatpush.bf16.msra.mxu0 %v645
        %658 = vmatpush.bf16.msra.mxu0 %v644
        %659 = vmatpush.bf16.msra.mxu0 %v643
        %660 = vmatpush.bf16.msra.mxu0 %v642
        %661 = vmatmul.bf16.gmra.mxu0 %v651
        %v662 = vpop.f32.mrf.mxu0
        %v663 = vadd.f32 0.0, %v662
        %v664 = vpop.f32.mrf.mxu0
        %v665 = vadd.f32 0.0, %v664
        %666 = vdwg.mxu0
        %vm667 = vcmp.eq.s32.totalorder %v441, %v513
        %vm668 = vcmp.eq.s32.totalorder %v441, %v514
        %v669 = vsel %vm667, 1, 0
        %v670 = vsel %vm668, 1, 0
        %v671 = vcvt.s32.f32 %v669
        %v672 = vcvt.s32.f32 %v670
        %v673 = vpack.c.bf16 %v672, %v671
        %v675 = vsel %vm446, %v673, 0
        %677 = vmatpush.bf16.msra.mxu0 0
        %678 = vmatpush.bf16.msra.mxu0 0
        %679 = vmatpush.bf16.msra.mxu0 0
        %680 = vmatpush.bf16.msra.mxu0 0
        %681 = vmatpush.bf16.msra.mxu0 0
        %682 = vmatpush.bf16.msra.mxu0 0
        %683 = vmatpush.bf16.msra.mxu0 0
        %684 = vmatpush.bf16.msra.mxu0 %v598
        %685 = vmatmul.bf16.gmra.mxu0 %v675
        %v686 = vpop.f32.mrf.mxu0
        %v687 = vadd.f32 0.0, %v686
        %v688 = vpop.f32.mrf.mxu0
        %v689 = vadd.f32 0.0, %v688
        %690 = vdwg.mxu0
        %v691 = vpack.c.bf16 %v689, %v687
        %v693 = vsel %vm378, %v691, 0
        %695 = vmatpush.bf16.msra.mxu0 0
        %696 = vmatpush.bf16.msra.mxu0 0
        %697 = vmatpush.bf16.msra.mxu0 0
        %698 = vmatpush.bf16.msra.mxu0 0
        %699 = vmatpush.bf16.msra.mxu0 %v645
        %700 = vmatpush.bf16.msra.mxu0 %v644
        %701 = vmatpush.bf16.msra.mxu0 %v643
        %702 = vmatpush.bf16.msra.mxu0 %v642
        %703 = vmatmul.bf16.gmra.mxu0 %v693
        %v704 = vpop.f32.mrf.mxu0
        %v705 = vadd.f32 0.0, %v704
        %v706 = vpop.f32.mrf.mxu0
        %v707 = vadd.f32 0.0, %v706
        %708 = vdwg.mxu0
        %v709 = vmax.f32 %v663, %v705
        %v710 = vmax.f32 %v665, %v707
        %v711 = vmin.f32 %v663, %v705
        %v712 = vmin.f32 %v665, %v707
        %vm713 = vcmp.eq.s32.totalorder %v441, %v549
        %vm714 = vcmp.eq.s32.totalorder %v441, %v550
        %v715 = vsel %vm713, 1, 0
        %v716 = vsel %vm714, 1, 0
        %v717 = vcvt.s32.f32 %v715
        %v718 = vcvt.s32.f32 %v716
        %v719 = vpack.c.bf16 %v718, %v717
        %v721 = vsel %vm446, %v719, 0
        %723 = vmatpush.bf16.msra.mxu0 0
        %724 = vmatpush.bf16.msra.mxu0 0
        %725 = vmatpush.bf16.msra.mxu0 0
        %726 = vmatpush.bf16.msra.mxu0 0
        %727 = vmatpush.bf16.msra.mxu0 0
        %728 = vmatpush.bf16.msra.mxu0 0
        %729 = vmatpush.bf16.msra.mxu0 0
        %730 = vmatpush.bf16.msra.mxu0 %v598
        %731 = vmatmul.bf16.gmra.mxu0 %v721
        %v732 = vpop.f32.mrf.mxu0
        %v733 = vadd.f32 0.0, %v732
        %v734 = vpop.f32.mrf.mxu0
        %v735 = vadd.f32 0.0, %v734
        %736 = vdwg.mxu0
        %v737 = vpack.c.bf16 %v735, %v733
        %v739 = vsel %vm378, %v737, 0
        %741 = vmatpush.bf16.msra.mxu0 0
        %742 = vmatpush.bf16.msra.mxu0 0
        %743 = vmatpush.bf16.msra.mxu0 0
        %744 = vmatpush.bf16.msra.mxu0 0
        %745 = vmatpush.bf16.msra.mxu0 %v645
        %746 = vmatpush.bf16.msra.mxu0 %v644
        %747 = vmatpush.bf16.msra.mxu0 %v643
        %748 = vmatpush.bf16.msra.mxu0 %v642
        %749 = vmatmul.bf16.gmra.mxu0 %v739
        %v750 = vpop.f32.mrf.mxu0
        %v751 = vadd.f32 0.0, %v750
        %v752 = vpop.f32.mrf.mxu0
        %v753 = vadd.f32 0.0, %v752
        %754 = vdwg.mxu0
        %v755 = vmax.f32 %v709, %v751
        %v756 = vmax.f32 %v710, %v753
        %v757 = vmin.f32 %v711, %v751
        %v758 = vmin.f32 %v712, %v753
        %vm759 = vcmp.eq.s32.totalorder %v441, %v585
        %vm760 = vcmp.eq.s32.totalorder %v441, %v586
        %v761 = vsel %vm759, 1, 0
        %v762 = vsel %vm760, 1, 0
        %v763 = vcvt.s32.f32 %v761
        %v764 = vcvt.s32.f32 %v762
        %v765 = vpack.c.bf16 %v764, %v763
        %v767 = vsel %vm446, %v765, 0
        %769 = vmatpush.bf16.msra.mxu0 0
        %770 = vmatpush.bf16.msra.mxu0 0
        %771 = vmatpush.bf16.msra.mxu0 0
        %772 = vmatpush.bf16.msra.mxu0 0
        %773 = vmatpush.bf16.msra.mxu0 0
        %774 = vmatpush.bf16.msra.mxu0 0
        %775 = vmatpush.bf16.msra.mxu0 0
        %776 = vmatpush.bf16.msra.mxu0 %v598
        %777 = vmatmul.bf16.gmra.mxu0 %v767
        %v778 = vpop.f32.mrf.mxu0
        %v779 = vadd.f32 0.0, %v778
        %v780 = vpop.f32.mrf.mxu0
        %v781 = vadd.f32 0.0, %v780
        %782 = vdwg.mxu0
        %v783 = vpack.c.bf16 %v781, %v779
        %v785 = vsel %vm378, %v783, 0
        %787 = vmatpush.bf16.msra.mxu0 0
        %788 = vmatpush.bf16.msra.mxu0 0
        %789 = vmatpush.bf16.msra.mxu0 0
        %790 = vmatpush.bf16.msra.mxu0 0
        %791 = vmatpush.bf16.msra.mxu0 %v645
        %792 = vmatpush.bf16.msra.mxu0 %v644
        %793 = vmatpush.bf16.msra.mxu0 %v643
        %794 = vmatpush.bf16.msra.mxu0 %v642
        %795 = vmatmul.bf16.gmra.mxu0 %v785
        %v796 = vpop.f32.mrf.mxu0
        %v797 = vadd.f32 0.0, %v796
        %v798 = vpop.f32.mrf.mxu0
        %v799 = vadd.f32 0.0, %v798
        %800 = vdwg.mxu0
        %v801 = vmax.f32 %v755, %v797
        %v802 = vmax.f32 %v756, %v799
        %v803 = vmin.f32 %v757, %v797
        %v804 = vmin.f32 %v758, %v799
        %v805 = vld [vmem:[#allocation2] sm:$0xf]
        %v806 = vld [vmem:[#allocation2 + $0x4] sm:$0xf]
        %v807 = vld [vmem:[#allocation2 + $0x8] sm:$0xf]
        %v808 = vld [vmem:[#allocation2 + $0xc] sm:$0xf]
        %v809 = vld [vmem:[#allocation2 + $0x10] sm:$0xf]
        %v810 = vld [vmem:[#allocation2 + $0x14] sm:$0xf]
        %v811 = vld [vmem:[#allocation2 + $0x18] sm:$0xf]
        %v812 = vld [vmem:[#allocation2 + $0x1c] sm:$0xf]
        %v815 = vunpack.c.l.b16 %v374
        %v816 = vunpack.c.l.b16 %v375
        %v817 = vpack.c.b16 %v816, %v815
        %v826 = vunpack.c.l.b16 %v805
        %v827 = vunpack.c.l.b16 %v806
        %v828 = vunpack.c.l.b16 %v807
        %v829 = vunpack.c.l.b16 %v808
        %v830 = vunpack.c.l.b16 %v809
        %v831 = vunpack.c.l.b16 %v810
        %v832 = vunpack.c.l.b16 %v811
        %v833 = vunpack.c.l.b16 %v812
        %v834 = vpack.c.b16 %v827, %v826
        %v835 = vpack.c.b16 %v829, %v828
        %v836 = vpack.c.b16 %v831, %v830
        %v837 = vpack.c.b16 %v833, %v832
        %v843 = vsel %vm378, %v817, 0
        %845 = vmatpush.bf16.msra.mxu0 0
        %846 = vmatpush.bf16.msra.mxu0 0
        %847 = vmatpush.bf16.msra.mxu0 0
        %848 = vmatpush.bf16.msra.mxu0 0
        %849 = vmatpush.bf16.msra.mxu0 %v837
        %850 = vmatpush.bf16.msra.mxu0 %v836
        %851 = vmatpush.bf16.msra.mxu0 %v835
        %852 = vmatpush.bf16.msra.mxu0 %v834
        %853 = vmatmul.bf16.gmra.mxu0 %v843
        %v854 = vpop.f32.mrf.mxu0
        %v855 = vadd.f32 0.0, %v854
        %v856 = vpop.f32.mrf.mxu0
        %v857 = vadd.f32 0.0, %v856
        %858 = vdwg.mxu0
        %v859 = vld [vmem:[%s5] sm:$0x1]
        %v860 = vld [vmem:[%s6] sm:$0x1]
        %vm861 = vcmp.gt.f32.partialorder %v859, 0.0
        %v862 = vsel %vm861, 1, 0
        %v863 = vperm.slane %v862, 0
        %vm864 = vcmp.eq.s32.totalorder %v863, 1
        %v865 = vsel %vm864, %v801, %v803
        %v866 = vsel %vm864, %v802, %v804
        %v867 = vadd.f32 %v865, %v855
        %v868 = vadd.f32 %v866, %v857
        %v870 = vperm.slane %v859, 0
        %v872 = vmul.f32 %v867, %v870
        %v873 = vmul.f32 %v868, %v870
        %v875 = vperm.slane %v860, 0
        %v877 = vadd.f32 %v872, %v875
        %v878 = vadd.f32 %v873, %v875
        %vm879 = vcmp.gt.f32.partialorder %v877, 0.0
        %vm880 = vcmp.gt.f32.partialorder %v878, 0.0
        %v881 = vmul.f32 %v877, 0.2
        %v882 = vmul.f32 %v878, 0.2
        %v883 = vsel %vm879, %v877, %v881
        %v884 = vsel %vm880, %v878, %v882
        %v885 = vpack.c.bf16 %v883, %v883
        %v886 = vpack.c.bf16 %v884, %v884
        %vm887 = vcmask 519168
        %888 = vst.msk [vmem:[%s367] sm:$0xf] %vm887, %v885
        %889 = vst.msk [vmem:[%s367 + $0x4] sm:$0xf] %vm887, %v886
        %s890 = smul.u32 2, %s24
        %p891 = scmp.lt.s32.totalorder %s23, 1
        %s892 = scalar_select %p891, %s23, 1
        %p893 = scmp.lt.s32.totalorder %s890, 1
        %s894 = scalar_select %p893, %s890, 1
        %s895 = smul.addr %s892, 2
        %s896 = sadd.s32 %s894, %s895
        %s897 = smul.addr %s896, 4
        %s898 = scalar_lea.vmem %s7, %s897
        // Predicated region
        $region53: #{dgcnn_cls_forward.7} parent=47 // pred_check
          %p899 = pneg %p215
        $region54: #{dgcnn_cls_forward.7} parent=47 // pred_check_branch
          %901 = sbr.rel (%p899) target = $region56
        $region55: #{dgcnn_cls_forward.7} parent=47 // pred_region
          %s902 = smul.u32 2, %s24
        $region56: #{dgcnn_cls_forward.7} parent=47 // pred_fallthru
          _
      $region48: #{dgcnn_cls_forward.7} parent=5 // pred_fallthru
        _
      %p903 = scmp.le.s32.totalorder 2, %s14
      // Predicated region
      $region57: #{dgcnn_cls_forward.7} parent=5 // pred_check
        %p904 = pneg %p903
      $region58: #{dgcnn_cls_forward.7} parent=5 // pred_check_branch
        %906 = sbr.rel (%p904) target = $region60
      $region59: #{dgcnn_cls_forward.7} parent=5 // pred_region
        %s907 = ssub.s32 %s14, 2
        // Predicated region
        $region61: #{dgcnn_cls_forward.7} parent=59 // pred_check
          %p908 = pneg %p221
        $region62: #{dgcnn_cls_forward.7} parent=59 // pred_check_branch
          %910 = sbr.rel (%p908) target = $region64
        $region63: #{dgcnn_cls_forward.7} parent=59 // pred_region
          %s911 = smul.u32 2, %s26
          %p912 = scmp.lt.s32.totalorder %s25, 1
          %s913 = scalar_select %p912, %s25, 1
          %p914 = scmp.lt.s32.totalorder %s911, 1
          %s915 = scalar_select %p914, %s911, 1
          %s916 = smul.addr %s913, 2
          %s917 = sadd.s32 %s915, %s916
          %s918 = smul.addr %s917, 4
          %s919 = scalar_lea.vmem %s7, %s918
        $region64: #{dgcnn_cls_forward.7} parent=59 // pred_fallthru
          _
      $region60: #{dgcnn_cls_forward.7} parent=5 // pred_fallthru
        _
    $region6: #{dgcnn_cls_forward.7} parent=1 // loop_footer
      %s18 = sadd.s32 1, %s14
    $region7: #{dgcnn_cls_forward.7} parent=1 // loop_footer_branch
      %13 = sbr.rel target = $region3
    $region8: #{dgcnn_cls_forward.7} parent=1 // loop_exit
      _
    %920 = vsyncpa [#allocation3], 1
    %s921 = scalar_lea.sflag [#allocation3], 1
    %922 = vsyncpa %s921, 1

// kernel: dgcnn_cls_forward.6
$region0: #{dgcnn_cls_forward.6}
  #allocation0 [shape = 'u32[]', space=smem, size = 0x4, offset = 0x4, fixed_abs, tag = 'smem constant byte address 0x4 - core index']
  #allocation1 [shape = 'u32[72,128]{1,0:T(1,128)}', space=vmem, size = 0x9000, scoped, tag = 'internal scratch']
  %s0 = inlined_call_operand.vmem [shape: f32[2,16,8], index: 0, kind: input, shape index: {}, may-alias: {0,1}]
  %s1 = inlined_call_operand.vmem [shape: f32[2,16,8], index: 1, kind: input, shape index: {}, may-alias: {0,1}]
  %s2 = inlined_call_operand.vmem [shape: f32[2,1,16], index: 2, kind: input, shape index: {}]
  %s3 = inlined_call_operand.vmem [shape: bf16[8,64], index: 3, kind: input, shape index: {}]
  %s4 = inlined_call_operand.vmem [shape: bf16[8,64], index: 4, kind: input, shape index: {}]
  %s5 = inlined_call_operand.vmem [shape: f32[1,64], index: 5, kind: input, shape index: {}]
  %s6 = inlined_call_operand.vmem [shape: f32[1,64], index: 6, kind: input, shape index: {}]
  %s7 = inlined_call_operand.vmem [shape: bf16[2,16,64], index: 7, kind: output, shape index: {}]
  %s8 = sld [smem:[#allocation0]]
  $region61: #{dgcnn_cls_forward.6} parent=0
    _
  %s10 = ssub.s32 1, %s8
  %s11 = scalar_select 0, %s10, %s8
  loop: start=0, step=1, limit=4
  $region2: #{dgcnn_cls_forward.6} parent=0 // loop_pre_header
    _
  $region3: #{dgcnn_cls_forward.6} parent=0 // loop_header
    %s13 = sphi 0, %s17
    %p14 = scmp.ge.s32.totalorder %s13, 4
    %s20 = sphi 0, %s32
    %s21 = sphi 0, %s28
    %s22 = sphi 0, %s20
    %s23 = sphi 0, %s21
    %s24 = sphi 0, %s22
    %s25 = sphi 0, %s23
    %s35 = sphi 0, %s37
    %s38 = sphi 0, %s35
    %s39 = sphi 0, %s38
    %s55 = sphi 0, %s39
    %s63 = sphi 0, %s65
    %s66 = sphi 0, %s63
    %s67 = sphi 0, %s66
    %s83 = sphi 0, %s67
    %s89 = sphi 0, %s91
    %s92 = sphi 0, %s89
    %s93 = sphi 0, %s92
    %s109 = sphi 0, %s93
    %s113 = sphi 0, %s113
    %s115 = sphi 0, %s113
    %s116 = sphi 0, %s115
    %s130 = sphi 0, %s116
    %s134 = sphi 0, %s134
    %s136 = sphi 0, %s134
    %s137 = sphi 0, %s136
    %s151 = sphi 0, %s137
    %s155 = sphi 0, %s155
    %s157 = sphi 0, %s155
    %s158 = sphi 0, %s157
    %s172 = sphi 0, %s158
    %s176 = sphi 0, %s176
    %s178 = sphi 0, %s176
    %s179 = sphi 0, %s178
    %s193 = sphi 0, %s179
    %s201 = sphi 0, %s203
    %s204 = sphi 0, %s201
    %s205 = sphi 0, %s204
    %s221 = sphi 0, %s205
  $region4: #{dgcnn_cls_forward.6} parent=0 // loop_header_branch
    %16 = sbr.rel (%p14) target = $region8
  $region5: #{dgcnn_cls_forward.6} parent=0 // loop_body
    %s18 = ssub.s32 %s13, 1
    %s19 = ssub.s32 %s13, 2
    %s26 = sadd.s32 1, %s21
    %p27 = scmp.ge.s32.totalorder %s26, 1
    %s28 = scalar_select %p27, 0, %s26
    %s29 = sadd.s32 1, %s20
    %s30 = scalar_select %p27, %s29, %s20
    %p31 = scmp.ge.s32.totalorder %s30, 2
    %s32 = scalar_select %p31, 0, %s30
    %s33 = ssub.s32 %s20, %s32
    %p34 = scmp.eq.s32.totalorder %s33, 0
    %s36 = sadd.s32 %s35, 1
    %s37 = scalar_select %p34, %s35, %s36
    %p40 = pneg %p34
    %p41 = scmp.eq.s32.totalorder %s13, 1
    %p42 = por %p40, %p41
    %p43 = scmp.ne.s32.totalorder %s35, %s38
    %p44 = scmp.eq.s32.totalorder %s13, 0
    %p45 = por %p43, %p44
    %p46 = scmp.ne.s32.totalorder %s35, %s38
    %p47 = scmp.eq.s32.totalorder %s18, 1
    %p48 = por %p46, %p47
    %p49 = scmp.ne.s32.totalorder %s38, %s39
    %p50 = scmp.eq.s32.totalorder %s18, 0
    %p51 = por %p49, %p50
    %p52 = scmp.ne.s32.totalorder %s38, %s39
    %p53 = scmp.eq.s32.totalorder %s19, 1
    %p54 = por %p52, %p53
    %p56 = scmp.ne.s32.totalorder %s39, %s55
    %p57 = scmp.eq.s32.totalorder %s19, 0
    %p58 = por %p56, %p57
    %s59 = ssub.s32 %s20, %s32
    %s60 = ssub.s32 %s21, %s28
    %s61 = sor.u32 %s59, %s60
    %p62 = scmp.eq.s32.totalorder %s61, 0
    %s64 = sadd.s32 %s63, 1
    %s65 = scalar_select %p62, %s63, %s64
    %p68 = pneg %p62
    %p69 = scmp.eq.s32.totalorder %s13, 1
    %p70 = por %p68, %p69
    %p71 = scmp.ne.s32.totalorder %s63, %s66
    %p72 = scmp.eq.s32.totalorder %s13, 0
    %p73 = por %p71, %p72
    %p74 = scmp.ne.s32.totalorder %s63, %s66
    %p75 = scmp.eq.s32.totalorder %s18, 1
    %p76 = por %p74, %p75
    %p77 = scmp.ne.s32.totalorder %s66, %s67
    %p78 = scmp.eq.s32.totalorder %s18, 0
    %p79 = por %p77, %p78
    %p80 = scmp.ne.s32.totalorder %s66, %s67
    %p81 = scmp.eq.s32.totalorder %s19, 1
    %p82 = por %p80, %p81
    %p84 = scmp.ne.s32.totalorder %s67, %s83
    %p85 = scmp.eq.s32.totalorder %s19, 0
    %p86 = por %p84, %p85
    %s87 = ssub.s32 %s20, %s32
    %p88 = scmp.eq.s32.totalorder %s87, 0
    %s90 = sadd.s32 %s89, 1
    %s91 = scalar_select %p88, %s89, %s90
    %p94 = pneg %p88
    %p95 = scmp.eq.s32.totalorder %s13, 1
    %p96 = por %p94, %p95
    %p97 = scmp.ne.s32.totalorder %s89, %s92
    %p98 = scmp.eq.s32.totalorder %s13, 0
    %p99 = por %p97, %p98
    %p100 = scmp.ne.s32.totalorder %s89, %s92
    %p101 = scmp.eq.s32.totalorder %s18, 1
    %p102 = por %p100, %p101
    %p103 = scmp.ne.s32.totalorder %s92, %s93
    %p104 = scmp.eq.s32.totalorder %s18, 0
    %p105 = por %p103, %p104
    %p106 = scmp.ne.s32.totalorder %s92, %s93
    %p107 = scmp.eq.s32.totalorder %s19, 1
    %p108 = por %p106, %p107
    %p110 = scmp.ne.s32.totalorder %s93, %s109
    %p111 = scmp.eq.s32.totalorder %s19, 0
    %p112 = por %p110, %p111
    %s114 = sadd.s32 %s113, 1
    %p117 = scmp.eq.s32.totalorder %s13, 1
    %p118 = scmp.ne.s32.totalorder %s113, %s115
    %p119 = scmp.eq.s32.totalorder %s13, 0
    %p120 = por %p118, %p119
    %p121 = scmp.ne.s32.totalorder %s113, %s115
    %p122 = scmp.eq.s32.totalorder %s18, 1
    %p123 = por %p121, %p122
    %p124 = scmp.ne.s32.totalorder %s115, %s116
    %p125 = scmp.eq.s32.totalorder %s18, 0
    %p126 = por %p124, %p125
    %p127 = scmp.ne.s32.totalorder %s115, %s116
    %p128 = scmp.eq.s32.totalorder %s19, 1
    %p129 = por %p127, %p128
    %p131 = scmp.ne.s32.totalorder %s116, %s130
    %p132 = scmp.eq.s32.totalorder %s19, 0
    %p133 = por %p131, %p132
    %s135 = sadd.s32 %s134, 1
    %p138 = scmp.eq.s32.totalorder %s13, 1
    %p139 = scmp.ne.s32.totalorder %s134, %s136
    %p140 = scmp.eq.s32.totalorder %s13, 0
    %p141 = por %p139, %p140
    %p142 = scmp.ne.s32.totalorder %s134, %s136
    %p143 = scmp.eq.s32.totalorder %s18, 1
    %p144 = por %p142, %p143
    %p145 = scmp.ne.s32.totalorder %s136, %s137
    %p146 = scmp.eq.s32.totalorder %s18, 0
    %p147 = por %p145, %p146
    %p148 = scmp.ne.s32.totalorder %s136, %s137
    %p149 = scmp.eq.s32.totalorder %s19, 1
    %p150 = por %p148, %p149
    %p152 = scmp.ne.s32.totalorder %s137, %s151
    %p153 = scmp.eq.s32.totalorder %s19, 0
    %p154 = por %p152, %p153
    %s156 = sadd.s32 %s155, 1
    %p159 = scmp.eq.s32.totalorder %s13, 1
    %p160 = scmp.ne.s32.totalorder %s155, %s157
    %p161 = scmp.eq.s32.totalorder %s13, 0
    %p162 = por %p160, %p161
    %p163 = scmp.ne.s32.totalorder %s155, %s157
    %p164 = scmp.eq.s32.totalorder %s18, 1
    %p165 = por %p163, %p164
    %p166 = scmp.ne.s32.totalorder %s157, %s158
    %p167 = scmp.eq.s32.totalorder %s18, 0
    %p168 = por %p166, %p167
    %p169 = scmp.ne.s32.totalorder %s157, %s158
    %p170 = scmp.eq.s32.totalorder %s19, 1
    %p171 = por %p169, %p170
    %p173 = scmp.ne.s32.totalorder %s158, %s172
    %p174 = scmp.eq.s32.totalorder %s19, 0
    %p175 = por %p173, %p174
    %s177 = sadd.s32 %s176, 1
    %p180 = scmp.eq.s32.totalorder %s13, 1
    %p181 = scmp.ne.s32.totalorder %s176, %s178
    %p182 = scmp.eq.s32.totalorder %s13, 0
    %p183 = por %p181, %p182
    %p184 = scmp.ne.s32.totalorder %s176, %s178
    %p185 = scmp.eq.s32.totalorder %s18, 1
    %p186 = por %p184, %p185
    %p187 = scmp.ne.s32.totalorder %s178, %s179
    %p188 = scmp.eq.s32.totalorder %s18, 0
    %p189 = por %p187, %p188
    %p190 = scmp.ne.s32.totalorder %s178, %s179
    %p191 = scmp.eq.s32.totalorder %s19, 1
    %p192 = por %p190, %p191
    %p194 = scmp.ne.s32.totalorder %s179, %s193
    %p195 = scmp.eq.s32.totalorder %s19, 0
    %p196 = por %p194, %p195
    %s197 = ssub.s32 %s20, %s32
    %s198 = ssub.s32 %s21, %s28
    %s199 = sor.u32 %s197, %s198
    %p200 = scmp.eq.s32.totalorder %s199, 0
    %s202 = sadd.s32 %s201, 1
    %s203 = scalar_select %p200, %s201, %s202
    %p206 = pneg %p200
    %p207 = scmp.eq.s32.totalorder %s13, 1
    %p208 = por %p206, %p207
    %p209 = scmp.ne.s32.totalorder %s201, %s204
    %p210 = scmp.eq.s32.totalorder %s13, 0
    %p211 = por %p209, %p210
    %p212 = scmp.ne.s32.totalorder %s201, %s204
    %p213 = scmp.eq.s32.totalorder %s18, 1
    %p214 = por %p212, %p213
    %p215 = scmp.ne.s32.totalorder %s204, %s205
    %p216 = scmp.eq.s32.totalorder %s18, 0
    %p217 = por %p215, %p216
    %p218 = scmp.ne.s32.totalorder %s204, %s205
    %p219 = scmp.eq.s32.totalorder %s19, 1
    %p220 = por %p218, %p219
    %p222 = scmp.ne.s32.totalorder %s205, %s221
    %p223 = scmp.eq.s32.totalorder %s19, 0
    %p224 = por %p222, %p223
    %p225 = scmp.le.s32.totalorder 1, %s13
    %p226 = scmp.lt.s32.totalorder %s13, 3
    %p227 = pnand %p225, %p226
    %p228 = pneg %p227
    // Predicated region
    $region9: #{dgcnn_cls_forward.6} parent=5 // pred_check
      _
    $region10: #{dgcnn_cls_forward.6} parent=5 // pred_check_branch
      %230 = sbr.rel (%p227) target = $region12
    $region11: #{dgcnn_cls_forward.6} parent=5 // pred_region
      %s231 = ssub.s32 %s13, 1
      // Predicated region
      $region13: #{dgcnn_cls_forward.6} parent=11 // pred_check
        %p232 = pneg %p126
      $region14: #{dgcnn_cls_forward.6} parent=11 // pred_check_branch
        %234 = sbr.rel (%p232) target = $region16
      $region15: #{dgcnn_cls_forward.6} parent=11 // pred_region
        _
      $region16: #{dgcnn_cls_forward.6} parent=11 // pred_fallthru
        _
      // Predicated region
      $region17: #{dgcnn_cls_forward.6} parent=11 // pred_check
        %p235 = pneg %p147
      $region18: #{dgcnn_cls_forward.6} parent=11 // pred_check_branch
        %237 = sbr.rel (%p235) target = $region20
      $region19: #{dgcnn_cls_forward.6} parent=11 // pred_region
        _
      $region20: #{dgcnn_cls_forward.6} parent=11 // pred_fallthru
        _
      // Predicated region
      $region21: #{dgcnn_cls_forward.6} parent=11 // pred_check
        %p238 = pneg %p168
      $region22: #{dgcnn_cls_forward.6} parent=11 // pred_check_branch
        %240 = sbr.rel (%p238) target = $region24
      $region23: #{dgcnn_cls_forward.6} parent=11 // pred_region
        _
      $region24: #{dgcnn_cls_forward.6} parent=11 // pred_fallthru
        _
      // Predicated region
      $region25: #{dgcnn_cls_forward.6} parent=11 // pred_check
        %p241 = pneg %p189
      $region26: #{dgcnn_cls_forward.6} parent=11 // pred_check_branch
        %243 = sbr.rel (%p241) target = $region28
      $region27: #{dgcnn_cls_forward.6} parent=11 // pred_region
        _
      $region28: #{dgcnn_cls_forward.6} parent=11 // pred_fallthru
        _
    $region12: #{dgcnn_cls_forward.6} parent=5 // pred_fallthru
      _
    %p244 = scmp.lt.s32.totalorder %s13, 2
    // Predicated region
    $region29: #{dgcnn_cls_forward.6} parent=5 // pred_check
      %p245 = pneg %p244
    $region30: #{dgcnn_cls_forward.6} parent=5 // pred_check_branch
      %247 = sbr.rel (%p245) target = $region32
    $region31: #{dgcnn_cls_forward.6} parent=5 // pred_region
      // Predicated region
      $region33: #{dgcnn_cls_forward.6} parent=31 // pred_check
        %p248 = pneg %p45
      $region34: #{dgcnn_cls_forward.6} parent=31 // pred_check_branch
        %250 = sbr.rel (%p248) target = $region36
      $region35: #{dgcnn_cls_forward.6} parent=31 // pred_region
        %p251 = scmp.lt.s32.totalorder %s20, 1
        %s252 = scalar_select %p251, %s20, 1
        %s253 = smul.addr %s252, 2
        %s254 = smul.addr %s253, 8
        %s255 = scalar_lea.vmem %s0, %s254
      $region36: #{dgcnn_cls_forward.6} parent=31 // pred_fallthru
        _
      // Predicated region
      $region37: #{dgcnn_cls_forward.6} parent=31 // pred_check
        %p256 = pneg %p73
      $region38: #{dgcnn_cls_forward.6} parent=31 // pred_check_branch
        %258 = sbr.rel (%p256) target = $region40
      $region39: #{dgcnn_cls_forward.6} parent=31 // pred_region
        %s259 = smul.u32 2, %s21
        %p260 = scmp.lt.s32.totalorder %s20, 1
        %s261 = scalar_select %p260, %s20, 1
        %p262 = scmp.lt.s32.totalorder %s259, 1
        %s263 = scalar_select %p262, %s259, 1
        %s264 = smul.addr %s261, 2
        %s265 = sadd.s32 %s263, %s264
        %s266 = smul.addr %s265, 8
        %s267 = scalar_lea.vmem %s1, %s266
        %s268 = smul.u32 2, %s21
      $region40: #{dgcnn_cls_forward.6} parent=31 // pred_fallthru
        _
      // Predicated region
      $region41: #{dgcnn_cls_forward.6} parent=31 // pred_check
        %p269 = pneg %p99
      $region42: #{dgcnn_cls_forward.6} parent=31 // pred_check_branch
        %271 = sbr.rel (%p269) target = $region44
      $region43: #{dgcnn_cls_forward.6} parent=31 // pred_region
        %p272 = scmp.lt.s32.totalorder %s20, 1
        %s273 = scalar_select %p272, %s20, 1
        %s274 = scalar_lea.vmem %s2, %s273
      $region44: #{dgcnn_cls_forward.6} parent=31 // pred_fallthru
        _
    $region32: #{dgcnn_cls_forward.6} parent=5 // pred_fallthru
      _
    %p275 = scmp.le.s32.totalorder 1, %s13
    %p276 = scmp.lt.s32.totalorder %s13, 3
    %p277 = pnand %p275, %p276
    %p278 = pneg %p277
    // Predicated region
    $region45: #{dgcnn_cls_forward.6} parent=5 // pred_check
      _
    $region46: #{dgcnn_cls_forward.6} parent=5 // pred_check_branch
      %280 = sbr.rel (%p277) target = $region48
    $region47: #{dgcnn_cls_forward.6} parent=5 // pred_region
      %s281 = ssub.s32 %s13, 1
      %p282 = scmp.lt.s32.totalorder %s22, 1
      %s283 = scalar_select %p282, %s22, 1
      %s284 = smul.addr %s283, 2
      %s285 = smul.addr %s284, 8
      %s286 = scalar_lea.vmem %s0, %s285
      %p287 = pneg %p51
      %p288 = pneg %p48
      %s289 = smul.u32 2, %s23
      %p290 = scmp.lt.s32.totalorder %s22, 1
      %s291 = scalar_select %p290, %s22, 1
      %p292 = scmp.lt.s32.totalorder %s289, 1
      %s293 = scalar_select %p292, %s289, 1
      %s294 = smul.addr %s291, 2
      %s295 = sadd.s32 %s293, %s294
      %s296 = smul.addr %s295, 8
      %s297 = scalar_lea.vmem %s1, %s296
      %p298 = pneg %p79
      %p299 = pneg %p76
      %p300 = scmp.lt.s32.totalorder %s22, 1
      %s301 = scalar_select %p300, %s22, 1
      %s302 = scalar_lea.vmem %s2, %s301
      %p303 = pneg %p105
      %p304 = pneg %p102
      %p305 = pneg %p126
      %p306 = pneg %p123
      %p307 = pneg %p147
      %p308 = pneg %p144
      %p309 = pneg %p168
      %p310 = pneg %p165
      %p311 = pneg %p189
      %p312 = pneg %p186
      %p313 = pneg %p217
      %p314 = pneg %p214
      %s315 = smul.u32 2, %s23
      %p316 = scmp.lt.s32.totalorder %s22, 1
      %s317 = scalar_select %p316, %s22, 1
      %p318 = scmp.lt.s32.totalorder %s315, 1
      %s319 = scalar_select %p318, %s315, 1
      %s320 = smul.addr %s317, 2
      %s321 = sadd.s32 %s319, %s320
      %s322 = smul.addr %s321, 4
      %s323 = scalar_lea.vmem %s7, %s322
      %p324 = scmp.lt.s32.totalorder %s22, 1
      %s325 = scalar_select %p324, %s22, 1
      %s326 = smul.addr %s325, 2
      %s327 = smul.addr %s326, 8
      %s328 = scalar_lea.vmem %s0, %s327
      %s329 = smul.u32 2, %s23
      %p330 = scmp.lt.s32.totalorder %s22, 1
      %s331 = scalar_select %p330, %s22, 1
      %p332 = scmp.lt.s32.totalorder %s329, 1
      %s333 = scalar_select %p332, %s329, 1
      %s334 = smul.addr %s331, 2
      %s335 = sadd.s32 %s333, %s334
      %s336 = smul.addr %s335, 8
      %s337 = scalar_lea.vmem %s1, %s336
      %s338 = smul.u32 2, %s23
      %p339 = scmp.lt.s32.totalorder %s22, 1
      %s340 = scalar_select %p339, %s22, 1
      %s341 = scalar_lea.vmem %s2, %s340
      %s342 = smul.u32 2, %s23
      %p343 = scmp.lt.s32.totalorder %s22, 1
      %s344 = scalar_select %p343, %s22, 1
      %p345 = scmp.lt.s32.totalorder %s342, 1
      %s346 = scalar_select %p345, %s342, 1
      %s347 = smul.addr %s344, 2
      %s348 = sadd.s32 %s346, %s347
      %s349 = smul.addr %s348, 4
      %s350 = scalar_lea.vmem %s7, %s349
      %s351 = smul.u32 2, %s23
      %v353 = vld [vmem:[%s328] sm:$0xff]
      %v354 = vld [vmem:[%s328 + $0x8] sm:$0xff]
      %v355 = vld [vmem:[%s337] sm:$0xff]
      %v356 = vld [vmem:[%s337 + $0x8] sm:$0xff]
      %vm357 = vcmask 64512
      %v359 = vsel %vm357, %v355, 0
      %v362 = vsel %vm357, %v356, 0
      %v365 = vsel %vm357, %v353, 0
      %v368 = vsel %vm357, %v354, 0
      %370 = vmatpush.xpose.msra.mxu0 0.0
      %371 = vmatpush.xpose.msra.mxu0 0.0
      %372 = vmatpush.xpose.msra.mxu0 0.0
      %373 = vmatpush.xpose.msra.mxu0 0.0
      %374 = vmatpush.xpose.msra.mxu0 0.0
      %375 = vmatpush.xpose.msra.mxu0 0.0
      %376 = vmatpush.xpose.msra.mxu0 0.0
      %377 = vmatpush.xpose.msra.mxu0 0.0
      %378 = vmatpush.xpose.msra.mxu0 0.0
      %379 = vmatpush.xpose.msra.mxu0 0.0
      %380 = vmatpush.xpose.msra.mxu0 0.0
      %381 = vmatpush.xpose.msra.mxu0 0.0
      %382 = vmatpush.xpose.msra.mxu0 0.0
      %383 = vmatpush.xpose.msra.mxu0 0.0
      %384 = vmatpush.xpose.msra.mxu0 %v368
      %385 = vmatpush.xpose.msra.mxu0 %v365
      %386 = vmatmul.f32.gmra.mxu0 %v359
      %v387 = vpop.f32.mrf.mxu0
      %v388 = vadd.f32 0.0, %v387
      %389 = vmatmul.f32.gmra.mxu0 %v362
      %v390 = vpop.f32.mrf.mxu0
      %v391 = vadd.f32 0.0, %v390
      %392 = vdwg.mxu0
      %v393 = vmul.f32 %v355, %v355
      %v394 = vmul.f32 %v356, %v356
      %v395 = vsel %vm357, %v393, 0.0
      %396 = vadd.xlane.f32.xlu0 %v395
      %v397 = vpop.xlane.xlu0 %396
      %v398 = vsel %vm357, %v394, 0.0
      %399 = vadd.xlane.f32.xlu0 %v398
      %v400 = vpop.xlane.xlu0 %399
      %v401 = vmul.f32 %v388, 2.0
      %v402 = vmul.f32 %v391, 2.0
      %v403 = vsub.f32 %v401, %v397
      %v404 = vsub.f32 %v402, %v400
      %v405 = vld [vmem:[%s341] sm:$0x1]
      %v407 = vperm.slane %v405, 0
      %v409 = vsub.f32 %v403, %v407
      %v410 = vsub.f32 %v404, %v407
      %vm413 = vcmp.lt.s32.totalorder %v409, 0
      %vm414 = vcmp.lt.s32.totalorder %v410, 0
      %v415 = vxor.u32 %v409, 2147483647
      %v416 = vxor.u32 %v410, 2147483647
      %v417 = vsel %vm413, %v415, %v409
      %v418 = vsel %vm414, %v416, %v410
      %v419 = vlaneseq
      %v420 = vand.u32 %v419, 127
      %v421 = vand.u32 %v417, 4294967280
      %v422 = vand.u32 %v418, 4294967280
      %v423 = vor.u32 %v421, %v420
      %v424 = vor.u32 %v422, %v420
      %vm425 = vcmask 130048
      %v426 = vsel %vm425, %v423, 2147483648
      %v427 = vand.u32 %v426, 65535
      %v428 = vshra.s32 %v426, 16
      %v429 = vcvt.s32.f32 %v427
      %v430 = vcvt.s32.f32 %v428
      %431 = vmax.xlane.f32.xlu0 %v430
      %v432 = vpop.xlane.xlu0 %431
      %vm433 = vcmp.eq.f32.partialorder %v430, %v432
      %v434 = vsel %vm433, %v429, -inf
      %435 = vmax.xlane.f32.xlu0 %v434
      %v436 = vpop.xlane.xlu0 %435
      %v437 = vcvt.f32.s32 %v436
      %v438 = vcvt.f32.s32 %v432
      %v439 = vshll.u32 %v438, 16
      %v440 = vadd.s32 %v439, %v437
      %v441 = vsel %vm425, %v424, 2147483648
      %v442 = vand.u32 %v441, 65535
      %v443 = vshra.s32 %v441, 16
      %v444 = vcvt.s32.f32 %v442
      %v445 = vcvt.s32.f32 %v443
      %446 = vmax.xlane.f32.xlu0 %v445
      %v447 = vpop.xlane.xlu0 %446
      %vm448 = vcmp.eq.f32.partialorder %v445, %v447
      %v449 = vsel %vm448, %v444, -inf
      %450 = vmax.xlane.f32.xlu0 %v449
      %v451 = vpop.xlane.xlu0 %450
      %v452 = vcvt.f32.s32 %v451
      %v453 = vcvt.f32.s32 %v447
      %v454 = vshll.u32 %v453, 16
      %v455 = vadd.s32 %v454, %v452
      %v456 = vand.u32 %v440, 15
      %v457 = vand.u32 %v455, 15
      %vm458 = vcmp.eq.s32.totalorder %v423, %v440
      %vm459 = vcmp.eq.s32.totalorder %v424, %v455
      %v460 = vsel %vm458, 2147483648, %v423
      %v461 = vsel %vm459, 2147483648, %v424
      %v462 = vsel %vm425, %v460, 2147483648
      %v463 = vand.u32 %v462, 65535
      %v464 = vshra.s32 %v462, 16
      %v465 = vcvt.s32.f32 %v463
      %v466 = vcvt.s32.f32 %v464
      %467 = vmax.xlane.f32.xlu0 %v466
      %v468 = vpop.xlane.xlu0 %467
      %vm469 = vcmp.eq.f32.partialorder %v466, %v468
      %v470 = vsel %vm469, %v465, -inf
      %471 = vmax.xlane.f32.xlu0 %v470
      %v472 = vpop.xlane.xlu0 %471
      %v473 = vcvt.f32.s32 %v472
      %v474 = vcvt.f32.s32 %v468
      %v475 = vshll.u32 %v474, 16
      %v476 = vadd.s32 %v475, %v473
      %v477 = vsel %vm425, %v461, 2147483648
      %v478 = vand.u32 %v477, 65535
      %v479 = vshra.s32 %v477, 16
      %v480 = vcvt.s32.f32 %v478
      %v481 = vcvt.s32.f32 %v479
      %482 = vmax.xlane.f32.xlu0 %v481
      %v483 = vpop.xlane.xlu0 %482
      %vm484 = vcmp.eq.f32.partialorder %v481, %v483
      %v485 = vsel %vm484, %v480, -inf
      %486 = vmax.xlane.f32.xlu0 %v485
      %v487 = vpop.xlane.xlu0 %486
      %v488 = vcvt.f32.s32 %v487
      %v489 = vcvt.f32.s32 %v483
      %v490 = vshll.u32 %v489, 16
      %v491 = vadd.s32 %v490, %v488
      %v492 = vand.u32 %v476, 15
      %v493 = vand.u32 %v491, 15
      %vm494 = vcmp.eq.s32.totalorder %v460, %v476
      %vm495 = vcmp.eq.s32.totalorder %v461, %v491
      %v496 = vsel %vm494, 2147483648, %v460
      %v497 = vsel %vm495, 2147483648, %v461
      %v498 = vsel %vm425, %v496, 2147483648
      %v499 = vand.u32 %v498, 65535
      %v500 = vshra.s32 %v498, 16
      %v501 = vcvt.s32.f32 %v499
      %v502 = vcvt.s32.f32 %v500
      %503 = vmax.xlane.f32.xlu0 %v502
      %v504 = vpop.xlane.xlu0 %503
      %vm505 = vcmp.eq.f32.partialorder %v502, %v504
      %v506 = vsel %vm505, %v501, -inf
      %507 = vmax.xlane.f32.xlu0 %v506
      %v508 = vpop.xlane.xlu0 %507
      %v509 = vcvt.f32.s32 %v508
      %v510 = vcvt.f32.s32 %v504
      %v511 = vshll.u32 %v510, 16
      %v512 = vadd.s32 %v511, %v509
      %v513 = vsel %vm425, %v497, 2147483648
      %v514 = vand.u32 %v513, 65535
      %v515 = vshra.s32 %v513, 16
      %v516 = vcvt.s32.f32 %v514
      %v517 = vcvt.s32.f32 %v515
      %518 = vmax.xlane.f32.xlu0 %v517
      %v519 = vpop.xlane.xlu0 %518
      %vm520 = vcmp.eq.f32.partialorder %v517, %v519
      %v521 = vsel %vm520, %v516, -inf
      %522 = vmax.xlane.f32.xlu0 %v521
      %v523 = vpop.xlane.xlu0 %522
      %v524 = vcvt.f32.s32 %v523
      %v525 = vcvt.f32.s32 %v519
      %v526 = vshll.u32 %v525, 16
      %v527 = vadd.s32 %v526, %v524
      %v528 = vand.u32 %v512, 15
      %v529 = vand.u32 %v527, 15
      %vm530 = vcmp.eq.s32.totalorder %v496, %v512
      %vm531 = vcmp.eq.s32.totalorder %v497, %v527
      %v532 = vsel %vm530, 2147483648, %v496
      %v533 = vsel %vm531, 2147483648, %v497
      %v534 = vsel %vm425, %v532, 2147483648
      %v535 = vand.u32 %v534, 65535
      %v536 = vshra.s32 %v534, 16
      %v537 = vcvt.s32.f32 %v535
      %v538 = vcvt.s32.f32 %v536
      %539 = vmax.xlane.f32.xlu0 %v538
      %v540 = vpop.xlane.xlu0 %539
      %vm541 = vcmp.eq.f32.partialorder %v538, %v540
      %v542 = vsel %vm541, %v537, -inf
      %543 = vmax.xlane.f32.xlu0 %v542
      %v544 = vpop.xlane.xlu0 %543
      %v545 = vcvt.f32.s32 %v544
      %v546 = vcvt.f32.s32 %v540
      %v547 = vshll.u32 %v546, 16
      %v548 = vadd.s32 %v547, %v545
      %v549 = vsel %vm425, %v533, 2147483648
      %v550 = vand.u32 %v549, 65535
      %v551 = vshra.s32 %v549, 16
      %v552 = vcvt.s32.f32 %v550
      %v553 = vcvt.s32.f32 %v551
      %554 = vmax.xlane.f32.xlu0 %v553
      %v555 = vpop.xlane.xlu0 %554
      %vm556 = vcmp.eq.f32.partialorder %v553, %v555
      %v557 = vsel %vm556, %v552, -inf
      %558 = vmax.xlane.f32.xlu0 %v557
      %v559 = vpop.xlane.xlu0 %558
      %v560 = vcvt.f32.s32 %v559
      %v561 = vcvt.f32.s32 %v555
      %v562 = vshll.u32 %v561, 16
      %v563 = vadd.s32 %v562, %v560
      %v564 = vand.u32 %v548, 15
      %v565 = vand.u32 %v563, 15
      %v566 = vpack.c.bf16 %v354, %v353
      %vm567 = vcmp.eq.s32.totalorder %v420, %v456
      %vm568 = vcmp.eq.s32.totalorder %v420, %v457
      %v569 = vsel %vm567, 1, 0
      %v570 = vsel %vm568, 1, 0
      %v571 = vcvt.s32.f32 %v569
      %v572 = vcvt.s32.f32 %v570
      %v573 = vpack.c.bf16 %v572, %v571
      %v575 = vsel %vm425, %v573, 0
      %577 = vmatpush.bf16.msra.mxu0 0
      %578 = vmatpush.bf16.msra.mxu0 0
      %579 = vmatpush.bf16.msra.mxu0 0
      %580 = vmatpush.bf16.msra.mxu0 0
      %581 = vmatpush.bf16.msra.mxu0 0
      %582 = vmatpush.bf16.msra.mxu0 0
      %583 = vmatpush.bf16.msra.mxu0 0
      %584 = vmatpush.bf16.msra.mxu0 %v566
      %585 = vmatmul.bf16.gmra.mxu0 %v575
      %v586 = vpop.f32.mrf.mxu0
      %v587 = vadd.f32 0.0, %v586
      %v588 = vpop.f32.mrf.mxu0
      %v589 = vadd.f32 0.0, %v588
      %590 = vdwg.mxu0
      %v591 = vpack.c.bf16 %v589, %v587
      %v592 = vld [vmem:[%s3] sm:$0xf]
      %v594 = vsel %vm357, %v591, 0
      %vm596 = vcmask 1043456
      %v598 = vsel %vm596, %v592, 0
      %600 = vmatpush.bf16.msra.mxu0 0
      %601 = vmatpush.bf16.msra.mxu0 0
      %602 = vmatpush.bf16.msra.mxu0 0
      %603 = vmatpush.bf16.msra.mxu0 0
      %604 = vmatpush.bf16.msra.mxu0 0
      %605 = vmatpush.bf16.msra.mxu0 0
      %606 = vmatpush.bf16.msra.mxu0 0
      %607 = vmatpush.bf16.msra.mxu0 %v598
      %608 = vmatmul.bf16.gmra.mxu0 %v594
      %v609 = vpop.f32.mrf.mxu0
      %v610 = vadd.f32 0.0, %v609
      %v611 = vpop.f32.mrf.mxu0
      %v612 = vadd.f32 0.0, %v611
      %613 = vdwg.mxu0
      %vm614 = vcmp.eq.s32.totalorder %v420, %v492
      %vm615 = vcmp.eq.s32.totalorder %v420, %v493
      %v616 = vsel %vm614, 1, 0
      %v617 = vsel %vm615, 1, 0
      %v618 = vcvt.s32.f32 %v616
      %v619 = vcvt.s32.f32 %v617
      %v620 = vpack.c.bf16 %v619, %v618
      %v622 = vsel %vm425, %v620, 0
      %624 = vmatpush.bf16.msra.mxu0 0
      %625 = vmatpush.bf16.msra.mxu0 0
      %626 = vmatpush.bf16.msra.mxu0 0
      %627 = vmatpush.bf16.msra.mxu0 0
      %628 = vmatpush.bf16.msra.mxu0 0
      %629 = vmatpush.bf16.msra.mxu0 0
      %630 = vmatpush.bf16.msra.mxu0 0
      %631 = vmatpush.bf16.msra.mxu0 %v566
      %632 = vmatmul.bf16.gmra.mxu0 %v622
      %v633 = vpop.f32.mrf.mxu0
      %v634 = vadd.f32 0.0, %v633
      %v635 = vpop.f32.mrf.mxu0
      %v636 = vadd.f32 0.0, %v635
      %637 = vdwg.mxu0
      %v638 = vpack.c.bf16 %v636, %v634
      %v640 = vsel %vm357, %v638, 0
      %642 = vmatpush.bf16.msra.mxu0 0
      %643 = vmatpush.bf16.msra.mxu0 0
      %644 = vmatpush.bf16.msra.mxu0 0
      %645 = vmatpush.bf16.msra.mxu0 0
      %646 = vmatpush.bf16.msra.mxu0 0
      %647 = vmatpush.bf16.msra.mxu0 0
      %648 = vmatpush.bf16.msra.mxu0 0
      %649 = vmatpush.bf16.msra.mxu0 %v598
      %650 = vmatmul.bf16.gmra.mxu0 %v640
      %v651 = vpop.f32.mrf.mxu0
      %v652 = vadd.f32 0.0, %v651
      %v653 = vpop.f32.mrf.mxu0
      %v654 = vadd.f32 0.0, %v653
      %655 = vdwg.mxu0
      %v656 = vmax.f32 %v610, %v652
      %v657 = vmax.f32 %v612, %v654
      %v658 = vmin.f32 %v610, %v652
      %v659 = vmin.f32 %v612, %v654
      %vm660 = vcmp.eq.s32.totalorder %v420, %v528
      %vm661 = vcmp.eq.s32.totalorder %v420, %v529
      %v662 = vsel %vm660, 1, 0
      %v663 = vsel %vm661, 1, 0
      %v664 = vcvt.s32.f32 %v662
      %v665 = vcvt.s32.f32 %v663
      %v666 = vpack.c.bf16 %v665, %v664
      %v668 = vsel %vm425, %v666, 0
      %670 = vmatpush.bf16.msra.mxu0 0
      %671 = vmatpush.bf16.msra.mxu0 0
      %672 = vmatpush.bf16.msra.mxu0 0
      %673 = vmatpush.bf16.msra.mxu0 0
      %674 = vmatpush.bf16.msra.mxu0 0
      %675 = vmatpush.bf16.msra.mxu0 0
      %676 = vmatpush.bf16.msra.mxu0 0
      %677 = vmatpush.bf16.msra.mxu0 %v566
      %678 = vmatmul.bf16.gmra.mxu0 %v668
      %v679 = vpop.f32.mrf.mxu0
      %v680 = vadd.f32 0.0, %v679
      %v681 = vpop.f32.mrf.mxu0
      %v682 = vadd.f32 0.0, %v681
      %683 = vdwg.mxu0
      %v684 = vpack.c.bf16 %v682, %v680
      %v686 = vsel %vm357, %v684, 0
      %688 = vmatpush.bf16.msra.mxu0 0
      %689 = vmatpush.bf16.msra.mxu0 0
      %690 = vmatpush.bf16.msra.mxu0 0
      %691 = vmatpush.bf16.msra.mxu0 0
      %692 = vmatpush.bf16.msra.mxu0 0
      %693 = vmatpush.bf16.msra.mxu0 0
      %694 = vmatpush.bf16.msra.mxu0 0
      %695 = vmatpush.bf16.msra.mxu0 %v598
      %696 = vmatmul.bf16.gmra.mxu0 %v686
      %v697 = vpop.f32.mrf.mxu0
      %v698 = vadd.f32 0.0, %v697
      %v699 = vpop.f32.mrf.mxu0
      %v700 = vadd.f32 0.0, %v699
      %701 = vdwg.mxu0
      %v702 = vmax.f32 %v656, %v698
      %v703 = vmax.f32 %v657, %v700
      %v704 = vmin.f32 %v658, %v698
      %v705 = vmin.f32 %v659, %v700
      %vm706 = vcmp.eq.s32.totalorder %v420, %v564
      %vm707 = vcmp.eq.s32.totalorder %v420, %v565
      %v708 = vsel %vm706, 1, 0
      %v709 = vsel %vm707, 1, 0
      %v710 = vcvt.s32.f32 %v708
      %v711 = vcvt.s32.f32 %v709
      %v712 = vpack.c.bf16 %v711, %v710
      %v714 = vsel %vm425, %v712, 0
      %716 = vmatpush.bf16.msra.mxu0 0
      %717 = vmatpush.bf16.msra.mxu0 0
      %718 = vmatpush.bf16.msra.mxu0 0
      %719 = vmatpush.bf16.msra.mxu0 0
      %720 = vmatpush.bf16.msra.mxu0 0
      %721 = vmatpush.bf16.msra.mxu0 0
      %722 = vmatpush.bf16.msra.mxu0 0
      %723 = vmatpush.bf16.msra.mxu0 %v566
      %724 = vmatmul.bf16.gmra.mxu0 %v714
      %v725 = vpop.f32.mrf.mxu0
      %v726 = vadd.f32 0.0, %v725
      %v727 = vpop.f32.mrf.mxu0
      %v728 = vadd.f32 0.0, %v727
      %729 = vdwg.mxu0
      %v730 = vpack.c.bf16 %v728, %v726
      %v732 = vsel %vm357, %v730, 0
      %734 = vmatpush.bf16.msra.mxu0 0
      %735 = vmatpush.bf16.msra.mxu0 0
      %736 = vmatpush.bf16.msra.mxu0 0
      %737 = vmatpush.bf16.msra.mxu0 0
      %738 = vmatpush.bf16.msra.mxu0 0
      %739 = vmatpush.bf16.msra.mxu0 0
      %740 = vmatpush.bf16.msra.mxu0 0
      %741 = vmatpush.bf16.msra.mxu0 %v598
      %742 = vmatmul.bf16.gmra.mxu0 %v732
      %v743 = vpop.f32.mrf.mxu0
      %v744 = vadd.f32 0.0, %v743
      %v745 = vpop.f32.mrf.mxu0
      %v746 = vadd.f32 0.0, %v745
      %747 = vdwg.mxu0
      %v748 = vmax.f32 %v702, %v744
      %v749 = vmax.f32 %v703, %v746
      %v750 = vmin.f32 %v704, %v744
      %v751 = vmin.f32 %v705, %v746
      %v752 = vpack.c.bf16 %v356, %v355
      %v753 = vld [vmem:[%s4] sm:$0xf]
      %v755 = vsel %vm357, %v752, 0
      %v758 = vsel %vm596, %v753, 0
      %760 = vmatpush.bf16.msra.mxu0 0
      %761 = vmatpush.bf16.msra.mxu0 0
      %762 = vmatpush.bf16.msra.mxu0 0
      %763 = vmatpush.bf16.msra.mxu0 0
      %764 = vmatpush.bf16.msra.mxu0 0
      %765 = vmatpush.bf16.msra.mxu0 0
      %766 = vmatpush.bf16.msra.mxu0 0
      %767 = vmatpush.bf16.msra.mxu0 %v758
      %768 = vmatmul.bf16.gmra.mxu0 %v755
      %v769 = vpop.f32.mrf.mxu0
      %v770 = vadd.f32 0.0, %v769
      %v771 = vpop.f32.mrf.mxu0
      %v772 = vadd.f32 0.0, %v771
      %773 = vdwg.mxu0
      %v774 = vld [vmem:[%s5] sm:$0x1]
      %v775 = vld [vmem:[%s6] sm:$0x1]
      %vm776 = vcmp.gt.f32.partialorder %v774, 0.0
      %v777 = vsel %vm776, 1, 0
      %v778 = vperm.slane %v777, 0
      %vm779 = vcmp.eq.s32.totalorder %v778, 1
      %v780 = vsel %vm779, %v748, %v750
      %v781 = vsel %vm779, %v749, %v751
      %v782 = vadd.f32 %v780, %v770
      %v783 = vadd.f32 %v781, %v772
      %v785 = vperm.slane %v774, 0
      %v787 = vmul.f32 %v782, %v785
      %v788 = vmul.f32 %v783, %v785
      %v790 = vperm.slane %v775, 0
      %v792 = vadd.f32 %v787, %v790
      %v793 = vadd.f32 %v788, %v790
      %vm794 = vcmp.gt.f32.partialorder %v792, 0.0
      %vm795 = vcmp.gt.f32.partialorder %v793, 0.0
      %v796 = vmul.f32 %v792, 0.2
      %v797 = vmul.f32 %v793, 0.2
      %v798 = vsel %vm794, %v792, %v796
      %v799 = vsel %vm795, %v793, %v797
      %v800 = vpack.c.bf16 %v798, %v798
      %v801 = vpack.c.bf16 %v799, %v799
      %vm802 = vcmask 519168
      %803 = vst.msk [vmem:[%s350] sm:$0xf] %vm802, %v800
      %804 = vst.msk [vmem:[%s350 + $0x4] sm:$0xf] %vm802, %v801
      %s805 = smul.u32 2, %s23
      %p806 = scmp.lt.s32.totalorder %s22, 1
      %s807 = scalar_select %p806, %s22, 1
      %p808 = scmp.lt.s32.totalorder %s805, 1
      %s809 = scalar_select %p808, %s805, 1
      %s810 = smul.addr %s807, 2
      %s811 = sadd.s32 %s809, %s810
      %s812 = smul.addr %s811, 4
      %s813 = scalar_lea.vmem %s7, %s812
      // Predicated region
      $region49: #{dgcnn_cls_forward.6} parent=47 // pred_check
        %p814 = pneg %p214
      $region50: #{dgcnn_cls_forward.6} parent=47 // pred_check_branch
        %816 = sbr.rel (%p814) target = $region52
      $region51: #{dgcnn_cls_forward.6} parent=47 // pred_region
        %s817 = smul.u32 2, %s23
      $region52: #{dgcnn_cls_forward.6} parent=47 // pred_fallthru
        _
    $region48: #{dgcnn_cls_forward.6} parent=5 // pred_fallthru
      _
    %p818 = scmp.le.s32.totalorder 2, %s13
    // Predicated region
    $region53: #{dgcnn_cls_forward.6} parent=5 // pred_check
      %p819 = pneg %p818
    $region54: #{dgcnn_cls_forward.6} parent=5 // pred_check_branch
      %821 = sbr.rel (%p819) target = $region56
    $region55: #{dgcnn_cls_forward.6} parent=5 // pred_region
      %s822 = ssub.s32 %s13, 2
      // Predicated region
      $region57: #{dgcnn_cls_forward.6} parent=55 // pred_check
        %p823 = pneg %p220
      $region58: #{dgcnn_cls_forward.6} parent=55 // pred_check_branch
        %825 = sbr.rel (%p823) target = $region60
      $region59: #{dgcnn_cls_forward.6} parent=55 // pred_region
        %s826 = smul.u32 2, %s25
        %p827 = scmp.lt.s32.totalorder %s24, 1
        %s828 = scalar_select %p827, %s24, 1
        %p829 = scmp.lt.s32.totalorder %s826, 1
        %s830 = scalar_select %p829, %s826, 1
        %s831 = smul.addr %s828, 2
        %s832 = sadd.s32 %s830, %s831
        %s833 = smul.addr %s832, 4
        %s834 = scalar_lea.vmem %s7, %s833
      $region60: #{dgcnn_cls_forward.6} parent=55 // pred_fallthru
        _
    $region56: #{dgcnn_cls_forward.6} parent=5 // pred_fallthru
      _
  $region6: #{dgcnn_cls_forward.6} parent=0 // loop_footer
    %s17 = sadd.s32 1, %s13
  $region7: #{dgcnn_cls_forward.6} parent=0 // loop_footer_branch
    %12 = sbr.rel target = $region3
  $region8: #{dgcnn_cls_forward.6} parent=0 // loop_exit
    _

// kernel: dgcnn_cls_forward.8
$region0: #{dgcnn_cls_forward.8}
  #allocation0 [shape = 'u32[]', space=smem, size = 0x4, offset = 0x4, fixed_abs, tag = 'smem constant byte address 0x4 - core index']
  #allocation1 [shape = 'u32[72,128]{1,0:T(1,128)}', space=vmem, size = 0x9000, scoped, tag = 'internal scratch']
  %s0 = inlined_call_operand.vmem [shape: bf16[2,16,64], index: 0, kind: input, shape index: {}, may-alias: {0,1}]
  %s1 = inlined_call_operand.vmem [shape: bf16[2,16,64], index: 1, kind: input, shape index: {}, may-alias: {0,1}]
  %s2 = inlined_call_operand.vmem [shape: f32[2,1,16], index: 2, kind: input, shape index: {}]
  %s3 = inlined_call_operand.hbm [shape: bf16[64,128], index: 3, kind: input, shape index: {}]
  %s4 = inlined_call_operand.hbm [shape: bf16[64,128], index: 4, kind: input, shape index: {}]
  %s5 = inlined_call_operand.hbm [shape: f32[1,128], index: 5, kind: input, shape index: {}]
  %s6 = inlined_call_operand.hbm [shape: f32[1,128], index: 6, kind: input, shape index: {}]
  %s7 = inlined_call_operand.vmem [shape: bf16[2,16,128], index: 7, kind: output, shape index: {}]
  %s8 = sld [smem:[#allocation0]]
  $region77: #{dgcnn_cls_forward.8} parent=0
    _
  %s10 = ssub.s32 1, %s8
  %s11 = scalar_select 0, %s10, %s8
  $region1: #{dgcnn_cls_forward.8} parent=0
    #allocation2 [shape = 'u8[16384]{0}', space=vmem, size = 0x4000, scoped, tag = 'input window, operand 3, single buffered']
    #allocation3 [shape = 's32[2]{0}', space=sflag, size = 0x8, scoped, tag = 'scoped memory for dgcnn_cls_forward.8']
    #allocation4 [shape = 'u8[16384]{0}', space=vmem, size = 0x4000, scoped, tag = 'input window, operand 4, single buffered']
    #allocation5 [shape = 's32[1]{0}', space=sflag, size = 0x4, scoped, tag = 'scoped memory for dgcnn_cls_forward.8']
    #allocation6 [shape = 'u8[512]{0}', space=vmem, size = 0x400, scoped, tag = 'input window, operand 5, single buffered']
    #allocation7 [shape = 'u8[512]{0}', space=vmem, size = 0x400, scoped, tag = 'input window, operand 6, single buffered']
    #allocation8 [shape = 's32[1]{0}', space=sflag, size = 0x4, scoped, tag = 'scoped memory for dgcnn_cls_forward.8']
    %12 = vsyncpa [#allocation3], 0
    %13 = vsyncpa [#allocation5], 0
    %14 = vsyncpa [#allocation8], 0
    loop: start=0, step=1, limit=4
    $region2: #{dgcnn_cls_forward.8} parent=1 // loop_pre_header
      _
    $region3: #{dgcnn_cls_forward.8} parent=1 // loop_header
      %s16 = sphi 0, %s20
      %p17 = scmp.ge.s32.totalorder %s16, 4
      %s23 = sphi 0, %s35
      %s24 = sphi 0, %s31
      %s25 = sphi 0, %s23
      %s26 = sphi 0, %s24
      %s27 = sphi 0, %s25
      %s28 = sphi 0, %s26
      %s38 = sphi 0, %s40
      %s41 = sphi 0, %s38
      %s42 = sphi 0, %s41
      %s58 = sphi 0, %s42
      %s66 = sphi 0, %s68
      %s69 = sphi 0, %s66
      %s70 = sphi 0, %s69
      %s86 = sphi 0, %s70
      %s92 = sphi 0, %s94
      %s95 = sphi 0, %s92
      %s96 = sphi 0, %s95
      %s112 = sphi 0, %s96
      %s116 = sphi 0, %s116
      %s118 = sphi 0, %s116
      %s119 = sphi 0, %s118
      %s133 = sphi 0, %s119
      %s137 = sphi 0, %s137
      %s139 = sphi 0, %s137
      %s140 = sphi 0, %s139
      %s154 = sphi 0, %s140
      %s158 = sphi 0, %s158
      %s160 = sphi 0, %s158
      %s161 = sphi 0, %s160
      %s175 = sphi 0, %s161
      %s179 = sphi 0, %s179
      %s181 = sphi 0, %s179
      %s182 = sphi 0, %s181
      %s196 = sphi 0, %s182
      %s204 = sphi 0, %s206
      %s207 = sphi 0, %s204
      %s208 = sphi 0, %s207
      %s224 = sphi 0, %s208
    $region4: #{dgcnn_cls_forward.8} parent=1 // loop_header_branch
      %19 = sbr.rel (%p17) target = $region8
    $region5: #{dgcnn_cls_forward.8} parent=1 // loop_body
      %s21 = ssub.s32 %s16, 1
      %s22 = ssub.s32 %s16, 2
      %s29 = sadd.s32 1, %s24
      %p30 = scmp.ge.s32.totalorder %s29, 1
      %s31 = scalar_select %p30, 0, %s29
      %s32 = sadd.s32 1, %s23
      %s33 = scalar_select %p30, %s32, %s23
      %p34 = scmp.ge.s32.totalorder %s33, 2
      %s35 = scalar_select %p34, 0, %s33
      %s36 = ssub.s32 %s23, %s35
      %p37 = scmp.eq.s32.totalorder %s36, 0
      %s39 = sadd.s32 %s38, 1
      %s40 = scalar_select %p37, %s38, %s39
      %p43 = pneg %p37
      %p44 = scmp.eq.s32.totalorder %s16, 1
      %p45 = por %p43, %p44
      %p46 = scmp.ne.s32.totalorder %s38, %s41
      %p47 = scmp.eq.s32.totalorder %s16, 0
      %p48 = por %p46, %p47
      %p49 = scmp.ne.s32.totalorder %s38, %s41
      %p50 = scmp.eq.s32.totalorder %s21, 1
      %p51 = por %p49, %p50
      %p52 = scmp.ne.s32.totalorder %s41, %s42
      %p53 = scmp.eq.s32.totalorder %s21, 0
      %p54 = por %p52, %p53
      %p55 = scmp.ne.s32.totalorder %s41, %s42
      %p56 = scmp.eq.s32.totalorder %s22, 1
      %p57 = por %p55, %p56
      %p59 = scmp.ne.s32.totalorder %s42, %s58
      %p60 = scmp.eq.s32.totalorder %s22, 0
      %p61 = por %p59, %p60
      %s62 = ssub.s32 %s23, %s35
      %s63 = ssub.s32 %s24, %s31
      %s64 = sor.u32 %s62, %s63
      %p65 = scmp.eq.s32.totalorder %s64, 0
      %s67 = sadd.s32 %s66, 1
      %s68 = scalar_select %p65, %s66, %s67
      %p71 = pneg %p65
      %p72 = scmp.eq.s32.totalorder %s16, 1
      %p73 = por %p71, %p72
      %p74 = scmp.ne.s32.totalorder %s66, %s69
      %p75 = scmp.eq.s32.totalorder %s16, 0
      %p76 = por %p74, %p75
      %p77 = scmp.ne.s32.totalorder %s66, %s69
      %p78 = scmp.eq.s32.totalorder %s21, 1
      %p79 = por %p77, %p78
      %p80 = scmp.ne.s32.totalorder %s69, %s70
      %p81 = scmp.eq.s32.totalorder %s21, 0
      %p82 = por %p80, %p81
      %p83 = scmp.ne.s32.totalorder %s69, %s70
      %p84 = scmp.eq.s32.totalorder %s22, 1
      %p85 = por %p83, %p84
      %p87 = scmp.ne.s32.totalorder %s70, %s86
      %p88 = scmp.eq.s32.totalorder %s22, 0
      %p89 = por %p87, %p88
      %s90 = ssub.s32 %s23, %s35
      %p91 = scmp.eq.s32.totalorder %s90, 0
      %s93 = sadd.s32 %s92, 1
      %s94 = scalar_select %p91, %s92, %s93
      %p97 = pneg %p91
      %p98 = scmp.eq.s32.totalorder %s16, 1
      %p99 = por %p97, %p98
      %p100 = scmp.ne.s32.totalorder %s92, %s95
      %p101 = scmp.eq.s32.totalorder %s16, 0
      %p102 = por %p100, %p101
      %p103 = scmp.ne.s32.totalorder %s92, %s95
      %p104 = scmp.eq.s32.totalorder %s21, 1
      %p105 = por %p103, %p104
      %p106 = scmp.ne.s32.totalorder %s95, %s96
      %p107 = scmp.eq.s32.totalorder %s21, 0
      %p108 = por %p106, %p107
      %p109 = scmp.ne.s32.totalorder %s95, %s96
      %p110 = scmp.eq.s32.totalorder %s22, 1
      %p111 = por %p109, %p110
      %p113 = scmp.ne.s32.totalorder %s96, %s112
      %p114 = scmp.eq.s32.totalorder %s22, 0
      %p115 = por %p113, %p114
      %s117 = sadd.s32 %s116, 1
      %p120 = scmp.eq.s32.totalorder %s16, 1
      %p121 = scmp.ne.s32.totalorder %s116, %s118
      %p122 = scmp.eq.s32.totalorder %s16, 0
      %p123 = por %p121, %p122
      %p124 = scmp.ne.s32.totalorder %s116, %s118
      %p125 = scmp.eq.s32.totalorder %s21, 1
      %p126 = por %p124, %p125
      %p127 = scmp.ne.s32.totalorder %s118, %s119
      %p128 = scmp.eq.s32.totalorder %s21, 0
      %p129 = por %p127, %p128
      %p130 = scmp.ne.s32.totalorder %s118, %s119
      %p131 = scmp.eq.s32.totalorder %s22, 1
      %p132 = por %p130, %p131
      %p134 = scmp.ne.s32.totalorder %s119, %s133
      %p135 = scmp.eq.s32.totalorder %s22, 0
      %p136 = por %p134, %p135
      %s138 = sadd.s32 %s137, 1
      %p141 = scmp.eq.s32.totalorder %s16, 1
      %p142 = scmp.ne.s32.totalorder %s137, %s139
      %p143 = scmp.eq.s32.totalorder %s16, 0
      %p144 = por %p142, %p143
      %p145 = scmp.ne.s32.totalorder %s137, %s139
      %p146 = scmp.eq.s32.totalorder %s21, 1
      %p147 = por %p145, %p146
      %p148 = scmp.ne.s32.totalorder %s139, %s140
      %p149 = scmp.eq.s32.totalorder %s21, 0
      %p150 = por %p148, %p149
      %p151 = scmp.ne.s32.totalorder %s139, %s140
      %p152 = scmp.eq.s32.totalorder %s22, 1
      %p153 = por %p151, %p152
      %p155 = scmp.ne.s32.totalorder %s140, %s154
      %p156 = scmp.eq.s32.totalorder %s22, 0
      %p157 = por %p155, %p156
      %s159 = sadd.s32 %s158, 1
      %p162 = scmp.eq.s32.totalorder %s16, 1
      %p163 = scmp.ne.s32.totalorder %s158, %s160
      %p164 = scmp.eq.s32.totalorder %s16, 0
      %p165 = por %p163, %p164
      %p166 = scmp.ne.s32.totalorder %s158, %s160
      %p167 = scmp.eq.s32.totalorder %s21, 1
      %p168 = por %p166, %p167
      %p169 = scmp.ne.s32.totalorder %s160, %s161
      %p170 = scmp.eq.s32.totalorder %s21, 0
      %p171 = por %p169, %p170
      %p172 = scmp.ne.s32.totalorder %s160, %s161
      %p173 = scmp.eq.s32.totalorder %s22, 1
      %p174 = por %p172, %p173
      %p176 = scmp.ne.s32.totalorder %s161, %s175
      %p177 = scmp.eq.s32.totalorder %s22, 0
      %p178 = por %p176, %p177
      %s180 = sadd.s32 %s179, 1
      %p183 = scmp.eq.s32.totalorder %s16, 1
      %p184 = scmp.ne.s32.totalorder %s179, %s181
      %p185 = scmp.eq.s32.totalorder %s16, 0
      %p186 = por %p184, %p185
      %p187 = scmp.ne.s32.totalorder %s179, %s181
      %p188 = scmp.eq.s32.totalorder %s21, 1
      %p189 = por %p187, %p188
      %p190 = scmp.ne.s32.totalorder %s181, %s182
      %p191 = scmp.eq.s32.totalorder %s21, 0
      %p192 = por %p190, %p191
      %p193 = scmp.ne.s32.totalorder %s181, %s182
      %p194 = scmp.eq.s32.totalorder %s22, 1
      %p195 = por %p193, %p194
      %p197 = scmp.ne.s32.totalorder %s182, %s196
      %p198 = scmp.eq.s32.totalorder %s22, 0
      %p199 = por %p197, %p198
      %s200 = ssub.s32 %s23, %s35
      %s201 = ssub.s32 %s24, %s31
      %s202 = sor.u32 %s200, %s201
      %p203 = scmp.eq.s32.totalorder %s202, 0
      %s205 = sadd.s32 %s204, 1
      %s206 = scalar_select %p203, %s204, %s205
      %p209 = pneg %p203
      %p210 = scmp.eq.s32.totalorder %s16, 1
      %p211 = por %p209, %p210
      %p212 = scmp.ne.s32.totalorder %s204, %s207
      %p213 = scmp.eq.s32.totalorder %s16, 0
      %p214 = por %p212, %p213
      %p215 = scmp.ne.s32.totalorder %s204, %s207
      %p216 = scmp.eq.s32.totalorder %s21, 1
      %p217 = por %p215, %p216
      %p218 = scmp.ne.s32.totalorder %s207, %s208
      %p219 = scmp.eq.s32.totalorder %s21, 0
      %p220 = por %p218, %p219
      %p221 = scmp.ne.s32.totalorder %s207, %s208
      %p222 = scmp.eq.s32.totalorder %s22, 1
      %p223 = por %p221, %p222
      %p225 = scmp.ne.s32.totalorder %s208, %s224
      %p226 = scmp.eq.s32.totalorder %s22, 0
      %p227 = por %p225, %p226
      %p228 = scmp.le.s32.totalorder 1, %s16
      %p229 = scmp.lt.s32.totalorder %s16, 3
      %p230 = pnand %p228, %p229
      %p231 = pneg %p230
      // Predicated region
      $region9: #{dgcnn_cls_forward.8} parent=5 // pred_check
        _
      $region10: #{dgcnn_cls_forward.8} parent=5 // pred_check_branch
        %233 = sbr.rel (%p230) target = $region12
      $region11: #{dgcnn_cls_forward.8} parent=5 // pred_region
        %s234 = ssub.s32 %s16, 1
        // Predicated region
        $region13: #{dgcnn_cls_forward.8} parent=11 // pred_check
          %p235 = pneg %p129
        $region14: #{dgcnn_cls_forward.8} parent=11 // pred_check_branch
          %237 = sbr.rel (%p235) target = $region16
        $region15: #{dgcnn_cls_forward.8} parent=11 // pred_region
          %239 = vsyncadd [#allocation3], 0
          %s240 = sshll.u32 %s3, 4
          %s241 = int_to_ptr.hbm [resolvable:$true] %s240
          %s242 = sshll.u32 [#allocation2], 4
          %s243 = int_to_ptr.vmem [resolvable:$true] %s242
          %248 = dma.hbm_to_vmem [thread:$0]  %s241, 512, %s243, [#allocation3], 64, 64, 4
        $region16: #{dgcnn_cls_forward.8} parent=11 // pred_fallthru
          _
        // Predicated region
        $region17: #{dgcnn_cls_forward.8} parent=11 // pred_check
          %p249 = pneg %p150
        $region18: #{dgcnn_cls_forward.8} parent=11 // pred_check_branch
          %251 = sbr.rel (%p249) target = $region20
        $region19: #{dgcnn_cls_forward.8} parent=11 // pred_region
          %253 = vsyncadd [#allocation5], 0
          %s254 = sshll.u32 %s4, 4
          %s255 = int_to_ptr.hbm [resolvable:$true] %s254
          %s256 = sshll.u32 [#allocation4], 4
          %s257 = int_to_ptr.vmem [resolvable:$true] %s256
          %262 = dma.hbm_to_vmem [thread:$0]  %s255, 512, %s257, [#allocation5], 64, 64, 4
        $region20: #{dgcnn_cls_forward.8} parent=11 // pred_fallthru
          _
        // Predicated region
        $region21: #{dgcnn_cls_forward.8} parent=11 // pred_check
          %p263 = pneg %p171
        $region22: #{dgcnn_cls_forward.8} parent=11 // pred_check_branch
          %265 = sbr.rel (%p263) target = $region24
        $region23: #{dgcnn_cls_forward.8} parent=11 // pred_region
          %267 = vsyncadd [#allocation5], 0
          %s269 = sshll.u32 %s5, 4
          %s270 = int_to_ptr.hbm [resolvable:$true] %s269
          %s271 = sshll.u32 [#allocation6], 4
          %s272 = int_to_ptr.vmem [resolvable:$true] %s271
          %274 = dma.hbm_to_vmem [thread:$0]  %s270, 16, %s272, [#allocation5]
        $region24: #{dgcnn_cls_forward.8} parent=11 // pred_fallthru
          _
        // Predicated region
        $region25: #{dgcnn_cls_forward.8} parent=11 // pred_check
          %p275 = pneg %p192
        $region26: #{dgcnn_cls_forward.8} parent=11 // pred_check_branch
          %277 = sbr.rel (%p275) target = $region28
        $region27: #{dgcnn_cls_forward.8} parent=11 // pred_region
          %279 = vsyncadd [#allocation8], 0
          %s281 = sshll.u32 %s6, 4
          %s282 = int_to_ptr.hbm [resolvable:$true] %s281
          %s283 = sshll.u32 [#allocation7], 4
          %s284 = int_to_ptr.vmem [resolvable:$true] %s283
          %286 = dma.hbm_to_vmem [thread:$0]  %s282, 16, %s284, [#allocation8]
        $region28: #{dgcnn_cls_forward.8} parent=11 // pred_fallthru
          _
      $region12: #{dgcnn_cls_forward.8} parent=5 // pred_fallthru
        _
      %p287 = scmp.lt.s32.totalorder %s16, 2
      // Predicated region
      $region29: #{dgcnn_cls_forward.8} parent=5 // pred_check
        %p288 = pneg %p287
      $region30: #{dgcnn_cls_forward.8} parent=5 // pred_check_branch
        %290 = sbr.rel (%p288) target = $region32
      $region31: #{dgcnn_cls_forward.8} parent=5 // pred_region
        // Predicated region
        $region33: #{dgcnn_cls_forward.8} parent=31 // pred_check
          %p291 = pneg %p48
        $region34: #{dgcnn_cls_forward.8} parent=31 // pred_check_branch
          %293 = sbr.rel (%p291) target = $region36
        $region35: #{dgcnn_cls_forward.8} parent=31 // pred_region
          %p294 = scmp.lt.s32.totalorder %s23, 1
          %s295 = scalar_select %p294, %s23, 1
          %s296 = smul.addr %s295, 2
          %s297 = smul.addr %s296, 4
          %s298 = scalar_lea.vmem %s0, %s297
        $region36: #{dgcnn_cls_forward.8} parent=31 // pred_fallthru
          _
        // Predicated region
        $region37: #{dgcnn_cls_forward.8} parent=31 // pred_check
          %p299 = pneg %p76
        $region38: #{dgcnn_cls_forward.8} parent=31 // pred_check_branch
          %301 = sbr.rel (%p299) target = $region40
        $region39: #{dgcnn_cls_forward.8} parent=31 // pred_region
          %s302 = smul.u32 2, %s24
          %p303 = scmp.lt.s32.totalorder %s23, 1
          %s304 = scalar_select %p303, %s23, 1
          %p305 = scmp.lt.s32.totalorder %s302, 1
          %s306 = scalar_select %p305, %s302, 1
          %s307 = smul.addr %s304, 2
          %s308 = sadd.s32 %s306, %s307
          %s309 = smul.addr %s308, 4
          %s310 = scalar_lea.vmem %s1, %s309
          %s311 = smul.u32 2, %s24
        $region40: #{dgcnn_cls_forward.8} parent=31 // pred_fallthru
          _
        // Predicated region
        $region41: #{dgcnn_cls_forward.8} parent=31 // pred_check
          %p312 = pneg %p102
        $region42: #{dgcnn_cls_forward.8} parent=31 // pred_check_branch
          %314 = sbr.rel (%p312) target = $region44
        $region43: #{dgcnn_cls_forward.8} parent=31 // pred_region
          %p315 = scmp.lt.s32.totalorder %s23, 1
          %s316 = scalar_select %p315, %s23, 1
          %s317 = scalar_lea.vmem %s2, %s316
        $region44: #{dgcnn_cls_forward.8} parent=31 // pred_fallthru
          _
      $region32: #{dgcnn_cls_forward.8} parent=5 // pred_fallthru
        _
      %p318 = scmp.le.s32.totalorder 1, %s16
      %p319 = scmp.lt.s32.totalorder %s16, 3
      %p320 = pnand %p318, %p319
      %p321 = pneg %p320
      // Predicated region
      $region45: #{dgcnn_cls_forward.8} parent=5 // pred_check
        _
      $region46: #{dgcnn_cls_forward.8} parent=5 // pred_check_branch
        %323 = sbr.rel (%p320) target = $region48
      $region47: #{dgcnn_cls_forward.8} parent=5 // pred_region
        %s324 = ssub.s32 %s16, 1
        // Predicated region
        $region49: #{dgcnn_cls_forward.8} parent=47 // pred_check
          %p325 = pneg %p129
        $region50: #{dgcnn_cls_forward.8} parent=47 // pred_check_branch
          %327 = sbr.rel (%p325) target = $region52
        $region51: #{dgcnn_cls_forward.8} parent=47 // pred_region
          %329 = dma.done [#allocation3], 512
        $region52: #{dgcnn_cls_forward.8} parent=47 // pred_fallthru
          _
        // Predicated region
        $region53: #{dgcnn_cls_forward.8} parent=47 // pred_check
          %p330 = pneg %p150
        $region54: #{dgcnn_cls_forward.8} parent=47 // pred_check_branch
          %332 = sbr.rel (%p330) target = $region56
        $region55: #{dgcnn_cls_forward.8} parent=47 // pred_region
          %334 = dma.done [#allocation5], 512
        $region56: #{dgcnn_cls_forward.8} parent=47 // pred_fallthru
          _
        // Predicated region
        $region57: #{dgcnn_cls_forward.8} parent=47 // pred_check
          %p335 = pneg %p171
        $region58: #{dgcnn_cls_forward.8} parent=47 // pred_check_branch
          %337 = sbr.rel (%p335) target = $region60
        $region59: #{dgcnn_cls_forward.8} parent=47 // pred_region
          %339 = dma.done [#allocation5], 16
        $region60: #{dgcnn_cls_forward.8} parent=47 // pred_fallthru
          _
        // Predicated region
        $region61: #{dgcnn_cls_forward.8} parent=47 // pred_check
          %p340 = pneg %p192
        $region62: #{dgcnn_cls_forward.8} parent=47 // pred_check_branch
          %342 = sbr.rel (%p340) target = $region64
        $region63: #{dgcnn_cls_forward.8} parent=47 // pred_region
          %344 = dma.done [#allocation8], 16
        $region64: #{dgcnn_cls_forward.8} parent=47 // pred_fallthru
          _
        %p345 = scmp.lt.s32.totalorder %s25, 1
        %s346 = scalar_select %p345, %s25, 1
        %s347 = smul.addr %s346, 2
        %s348 = smul.addr %s347, 4
        %s349 = scalar_lea.vmem %s0, %s348
        %p350 = pneg %p54
        %p351 = pneg %p51
        %s352 = smul.u32 2, %s26
        %p353 = scmp.lt.s32.totalorder %s25, 1
        %s354 = scalar_select %p353, %s25, 1
        %p355 = scmp.lt.s32.totalorder %s352, 1
        %s356 = scalar_select %p355, %s352, 1
        %s357 = smul.addr %s354, 2
        %s358 = sadd.s32 %s356, %s357
        %s359 = smul.addr %s358, 4
        %s360 = scalar_lea.vmem %s1, %s359
        %p361 = pneg %p82
        %p362 = pneg %p79
        %p363 = scmp.lt.s32.totalorder %s25, 1
        %s364 = scalar_select %p363, %s25, 1
        %s365 = scalar_lea.vmem %s2, %s364
        %p366 = pneg %p108
        %p367 = pneg %p105
        %p368 = pneg %p129
        %p369 = pneg %p126
        %p370 = pneg %p150
        %p371 = pneg %p147
        %p372 = pneg %p171
        %p373 = pneg %p168
        %p374 = pneg %p192
        %p375 = pneg %p189
        %p376 = pneg %p220
        %p377 = pneg %p217
        %s378 = smul.u32 2, %s26
        %p379 = scmp.lt.s32.totalorder %s25, 1
        %s380 = scalar_select %p379, %s25, 1
        %p381 = scmp.lt.s32.totalorder %s378, 1
        %s382 = scalar_select %p381, %s378, 1
        %s383 = smul.addr %s380, 2
        %s384 = sadd.s32 %s382, %s383
        %s385 = smul.addr %s384, 4
        %s386 = scalar_lea.vmem %s7, %s385
        %p387 = scmp.lt.s32.totalorder %s25, 1
        %s388 = scalar_select %p387, %s25, 1
        %s389 = smul.addr %s388, 2
        %s390 = smul.addr %s389, 4
        %s391 = scalar_lea.vmem %s0, %s390
        %s392 = smul.u32 2, %s26
        %p393 = scmp.lt.s32.totalorder %s25, 1
        %s394 = scalar_select %p393, %s25, 1
        %p395 = scmp.lt.s32.totalorder %s392, 1
        %s396 = scalar_select %p395, %s392, 1
        %s397 = smul.addr %s394, 2
        %s398 = sadd.s32 %s396, %s397
        %s399 = smul.addr %s398, 4
        %s400 = scalar_lea.vmem %s1, %s399
        %s401 = smul.u32 2, %s26
        %p402 = scmp.lt.s32.totalorder %s25, 1
        %s403 = scalar_select %p402, %s25, 1
        %s404 = scalar_lea.vmem %s2, %s403
        %s405 = smul.u32 2, %s26
        %p406 = scmp.lt.s32.totalorder %s25, 1
        %s407 = scalar_select %p406, %s25, 1
        %p408 = scmp.lt.s32.totalorder %s405, 1
        %s409 = scalar_select %p408, %s405, 1
        %s410 = smul.addr %s407, 2
        %s411 = sadd.s32 %s409, %s410
        %s412 = smul.addr %s411, 4
        %s413 = scalar_lea.vmem %s7, %s412
        %s414 = smul.u32 2, %s26
        %v416 = vld [vmem:[%s391] sm:$0xf]
        %v417 = vld [vmem:[%s391 + $0x4] sm:$0xf]
        %v418 = vunpack.c.l.bf16 %v416
        %v419 = vunpack.c.l.bf16 %v417
        %v420 = vld [vmem:[%s400] sm:$0xf]
        %v421 = vld [vmem:[%s400 + $0x4] sm:$0xf]
        %v422 = vunpack.c.l.bf16 %v420
        %v423 = vunpack.c.l.bf16 %v421
        %vm424 = vcmask 523264
        %v426 = vsel %vm424, %v422, 0
        %v429 = vsel %vm424, %v423, 0
        %v432 = vsel %vm424, %v418, 0
        %v435 = vsel %vm424, %v419, 0
        %437 = vmatpush.xpose.msra.mxu0 0.0
        %438 = vmatpush.xpose.msra.mxu0 0.0
        %439 = vmatpush.xpose.msra.mxu0 0.0
        %440 = vmatpush.xpose.msra.mxu0 0.0
        %441 = vmatpush.xpose.msra.mxu0 0.0
        %442 = vmatpush.xpose.msra.mxu0 0.0
        %443 = vmatpush.xpose.msra.mxu0 0.0
        %444 = vmatpush.xpose.msra.mxu0 0.0
        %445 = vmatpush.xpose.msra.mxu0 0.0
        %446 = vmatpush.xpose.msra.mxu0 0.0
        %447 = vmatpush.xpose.msra.mxu0 0.0
        %448 = vmatpush.xpose.msra.mxu0 0.0
        %449 = vmatpush.xpose.msra.mxu0 0.0
        %450 = vmatpush.xpose.msra.mxu0 0.0
        %451 = vmatpush.xpose.msra.mxu0 %v435
        %452 = vmatpush.xpose.msra.mxu0 %v432
        %453 = vmatmul.f32.gmra.mxu0 %v426
        %v454 = vpop.f32.mrf.mxu0
        %v455 = vadd.f32 0.0, %v454
        %456 = vmatmul.f32.gmra.mxu0 %v429
        %v457 = vpop.f32.mrf.mxu0
        %v458 = vadd.f32 0.0, %v457
        %459 = vdwg.mxu0
        %v460 = vmul.f32 %v422, %v422
        %v461 = vmul.f32 %v423, %v423
        %v462 = vsel %vm424, %v460, 0.0
        %463 = vadd.xlane.f32.xlu0 %v462
        %v464 = vpop.xlane.xlu0 %463
        %v465 = vsel %vm424, %v461, 0.0
        %466 = vadd.xlane.f32.xlu0 %v465
        %v467 = vpop.xlane.xlu0 %466
        %v468 = vmul.f32 %v455, 2.0
        %v469 = vmul.f32 %v458, 2.0
        %v470 = vsub.f32 %v468, %v464
        %v471 = vsub.f32 %v469, %v467
        %v472 = vld [vmem:[%s404] sm:$0x1]
        %v474 = vperm.slane %v472, 0
        %v476 = vsub.f32 %v470, %v474
        %v477 = vsub.f32 %v471, %v474
        %vm480 = vcmp.lt.s32.totalorder %v476, 0
        %vm481 = vcmp.lt.s32.totalorder %v477, 0
        %v482 = vxor.u32 %v476, 2147483647
        %v483 = vxor.u32 %v477, 2147483647
        %v484 = vsel %vm480, %v482, %v476
        %v485 = vsel %vm481, %v483, %v477
        %v486 = vlaneseq
        %v487 = vand.u32 %v486, 127
        %v488 = vand.u32 %v484, 4294967280
        %v489 = vand.u32 %v485, 4294967280
        %v490 = vor.u32 %v488, %v487
        %v491 = vor.u32 %v489, %v487
        %vm492 = vcmask 130048
        %v493 = vsel %vm492, %v490, 2147483648
        %v494 = vand.u32 %v493, 65535
        %v495 = vshra.s32 %v493, 16
        %v496 = vcvt.s32.f32 %v494
        %v497 = vcvt.s32.f32 %v495
        %498 = vmax.xlane.f32.xlu0 %v497
        %v499 = vpop.xlane.xlu0 %498
        %vm500 = vcmp.eq.f32.partialorder %v497, %v499
        %v501 = vsel %vm500, %v496, -inf
        %502 = vmax.xlane.f32.xlu0 %v501
        %v503 = vpop.xlane.xlu0 %502
        %v504 = vcvt.f32.s32 %v503
        %v505 = vcvt.f32.s32 %v499
        %v506 = vshll.u32 %v505, 16
        %v507 = vadd.s32 %v506, %v504
        %v508 = vsel %vm492, %v491, 2147483648
        %v509 = vand.u32 %v508, 65535
        %v510 = vshra.s32 %v508, 16
        %v511 = vcvt.s32.f32 %v509
        %v512 = vcvt.s32.f32 %v510
        %513 = vmax.xlane.f32.xlu0 %v512
        %v514 = vpop.xlane.xlu0 %513
        %vm515 = vcmp.eq.f32.partialorder %v512, %v514
        %v516 = vsel %vm515, %v511, -inf
        %517 = vmax.xlane.f32.xlu0 %v516
        %v518 = vpop.xlane.xlu0 %517
        %v519 = vcvt.f32.s32 %v518
        %v520 = vcvt.f32.s32 %v514
        %v521 = vshll.u32 %v520, 16
        %v522 = vadd.s32 %v521, %v519
        %v523 = vand.u32 %v507, 15
        %v524 = vand.u32 %v522, 15
        %vm525 = vcmp.eq.s32.totalorder %v490, %v507
        %vm526 = vcmp.eq.s32.totalorder %v491, %v522
        %v527 = vsel %vm525, 2147483648, %v490
        %v528 = vsel %vm526, 2147483648, %v491
        %v529 = vsel %vm492, %v527, 2147483648
        %v530 = vand.u32 %v529, 65535
        %v531 = vshra.s32 %v529, 16
        %v532 = vcvt.s32.f32 %v530
        %v533 = vcvt.s32.f32 %v531
        %534 = vmax.xlane.f32.xlu0 %v533
        %v535 = vpop.xlane.xlu0 %534
        %vm536 = vcmp.eq.f32.partialorder %v533, %v535
        %v537 = vsel %vm536, %v532, -inf
        %538 = vmax.xlane.f32.xlu0 %v537
        %v539 = vpop.xlane.xlu0 %538
        %v540 = vcvt.f32.s32 %v539
        %v541 = vcvt.f32.s32 %v535
        %v542 = vshll.u32 %v541, 16
        %v543 = vadd.s32 %v542, %v540
        %v544 = vsel %vm492, %v528, 2147483648
        %v545 = vand.u32 %v544, 65535
        %v546 = vshra.s32 %v544, 16
        %v547 = vcvt.s32.f32 %v545
        %v548 = vcvt.s32.f32 %v546
        %549 = vmax.xlane.f32.xlu0 %v548
        %v550 = vpop.xlane.xlu0 %549
        %vm551 = vcmp.eq.f32.partialorder %v548, %v550
        %v552 = vsel %vm551, %v547, -inf
        %553 = vmax.xlane.f32.xlu0 %v552
        %v554 = vpop.xlane.xlu0 %553
        %v555 = vcvt.f32.s32 %v554
        %v556 = vcvt.f32.s32 %v550
        %v557 = vshll.u32 %v556, 16
        %v558 = vadd.s32 %v557, %v555
        %v559 = vand.u32 %v543, 15
        %v560 = vand.u32 %v558, 15
        %vm561 = vcmp.eq.s32.totalorder %v527, %v543
        %vm562 = vcmp.eq.s32.totalorder %v528, %v558
        %v563 = vsel %vm561, 2147483648, %v527
        %v564 = vsel %vm562, 2147483648, %v528
        %v565 = vsel %vm492, %v563, 2147483648
        %v566 = vand.u32 %v565, 65535
        %v567 = vshra.s32 %v565, 16
        %v568 = vcvt.s32.f32 %v566
        %v569 = vcvt.s32.f32 %v567
        %570 = vmax.xlane.f32.xlu0 %v569
        %v571 = vpop.xlane.xlu0 %570
        %vm572 = vcmp.eq.f32.partialorder %v569, %v571
        %v573 = vsel %vm572, %v568, -inf
        %574 = vmax.xlane.f32.xlu0 %v573
        %v575 = vpop.xlane.xlu0 %574
        %v576 = vcvt.f32.s32 %v575
        %v577 = vcvt.f32.s32 %v571
        %v578 = vshll.u32 %v577, 16
        %v579 = vadd.s32 %v578, %v576
        %v580 = vsel %vm492, %v564, 2147483648
        %v581 = vand.u32 %v580, 65535
        %v582 = vshra.s32 %v580, 16
        %v583 = vcvt.s32.f32 %v581
        %v584 = vcvt.s32.f32 %v582
        %585 = vmax.xlane.f32.xlu0 %v584
        %v586 = vpop.xlane.xlu0 %585
        %vm587 = vcmp.eq.f32.partialorder %v584, %v586
        %v588 = vsel %vm587, %v583, -inf
        %589 = vmax.xlane.f32.xlu0 %v588
        %v590 = vpop.xlane.xlu0 %589
        %v591 = vcvt.f32.s32 %v590
        %v592 = vcvt.f32.s32 %v586
        %v593 = vshll.u32 %v592, 16
        %v594 = vadd.s32 %v593, %v591
        %v595 = vand.u32 %v579, 15
        %v596 = vand.u32 %v594, 15
        %vm597 = vcmp.eq.s32.totalorder %v563, %v579
        %vm598 = vcmp.eq.s32.totalorder %v564, %v594
        %v599 = vsel %vm597, 2147483648, %v563
        %v600 = vsel %vm598, 2147483648, %v564
        %v601 = vsel %vm492, %v599, 2147483648
        %v602 = vand.u32 %v601, 65535
        %v603 = vshra.s32 %v601, 16
        %v604 = vcvt.s32.f32 %v602
        %v605 = vcvt.s32.f32 %v603
        %606 = vmax.xlane.f32.xlu0 %v605
        %v607 = vpop.xlane.xlu0 %606
        %vm608 = vcmp.eq.f32.partialorder %v605, %v607
        %v609 = vsel %vm608, %v604, -inf
        %610 = vmax.xlane.f32.xlu0 %v609
        %v611 = vpop.xlane.xlu0 %610
        %v612 = vcvt.f32.s32 %v611
        %v613 = vcvt.f32.s32 %v607
        %v614 = vshll.u32 %v613, 16
        %v615 = vadd.s32 %v614, %v612
        %v616 = vsel %vm492, %v600, 2147483648
        %v617 = vand.u32 %v616, 65535
        %v618 = vshra.s32 %v616, 16
        %v619 = vcvt.s32.f32 %v617
        %v620 = vcvt.s32.f32 %v618
        %621 = vmax.xlane.f32.xlu0 %v620
        %v622 = vpop.xlane.xlu0 %621
        %vm623 = vcmp.eq.f32.partialorder %v620, %v622
        %v624 = vsel %vm623, %v619, -inf
        %625 = vmax.xlane.f32.xlu0 %v624
        %v626 = vpop.xlane.xlu0 %625
        %v627 = vcvt.f32.s32 %v626
        %v628 = vcvt.f32.s32 %v622
        %v629 = vshll.u32 %v628, 16
        %v630 = vadd.s32 %v629, %v627
        %v631 = vand.u32 %v615, 15
        %v632 = vand.u32 %v630, 15
        %vm633 = vcmp.eq.s32.totalorder %v487, %v523
        %vm634 = vcmp.eq.s32.totalorder %v487, %v524
        %v635 = vsel %vm633, 1, 0
        %v636 = vsel %vm634, 1, 0
        %v637 = vcvt.s32.f32 %v635
        %v638 = vcvt.s32.f32 %v636
        %v639 = vpack.c.bf16 %v638, %v637
        %v642 = vunpack.c.l.b16 %v416
        %v643 = vunpack.c.l.b16 %v417
        %v644 = vpack.c.b16 %v643, %v642
        %v647 = vsel %vm492, %v639, 0
        %649 = vmatpush.bf16.msra.mxu0 0
        %650 = vmatpush.bf16.msra.mxu0 0
        %651 = vmatpush.bf16.msra.mxu0 0
        %652 = vmatpush.bf16.msra.mxu0 0
        %653 = vmatpush.bf16.msra.mxu0 0
        %654 = vmatpush.bf16.msra.mxu0 0
        %655 = vmatpush.bf16.msra.mxu0 0
        %656 = vmatpush.bf16.msra.mxu0 %v644
        %657 = vmatmul.bf16.gmra.mxu0 %v647
        %v658 = vpop.f32.mrf.mxu0
        %v659 = vadd.f32 0.0, %v658
        %v660 = vpop.f32.mrf.mxu0
        %v661 = vadd.f32 0.0, %v660
        %662 = vdwg.mxu0
        %v663 = vpack.c.bf16 %v661, %v659
        %v664 = vld [vmem:[#allocation2] sm:$0xf]
        %v665 = vld [vmem:[#allocation2 + $0x4] sm:$0xf]
        %v666 = vld [vmem:[#allocation2 + $0x8] sm:$0xf]
        %v667 = vld [vmem:[#allocation2 + $0xc] sm:$0xf]
        %v668 = vld [vmem:[#allocation2 + $0x10] sm:$0xf]
        %v669 = vld [vmem:[#allocation2 + $0x14] sm:$0xf]
        %v670 = vld [vmem:[#allocation2 + $0x18] sm:$0xf]
        %v671 = vld [vmem:[#allocation2 + $0x1c] sm:$0xf]
        %v680 = vunpack.c.l.b16 %v664
        %v681 = vunpack.c.l.b16 %v665
        %v682 = vunpack.c.l.b16 %v666
        %v683 = vunpack.c.l.b16 %v667
        %v684 = vunpack.c.l.b16 %v668
        %v685 = vunpack.c.l.b16 %v669
        %v686 = vunpack.c.l.b16 %v670
        %v687 = vunpack.c.l.b16 %v671
        %v688 = vpack.c.b16 %v681, %v680
        %v689 = vpack.c.b16 %v683, %v682
        %v690 = vpack.c.b16 %v685, %v684
        %v691 = vpack.c.b16 %v687, %v686
        %v697 = vsel %vm424, %v663, 0
        %699 = vmatpush.bf16.msra.mxu0 0
        %700 = vmatpush.bf16.msra.mxu0 0
        %701 = vmatpush.bf16.msra.mxu0 0
        %702 = vmatpush.bf16.msra.mxu0 0
        %703 = vmatpush.bf16.msra.mxu0 %v691
        %704 = vmatpush.bf16.msra.mxu0 %v690
        %705 = vmatpush.bf16.msra.mxu0 %v689
        %706 = vmatpush.bf16.msra.mxu0 %v688
        %707 = vmatmul.bf16.gmra.mxu0 %v697
        %v708 = vpop.f32.mrf.mxu0
        %v709 = vadd.f32 0.0, %v708
        %v710 = vpop.f32.mrf.mxu0
        %v711 = vadd.f32 0.0, %v710
        %712 = vdwg.mxu0
        %vm713 = vcmp.eq.s32.totalorder %v487, %v559
        %vm714 = vcmp.eq.s32.totalorder %v487, %v560
        %v715 = vsel %vm713, 1, 0
        %v716 = vsel %vm714, 1, 0
        %v717 = vcvt.s32.f32 %v715
        %v718 = vcvt.s32.f32 %v716
        %v719 = vpack.c.bf16 %v718, %v717
        %v721 = vsel %vm492, %v719, 0
        %723 = vmatpush.bf16.msra.mxu0 0
        %724 = vmatpush.bf16.msra.mxu0 0
        %725 = vmatpush.bf16.msra.mxu0 0
        %726 = vmatpush.bf16.msra.mxu0 0
        %727 = vmatpush.bf16.msra.mxu0 0
        %728 = vmatpush.bf16.msra.mxu0 0
        %729 = vmatpush.bf16.msra.mxu0 0
        %730 = vmatpush.bf16.msra.mxu0 %v644
        %731 = vmatmul.bf16.gmra.mxu0 %v721
        %v732 = vpop.f32.mrf.mxu0
        %v733 = vadd.f32 0.0, %v732
        %v734 = vpop.f32.mrf.mxu0
        %v735 = vadd.f32 0.0, %v734
        %736 = vdwg.mxu0
        %v737 = vpack.c.bf16 %v735, %v733
        %v739 = vsel %vm424, %v737, 0
        %741 = vmatpush.bf16.msra.mxu0 0
        %742 = vmatpush.bf16.msra.mxu0 0
        %743 = vmatpush.bf16.msra.mxu0 0
        %744 = vmatpush.bf16.msra.mxu0 0
        %745 = vmatpush.bf16.msra.mxu0 %v691
        %746 = vmatpush.bf16.msra.mxu0 %v690
        %747 = vmatpush.bf16.msra.mxu0 %v689
        %748 = vmatpush.bf16.msra.mxu0 %v688
        %749 = vmatmul.bf16.gmra.mxu0 %v739
        %v750 = vpop.f32.mrf.mxu0
        %v751 = vadd.f32 0.0, %v750
        %v752 = vpop.f32.mrf.mxu0
        %v753 = vadd.f32 0.0, %v752
        %754 = vdwg.mxu0
        %v755 = vmax.f32 %v709, %v751
        %v756 = vmax.f32 %v711, %v753
        %v757 = vmin.f32 %v709, %v751
        %v758 = vmin.f32 %v711, %v753
        %vm759 = vcmp.eq.s32.totalorder %v487, %v595
        %vm760 = vcmp.eq.s32.totalorder %v487, %v596
        %v761 = vsel %vm759, 1, 0
        %v762 = vsel %vm760, 1, 0
        %v763 = vcvt.s32.f32 %v761
        %v764 = vcvt.s32.f32 %v762
        %v765 = vpack.c.bf16 %v764, %v763
        %v767 = vsel %vm492, %v765, 0
        %769 = vmatpush.bf16.msra.mxu0 0
        %770 = vmatpush.bf16.msra.mxu0 0
        %771 = vmatpush.bf16.msra.mxu0 0
        %772 = vmatpush.bf16.msra.mxu0 0
        %773 = vmatpush.bf16.msra.mxu0 0
        %774 = vmatpush.bf16.msra.mxu0 0
        %775 = vmatpush.bf16.msra.mxu0 0
        %776 = vmatpush.bf16.msra.mxu0 %v644
        %777 = vmatmul.bf16.gmra.mxu0 %v767
        %v778 = vpop.f32.mrf.mxu0
        %v779 = vadd.f32 0.0, %v778
        %v780 = vpop.f32.mrf.mxu0
        %v781 = vadd.f32 0.0, %v780
        %782 = vdwg.mxu0
        %v783 = vpack.c.bf16 %v781, %v779
        %v785 = vsel %vm424, %v783, 0
        %787 = vmatpush.bf16.msra.mxu0 0
        %788 = vmatpush.bf16.msra.mxu0 0
        %789 = vmatpush.bf16.msra.mxu0 0
        %790 = vmatpush.bf16.msra.mxu0 0
        %791 = vmatpush.bf16.msra.mxu0 %v691
        %792 = vmatpush.bf16.msra.mxu0 %v690
        %793 = vmatpush.bf16.msra.mxu0 %v689
        %794 = vmatpush.bf16.msra.mxu0 %v688
        %795 = vmatmul.bf16.gmra.mxu0 %v785
        %v796 = vpop.f32.mrf.mxu0
        %v797 = vadd.f32 0.0, %v796
        %v798 = vpop.f32.mrf.mxu0
        %v799 = vadd.f32 0.0, %v798
        %800 = vdwg.mxu0
        %v801 = vmax.f32 %v755, %v797
        %v802 = vmax.f32 %v756, %v799
        %v803 = vmin.f32 %v757, %v797
        %v804 = vmin.f32 %v758, %v799
        %vm805 = vcmp.eq.s32.totalorder %v487, %v631
        %vm806 = vcmp.eq.s32.totalorder %v487, %v632
        %v807 = vsel %vm805, 1, 0
        %v808 = vsel %vm806, 1, 0
        %v809 = vcvt.s32.f32 %v807
        %v810 = vcvt.s32.f32 %v808
        %v811 = vpack.c.bf16 %v810, %v809
        %v813 = vsel %vm492, %v811, 0
        %815 = vmatpush.bf16.msra.mxu0 0
        %816 = vmatpush.bf16.msra.mxu0 0
        %817 = vmatpush.bf16.msra.mxu0 0
        %818 = vmatpush.bf16.msra.mxu0 0
        %819 = vmatpush.bf16.msra.mxu0 0
        %820 = vmatpush.bf16.msra.mxu0 0
        %821 = vmatpush.bf16.msra.mxu0 0
        %822 = vmatpush.bf16.msra.mxu0 %v644
        %823 = vmatmul.bf16.gmra.mxu0 %v813
        %v824 = vpop.f32.mrf.mxu0
        %v825 = vadd.f32 0.0, %v824
        %v826 = vpop.f32.mrf.mxu0
        %v827 = vadd.f32 0.0, %v826
        %828 = vdwg.mxu0
        %v829 = vpack.c.bf16 %v827, %v825
        %v831 = vsel %vm424, %v829, 0
        %833 = vmatpush.bf16.msra.mxu0 0
        %834 = vmatpush.bf16.msra.mxu0 0
        %835 = vmatpush.bf16.msra.mxu0 0
        %836 = vmatpush.bf16.msra.mxu0 0
        %837 = vmatpush.bf16.msra.mxu0 %v691
        %838 = vmatpush.bf16.msra.mxu0 %v690
        %839 = vmatpush.bf16.msra.mxu0 %v689
        %840 = vmatpush.bf16.msra.mxu0 %v688
        %841 = vmatmul.bf16.gmra.mxu0 %v831
        %v842 = vpop.f32.mrf.mxu0
        %v843 = vadd.f32 0.0, %v842
        %v844 = vpop.f32.mrf.mxu0
        %v845 = vadd.f32 0.0, %v844
        %846 = vdwg.mxu0
        %v847 = vmax.f32 %v801, %v843
        %v848 = vmax.f32 %v802, %v845
        %v849 = vmin.f32 %v803, %v843
        %v850 = vmin.f32 %v804, %v845
        %v851 = vld [vmem:[#allocation4] sm:$0xf]
        %v852 = vld [vmem:[#allocation4 + $0x4] sm:$0xf]
        %v853 = vld [vmem:[#allocation4 + $0x8] sm:$0xf]
        %v854 = vld [vmem:[#allocation4 + $0xc] sm:$0xf]
        %v855 = vld [vmem:[#allocation4 + $0x10] sm:$0xf]
        %v856 = vld [vmem:[#allocation4 + $0x14] sm:$0xf]
        %v857 = vld [vmem:[#allocation4 + $0x18] sm:$0xf]
        %v858 = vld [vmem:[#allocation4 + $0x1c] sm:$0xf]
        %v861 = vunpack.c.l.b16 %v420
        %v862 = vunpack.c.l.b16 %v421
        %v863 = vpack.c.b16 %v862, %v861
        %v872 = vunpack.c.l.b16 %v851
        %v873 = vunpack.c.l.b16 %v852
        %v874 = vunpack.c.l.b16 %v853
        %v875 = vunpack.c.l.b16 %v854
        %v876 = vunpack.c.l.b16 %v855
        %v877 = vunpack.c.l.b16 %v856
        %v878 = vunpack.c.l.b16 %v857
        %v879 = vunpack.c.l.b16 %v858
        %v880 = vpack.c.b16 %v873, %v872
        %v881 = vpack.c.b16 %v875, %v874
        %v882 = vpack.c.b16 %v877, %v876
        %v883 = vpack.c.b16 %v879, %v878
        %v889 = vsel %vm424, %v863, 0
        %891 = vmatpush.bf16.msra.mxu0 0
        %892 = vmatpush.bf16.msra.mxu0 0
        %893 = vmatpush.bf16.msra.mxu0 0
        %894 = vmatpush.bf16.msra.mxu0 0
        %895 = vmatpush.bf16.msra.mxu0 %v883
        %896 = vmatpush.bf16.msra.mxu0 %v882
        %897 = vmatpush.bf16.msra.mxu0 %v881
        %898 = vmatpush.bf16.msra.mxu0 %v880
        %899 = vmatmul.bf16.gmra.mxu0 %v889
        %v900 = vpop.f32.mrf.mxu0
        %v901 = vadd.f32 0.0, %v900
        %v902 = vpop.f32.mrf.mxu0
        %v903 = vadd.f32 0.0, %v902
        %904 = vdwg.mxu0
        %v905 = vld [vmem:[#allocation6] sm:$0x1]
        %v906 = vld [vmem:[#allocation7] sm:$0x1]
        %vm907 = vcmp.gt.f32.partialorder %v905, 0.0
        %v908 = vsel %vm907, 1, 0
        %v909 = vperm.slane %v908, 0
        %vm910 = vcmp.eq.s32.totalorder %v909, 1
        %v911 = vsel %vm910, %v847, %v849
        %v912 = vsel %vm910, %v848, %v850
        %v913 = vadd.f32 %v911, %v901
        %v914 = vadd.f32 %v912, %v903
        %v916 = vperm.slane %v905, 0
        %v918 = vmul.f32 %v913, %v916
        %v919 = vmul.f32 %v914, %v916
        %v921 = vperm.slane %v906, 0
        %v923 = vadd.f32 %v918, %v921
        %v924 = vadd.f32 %v919, %v921
        %vm925 = vcmp.gt.f32.partialorder %v923, 0.0
        %vm926 = vcmp.gt.f32.partialorder %v924, 0.0
        %v927 = vmul.f32 %v923, 0.2
        %v928 = vmul.f32 %v924, 0.2
        %v929 = vsel %vm925, %v923, %v927
        %v930 = vsel %vm926, %v924, %v928
        %v931 = vpack.c.bf16 %v929, %v929
        %v932 = vpack.c.bf16 %v930, %v930
        %933 = vst [vmem:[%s413] sm:$0xf] %v931
        %934 = vst [vmem:[%s413 + $0x4] sm:$0xf] %v932
        %s935 = smul.u32 2, %s26
        %p936 = scmp.lt.s32.totalorder %s25, 1
        %s937 = scalar_select %p936, %s25, 1
        %p938 = scmp.lt.s32.totalorder %s935, 1
        %s939 = scalar_select %p938, %s935, 1
        %s940 = smul.addr %s937, 2
        %s941 = sadd.s32 %s939, %s940
        %s942 = smul.addr %s941, 4
        %s943 = scalar_lea.vmem %s7, %s942
        // Predicated region
        $region65: #{dgcnn_cls_forward.8} parent=47 // pred_check
          %p944 = pneg %p217
        $region66: #{dgcnn_cls_forward.8} parent=47 // pred_check_branch
          %946 = sbr.rel (%p944) target = $region68
        $region67: #{dgcnn_cls_forward.8} parent=47 // pred_region
          %s947 = smul.u32 2, %s26
        $region68: #{dgcnn_cls_forward.8} parent=47 // pred_fallthru
          _
      $region48: #{dgcnn_cls_forward.8} parent=5 // pred_fallthru
        _
      %p948 = scmp.le.s32.totalorder 2, %s16
      // Predicated region
      $region69: #{dgcnn_cls_forward.8} parent=5 // pred_check
        %p949 = pneg %p948
      $region70: #{dgcnn_cls_forward.8} parent=5 // pred_check_branch
        %951 = sbr.rel (%p949) target = $region72
      $region71: #{dgcnn_cls_forward.8} parent=5 // pred_region
        %s952 = ssub.s32 %s16, 2
        // Predicated region
        $region73: #{dgcnn_cls_forward.8} parent=71 // pred_check
          %p953 = pneg %p223
        $region74: #{dgcnn_cls_forward.8} parent=71 // pred_check_branch
          %955 = sbr.rel (%p953) target = $region76
        $region75: #{dgcnn_cls_forward.8} parent=71 // pred_region
          %s956 = smul.u32 2, %s28
          %p957 = scmp.lt.s32.totalorder %s27, 1
          %s958 = scalar_select %p957, %s27, 1
          %p959 = scmp.lt.s32.totalorder %s956, 1
          %s960 = scalar_select %p959, %s956, 1
          %s961 = smul.addr %s958, 2
          %s962 = sadd.s32 %s960, %s961
          %s963 = smul.addr %s962, 4
          %s964 = scalar_lea.vmem %s7, %s963
        $region76: #{dgcnn_cls_forward.8} parent=71 // pred_fallthru
          _
      $region72: #{dgcnn_cls_forward.8} parent=5 // pred_fallthru
        _
    $region6: #{dgcnn_cls_forward.8} parent=1 // loop_footer
      %s20 = sadd.s32 1, %s16
    $region7: #{dgcnn_cls_forward.8} parent=1 // loop_footer_branch
      %15 = sbr.rel target = $region3
    $region8: #{dgcnn_cls_forward.8} parent=1 // loop_exit
      _
    %965 = vsyncpa [#allocation3], 1
    %s966 = scalar_lea.sflag [#allocation3], 1
    %967 = vsyncpa %s966, 1
    %968 = vsyncpa [#allocation5], 1
    %969 = vsyncpa [#allocation8], 1

// kernel: dgcnn_cls_forward.9
$region0: #{dgcnn_cls_forward.9}
  #allocation0 [shape = 'u32[]', space=smem, size = 0x4, offset = 0x4, fixed_abs, tag = 'smem constant byte address 0x4 - core index']
  #allocation1 [shape = 'u32[72,128]{1,0:T(1,128)}', space=vmem, size = 0x9000, scoped, tag = 'internal scratch']
  %s0 = inlined_call_operand.vmem [shape: bf16[2,16,128], index: 0, kind: input, shape index: {}, may-alias: {0,1}]
  %s1 = inlined_call_operand.vmem [shape: bf16[2,16,128], index: 1, kind: input, shape index: {}, may-alias: {0,1}]
  %s2 = inlined_call_operand.vmem [shape: f32[2,1,16], index: 2, kind: input, shape index: {}]
  %s3 = inlined_call_operand.hbm [shape: bf16[128,256], index: 3, kind: input, shape index: {}]
  %s4 = inlined_call_operand.hbm [shape: bf16[128,256], index: 4, kind: input, shape index: {}]
  %s5 = inlined_call_operand.vmem [shape: f32[1,256], index: 5, kind: input, shape index: {}]
  %s6 = inlined_call_operand.vmem [shape: f32[1,256], index: 6, kind: input, shape index: {}]
  %s7 = inlined_call_operand.vmem [shape: bf16[2,16,256], index: 7, kind: output, shape index: {}]
  %s8 = sld [smem:[#allocation0]]
  $region69: #{dgcnn_cls_forward.9} parent=0
    _
  %s10 = ssub.s32 1, %s8
  %s11 = scalar_select 0, %s10, %s8
  $region1: #{dgcnn_cls_forward.9} parent=0
    #allocation2 [shape = 'u8[65536]{0}', space=vmem, size = 0x10000, scoped, tag = 'input window, operand 3, single buffered']
    #allocation3 [shape = 's32[2]{0}', space=sflag, size = 0x8, scoped, tag = 'scoped memory for dgcnn_cls_forward.9']
    #allocation4 [shape = 'u8[65536]{0}', space=vmem, size = 0x10000, scoped, tag = 'input window, operand 4, single buffered']
    #allocation5 [shape = 's32[1]{0}', space=sflag, size = 0x4, scoped, tag = 'scoped memory for dgcnn_cls_forward.9']
    %12 = vsyncpa [#allocation3], 0
    %13 = vsyncpa [#allocation5], 0
    loop: start=0, step=1, limit=4
    $region2: #{dgcnn_cls_forward.9} parent=1 // loop_pre_header
      _
    $region3: #{dgcnn_cls_forward.9} parent=1 // loop_header
      %s15 = sphi 0, %s19
      %p16 = scmp.ge.s32.totalorder %s15, 4
      %s22 = sphi 0, %s34
      %s23 = sphi 0, %s30
      %s24 = sphi 0, %s22
      %s25 = sphi 0, %s23
      %s26 = sphi 0, %s24
      %s27 = sphi 0, %s25
      %s37 = sphi 0, %s39
      %s40 = sphi 0, %s37
      %s41 = sphi 0, %s40
      %s57 = sphi 0, %s41
      %s65 = sphi 0, %s67
      %s68 = sphi 0, %s65
      %s69 = sphi 0, %s68
      %s85 = sphi 0, %s69
      %s91 = sphi 0, %s93
      %s94 = sphi 0, %s91
      %s95 = sphi 0, %s94
      %s111 = sphi 0, %s95
      %s115 = sphi 0, %s115
      %s117 = sphi 0, %s115
      %s118 = sphi 0, %s117
      %s132 = sphi 0, %s118
      %s136 = sphi 0, %s136
      %s138 = sphi 0, %s136
      %s139 = sphi 0, %s138
      %s153 = sphi 0, %s139
      %s157 = sphi 0, %s157
      %s159 = sphi 0, %s157
      %s160 = sphi 0, %s159
      %s174 = sphi 0, %s160
      %s178 = sphi 0, %s178
      %s180 = sphi 0, %s178
      %s181 = sphi 0, %s180
      %s195 = sphi 0, %s181
      %s203 = sphi 0, %s205
      %s206 = sphi 0, %s203
      %s207 = sphi 0, %s206
      %s223 = sphi 0, %s207
    $region4: #{dgcnn_cls_forward.9} parent=1 // loop_header_branch
      %18 = sbr.rel (%p16) target = $region8
    $region5: #{dgcnn_cls_forward.9} parent=1 // loop_body
      %s20 = ssub.s32 %s15, 1
      %s21 = ssub.s32 %s15, 2
      %s28 = sadd.s32 1, %s23
      %p29 = scmp.ge.s32.totalorder %s28, 1
      %s30 = scalar_select %p29, 0, %s28
      %s31 = sadd.s32 1, %s22
      %s32 = scalar_select %p29, %s31, %s22
      %p33 = scmp.ge.s32.totalorder %s32, 2
      %s34 = scalar_select %p33, 0, %s32
      %s35 = ssub.s32 %s22, %s34
      %p36 = scmp.eq.s32.totalorder %s35, 0
      %s38 = sadd.s32 %s37, 1
      %s39 = scalar_select %p36, %s37, %s38
      %p42 = pneg %p36
      %p43 = scmp.eq.s32.totalorder %s15, 1
      %p44 = por %p42, %p43
      %p45 = scmp.ne.s32.totalorder %s37, %s40
      %p46 = scmp.eq.s32.totalorder %s15, 0
      %p47 = por %p45, %p46
      %p48 = scmp.ne.s32.totalorder %s37, %s40
      %p49 = scmp.eq.s32.totalorder %s20, 1
      %p50 = por %p48, %p49
      %p51 = scmp.ne.s32.totalorder %s40, %s41
      %p52 = scmp.eq.s32.totalorder %s20, 0
      %p53 = por %p51, %p52
      %p54 = scmp.ne.s32.totalorder %s40, %s41
      %p55 = scmp.eq.s32.totalorder %s21, 1
      %p56 = por %p54, %p55
      %p58 = scmp.ne.s32.totalorder %s41, %s57
      %p59 = scmp.eq.s32.totalorder %s21, 0
      %p60 = por %p58, %p59
      %s61 = ssub.s32 %s22, %s34
      %s62 = ssub.s32 %s23, %s30
      %s63 = sor.u32 %s61, %s62
      %p64 = scmp.eq.s32.totalorder %s63, 0
      %s66 = sadd.s32 %s65, 1
      %s67 = scalar_select %p64, %s65, %s66
      %p70 = pneg %p64
      %p71 = scmp.eq.s32.totalorder %s15, 1
      %p72 = por %p70, %p71
      %p73 = scmp.ne.s32.totalorder %s65, %s68
      %p74 = scmp.eq.s32.totalorder %s15, 0
      %p75 = por %p73, %p74
      %p76 = scmp.ne.s32.totalorder %s65, %s68
      %p77 = scmp.eq.s32.totalorder %s20, 1
      %p78 = por %p76, %p77
      %p79 = scmp.ne.s32.totalorder %s68, %s69
      %p80 = scmp.eq.s32.totalorder %s20, 0
      %p81 = por %p79, %p80
      %p82 = scmp.ne.s32.totalorder %s68, %s69
      %p83 = scmp.eq.s32.totalorder %s21, 1
      %p84 = por %p82, %p83
      %p86 = scmp.ne.s32.totalorder %s69, %s85
      %p87 = scmp.eq.s32.totalorder %s21, 0
      %p88 = por %p86, %p87
      %s89 = ssub.s32 %s22, %s34
      %p90 = scmp.eq.s32.totalorder %s89, 0
      %s92 = sadd.s32 %s91, 1
      %s93 = scalar_select %p90, %s91, %s92
      %p96 = pneg %p90
      %p97 = scmp.eq.s32.totalorder %s15, 1
      %p98 = por %p96, %p97
      %p99 = scmp.ne.s32.totalorder %s91, %s94
      %p100 = scmp.eq.s32.totalorder %s15, 0
      %p101 = por %p99, %p100
      %p102 = scmp.ne.s32.totalorder %s91, %s94
      %p103 = scmp.eq.s32.totalorder %s20, 1
      %p104 = por %p102, %p103
      %p105 = scmp.ne.s32.totalorder %s94, %s95
      %p106 = scmp.eq.s32.totalorder %s20, 0
      %p107 = por %p105, %p106
      %p108 = scmp.ne.s32.totalorder %s94, %s95
      %p109 = scmp.eq.s32.totalorder %s21, 1
      %p110 = por %p108, %p109
      %p112 = scmp.ne.s32.totalorder %s95, %s111
      %p113 = scmp.eq.s32.totalorder %s21, 0
      %p114 = por %p112, %p113
      %s116 = sadd.s32 %s115, 1
      %p119 = scmp.eq.s32.totalorder %s15, 1
      %p120 = scmp.ne.s32.totalorder %s115, %s117
      %p121 = scmp.eq.s32.totalorder %s15, 0
      %p122 = por %p120, %p121
      %p123 = scmp.ne.s32.totalorder %s115, %s117
      %p124 = scmp.eq.s32.totalorder %s20, 1
      %p125 = por %p123, %p124
      %p126 = scmp.ne.s32.totalorder %s117, %s118
      %p127 = scmp.eq.s32.totalorder %s20, 0
      %p128 = por %p126, %p127
      %p129 = scmp.ne.s32.totalorder %s117, %s118
      %p130 = scmp.eq.s32.totalorder %s21, 1
      %p131 = por %p129, %p130
      %p133 = scmp.ne.s32.totalorder %s118, %s132
      %p134 = scmp.eq.s32.totalorder %s21, 0
      %p135 = por %p133, %p134
      %s137 = sadd.s32 %s136, 1
      %p140 = scmp.eq.s32.totalorder %s15, 1
      %p141 = scmp.ne.s32.totalorder %s136, %s138
      %p142 = scmp.eq.s32.totalorder %s15, 0
      %p143 = por %p141, %p142
      %p144 = scmp.ne.s32.totalorder %s136, %s138
      %p145 = scmp.eq.s32.totalorder %s20, 1
      %p146 = por %p144, %p145
      %p147 = scmp.ne.s32.totalorder %s138, %s139
      %p148 = scmp.eq.s32.totalorder %s20, 0
      %p149 = por %p147, %p148
      %p150 = scmp.ne.s32.totalorder %s138, %s139
      %p151 = scmp.eq.s32.totalorder %s21, 1
      %p152 = por %p150, %p151
      %p154 = scmp.ne.s32.totalorder %s139, %s153
      %p155 = scmp.eq.s32.totalorder %s21, 0
      %p156 = por %p154, %p155
      %s158 = sadd.s32 %s157, 1
      %p161 = scmp.eq.s32.totalorder %s15, 1
      %p162 = scmp.ne.s32.totalorder %s157, %s159
      %p163 = scmp.eq.s32.totalorder %s15, 0
      %p164 = por %p162, %p163
      %p165 = scmp.ne.s32.totalorder %s157, %s159
      %p166 = scmp.eq.s32.totalorder %s20, 1
      %p167 = por %p165, %p166
      %p168 = scmp.ne.s32.totalorder %s159, %s160
      %p169 = scmp.eq.s32.totalorder %s20, 0
      %p170 = por %p168, %p169
      %p171 = scmp.ne.s32.totalorder %s159, %s160
      %p172 = scmp.eq.s32.totalorder %s21, 1
      %p173 = por %p171, %p172
      %p175 = scmp.ne.s32.totalorder %s160, %s174
      %p176 = scmp.eq.s32.totalorder %s21, 0
      %p177 = por %p175, %p176
      %s179 = sadd.s32 %s178, 1
      %p182 = scmp.eq.s32.totalorder %s15, 1
      %p183 = scmp.ne.s32.totalorder %s178, %s180
      %p184 = scmp.eq.s32.totalorder %s15, 0
      %p185 = por %p183, %p184
      %p186 = scmp.ne.s32.totalorder %s178, %s180
      %p187 = scmp.eq.s32.totalorder %s20, 1
      %p188 = por %p186, %p187
      %p189 = scmp.ne.s32.totalorder %s180, %s181
      %p190 = scmp.eq.s32.totalorder %s20, 0
      %p191 = por %p189, %p190
      %p192 = scmp.ne.s32.totalorder %s180, %s181
      %p193 = scmp.eq.s32.totalorder %s21, 1
      %p194 = por %p192, %p193
      %p196 = scmp.ne.s32.totalorder %s181, %s195
      %p197 = scmp.eq.s32.totalorder %s21, 0
      %p198 = por %p196, %p197
      %s199 = ssub.s32 %s22, %s34
      %s200 = ssub.s32 %s23, %s30
      %s201 = sor.u32 %s199, %s200
      %p202 = scmp.eq.s32.totalorder %s201, 0
      %s204 = sadd.s32 %s203, 1
      %s205 = scalar_select %p202, %s203, %s204
      %p208 = pneg %p202
      %p209 = scmp.eq.s32.totalorder %s15, 1
      %p210 = por %p208, %p209
      %p211 = scmp.ne.s32.totalorder %s203, %s206
      %p212 = scmp.eq.s32.totalorder %s15, 0
      %p213 = por %p211, %p212
      %p214 = scmp.ne.s32.totalorder %s203, %s206
      %p215 = scmp.eq.s32.totalorder %s20, 1
      %p216 = por %p214, %p215
      %p217 = scmp.ne.s32.totalorder %s206, %s207
      %p218 = scmp.eq.s32.totalorder %s20, 0
      %p219 = por %p217, %p218
      %p220 = scmp.ne.s32.totalorder %s206, %s207
      %p221 = scmp.eq.s32.totalorder %s21, 1
      %p222 = por %p220, %p221
      %p224 = scmp.ne.s32.totalorder %s207, %s223
      %p225 = scmp.eq.s32.totalorder %s21, 0
      %p226 = por %p224, %p225
      %p227 = scmp.le.s32.totalorder 1, %s15
      %p228 = scmp.lt.s32.totalorder %s15, 3
      %p229 = pnand %p227, %p228
      %p230 = pneg %p229
      // Predicated region
      $region9: #{dgcnn_cls_forward.9} parent=5 // pred_check
        _
      $region10: #{dgcnn_cls_forward.9} parent=5 // pred_check_branch
        %232 = sbr.rel (%p229) target = $region12
      $region11: #{dgcnn_cls_forward.9} parent=5 // pred_region
        %s233 = ssub.s32 %s15, 1
        // Predicated region
        $region13: #{dgcnn_cls_forward.9} parent=11 // pred_check
          %p234 = pneg %p128
        $region14: #{dgcnn_cls_forward.9} parent=11 // pred_check_branch
          %236 = sbr.rel (%p234) target = $region16
        $region15: #{dgcnn_cls_forward.9} parent=11 // pred_region
          %238 = vsyncadd [#allocation3], 0
          %s239 = sshll.u32 %s3, 4
          %s240 = int_to_ptr.hbm [resolvable:$true] %s239
          %s241 = sshll.u32 [#allocation2], 4
          %s242 = int_to_ptr.vmem [resolvable:$true] %s241
          %247 = dma.hbm_to_vmem [thread:$0]  %s240, 2048, %s242, [#allocation3], 128, 128, 8
        $region16: #{dgcnn_cls_forward.9} parent=11 // pred_fallthru
          _
        // Predicated region
        $region17: #{dgcnn_cls_forward.9} parent=11 // pred_check
          %p248 = pneg %p149
        $region18: #{dgcnn_cls_forward.9} parent=11 // pred_check_branch
          %250 = sbr.rel (%p248) target = $region20
        $region19: #{dgcnn_cls_forward.9} parent=11 // pred_region
          %252 = vsyncadd [#allocation5], 0
          %s253 = sshll.u32 %s4, 4
          %s254 = int_to_ptr.hbm [resolvable:$true] %s253
          %s255 = sshll.u32 [#allocation4], 4
          %s256 = int_to_ptr.vmem [resolvable:$true] %s255
          %261 = dma.hbm_to_vmem [thread:$0]  %s254, 2048, %s256, [#allocation5], 128, 128, 8
        $region20: #{dgcnn_cls_forward.9} parent=11 // pred_fallthru
          _
        // Predicated region
        $region21: #{dgcnn_cls_forward.9} parent=11 // pred_check
          %p262 = pneg %p170
        $region22: #{dgcnn_cls_forward.9} parent=11 // pred_check_branch
          %264 = sbr.rel (%p262) target = $region24
        $region23: #{dgcnn_cls_forward.9} parent=11 // pred_region
          _
        $region24: #{dgcnn_cls_forward.9} parent=11 // pred_fallthru
          _
        // Predicated region
        $region25: #{dgcnn_cls_forward.9} parent=11 // pred_check
          %p265 = pneg %p191
        $region26: #{dgcnn_cls_forward.9} parent=11 // pred_check_branch
          %267 = sbr.rel (%p265) target = $region28
        $region27: #{dgcnn_cls_forward.9} parent=11 // pred_region
          _
        $region28: #{dgcnn_cls_forward.9} parent=11 // pred_fallthru
          _
      $region12: #{dgcnn_cls_forward.9} parent=5 // pred_fallthru
        _
      %p268 = scmp.lt.s32.totalorder %s15, 2
      // Predicated region
      $region29: #{dgcnn_cls_forward.9} parent=5 // pred_check
        %p269 = pneg %p268
      $region30: #{dgcnn_cls_forward.9} parent=5 // pred_check_branch
        %271 = sbr.rel (%p269) target = $region32
      $region31: #{dgcnn_cls_forward.9} parent=5 // pred_region
        // Predicated region
        $region33: #{dgcnn_cls_forward.9} parent=31 // pred_check
          %p272 = pneg %p47
        $region34: #{dgcnn_cls_forward.9} parent=31 // pred_check_branch
          %274 = sbr.rel (%p272) target = $region36
        $region35: #{dgcnn_cls_forward.9} parent=31 // pred_region
          %p275 = scmp.lt.s32.totalorder %s22, 1
          %s276 = scalar_select %p275, %s22, 1
          %s277 = smul.addr %s276, 2
          %s278 = smul.addr %s277, 4
          %s279 = scalar_lea.vmem %s0, %s278
        $region36: #{dgcnn_cls_forward.9} parent=31 // pred_fallthru
          _
        // Predicated region
        $region37: #{dgcnn_cls_forward.9} parent=31 // pred_check
          %p280 = pneg %p75
        $region38: #{dgcnn_cls_forward.9} parent=31 // pred_check_branch
          %282 = sbr.rel (%p280) target = $region40
        $region39: #{dgcnn_cls_forward.9} parent=31 // pred_region
          %s283 = smul.u32 2, %s23
          %p284 = scmp.lt.s32.totalorder %s22, 1
          %s285 = scalar_select %p284, %s22, 1
          %p286 = scmp.lt.s32.totalorder %s283, 1
          %s287 = scalar_select %p286, %s283, 1
          %s288 = smul.addr %s285, 2
          %s289 = sadd.s32 %s287, %s288
          %s290 = smul.addr %s289, 4
          %s291 = scalar_lea.vmem %s1, %s290
          %s292 = smul.u32 2, %s23
        $region40: #{dgcnn_cls_forward.9} parent=31 // pred_fallthru
          _
        // Predicated region
        $region41: #{dgcnn_cls_forward.9} parent=31 // pred_check
          %p293 = pneg %p101
        $region42: #{dgcnn_cls_forward.9} parent=31 // pred_check_branch
          %295 = sbr.rel (%p293) target = $region44
        $region43: #{dgcnn_cls_forward.9} parent=31 // pred_region
          %p296 = scmp.lt.s32.totalorder %s22, 1
          %s297 = scalar_select %p296, %s22, 1
          %s298 = scalar_lea.vmem %s2, %s297
        $region44: #{dgcnn_cls_forward.9} parent=31 // pred_fallthru
          _
      $region32: #{dgcnn_cls_forward.9} parent=5 // pred_fallthru
        _
      %p299 = scmp.le.s32.totalorder 1, %s15
      %p300 = scmp.lt.s32.totalorder %s15, 3
      %p301 = pnand %p299, %p300
      %p302 = pneg %p301
      // Predicated region
      $region45: #{dgcnn_cls_forward.9} parent=5 // pred_check
        _
      $region46: #{dgcnn_cls_forward.9} parent=5 // pred_check_branch
        %304 = sbr.rel (%p301) target = $region48
      $region47: #{dgcnn_cls_forward.9} parent=5 // pred_region
        %s305 = ssub.s32 %s15, 1
        // Predicated region
        $region49: #{dgcnn_cls_forward.9} parent=47 // pred_check
          %p306 = pneg %p128
        $region50: #{dgcnn_cls_forward.9} parent=47 // pred_check_branch
          %308 = sbr.rel (%p306) target = $region52
        $region51: #{dgcnn_cls_forward.9} parent=47 // pred_region
          %310 = dma.done [#allocation3], 2048
        $region52: #{dgcnn_cls_forward.9} parent=47 // pred_fallthru
          _
        // Predicated region
        $region53: #{dgcnn_cls_forward.9} parent=47 // pred_check
          %p311 = pneg %p149
        $region54: #{dgcnn_cls_forward.9} parent=47 // pred_check_branch
          %313 = sbr.rel (%p311) target = $region56
        $region55: #{dgcnn_cls_forward.9} parent=47 // pred_region
          %315 = dma.done [#allocation5], 2048
        $region56: #{dgcnn_cls_forward.9} parent=47 // pred_fallthru
          _
        %p316 = scmp.lt.s32.totalorder %s24, 1
        %s317 = scalar_select %p316, %s24, 1
        %s318 = smul.addr %s317, 2
        %s319 = smul.addr %s318, 4
        %s320 = scalar_lea.vmem %s0, %s319
        %p321 = pneg %p53
        %p322 = pneg %p50
        %s323 = smul.u32 2, %s25
        %p324 = scmp.lt.s32.totalorder %s24, 1
        %s325 = scalar_select %p324, %s24, 1
        %p326 = scmp.lt.s32.totalorder %s323, 1
        %s327 = scalar_select %p326, %s323, 1
        %s328 = smul.addr %s325, 2
        %s329 = sadd.s32 %s327, %s328
        %s330 = smul.addr %s329, 4
        %s331 = scalar_lea.vmem %s1, %s330
        %p332 = pneg %p81
        %p333 = pneg %p78
        %p334 = scmp.lt.s32.totalorder %s24, 1
        %s335 = scalar_select %p334, %s24, 1
        %s336 = scalar_lea.vmem %s2, %s335
        %p337 = pneg %p107
        %p338 = pneg %p104
        %p339 = pneg %p128
        %p340 = pneg %p125
        %p341 = pneg %p149
        %p342 = pneg %p146
        %p343 = pneg %p170
        %p344 = pneg %p167
        %p345 = pneg %p191
        %p346 = pneg %p188
        %p347 = pneg %p219
        %p348 = pneg %p216
        %s349 = smul.u32 2, %s25
        %p350 = scmp.lt.s32.totalorder %s24, 1
        %s351 = scalar_select %p350, %s24, 1
        %p352 = scmp.lt.s32.totalorder %s349, 1
        %s353 = scalar_select %p352, %s349, 1
        %s354 = smul.addr %s353, 2
        %s355 = smul.addr %s351, 4
        %s356 = sadd.s32 %s354, %s355
        %s357 = smul.addr %s356, 4
        %s358 = scalar_lea.vmem %s7, %s357
        %p359 = scmp.lt.s32.totalorder %s24, 1
        %s360 = scalar_select %p359, %s24, 1
        %s361 = smul.addr %s360, 2
        %s362 = smul.addr %s361, 4
        %s363 = scalar_lea.vmem %s0, %s362
        %s364 = smul.u32 2, %s25
        %p365 = scmp.lt.s32.totalorder %s24, 1
        %s366 = scalar_select %p365, %s24, 1
        %p367 = scmp.lt.s32.totalorder %s364, 1
        %s368 = scalar_select %p367, %s364, 1
        %s369 = smul.addr %s366, 2
        %s370 = sadd.s32 %s368, %s369
        %s371 = smul.addr %s370, 4
        %s372 = scalar_lea.vmem %s1, %s371
        %s373 = smul.u32 2, %s25
        %p374 = scmp.lt.s32.totalorder %s24, 1
        %s375 = scalar_select %p374, %s24, 1
        %s376 = scalar_lea.vmem %s2, %s375
        %s377 = smul.u32 2, %s25
        %p378 = scmp.lt.s32.totalorder %s24, 1
        %s379 = scalar_select %p378, %s24, 1
        %p380 = scmp.lt.s32.totalorder %s377, 1
        %s381 = scalar_select %p380, %s377, 1
        %s382 = smul.addr %s381, 2
        %s383 = smul.addr %s379, 4
        %s384 = sadd.s32 %s382, %s383
        %s385 = smul.addr %s384, 4
        %s386 = scalar_lea.vmem %s7, %s385
        %s387 = smul.u32 2, %s25
        %v389 = vld [vmem:[%s363] sm:$0xf]
        %v390 = vld [vmem:[%s363 + $0x4] sm:$0xf]
        %v391 = vunpack.c.l.bf16 %v389
        %v392 = vunpack.c.l.bf16 %v390
        %v393 = vld [vmem:[%s372] sm:$0xf]
        %v394 = vld [vmem:[%s372 + $0x4] sm:$0xf]
        %v395 = vunpack.c.l.bf16 %v393
        %v396 = vunpack.c.l.bf16 %v394
        %397 = vmatpush.xpose.msra.mxu0 0.0
        %398 = vmatpush.xpose.msra.mxu0 0.0
        %399 = vmatpush.xpose.msra.mxu0 0.0
        %400 = vmatpush.xpose.msra.mxu0 0.0
        %401 = vmatpush.xpose.msra.mxu0 0.0
        %402 = vmatpush.xpose.msra.mxu0 0.0
        %403 = vmatpush.xpose.msra.mxu0 0.0
        %404 = vmatpush.xpose.msra.mxu0 0.0
        %405 = vmatpush.xpose.msra.mxu0 0.0
        %406 = vmatpush.xpose.msra.mxu0 0.0
        %407 = vmatpush.xpose.msra.mxu0 0.0
        %408 = vmatpush.xpose.msra.mxu0 0.0
        %409 = vmatpush.xpose.msra.mxu0 0.0
        %410 = vmatpush.xpose.msra.mxu0 0.0
        %411 = vmatpush.xpose.msra.mxu0 %v392
        %412 = vmatpush.xpose.msra.mxu0 %v391
        %413 = vmatmul.f32.gmra.mxu0 %v395
        %v414 = vpop.f32.mrf.mxu0
        %v415 = vadd.f32 0.0, %v414
        %416 = vmatmul.f32.gmra.mxu0 %v396
        %v417 = vpop.f32.mrf.mxu0
        %v418 = vadd.f32 0.0, %v417
        %419 = vdwg.mxu0
        %v420 = vmul.f32 %v395, %v395
        %v421 = vmul.f32 %v396, %v396
        %422 = vadd.xlane.f32.xlu0 %v420
        %v423 = vpop.xlane.xlu0 %422
        %424 = vadd.xlane.f32.xlu0 %v421
        %v425 = vpop.xlane.xlu0 %424
        %v426 = vmul.f32 %v415, 2.0
        %v427 = vmul.f32 %v418, 2.0
        %v428 = vsub.f32 %v426, %v423
        %v429 = vsub.f32 %v427, %v425
        %v430 = vld [vmem:[%s376] sm:$0x1]
        %v432 = vperm.slane %v430, 0
        %v434 = vsub.f32 %v428, %v432
        %v435 = vsub.f32 %v429, %v432
        %vm438 = vcmp.lt.s32.totalorder %v434, 0
        %vm439 = vcmp.lt.s32.totalorder %v435, 0
        %v440 = vxor.u32 %v434, 2147483647
        %v441 = vxor.u32 %v435, 2147483647
        %v442 = vsel %vm438, %v440, %v434
        %v443 = vsel %vm439, %v441, %v435
        %v444 = vlaneseq
        %v445 = vand.u32 %v444, 127
        %v446 = vand.u32 %v442, 4294967280
        %v447 = vand.u32 %v443, 4294967280
        %v448 = vor.u32 %v446, %v445
        %v449 = vor.u32 %v447, %v445
        %vm450 = vcmask 130048
        %v451 = vsel %vm450, %v448, 2147483648
        %v452 = vand.u32 %v451, 65535
        %v453 = vshra.s32 %v451, 16
        %v454 = vcvt.s32.f32 %v452
        %v455 = vcvt.s32.f32 %v453
        %456 = vmax.xlane.f32.xlu0 %v455
        %v457 = vpop.xlane.xlu0 %456
        %vm458 = vcmp.eq.f32.partialorder %v455, %v457
        %v459 = vsel %vm458, %v454, -inf
        %460 = vmax.xlane.f32.xlu0 %v459
        %v461 = vpop.xlane.xlu0 %460
        %v462 = vcvt.f32.s32 %v461
        %v463 = vcvt.f32.s32 %v457
        %v464 = vshll.u32 %v463, 16
        %v465 = vadd.s32 %v464, %v462
        %v466 = vsel %vm450, %v449, 2147483648
        %v467 = vand.u32 %v466, 65535
        %v468 = vshra.s32 %v466, 16
        %v469 = vcvt.s32.f32 %v467
        %v470 = vcvt.s32.f32 %v468
        %471 = vmax.xlane.f32.xlu0 %v470
        %v472 = vpop.xlane.xlu0 %471
        %vm473 = vcmp.eq.f32.partialorder %v470, %v472
        %v474 = vsel %vm473, %v469, -inf
        %475 = vmax.xlane.f32.xlu0 %v474
        %v476 = vpop.xlane.xlu0 %475
        %v477 = vcvt.f32.s32 %v476
        %v478 = vcvt.f32.s32 %v472
        %v479 = vshll.u32 %v478, 16
        %v480 = vadd.s32 %v479, %v477
        %v481 = vand.u32 %v465, 15
        %v482 = vand.u32 %v480, 15
        %vm483 = vcmp.eq.s32.totalorder %v448, %v465
        %vm484 = vcmp.eq.s32.totalorder %v449, %v480
        %v485 = vsel %vm483, 2147483648, %v448
        %v486 = vsel %vm484, 2147483648, %v449
        %v487 = vsel %vm450, %v485, 2147483648
        %v488 = vand.u32 %v487, 65535
        %v489 = vshra.s32 %v487, 16
        %v490 = vcvt.s32.f32 %v488
        %v491 = vcvt.s32.f32 %v489
        %492 = vmax.xlane.f32.xlu0 %v491
        %v493 = vpop.xlane.xlu0 %492
        %vm494 = vcmp.eq.f32.partialorder %v491, %v493
        %v495 = vsel %vm494, %v490, -inf
        %496 = vmax.xlane.f32.xlu0 %v495
        %v497 = vpop.xlane.xlu0 %496
        %v498 = vcvt.f32.s32 %v497
        %v499 = vcvt.f32.s32 %v493
        %v500 = vshll.u32 %v499, 16
        %v501 = vadd.s32 %v500, %v498
        %v502 = vsel %vm450, %v486, 2147483648
        %v503 = vand.u32 %v502, 65535
        %v504 = vshra.s32 %v502, 16
        %v505 = vcvt.s32.f32 %v503
        %v506 = vcvt.s32.f32 %v504
        %507 = vmax.xlane.f32.xlu0 %v506
        %v508 = vpop.xlane.xlu0 %507
        %vm509 = vcmp.eq.f32.partialorder %v506, %v508
        %v510 = vsel %vm509, %v505, -inf
        %511 = vmax.xlane.f32.xlu0 %v510
        %v512 = vpop.xlane.xlu0 %511
        %v513 = vcvt.f32.s32 %v512
        %v514 = vcvt.f32.s32 %v508
        %v515 = vshll.u32 %v514, 16
        %v516 = vadd.s32 %v515, %v513
        %v517 = vand.u32 %v501, 15
        %v518 = vand.u32 %v516, 15
        %vm519 = vcmp.eq.s32.totalorder %v485, %v501
        %vm520 = vcmp.eq.s32.totalorder %v486, %v516
        %v521 = vsel %vm519, 2147483648, %v485
        %v522 = vsel %vm520, 2147483648, %v486
        %v523 = vsel %vm450, %v521, 2147483648
        %v524 = vand.u32 %v523, 65535
        %v525 = vshra.s32 %v523, 16
        %v526 = vcvt.s32.f32 %v524
        %v527 = vcvt.s32.f32 %v525
        %528 = vmax.xlane.f32.xlu0 %v527
        %v529 = vpop.xlane.xlu0 %528
        %vm530 = vcmp.eq.f32.partialorder %v527, %v529
        %v531 = vsel %vm530, %v526, -inf
        %532 = vmax.xlane.f32.xlu0 %v531
        %v533 = vpop.xlane.xlu0 %532
        %v534 = vcvt.f32.s32 %v533
        %v535 = vcvt.f32.s32 %v529
        %v536 = vshll.u32 %v535, 16
        %v537 = vadd.s32 %v536, %v534
        %v538 = vsel %vm450, %v522, 2147483648
        %v539 = vand.u32 %v538, 65535
        %v540 = vshra.s32 %v538, 16
        %v541 = vcvt.s32.f32 %v539
        %v542 = vcvt.s32.f32 %v540
        %543 = vmax.xlane.f32.xlu0 %v542
        %v544 = vpop.xlane.xlu0 %543
        %vm545 = vcmp.eq.f32.partialorder %v542, %v544
        %v546 = vsel %vm545, %v541, -inf
        %547 = vmax.xlane.f32.xlu0 %v546
        %v548 = vpop.xlane.xlu0 %547
        %v549 = vcvt.f32.s32 %v548
        %v550 = vcvt.f32.s32 %v544
        %v551 = vshll.u32 %v550, 16
        %v552 = vadd.s32 %v551, %v549
        %v553 = vand.u32 %v537, 15
        %v554 = vand.u32 %v552, 15
        %vm555 = vcmp.eq.s32.totalorder %v521, %v537
        %vm556 = vcmp.eq.s32.totalorder %v522, %v552
        %v557 = vsel %vm555, 2147483648, %v521
        %v558 = vsel %vm556, 2147483648, %v522
        %v559 = vsel %vm450, %v557, 2147483648
        %v560 = vand.u32 %v559, 65535
        %v561 = vshra.s32 %v559, 16
        %v562 = vcvt.s32.f32 %v560
        %v563 = vcvt.s32.f32 %v561
        %564 = vmax.xlane.f32.xlu0 %v563
        %v565 = vpop.xlane.xlu0 %564
        %vm566 = vcmp.eq.f32.partialorder %v563, %v565
        %v567 = vsel %vm566, %v562, -inf
        %568 = vmax.xlane.f32.xlu0 %v567
        %v569 = vpop.xlane.xlu0 %568
        %v570 = vcvt.f32.s32 %v569
        %v571 = vcvt.f32.s32 %v565
        %v572 = vshll.u32 %v571, 16
        %v573 = vadd.s32 %v572, %v570
        %v574 = vsel %vm450, %v558, 2147483648
        %v575 = vand.u32 %v574, 65535
        %v576 = vshra.s32 %v574, 16
        %v577 = vcvt.s32.f32 %v575
        %v578 = vcvt.s32.f32 %v576
        %579 = vmax.xlane.f32.xlu0 %v578
        %v580 = vpop.xlane.xlu0 %579
        %vm581 = vcmp.eq.f32.partialorder %v578, %v580
        %v582 = vsel %vm581, %v577, -inf
        %583 = vmax.xlane.f32.xlu0 %v582
        %v584 = vpop.xlane.xlu0 %583
        %v585 = vcvt.f32.s32 %v584
        %v586 = vcvt.f32.s32 %v580
        %v587 = vshll.u32 %v586, 16
        %v588 = vadd.s32 %v587, %v585
        %v589 = vand.u32 %v573, 15
        %v590 = vand.u32 %v588, 15
        %vm591 = vcmp.eq.s32.totalorder %v445, %v481
        %vm592 = vcmp.eq.s32.totalorder %v445, %v482
        %v593 = vsel %vm591, 1, 0
        %v594 = vsel %vm592, 1, 0
        %v595 = vcvt.s32.f32 %v593
        %v596 = vcvt.s32.f32 %v594
        %v597 = vpack.c.bf16 %v596, %v595
        %v600 = vunpack.c.l.b16 %v389
        %v601 = vunpack.c.l.b16 %v390
        %v602 = vpack.c.b16 %v601, %v600
        %v605 = vsel %vm450, %v597, 0
        %607 = vmatpush.bf16.msra.mxu0 0
        %608 = vmatpush.bf16.msra.mxu0 0
        %609 = vmatpush.bf16.msra.mxu0 0
        %610 = vmatpush.bf16.msra.mxu0 0
        %611 = vmatpush.bf16.msra.mxu0 0
        %612 = vmatpush.bf16.msra.mxu0 0
        %613 = vmatpush.bf16.msra.mxu0 0
        %614 = vmatpush.bf16.msra.mxu0 %v602
        %615 = vmatmul.bf16.gmra.mxu0 %v605
        %v616 = vpop.f32.mrf.mxu0
        %v617 = vadd.f32 0.0, %v616
        %v618 = vpop.f32.mrf.mxu0
        %v619 = vadd.f32 0.0, %v618
        %620 = vdwg.mxu0
        %v621 = vpack.c.bf16 %v619, %v617
        %v622 = vld [vmem:[#allocation2] sm:$0xff]
        %v623 = vld [vmem:[#allocation2 + $0x8] sm:$0xff]
        %v624 = vld [vmem:[#allocation2 + $0x10] sm:$0xff]
        %v625 = vld [vmem:[#allocation2 + $0x18] sm:$0xff]
        %v626 = vld [vmem:[#allocation2 + $0x20] sm:$0xff]
        %v627 = vld [vmem:[#allocation2 + $0x28] sm:$0xff]
        %v628 = vld [vmem:[#allocation2 + $0x30] sm:$0xff]
        %v629 = vld [vmem:[#allocation2 + $0x38] sm:$0xff]
        %v630 = vld [vmem:[#allocation2 + $0x40] sm:$0xff]
        %v631 = vld [vmem:[#allocation2 + $0x48] sm:$0xff]
        %v632 = vld [vmem:[#allocation2 + $0x50] sm:$0xff]
        %v633 = vld [vmem:[#allocation2 + $0x58] sm:$0xff]
        %v634 = vld [vmem:[#allocation2 + $0x60] sm:$0xff]
        %v635 = vld [vmem:[#allocation2 + $0x68] sm:$0xff]
        %v636 = vld [vmem:[#allocation2 + $0x70] sm:$0xff]
        %v637 = vld [vmem:[#allocation2 + $0x78] sm:$0xff]
        %v654 = vunpack.c.l.b16 %v622
        %v655 = vunpack.c.h.b16 %v622
        %v656 = vunpack.c.l.b16 %v623
        %v657 = vunpack.c.h.b16 %v623
        %v658 = vunpack.c.l.b16 %v624
        %v659 = vunpack.c.h.b16 %v624
        %v660 = vunpack.c.l.b16 %v625
        %v661 = vunpack.c.h.b16 %v625
        %v662 = vunpack.c.l.b16 %v626
        %v663 = vunpack.c.h.b16 %v626
        %v664 = vunpack.c.l.b16 %v627
        %v665 = vunpack.c.h.b16 %v627
        %v666 = vunpack.c.l.b16 %v628
        %v667 = vunpack.c.h.b16 %v628
        %v668 = vunpack.c.l.b16 %v629
        %v669 = vunpack.c.h.b16 %v629
        %v670 = vunpack.c.l.b16 %v630
        %v671 = vunpack.c.h.b16 %v630
        %v672 = vunpack.c.l.b16 %v631
        %v673 = vunpack.c.h.b16 %v631
        %v674 = vunpack.c.l.b16 %v632
        %v675 = vunpack.c.h.b16 %v632
        %v676 = vunpack.c.l.b16 %v633
        %v677 = vunpack.c.h.b16 %v633
        %v678 = vunpack.c.l.b16 %v634
        %v679 = vunpack.c.h.b16 %v634
        %v680 = vunpack.c.l.b16 %v635
        %v681 = vunpack.c.h.b16 %v635
        %v682 = vunpack.c.l.b16 %v636
        %v683 = vunpack.c.h.b16 %v636
        %v684 = vunpack.c.l.b16 %v637
        %v685 = vunpack.c.h.b16 %v637
        %v686 = vpack.c.b16 %v656, %v654
        %v687 = vpack.c.b16 %v657, %v655
        %v688 = vpack.c.b16 %v660, %v658
        %v689 = vpack.c.b16 %v661, %v659
        %v690 = vpack.c.b16 %v664, %v662
        %v691 = vpack.c.b16 %v665, %v663
        %v692 = vpack.c.b16 %v668, %v666
        %v693 = vpack.c.b16 %v669, %v667
        %v694 = vpack.c.b16 %v672, %v670
        %v695 = vpack.c.b16 %v673, %v671
        %v696 = vpack.c.b16 %v676, %v674
        %v697 = vpack.c.b16 %v677, %v675
        %v698 = vpack.c.b16 %v680, %v678
        %v699 = vpack.c.b16 %v681, %v679
        %v700 = vpack.c.b16 %v684, %v682
        %v701 = vpack.c.b16 %v685, %v683
        %718 = vmatpush.bf16.msra.mxu0 %v700
        %719 = vmatpush.bf16.msra.mxu0 %v698
        %720 = vmatpush.bf16.msra.mxu0 %v696
        %721 = vmatpush.bf16.msra.mxu0 %v694
        %722 = vmatpush.bf16.msra.mxu0 %v692
        %723 = vmatpush.bf16.msra.mxu0 %v690
        %724 = vmatpush.bf16.msra.mxu0 %v688
        %725 = vmatpush.bf16.msra.mxu0 %v686
        %726 = vmatmul.bf16.gmra.mxu0 %v621
        %v727 = vpop.f32.mrf.mxu0
        %v728 = vadd.f32 0.0, %v727
        %v729 = vpop.f32.mrf.mxu0
        %v730 = vadd.f32 0.0, %v729
        %731 = vdwg.mxu0
        %732 = vmatpush.bf16.msra.mxu0 %v701
        %733 = vmatpush.bf16.msra.mxu0 %v699
        %734 = vmatpush.bf16.msra.mxu0 %v697
        %735 = vmatpush.bf16.msra.mxu0 %v695
        %736 = vmatpush.bf16.msra.mxu0 %v693
        %737 = vmatpush.bf16.msra.mxu0 %v691
        %738 = vmatpush.bf16.msra.mxu0 %v689
        %739 = vmatpush.bf16.msra.mxu0 %v687
        %740 = vmatmul.bf16.gmra.mxu0 %v621
        %v741 = vpop.f32.mrf.mxu0
        %v742 = vadd.f32 0.0, %v741
        %v743 = vpop.f32.mrf.mxu0
        %v744 = vadd.f32 0.0, %v743
        %745 = vdwg.mxu0
        %vm746 = vcmp.eq.s32.totalorder %v445, %v517
        %vm747 = vcmp.eq.s32.totalorder %v445, %v518
        %v748 = vsel %vm746, 1, 0
        %v749 = vsel %vm747, 1, 0
        %v750 = vcvt.s32.f32 %v748
        %v751 = vcvt.s32.f32 %v749
        %v752 = vpack.c.bf16 %v751, %v750
        %v754 = vsel %vm450, %v752, 0
        %756 = vmatpush.bf16.msra.mxu0 0
        %757 = vmatpush.bf16.msra.mxu0 0
        %758 = vmatpush.bf16.msra.mxu0 0
        %759 = vmatpush.bf16.msra.mxu0 0
        %760 = vmatpush.bf16.msra.mxu0 0
        %761 = vmatpush.bf16.msra.mxu0 0
        %762 = vmatpush.bf16.msra.mxu0 0
        %763 = vmatpush.bf16.msra.mxu0 %v602
        %764 = vmatmul.bf16.gmra.mxu0 %v754
        %v765 = vpop.f32.mrf.mxu0
        %v766 = vadd.f32 0.0, %v765
        %v767 = vpop.f32.mrf.mxu0
        %v768 = vadd.f32 0.0, %v767
        %769 = vdwg.mxu0
        %v770 = vpack.c.bf16 %v768, %v766
        %771 = vmatpush.bf16.msra.mxu0 %v700
        %772 = vmatpush.bf16.msra.mxu0 %v698
        %773 = vmatpush.bf16.msra.mxu0 %v696
        %774 = vmatpush.bf16.msra.mxu0 %v694
        %775 = vmatpush.bf16.msra.mxu0 %v692
        %776 = vmatpush.bf16.msra.mxu0 %v690
        %777 = vmatpush.bf16.msra.mxu0 %v688
        %778 = vmatpush.bf16.msra.mxu0 %v686
        %779 = vmatmul.bf16.gmra.mxu0 %v770
        %v780 = vpop.f32.mrf.mxu0
        %v781 = vadd.f32 0.0, %v780
        %v782 = vpop.f32.mrf.mxu0
        %v783 = vadd.f32 0.0, %v782
        %784 = vdwg.mxu0
        %785 = vmatpush.bf16.msra.mxu0 %v701
        %786 = vmatpush.bf16.msra.mxu0 %v699
        %787 = vmatpush.bf16.msra.mxu0 %v697
        %788 = vmatpush.bf16.msra.mxu0 %v695
        %789 = vmatpush.bf16.msra.mxu0 %v693
        %790 = vmatpush.bf16.msra.mxu0 %v691
        %791 = vmatpush.bf16.msra.mxu0 %v689
        %792 = vmatpush.bf16.msra.mxu0 %v687
        %793 = vmatmul.bf16.gmra.mxu0 %v770
        %v794 = vpop.f32.mrf.mxu0
        %v795 = vadd.f32 0.0, %v794
        %v796 = vpop.f32.mrf.mxu0
        %v797 = vadd.f32 0.0, %v796
        %798 = vdwg.mxu0
        %v799 = vmax.f32 %v728, %v781
        %v800 = vmax.f32 %v742, %v795
        %v801 = vmax.f32 %v730, %v783
        %v802 = vmax.f32 %v744, %v797
        %v803 = vmin.f32 %v728, %v781
        %v804 = vmin.f32 %v742, %v795
        %v805 = vmin.f32 %v730, %v783
        %v806 = vmin.f32 %v744, %v797
        %vm807 = vcmp.eq.s32.totalorder %v445, %v553
        %vm808 = vcmp.eq.s32.totalorder %v445, %v554
        %v809 = vsel %vm807, 1, 0
        %v810 = vsel %vm808, 1, 0
        %v811 = vcvt.s32.f32 %v809
        %v812 = vcvt.s32.f32 %v810
        %v813 = vpack.c.bf16 %v812, %v811
        %v815 = vsel %vm450, %v813, 0
        %817 = vmatpush.bf16.msra.mxu0 0
        %818 = vmatpush.bf16.msra.mxu0 0
        %819 = vmatpush.bf16.msra.mxu0 0
        %820 = vmatpush.bf16.msra.mxu0 0
        %821 = vmatpush.bf16.msra.mxu0 0
        %822 = vmatpush.bf16.msra.mxu0 0
        %823 = vmatpush.bf16.msra.mxu0 0
        %824 = vmatpush.bf16.msra.mxu0 %v602
        %825 = vmatmul.bf16.gmra.mxu0 %v815
        %v826 = vpop.f32.mrf.mxu0
        %v827 = vadd.f32 0.0, %v826
        %v828 = vpop.f32.mrf.mxu0
        %v829 = vadd.f32 0.0, %v828
        %830 = vdwg.mxu0
        %v831 = vpack.c.bf16 %v829, %v827
        %832 = vmatpush.bf16.msra.mxu0 %v700
        %833 = vmatpush.bf16.msra.mxu0 %v698
        %834 = vmatpush.bf16.msra.mxu0 %v696
        %835 = vmatpush.bf16.msra.mxu0 %v694
        %836 = vmatpush.bf16.msra.mxu0 %v692
        %837 = vmatpush.bf16.msra.mxu0 %v690
        %838 = vmatpush.bf16.msra.mxu0 %v688
        %839 = vmatpush.bf16.msra.mxu0 %v686
        %840 = vmatmul.bf16.gmra.mxu0 %v831
        %v841 = vpop.f32.mrf.mxu0
        %v842 = vadd.f32 0.0, %v841
        %v843 = vpop.f32.mrf.mxu0
        %v844 = vadd.f32 0.0, %v843
        %845 = vdwg.mxu0
        %846 = vmatpush.bf16.msra.mxu0 %v701
        %847 = vmatpush.bf16.msra.mxu0 %v699
        %848 = vmatpush.bf16.msra.mxu0 %v697
        %849 = vmatpush.bf16.msra.mxu0 %v695
        %850 = vmatpush.bf16.msra.mxu0 %v693
        %851 = vmatpush.bf16.msra.mxu0 %v691
        %852 = vmatpush.bf16.msra.mxu0 %v689
        %853 = vmatpush.bf16.msra.mxu0 %v687
        %854 = vmatmul.bf16.gmra.mxu0 %v831
        %v855 = vpop.f32.mrf.mxu0
        %v856 = vadd.f32 0.0, %v855
        %v857 = vpop.f32.mrf.mxu0
        %v858 = vadd.f32 0.0, %v857
        %859 = vdwg.mxu0
        %v860 = vmax.f32 %v799, %v842
        %v861 = vmax.f32 %v800, %v856
        %v862 = vmax.f32 %v801, %v844
        %v863 = vmax.f32 %v802, %v858
        %v864 = vmin.f32 %v803, %v842
        %v865 = vmin.f32 %v804, %v856
        %v866 = vmin.f32 %v805, %v844
        %v867 = vmin.f32 %v806, %v858
        %vm868 = vcmp.eq.s32.totalorder %v445, %v589
        %vm869 = vcmp.eq.s32.totalorder %v445, %v590
        %v870 = vsel %vm868, 1, 0
        %v871 = vsel %vm869, 1, 0
        %v872 = vcvt.s32.f32 %v870
        %v873 = vcvt.s32.f32 %v871
        %v874 = vpack.c.bf16 %v873, %v872
        %v876 = vsel %vm450, %v874, 0
        %878 = vmatpush.bf16.msra.mxu0 0
        %879 = vmatpush.bf16.msra.mxu0 0
        %880 = vmatpush.bf16.msra.mxu0 0
        %881 = vmatpush.bf16.msra.mxu0 0
        %882 = vmatpush.bf16.msra.mxu0 0
        %883 = vmatpush.bf16.msra.mxu0 0
        %884 = vmatpush.bf16.msra.mxu0 0
        %885 = vmatpush.bf16.msra.mxu0 %v602
        %886 = vmatmul.bf16.gmra.mxu0 %v876
        %v887 = vpop.f32.mrf.mxu0
        %v888 = vadd.f32 0.0, %v887
        %v889 = vpop.f32.mrf.mxu0
        %v890 = vadd.f32 0.0, %v889
        %891 = vdwg.mxu0
        %v892 = vpack.c.bf16 %v890, %v888
        %893 = vmatpush.bf16.msra.mxu0 %v700
        %894 = vmatpush.bf16.msra.mxu0 %v698
        %895 = vmatpush.bf16.msra.mxu0 %v696
        %896 = vmatpush.bf16.msra.mxu0 %v694
        %897 = vmatpush.bf16.msra.mxu0 %v692
        %898 = vmatpush.bf16.msra.mxu0 %v690
        %899 = vmatpush.bf16.msra.mxu0 %v688
        %900 = vmatpush.bf16.msra.mxu0 %v686
        %901 = vmatmul.bf16.gmra.mxu0 %v892
        %v902 = vpop.f32.mrf.mxu0
        %v903 = vadd.f32 0.0, %v902
        %v904 = vpop.f32.mrf.mxu0
        %v905 = vadd.f32 0.0, %v904
        %906 = vdwg.mxu0
        %907 = vmatpush.bf16.msra.mxu0 %v701
        %908 = vmatpush.bf16.msra.mxu0 %v699
        %909 = vmatpush.bf16.msra.mxu0 %v697
        %910 = vmatpush.bf16.msra.mxu0 %v695
        %911 = vmatpush.bf16.msra.mxu0 %v693
        %912 = vmatpush.bf16.msra.mxu0 %v691
        %913 = vmatpush.bf16.msra.mxu0 %v689
        %914 = vmatpush.bf16.msra.mxu0 %v687
        %915 = vmatmul.bf16.gmra.mxu0 %v892
        %v916 = vpop.f32.mrf.mxu0
        %v917 = vadd.f32 0.0, %v916
        %v918 = vpop.f32.mrf.mxu0
        %v919 = vadd.f32 0.0, %v918
        %920 = vdwg.mxu0
        %v921 = vmax.f32 %v860, %v903
        %v922 = vmax.f32 %v861, %v917
        %v923 = vmax.f32 %v862, %v905
        %v924 = vmax.f32 %v863, %v919
        %v925 = vmin.f32 %v864, %v903
        %v926 = vmin.f32 %v865, %v917
        %v927 = vmin.f32 %v866, %v905
        %v928 = vmin.f32 %v867, %v919
        %v929 = vld [vmem:[#allocation4] sm:$0xff]
        %v930 = vld [vmem:[#allocation4 + $0x8] sm:$0xff]
        %v931 = vld [vmem:[#allocation4 + $0x10] sm:$0xff]
        %v932 = vld [vmem:[#allocation4 + $0x18] sm:$0xff]
        %v933 = vld [vmem:[#allocation4 + $0x20] sm:$0xff]
        %v934 = vld [vmem:[#allocation4 + $0x28] sm:$0xff]
        %v935 = vld [vmem:[#allocation4 + $0x30] sm:$0xff]
        %v936 = vld [vmem:[#allocation4 + $0x38] sm:$0xff]
        %v937 = vld [vmem:[#allocation4 + $0x40] sm:$0xff]
        %v938 = vld [vmem:[#allocation4 + $0x48] sm:$0xff]
        %v939 = vld [vmem:[#allocation4 + $0x50] sm:$0xff]
        %v940 = vld [vmem:[#allocation4 + $0x58] sm:$0xff]
        %v941 = vld [vmem:[#allocation4 + $0x60] sm:$0xff]
        %v942 = vld [vmem:[#allocation4 + $0x68] sm:$0xff]
        %v943 = vld [vmem:[#allocation4 + $0x70] sm:$0xff]
        %v944 = vld [vmem:[#allocation4 + $0x78] sm:$0xff]
        %v947 = vunpack.c.l.b16 %v393
        %v948 = vunpack.c.l.b16 %v394
        %v949 = vpack.c.b16 %v948, %v947
        %v967 = vunpack.c.l.b16 %v929
        %v968 = vunpack.c.h.b16 %v929
        %v969 = vunpack.c.l.b16 %v930
        %v970 = vunpack.c.h.b16 %v930
        %v971 = vunpack.c.l.b16 %v931
        %v972 = vunpack.c.h.b16 %v931
        %v973 = vunpack.c.l.b16 %v932
        %v974 = vunpack.c.h.b16 %v932
        %v975 = vunpack.c.l.b16 %v933
        %v976 = vunpack.c.h.b16 %v933
        %v977 = vunpack.c.l.b16 %v934
        %v978 = vunpack.c.h.b16 %v934
        %v979 = vunpack.c.l.b16 %v935
        %v980 = vunpack.c.h.b16 %v935
        %v981 = vunpack.c.l.b16 %v936
        %v982 = vunpack.c.h.b16 %v936
        %v983 = vunpack.c.l.b16 %v937
        %v984 = vunpack.c.h.b16 %v937
        %v985 = vunpack.c.l.b16 %v938
        %v986 = vunpack.c.h.b16 %v938
        %v987 = vunpack.c.l.b16 %v939
        %v988 = vunpack.c.h.b16 %v939
        %v989 = vunpack.c.l.b16 %v940
        %v990 = vunpack.c.h.b16 %v940
        %v991 = vunpack.c.l.b16 %v941
        %v992 = vunpack.c.h.b16 %v941
        %v993 = vunpack.c.l.b16 %v942
        %v994 = vunpack.c.h.b16 %v942
        %v995 = vunpack.c.l.b16 %v943
        %v996 = vunpack.c.h.b16 %v943
        %v997 = vunpack.c.l.b16 %v944
        %v998 = vunpack.c.h.b16 %v944
        %v999 = vpack.c.b16 %v969, %v967
        %v1000 = vpack.c.b16 %v970, %v968
        %v1001 = vpack.c.b16 %v973, %v971
        %v1002 = vpack.c.b16 %v974, %v972
        %v1003 = vpack.c.b16 %v977, %v975
        %v1004 = vpack.c.b16 %v978, %v976
        %v1005 = vpack.c.b16 %v981, %v979
        %v1006 = vpack.c.b16 %v982, %v980
        %v1007 = vpack.c.b16 %v985, %v983
        %v1008 = vpack.c.b16 %v986, %v984
        %v1009 = vpack.c.b16 %v989, %v987
        %v1010 = vpack.c.b16 %v990, %v988
        %v1011 = vpack.c.b16 %v993, %v991
        %v1012 = vpack.c.b16 %v994, %v992
        %v1013 = vpack.c.b16 %v997, %v995
        %v1014 = vpack.c.b16 %v998, %v996
        %1031 = vmatpush.bf16.msra.mxu0 %v1013
        %1032 = vmatpush.bf16.msra.mxu0 %v1011
        %1033 = vmatpush.bf16.msra.mxu0 %v1009
        %1034 = vmatpush.bf16.msra.mxu0 %v1007
        %1035 = vmatpush.bf16.msra.mxu0 %v1005
        %1036 = vmatpush.bf16.msra.mxu0 %v1003
        %1037 = vmatpush.bf16.msra.mxu0 %v1001
        %1038 = vmatpush.bf16.msra.mxu0 %v999
        %1039 = vmatmul.bf16.gmra.mxu0 %v949
        %v1040 = vpop.f32.mrf.mxu0
        %v1041 = vadd.f32 0.0, %v1040
        %v1042 = vpop.f32.mrf.mxu0
        %v1043 = vadd.f32 0.0, %v1042
        %1044 = vdwg.mxu0
        %1045 = vmatpush.bf16.msra.mxu0 %v1014
        %1046 = vmatpush.bf16.msra.mxu0 %v1012
        %1047 = vmatpush.bf16.msra.mxu0 %v1010
        %1048 = vmatpush.bf16.msra.mxu0 %v1008
        %1049 = vmatpush.bf16.msra.mxu0 %v1006
        %1050 = vmatpush.bf16.msra.mxu0 %v1004
        %1051 = vmatpush.bf16.msra.mxu0 %v1002
        %1052 = vmatpush.bf16.msra.mxu0 %v1000
        %1053 = vmatmul.bf16.gmra.mxu0 %v949
        %v1054 = vpop.f32.mrf.mxu0
        %v1055 = vadd.f32 0.0, %v1054
        %v1056 = vpop.f32.mrf.mxu0
        %v1057 = vadd.f32 0.0, %v1056
        %1058 = vdwg.mxu0
        %v1059 = vld [vmem:[%s5] sm:$0x3]
        %v1060 = vld [vmem:[%s6] sm:$0x3]
        %vm1061 = vcmp.gt.f32.partialorder %v1059, 0.0
        %v1062 = vsel %vm1061, 1, 0
        %v1063 = vperm.slane %v1062, 0
        %v1064 = vperm.slane %v1062, 1
        %vm1065 = vcmp.eq.s32.totalorder %v1063, 1
        %vm1066 = vcmp.eq.s32.totalorder %v1064, 1
        %v1067 = vsel %vm1065, %v921, %v925
        %v1068 = vsel %vm1066, %v922, %v926
        %v1069 = vsel %vm1065, %v923, %v927
        %v1070 = vsel %vm1066, %v924, %v928
        %v1071 = vadd.f32 %v1067, %v1041
        %v1072 = vadd.f32 %v1068, %v1055
        %v1073 = vadd.f32 %v1069, %v1043
        %v1074 = vadd.f32 %v1070, %v1057
        %v1076 = vperm.slane %v1059, 0
        %v1077 = vperm.slane %v1059, 1
        %v1080 = vmul.f32 %v1071, %v1076
        %v1081 = vmul.f32 %v1072, %v1077
        %v1082 = vmul.f32 %v1073, %v1076
        %v1083 = vmul.f32 %v1074, %v1077
        %v1085 = vperm.slane %v1060, 0
        %v1086 = vperm.slane %v1060, 1
        %v1089 = vadd.f32 %v1080, %v1085
        %v1090 = vadd.f32 %v1081, %v1086
        %v1091 = vadd.f32 %v1082, %v1085
        %v1092 = vadd.f32 %v1083, %v1086
        %vm1093 = vcmp.gt.f32.partialorder %v1089, 0.0
        %vm1094 = vcmp.gt.f32.partialorder %v1090, 0.0
        %vm1095 = vcmp.gt.f32.partialorder %v1091, 0.0
        %vm1096 = vcmp.gt.f32.partialorder %v1092, 0.0
        %v1097 = vmul.f32 %v1089, 0.2
        %v1098 = vmul.f32 %v1090, 0.2
        %v1099 = vmul.f32 %v1091, 0.2
        %v1100 = vmul.f32 %v1092, 0.2
        %v1101 = vsel %vm1093, %v1089, %v1097
        %v1102 = vsel %vm1094, %v1090, %v1098
        %v1103 = vsel %vm1095, %v1091, %v1099
        %v1104 = vsel %vm1096, %v1092, %v1100
        %v1105 = vpack.c.bf16 %v1102, %v1101
        %v1106 = vpack.c.bf16 %v1104, %v1103
        %1107 = vst [vmem:[%s386] sm:$0xff] %v1105
        %1108 = vst [vmem:[%s386 + $0x8] sm:$0xff] %v1106
        %s1109 = smul.u32 2, %s25
        %p1110 = scmp.lt.s32.totalorder %s24, 1
        %s1111 = scalar_select %p1110, %s24, 1
        %p1112 = scmp.lt.s32.totalorder %s1109, 1
        %s1113 = scalar_select %p1112, %s1109, 1
        %s1114 = smul.addr %s1113, 2
        %s1115 = smul.addr %s1111, 4
        %s1116 = sadd.s32 %s1114, %s1115
        %s1117 = smul.addr %s1116, 4
        %s1118 = scalar_lea.vmem %s7, %s1117
        // Predicated region
        $region57: #{dgcnn_cls_forward.9} parent=47 // pred_check
          %p1119 = pneg %p216
        $region58: #{dgcnn_cls_forward.9} parent=47 // pred_check_branch
          %1121 = sbr.rel (%p1119) target = $region60
        $region59: #{dgcnn_cls_forward.9} parent=47 // pred_region
          %s1122 = smul.u32 2, %s25
        $region60: #{dgcnn_cls_forward.9} parent=47 // pred_fallthru
          _
      $region48: #{dgcnn_cls_forward.9} parent=5 // pred_fallthru
        _
      %p1123 = scmp.le.s32.totalorder 2, %s15
      // Predicated region
      $region61: #{dgcnn_cls_forward.9} parent=5 // pred_check
        %p1124 = pneg %p1123
      $region62: #{dgcnn_cls_forward.9} parent=5 // pred_check_branch
        %1126 = sbr.rel (%p1124) target = $region64
      $region63: #{dgcnn_cls_forward.9} parent=5 // pred_region
        %s1127 = ssub.s32 %s15, 2
        // Predicated region
        $region65: #{dgcnn_cls_forward.9} parent=63 // pred_check
          %p1128 = pneg %p222
        $region66: #{dgcnn_cls_forward.9} parent=63 // pred_check_branch
          %1130 = sbr.rel (%p1128) target = $region68
        $region67: #{dgcnn_cls_forward.9} parent=63 // pred_region
          %s1131 = smul.u32 2, %s27
          %p1132 = scmp.lt.s32.totalorder %s26, 1
          %s1133 = scalar_select %p1132, %s26, 1
          %p1134 = scmp.lt.s32.totalorder %s1131, 1
          %s1135 = scalar_select %p1134, %s1131, 1
          %s1136 = smul.addr %s1135, 2
          %s1137 = smul.addr %s1133, 4
          %s1138 = sadd.s32 %s1136, %s1137
          %s1139 = smul.addr %s1138, 4
          %s1140 = scalar_lea.vmem %s7, %s1139
        $region68: #{dgcnn_cls_forward.9} parent=63 // pred_fallthru
          _
      $region64: #{dgcnn_cls_forward.9} parent=5 // pred_fallthru
        _
    $region6: #{dgcnn_cls_forward.9} parent=1 // loop_footer
      %s19 = sadd.s32 1, %s15
    $region7: #{dgcnn_cls_forward.9} parent=1 // loop_footer_branch
      %14 = sbr.rel target = $region3
    $region8: #{dgcnn_cls_forward.9} parent=1 // loop_exit
      _
    %1141 = vsyncpa [#allocation3], 1
    %s1142 = scalar_lea.sflag [#allocation3], 1
    %1143 = vsyncpa %s1142, 1
    %1144 = vsyncpa [#allocation5], 1

// kernel: dgcnn_cls_forward.10
$region0: #{dgcnn_cls_forward.10}
  #allocation0 [shape = 'u32[]', space=smem, size = 0x4, offset = 0x4, fixed_abs, tag = 'smem constant byte address 0x4 - core index']
  #allocation1 [shape = 'u32[72,128]{1,0:T(1,128)}', space=vmem, size = 0x9000, scoped, tag = 'internal scratch']
  %s0 = inlined_call_operand.vmem [shape: bf16[2,16,64], index: 0, kind: input, shape index: {}]
  %s1 = inlined_call_operand.vmem [shape: bf16[2,16,64], index: 1, kind: input, shape index: {}]
  %s2 = inlined_call_operand.vmem [shape: bf16[2,16,128], index: 2, kind: input, shape index: {}]
  %s3 = inlined_call_operand.vmem [shape: bf16[2,16,256], index: 3, kind: input, shape index: {}]
  %s4 = inlined_call_operand.vmem [shape: bf16[512,64], index: 4, kind: input, shape index: {}]
  %s5 = inlined_call_operand.vmem [shape: f32[1,64], index: 5, kind: input, shape index: {}]
  %s6 = inlined_call_operand.vmem [shape: f32[1,64], index: 6, kind: input, shape index: {}]
  %s7 = inlined_call_operand.vmem [shape: f32[2,1,64], index: 7, kind: output, shape index: {}]
  %s8 = sld [smem:[#allocation0]]
  $region65: #{dgcnn_cls_forward.10} parent=0
    _
  %s10 = ssub.s32 1, %s8
  %s11 = scalar_select 0, %s10, %s8
  loop: start=0, step=1, limit=4
  $region2: #{dgcnn_cls_forward.10} parent=0 // loop_pre_header
    _
  $region3: #{dgcnn_cls_forward.10} parent=0 // loop_header
    %s13 = sphi 0, %s17
    %p14 = scmp.ge.s32.totalorder %s13, 4
    %s20 = sphi 0, %s32
    %s21 = sphi 0, %s28
    %s22 = sphi 0, %s20
    %s23 = sphi 0, %s21
    %s24 = sphi 0, %s22
    %s25 = sphi 0, %s23
    %s37 = sphi 0, %s39
    %s40 = sphi 0, %s37
    %s41 = sphi 0, %s40
    %s57 = sphi 0, %s41
    %s65 = sphi 0, %s67
    %s68 = sphi 0, %s65
    %s69 = sphi 0, %s68
    %s85 = sphi 0, %s69
    %s93 = sphi 0, %s95
    %s96 = sphi 0, %s93
    %s97 = sphi 0, %s96
    %s113 = sphi 0, %s97
    %s121 = sphi 0, %s123
    %s124 = sphi 0, %s121
    %s125 = sphi 0, %s124
    %s141 = sphi 0, %s125
    %s145 = sphi 0, %s145
    %s147 = sphi 0, %s145
    %s148 = sphi 0, %s147
    %s162 = sphi 0, %s148
    %s166 = sphi 0, %s166
    %s168 = sphi 0, %s166
    %s169 = sphi 0, %s168
    %s183 = sphi 0, %s169
    %s187 = sphi 0, %s187
    %s189 = sphi 0, %s187
    %s190 = sphi 0, %s189
    %s204 = sphi 0, %s190
    %s210 = sphi 0, %s212
    %s213 = sphi 0, %s210
    %s214 = sphi 0, %s213
    %s230 = sphi 0, %s214
  $region4: #{dgcnn_cls_forward.10} parent=0 // loop_header_branch
    %16 = sbr.rel (%p14) target = $region8
  $region5: #{dgcnn_cls_forward.10} parent=0 // loop_body
    %s18 = ssub.s32 %s13, 1
    %s19 = ssub.s32 %s13, 2
    %s26 = sadd.s32 1, %s21
    %p27 = scmp.ge.s32.totalorder %s26, 1
    %s28 = scalar_select %p27, 0, %s26
    %s29 = sadd.s32 1, %s20
    %s30 = scalar_select %p27, %s29, %s20
    %p31 = scmp.ge.s32.totalorder %s30, 2
    %s32 = scalar_select %p31, 0, %s30
    %s33 = ssub.s32 %s20, %s32
    %s34 = ssub.s32 %s21, %s28
    %s35 = sor.u32 %s33, %s34
    %p36 = scmp.eq.s32.totalorder %s35, 0
    %s38 = sadd.s32 %s37, 1
    %s39 = scalar_select %p36, %s37, %s38
    %p42 = pneg %p36
    %p43 = scmp.eq.s32.totalorder %s13, 1
    %p44 = por %p42, %p43
    %p45 = scmp.ne.s32.totalorder %s37, %s40
    %p46 = scmp.eq.s32.totalorder %s13, 0
    %p47 = por %p45, %p46
    %p48 = scmp.ne.s32.totalorder %s37, %s40
    %p49 = scmp.eq.s32.totalorder %s18, 1
    %p50 = por %p48, %p49
    %p51 = scmp.ne.s32.totalorder %s40, %s41
    %p52 = scmp.eq.s32.totalorder %s18, 0
    %p53 = por %p51, %p52
    %p54 = scmp.ne.s32.totalorder %s40, %s41
    %p55 = scmp.eq.s32.totalorder %s19, 1
    %p56 = por %p54, %p55
    %p58 = scmp.ne.s32.totalorder %s41, %s57
    %p59 = scmp.eq.s32.totalorder %s19, 0
    %p60 = por %p58, %p59
    %s61 = ssub.s32 %s20, %s32
    %s62 = ssub.s32 %s21, %s28
    %s63 = sor.u32 %s61, %s62
    %p64 = scmp.eq.s32.totalorder %s63, 0
    %s66 = sadd.s32 %s65, 1
    %s67 = scalar_select %p64, %s65, %s66
    %p70 = pneg %p64
    %p71 = scmp.eq.s32.totalorder %s13, 1
    %p72 = por %p70, %p71
    %p73 = scmp.ne.s32.totalorder %s65, %s68
    %p74 = scmp.eq.s32.totalorder %s13, 0
    %p75 = por %p73, %p74
    %p76 = scmp.ne.s32.totalorder %s65, %s68
    %p77 = scmp.eq.s32.totalorder %s18, 1
    %p78 = por %p76, %p77
    %p79 = scmp.ne.s32.totalorder %s68, %s69
    %p80 = scmp.eq.s32.totalorder %s18, 0
    %p81 = por %p79, %p80
    %p82 = scmp.ne.s32.totalorder %s68, %s69
    %p83 = scmp.eq.s32.totalorder %s19, 1
    %p84 = por %p82, %p83
    %p86 = scmp.ne.s32.totalorder %s69, %s85
    %p87 = scmp.eq.s32.totalorder %s19, 0
    %p88 = por %p86, %p87
    %s89 = ssub.s32 %s20, %s32
    %s90 = ssub.s32 %s21, %s28
    %s91 = sor.u32 %s89, %s90
    %p92 = scmp.eq.s32.totalorder %s91, 0
    %s94 = sadd.s32 %s93, 1
    %s95 = scalar_select %p92, %s93, %s94
    %p98 = pneg %p92
    %p99 = scmp.eq.s32.totalorder %s13, 1
    %p100 = por %p98, %p99
    %p101 = scmp.ne.s32.totalorder %s93, %s96
    %p102 = scmp.eq.s32.totalorder %s13, 0
    %p103 = por %p101, %p102
    %p104 = scmp.ne.s32.totalorder %s93, %s96
    %p105 = scmp.eq.s32.totalorder %s18, 1
    %p106 = por %p104, %p105
    %p107 = scmp.ne.s32.totalorder %s96, %s97
    %p108 = scmp.eq.s32.totalorder %s18, 0
    %p109 = por %p107, %p108
    %p110 = scmp.ne.s32.totalorder %s96, %s97
    %p111 = scmp.eq.s32.totalorder %s19, 1
    %p112 = por %p110, %p111
    %p114 = scmp.ne.s32.totalorder %s97, %s113
    %p115 = scmp.eq.s32.totalorder %s19, 0
    %p116 = por %p114, %p115
    %s117 = ssub.s32 %s20, %s32
    %s118 = ssub.s32 %s21, %s28
    %s119 = sor.u32 %s117, %s118
    %p120 = scmp.eq.s32.totalorder %s119, 0
    %s122 = sadd.s32 %s121, 1
    %s123 = scalar_select %p120, %s121, %s122
    %p126 = pneg %p120
    %p127 = scmp.eq.s32.totalorder %s13, 1
    %p128 = por %p126, %p127
    %p129 = scmp.ne.s32.totalorder %s121, %s124
    %p130 = scmp.eq.s32.totalorder %s13, 0
    %p131 = por %p129, %p130
    %p132 = scmp.ne.s32.totalorder %s121, %s124
    %p133 = scmp.eq.s32.totalorder %s18, 1
    %p134 = por %p132, %p133
    %p135 = scmp.ne.s32.totalorder %s124, %s125
    %p136 = scmp.eq.s32.totalorder %s18, 0
    %p137 = por %p135, %p136
    %p138 = scmp.ne.s32.totalorder %s124, %s125
    %p139 = scmp.eq.s32.totalorder %s19, 1
    %p140 = por %p138, %p139
    %p142 = scmp.ne.s32.totalorder %s125, %s141
    %p143 = scmp.eq.s32.totalorder %s19, 0
    %p144 = por %p142, %p143
    %s146 = sadd.s32 %s145, 1
    %p149 = scmp.eq.s32.totalorder %s13, 1
    %p150 = scmp.ne.s32.totalorder %s145, %s147
    %p151 = scmp.eq.s32.totalorder %s13, 0
    %p152 = por %p150, %p151
    %p153 = scmp.ne.s32.totalorder %s145, %s147
    %p154 = scmp.eq.s32.totalorder %s18, 1
    %p155 = por %p153, %p154
    %p156 = scmp.ne.s32.totalorder %s147, %s148
    %p157 = scmp.eq.s32.totalorder %s18, 0
    %p158 = por %p156, %p157
    %p159 = scmp.ne.s32.totalorder %s147, %s148
    %p160 = scmp.eq.s32.totalorder %s19, 1
    %p161 = por %p159, %p160
    %p163 = scmp.ne.s32.totalorder %s148, %s162
    %p164 = scmp.eq.s32.totalorder %s19, 0
    %p165 = por %p163, %p164
    %s167 = sadd.s32 %s166, 1
    %p170 = scmp.eq.s32.totalorder %s13, 1
    %p171 = scmp.ne.s32.totalorder %s166, %s168
    %p172 = scmp.eq.s32.totalorder %s13, 0
    %p173 = por %p171, %p172
    %p174 = scmp.ne.s32.totalorder %s166, %s168
    %p175 = scmp.eq.s32.totalorder %s18, 1
    %p176 = por %p174, %p175
    %p177 = scmp.ne.s32.totalorder %s168, %s169
    %p178 = scmp.eq.s32.totalorder %s18, 0
    %p179 = por %p177, %p178
    %p180 = scmp.ne.s32.totalorder %s168, %s169
    %p181 = scmp.eq.s32.totalorder %s19, 1
    %p182 = por %p180, %p181
    %p184 = scmp.ne.s32.totalorder %s169, %s183
    %p185 = scmp.eq.s32.totalorder %s19, 0
    %p186 = por %p184, %p185
    %s188 = sadd.s32 %s187, 1
    %p191 = scmp.eq.s32.totalorder %s13, 1
    %p192 = scmp.ne.s32.totalorder %s187, %s189
    %p193 = scmp.eq.s32.totalorder %s13, 0
    %p194 = por %p192, %p193
    %p195 = scmp.ne.s32.totalorder %s187, %s189
    %p196 = scmp.eq.s32.totalorder %s18, 1
    %p197 = por %p195, %p196
    %p198 = scmp.ne.s32.totalorder %s189, %s190
    %p199 = scmp.eq.s32.totalorder %s18, 0
    %p200 = por %p198, %p199
    %p201 = scmp.ne.s32.totalorder %s189, %s190
    %p202 = scmp.eq.s32.totalorder %s19, 1
    %p203 = por %p201, %p202
    %p205 = scmp.ne.s32.totalorder %s190, %s204
    %p206 = scmp.eq.s32.totalorder %s19, 0
    %p207 = por %p205, %p206
    %s208 = ssub.s32 %s20, %s32
    %p209 = scmp.eq.s32.totalorder %s208, 0
    %s211 = sadd.s32 %s210, 1
    %s212 = scalar_select %p209, %s210, %s211
    %p215 = pneg %p209
    %p216 = scmp.eq.s32.totalorder %s13, 1
    %p217 = por %p215, %p216
    %p218 = scmp.ne.s32.totalorder %s210, %s213
    %p219 = scmp.eq.s32.totalorder %s13, 0
    %p220 = por %p218, %p219
    %p221 = scmp.ne.s32.totalorder %s210, %s213
    %p222 = scmp.eq.s32.totalorder %s18, 1
    %p223 = por %p221, %p222
    %p224 = scmp.ne.s32.totalorder %s213, %s214
    %p225 = scmp.eq.s32.totalorder %s18, 0
    %p226 = por %p224, %p225
    %p227 = scmp.ne.s32.totalorder %s213, %s214
    %p228 = scmp.eq.s32.totalorder %s19, 1
    %p229 = por %p227, %p228
    %p231 = scmp.ne.s32.totalorder %s214, %s230
    %p232 = scmp.eq.s32.totalorder %s19, 0
    %p233 = por %p231, %p232
    %p234 = scmp.le.s32.totalorder 1, %s13
    %p235 = scmp.lt.s32.totalorder %s13, 3
    %p236 = pnand %p234, %p235
    %p237 = pneg %p236
    // Predicated region
    $region9: #{dgcnn_cls_forward.10} parent=5 // pred_check
      _
    $region10: #{dgcnn_cls_forward.10} parent=5 // pred_check_branch
      %239 = sbr.rel (%p236) target = $region12
    $region11: #{dgcnn_cls_forward.10} parent=5 // pred_region
      %s240 = ssub.s32 %s13, 1
      // Predicated region
      $region13: #{dgcnn_cls_forward.10} parent=11 // pred_check
        %p241 = pneg %p158
      $region14: #{dgcnn_cls_forward.10} parent=11 // pred_check_branch
        %243 = sbr.rel (%p241) target = $region16
      $region15: #{dgcnn_cls_forward.10} parent=11 // pred_region
        _
      $region16: #{dgcnn_cls_forward.10} parent=11 // pred_fallthru
        _
      // Predicated region
      $region17: #{dgcnn_cls_forward.10} parent=11 // pred_check
        %p244 = pneg %p179
      $region18: #{dgcnn_cls_forward.10} parent=11 // pred_check_branch
        %246 = sbr.rel (%p244) target = $region20
      $region19: #{dgcnn_cls_forward.10} parent=11 // pred_region
        _
      $region20: #{dgcnn_cls_forward.10} parent=11 // pred_fallthru
        _
      // Predicated region
      $region21: #{dgcnn_cls_forward.10} parent=11 // pred_check
        %p247 = pneg %p200
      $region22: #{dgcnn_cls_forward.10} parent=11 // pred_check_branch
        %249 = sbr.rel (%p247) target = $region24
      $region23: #{dgcnn_cls_forward.10} parent=11 // pred_region
        _
      $region24: #{dgcnn_cls_forward.10} parent=11 // pred_fallthru
        _
    $region12: #{dgcnn_cls_forward.10} parent=5 // pred_fallthru
      _
    %p250 = scmp.lt.s32.totalorder %s13, 2
    // Predicated region
    $region25: #{dgcnn_cls_forward.10} parent=5 // pred_check
      %p251 = pneg %p250
    $region26: #{dgcnn_cls_forward.10} parent=5 // pred_check_branch
      %253 = sbr.rel (%p251) target = $region28
    $region27: #{dgcnn_cls_forward.10} parent=5 // pred_region
      // Predicated region
      $region29: #{dgcnn_cls_forward.10} parent=27 // pred_check
        %p254 = pneg %p47
      $region30: #{dgcnn_cls_forward.10} parent=27 // pred_check_branch
        %256 = sbr.rel (%p254) target = $region32
      $region31: #{dgcnn_cls_forward.10} parent=27 // pred_region
        %s257 = smul.u32 2, %s21
        %p258 = scmp.lt.s32.totalorder %s20, 1
        %s259 = scalar_select %p258, %s20, 1
        %p260 = scmp.lt.s32.totalorder %s257, 1
        %s261 = scalar_select %p260, %s257, 1
        %s262 = smul.addr %s259, 2
        %s263 = sadd.s32 %s261, %s262
        %s264 = smul.addr %s263, 4
        %s265 = scalar_lea.vmem %s0, %s264
        %s266 = smul.u32 2, %s21
      $region32: #{dgcnn_cls_forward.10} parent=27 // pred_fallthru
        _
      // Predicated region
      $region33: #{dgcnn_cls_forward.10} parent=27 // pred_check
        %p267 = pneg %p75
      $region34: #{dgcnn_cls_forward.10} parent=27 // pred_check_branch
        %269 = sbr.rel (%p267) target = $region36
      $region35: #{dgcnn_cls_forward.10} parent=27 // pred_region
        %s270 = smul.u32 2, %s21
        %p271 = scmp.lt.s32.totalorder %s20, 1
        %s272 = scalar_select %p271, %s20, 1
        %p273 = scmp.lt.s32.totalorder %s270, 1
        %s274 = scalar_select %p273, %s270, 1
        %s275 = smul.addr %s272, 2
        %s276 = sadd.s32 %s274, %s275
        %s277 = smul.addr %s276, 4
        %s278 = scalar_lea.vmem %s1, %s277
        %s279 = smul.u32 2, %s21
      $region36: #{dgcnn_cls_forward.10} parent=27 // pred_fallthru
        _
      // Predicated region
      $region37: #{dgcnn_cls_forward.10} parent=27 // pred_check
        %p280 = pneg %p103
      $region38: #{dgcnn_cls_forward.10} parent=27 // pred_check_branch
        %282 = sbr.rel (%p280) target = $region40
      $region39: #{dgcnn_cls_forward.10} parent=27 // pred_region
        %s283 = smul.u32 2, %s21
        %p284 = scmp.lt.s32.totalorder %s20, 1
        %s285 = scalar_select %p284, %s20, 1
        %p286 = scmp.lt.s32.totalorder %s283, 1
        %s287 = scalar_select %p286, %s283, 1
        %s288 = smul.addr %s285, 2
        %s289 = sadd.s32 %s287, %s288
        %s290 = smul.addr %s289, 4
        %s291 = scalar_lea.vmem %s2, %s290
        %s292 = smul.u32 2, %s21
      $region40: #{dgcnn_cls_forward.10} parent=27 // pred_fallthru
        _
      // Predicated region
      $region41: #{dgcnn_cls_forward.10} parent=27 // pred_check
        %p293 = pneg %p131
      $region42: #{dgcnn_cls_forward.10} parent=27 // pred_check_branch
        %295 = sbr.rel (%p293) target = $region44
      $region43: #{dgcnn_cls_forward.10} parent=27 // pred_region
        %s296 = smul.u32 2, %s21
        %p297 = scmp.lt.s32.totalorder %s20, 1
        %s298 = scalar_select %p297, %s20, 1
        %p299 = scmp.lt.s32.totalorder %s296, 1
        %s300 = scalar_select %p299, %s296, 1
        %s301 = smul.addr %s300, 2
        %s302 = smul.addr %s298, 4
        %s303 = sadd.s32 %s301, %s302
        %s304 = smul.addr %s303, 4
        %s305 = scalar_lea.vmem %s3, %s304
        %s306 = smul.u32 2, %s21
      $region44: #{dgcnn_cls_forward.10} parent=27 // pred_fallthru
        _
    $region28: #{dgcnn_cls_forward.10} parent=5 // pred_fallthru
      _
    %p307 = scmp.le.s32.totalorder 1, %s13
    %p308 = scmp.lt.s32.totalorder %s13, 3
    %p309 = pnand %p307, %p308
    %p310 = pneg %p309
    // Predicated region
    $region45: #{dgcnn_cls_forward.10} parent=5 // pred_check
      _
    $region46: #{dgcnn_cls_forward.10} parent=5 // pred_check_branch
      %312 = sbr.rel (%p309) target = $region48
    $region47: #{dgcnn_cls_forward.10} parent=5 // pred_region
      %s313 = ssub.s32 %s13, 1
      %s314 = smul.u32 2, %s23
      %p315 = scmp.lt.s32.totalorder %s22, 1
      %s316 = scalar_select %p315, %s22, 1
      %p317 = scmp.lt.s32.totalorder %s314, 1
      %s318 = scalar_select %p317, %s314, 1
      %s319 = smul.addr %s316, 2
      %s320 = sadd.s32 %s318, %s319
      %s321 = smul.addr %s320, 4
      %s322 = scalar_lea.vmem %s0, %s321
      %p323 = pneg %p53
      %p324 = pneg %p50
      %s325 = smul.u32 2, %s23
      %p326 = scmp.lt.s32.totalorder %s22, 1
      %s327 = scalar_select %p326, %s22, 1
      %p328 = scmp.lt.s32.totalorder %s325, 1
      %s329 = scalar_select %p328, %s325, 1
      %s330 = smul.addr %s327, 2
      %s331 = sadd.s32 %s329, %s330
      %s332 = smul.addr %s331, 4
      %s333 = scalar_lea.vmem %s1, %s332
      %p334 = pneg %p81
      %p335 = pneg %p78
      %s336 = smul.u32 2, %s23
      %p337 = scmp.lt.s32.totalorder %s22, 1
      %s338 = scalar_select %p337, %s22, 1
      %p339 = scmp.lt.s32.totalorder %s336, 1
      %s340 = scalar_select %p339, %s336, 1
      %s341 = smul.addr %s338, 2
      %s342 = sadd.s32 %s340, %s341
      %s343 = smul.addr %s342, 4
      %s344 = scalar_lea.vmem %s2, %s343
      %p345 = pneg %p109
      %p346 = pneg %p106
      %s347 = smul.u32 2, %s23
      %p348 = scmp.lt.s32.totalorder %s22, 1
      %s349 = scalar_select %p348, %s22, 1
      %p350 = scmp.lt.s32.totalorder %s347, 1
      %s351 = scalar_select %p350, %s347, 1
      %s352 = smul.addr %s351, 2
      %s353 = smul.addr %s349, 4
      %s354 = sadd.s32 %s352, %s353
      %s355 = smul.addr %s354, 4
      %s356 = scalar_lea.vmem %s3, %s355
      %p357 = pneg %p137
      %p358 = pneg %p134
      %p359 = pneg %p158
      %p360 = pneg %p155
      %p361 = pneg %p179
      %p362 = pneg %p176
      %p363 = pneg %p200
      %p364 = pneg %p197
      %p365 = pneg %p226
      %p366 = pneg %p223
      %p367 = scmp.lt.s32.totalorder %s22, 1
      %s368 = scalar_select %p367, %s22, 1
      %s369 = scalar_lea.vmem %s7, %s368
      %s370 = smul.u32 2, %s23
      %p371 = scmp.lt.s32.totalorder %s22, 1
      %s372 = scalar_select %p371, %s22, 1
      %p373 = scmp.lt.s32.totalorder %s370, 1
      %s374 = scalar_select %p373, %s370, 1
      %s375 = smul.addr %s372, 2
      %s376 = sadd.s32 %s374, %s375
      %s377 = smul.addr %s376, 4
      %s378 = scalar_lea.vmem %s0, %s377
      %s379 = smul.u32 2, %s23
      %s380 = smul.u32 2, %s23
      %p381 = scmp.lt.s32.totalorder %s22, 1
      %s382 = scalar_select %p381, %s22, 1
      %p383 = scmp.lt.s32.totalorder %s380, 1
      %s384 = scalar_select %p383, %s380, 1
      %s385 = smul.addr %s382, 2
      %s386 = sadd.s32 %s384, %s385
      %s387 = smul.addr %s386, 4
      %s388 = scalar_lea.vmem %s1, %s387
      %s389 = smul.u32 2, %s23
      %s390 = smul.u32 2, %s23
      %p391 = scmp.lt.s32.totalorder %s22, 1
      %s392 = scalar_select %p391, %s22, 1
      %p393 = scmp.lt.s32.totalorder %s390, 1
      %s394 = scalar_select %p393, %s390, 1
      %s395 = smul.addr %s392, 2
      %s396 = sadd.s32 %s394, %s395
      %s397 = smul.addr %s396, 4
      %s398 = scalar_lea.vmem %s2, %s397
      %s399 = smul.u32 2, %s23
      %s400 = smul.u32 2, %s23
      %p401 = scmp.lt.s32.totalorder %s22, 1
      %s402 = scalar_select %p401, %s22, 1
      %p403 = scmp.lt.s32.totalorder %s400, 1
      %s404 = scalar_select %p403, %s400, 1
      %s405 = smul.addr %s404, 2
      %s406 = smul.addr %s402, 4
      %s407 = sadd.s32 %s405, %s406
      %s408 = smul.addr %s407, 4
      %s409 = scalar_lea.vmem %s3, %s408
      %s410 = smul.u32 2, %s23
      %p411 = scmp.lt.s32.totalorder %s22, 1
      %s412 = scalar_select %p411, %s22, 1
      %s413 = scalar_lea.vmem %s7, %s412
      %p414 = scmp.eq.s32.totalorder %s23, 0
      // Predicated region
      $region49: #{dgcnn_cls_forward.10} parent=47 // pred_check
        %p415 = pneg %p414
      $region50: #{dgcnn_cls_forward.10} parent=47 // pred_check_branch
        %417 = sbr.rel (%p415) target = $region52
      $region51: #{dgcnn_cls_forward.10} parent=47 // pred_region
        %vm418 = vcmask 516096
        %419 = vst.msk [vmem:[%s413] sm:$0x1] %vm418, -inf
      $region52: #{dgcnn_cls_forward.10} parent=47 // pred_fallthru
        _
      %v420 = vld [vmem:[%s378] sm:$0xf]
      %v421 = vld [vmem:[%s378 + $0x4] sm:$0xf]
      %v422 = vld [vmem:[%s388] sm:$0xf]
      %v423 = vld [vmem:[%s388 + $0x4] sm:$0xf]
      %v424 = vld [vmem:[%s398] sm:$0xf]
      %v425 = vld [vmem:[%s398 + $0x4] sm:$0xf]
      %v426 = vld [vmem:[%s409] sm:$0xff]
      %v427 = vld [vmem:[%s409 + $0x8] sm:$0xff]
      %v430 = vunpack.c.l.b16 %v420
      %v431 = vunpack.c.l.b16 %v421
      %v432 = vpack.c.b16 %v431, %v430
      %v435 = vunpack.c.l.b16 %v422
      %v436 = vunpack.c.l.b16 %v423
      %v437 = vpack.c.b16 %v436, %v435
      %438 = vrot.lane.b32.xlu0 %v437, 64
      %v439 = vpop.permute.xlu0 %438
      %v442 = vunpack.c.l.b16 %v424
      %v443 = vunpack.c.l.b16 %v425
      %v444 = vpack.c.b16 %v443, %v442
      %v448 = vunpack.c.l.b16 %v426
      %v449 = vunpack.c.h.b16 %v426
      %v450 = vunpack.c.l.b16 %v427
      %v451 = vunpack.c.h.b16 %v427
      %v452 = vpack.c.b16 %v450, %v448
      %v453 = vpack.c.b16 %v451, %v449
      %vm456 = vcmask 523264
      %v459 = vsel %vm456, %v432, %v439
      %v461 = vld [vmem:[%s4] sm:$0xf]
      %v462 = vld [vmem:[%s4 + $0x4] sm:$0xf]
      %v463 = vld [vmem:[%s4 + $0x8] sm:$0xf]
      %v464 = vld [vmem:[%s4 + $0xc] sm:$0xf]
      %v465 = vld [vmem:[%s4 + $0x10] sm:$0xf]
      %v466 = vld [vmem:[%s4 + $0x14] sm:$0xf]
      %v467 = vld [vmem:[%s4 + $0x18] sm:$0xf]
      %v468 = vld [vmem:[%s4 + $0x1c] sm:$0xf]
      %v469 = vld [vmem:[%s4 + $0x20] sm:$0xf]
      %v470 = vld [vmem:[%s4 + $0x24] sm:$0xf]
      %v471 = vld [vmem:[%s4 + $0x28] sm:$0xf]
      %v472 = vld [vmem:[%s4 + $0x2c] sm:$0xf]
      %v473 = vld [vmem:[%s4 + $0x30] sm:$0xf]
      %v474 = vld [vmem:[%s4 + $0x34] sm:$0xf]
      %v475 = vld [vmem:[%s4 + $0x38] sm:$0xf]
      %v476 = vld [vmem:[%s4 + $0x3c] sm:$0xf]
      %v477 = vld [vmem:[%s4 + $0x40] sm:$0xf]
      %v478 = vld [vmem:[%s4 + $0x44] sm:$0xf]
      %v479 = vld [vmem:[%s4 + $0x48] sm:$0xf]
      %v480 = vld [vmem:[%s4 + $0x4c] sm:$0xf]
      %v481 = vld [vmem:[%s4 + $0x50] sm:$0xf]
      %v482 = vld [vmem:[%s4 + $0x54] sm:$0xf]
      %v483 = vld [vmem:[%s4 + $0x58] sm:$0xf]
      %v484 = vld [vmem:[%s4 + $0x5c] sm:$0xf]
      %v485 = vld [vmem:[%s4 + $0x60] sm:$0xf]
      %v486 = vld [vmem:[%s4 + $0x64] sm:$0xf]
      %v487 = vld [vmem:[%s4 + $0x68] sm:$0xf]
      %v488 = vld [vmem:[%s4 + $0x6c] sm:$0xf]
      %v489 = vld [vmem:[%s4 + $0x70] sm:$0xf]
      %v490 = vld [vmem:[%s4 + $0x74] sm:$0xf]
      %v491 = vld [vmem:[%s4 + $0x78] sm:$0xf]
      %v492 = vld [vmem:[%s4 + $0x7c] sm:$0xf]
      %v493 = vld [vmem:[%s4 + $0x80] sm:$0xf]
      %v494 = vld [vmem:[%s4 + $0x84] sm:$0xf]
      %v495 = vld [vmem:[%s4 + $0x88] sm:$0xf]
      %v496 = vld [vmem:[%s4 + $0x8c] sm:$0xf]
      %v497 = vld [vmem:[%s4 + $0x90] sm:$0xf]
      %v498 = vld [vmem:[%s4 + $0x94] sm:$0xf]
      %v499 = vld [vmem:[%s4 + $0x98] sm:$0xf]
      %v500 = vld [vmem:[%s4 + $0x9c] sm:$0xf]
      %v501 = vld [vmem:[%s4 + $0xa0] sm:$0xf]
      %v502 = vld [vmem:[%s4 + $0xa4] sm:$0xf]
      %v503 = vld [vmem:[%s4 + $0xa8] sm:$0xf]
      %v504 = vld [vmem:[%s4 + $0xac] sm:$0xf]
      %v505 = vld [vmem:[%s4 + $0xb0] sm:$0xf]
      %v506 = vld [vmem:[%s4 + $0xb4] sm:$0xf]
      %v507 = vld [vmem:[%s4 + $0xb8] sm:$0xf]
      %v508 = vld [vmem:[%s4 + $0xbc] sm:$0xf]
      %v509 = vld [vmem:[%s4 + $0xc0] sm:$0xf]
      %v510 = vld [vmem:[%s4 + $0xc4] sm:$0xf]
      %v511 = vld [vmem:[%s4 + $0xc8] sm:$0xf]
      %v512 = vld [vmem:[%s4 + $0xcc] sm:$0xf]
      %v513 = vld [vmem:[%s4 + $0xd0] sm:$0xf]
      %v514 = vld [vmem:[%s4 + $0xd4] sm:$0xf]
      %v515 = vld [vmem:[%s4 + $0xd8] sm:$0xf]
      %v516 = vld [vmem:[%s4 + $0xdc] sm:$0xf]
      %v517 = vld [vmem:[%s4 + $0xe0] sm:$0xf]
      %v518 = vld [vmem:[%s4 + $0xe4] sm:$0xf]
      %v519 = vld [vmem:[%s4 + $0xe8] sm:$0xf]
      %v520 = vld [vmem:[%s4 + $0xec] sm:$0xf]
      %v521 = vld [vmem:[%s4 + $0xf0] sm:$0xf]
      %v522 = vld [vmem:[%s4 + $0xf4] sm:$0xf]
      %v523 = vld [vmem:[%s4 + $0xf8] sm:$0xf]
      %v524 = vld [vmem:[%s4 + $0xfc] sm:$0xf]
      %v589 = vunpack.c.l.b16 %v461
      %v590 = vunpack.c.l.b16 %v462
      %v591 = vunpack.c.l.b16 %v463
      %v592 = vunpack.c.l.b16 %v464
      %v593 = vunpack.c.l.b16 %v465
      %v594 = vunpack.c.l.b16 %v466
      %v595 = vunpack.c.l.b16 %v467
      %v596 = vunpack.c.l.b16 %v468
      %v597 = vunpack.c.l.b16 %v469
      %v598 = vunpack.c.l.b16 %v470
      %v599 = vunpack.c.l.b16 %v471
      %v600 = vunpack.c.l.b16 %v472
      %v601 = vunpack.c.l.b16 %v473
      %v602 = vunpack.c.l.b16 %v474
      %v603 = vunpack.c.l.b16 %v475
      %v604 = vunpack.c.l.b16 %v476
      %v605 = vunpack.c.l.b16 %v477
      %v606 = vunpack.c.l.b16 %v478
      %v607 = vunpack.c.l.b16 %v479
      %v608 = vunpack.c.l.b16 %v480
      %v609 = vunpack.c.l.b16 %v481
      %v610 = vunpack.c.l.b16 %v482
      %v611 = vunpack.c.l.b16 %v483
      %v612 = vunpack.c.l.b16 %v484
      %v613 = vunpack.c.l.b16 %v485
      %v614 = vunpack.c.l.b16 %v486
      %v615 = vunpack.c.l.b16 %v487
      %v616 = vunpack.c.l.b16 %v488
      %v617 = vunpack.c.l.b16 %v489
      %v618 = vunpack.c.l.b16 %v490
      %v619 = vunpack.c.l.b16 %v491
      %v620 = vunpack.c.l.b16 %v492
      %v621 = vunpack.c.l.b16 %v493
      %v622 = vunpack.c.l.b16 %v494
      %v623 = vunpack.c.l.b16 %v495
      %v624 = vunpack.c.l.b16 %v496
      %v625 = vunpack.c.l.b16 %v497
      %v626 = vunpack.c.l.b16 %v498
      %v627 = vunpack.c.l.b16 %v499
      %v628 = vunpack.c.l.b16 %v500
      %v629 = vunpack.c.l.b16 %v501
      %v630 = vunpack.c.l.b16 %v502
      %v631 = vunpack.c.l.b16 %v503
      %v632 = vunpack.c.l.b16 %v504
      %v633 = vunpack.c.l.b16 %v505
      %v634 = vunpack.c.l.b16 %v506
      %v635 = vunpack.c.l.b16 %v507
      %v636 = vunpack.c.l.b16 %v508
      %v637 = vunpack.c.l.b16 %v509
      %v638 = vunpack.c.l.b16 %v510
      %v639 = vunpack.c.l.b16 %v511
      %v640 = vunpack.c.l.b16 %v512
      %v641 = vunpack.c.l.b16 %v513
      %v642 = vunpack.c.l.b16 %v514
      %v643 = vunpack.c.l.b16 %v515
      %v644 = vunpack.c.l.b16 %v516
      %v645 = vunpack.c.l.b16 %v517
      %v646 = vunpack.c.l.b16 %v518
      %v647 = vunpack.c.l.b16 %v519
      %v648 = vunpack.c.l.b16 %v520
      %v649 = vunpack.c.l.b16 %v521
      %v650 = vunpack.c.l.b16 %v522
      %v651 = vunpack.c.l.b16 %v523
      %v652 = vunpack.c.l.b16 %v524
      %v653 = vpack.c.b16 %v590, %v589
      %v654 = vpack.c.b16 %v592, %v591
      %v655 = vpack.c.b16 %v594, %v593
      %v656 = vpack.c.b16 %v596, %v595
      %v657 = vpack.c.b16 %v598, %v597
      %v658 = vpack.c.b16 %v600, %v599
      %v659 = vpack.c.b16 %v602, %v601
      %v660 = vpack.c.b16 %v604, %v603
      %v661 = vpack.c.b16 %v606, %v605
      %v662 = vpack.c.b16 %v608, %v607
      %v663 = vpack.c.b16 %v610, %v609
      %v664 = vpack.c.b16 %v612, %v611
      %v665 = vpack.c.b16 %v614, %v613
      %v666 = vpack.c.b16 %v616, %v615
      %v667 = vpack.c.b16 %v618, %v617
      %v668 = vpack.c.b16 %v620, %v619
      %v669 = vpack.c.b16 %v622, %v621
      %v670 = vpack.c.b16 %v624, %v623
      %v671 = vpack.c.b16 %v626, %v625
      %v672 = vpack.c.b16 %v628, %v627
      %v673 = vpack.c.b16 %v630, %v629
      %v674 = vpack.c.b16 %v632, %v631
      %v675 = vpack.c.b16 %v634, %v633
      %v676 = vpack.c.b16 %v636, %v635
      %v677 = vpack.c.b16 %v638, %v637
      %v678 = vpack.c.b16 %v640, %v639
      %v679 = vpack.c.b16 %v642, %v641
      %v680 = vpack.c.b16 %v644, %v643
      %v681 = vpack.c.b16 %v646, %v645
      %v682 = vpack.c.b16 %v648, %v647
      %v683 = vpack.c.b16 %v650, %v649
      %v684 = vpack.c.b16 %v652, %v651
      %717 = vmatpush.bf16.msra.mxu0 %v660
      %718 = vmatpush.bf16.msra.mxu0 %v659
      %719 = vmatpush.bf16.msra.mxu0 %v658
      %720 = vmatpush.bf16.msra.mxu0 %v657
      %721 = vmatpush.bf16.msra.mxu0 %v656
      %722 = vmatpush.bf16.msra.mxu0 %v655
      %723 = vmatpush.bf16.msra.mxu0 %v654
      %724 = vmatpush.bf16.msra.mxu0 %v653
      %725 = vmatmul.bf16.gmra.mxu0 %v459
      %v726 = vpop.f32.mrf.mxu0
      %v727 = vadd.f32 0.0, %v726
      %v728 = vpop.f32.mrf.mxu0
      %v729 = vadd.f32 0.0, %v728
      %730 = vdwg.mxu0
      %731 = vmatpush.bf16.msra.mxu0 %v668
      %732 = vmatpush.bf16.msra.mxu0 %v667
      %733 = vmatpush.bf16.msra.mxu0 %v666
      %734 = vmatpush.bf16.msra.mxu0 %v665
      %735 = vmatpush.bf16.msra.mxu0 %v664
      %736 = vmatpush.bf16.msra.mxu0 %v663
      %737 = vmatpush.bf16.msra.mxu0 %v662
      %738 = vmatpush.bf16.msra.mxu0 %v661
      %739 = vmatmul.bf16.gmra.mxu0 %v444
      %v740 = vpop.f32.mrf.mxu0
      %v741 = vadd.f32 %v727, %v740
      %v742 = vpop.f32.mrf.mxu0
      %v743 = vadd.f32 %v729, %v742
      %744 = vdwg.mxu0
      %745 = vmatpush.bf16.msra.mxu0 %v676
      %746 = vmatpush.bf16.msra.mxu0 %v675
      %747 = vmatpush.bf16.msra.mxu0 %v674
      %748 = vmatpush.bf16.msra.mxu0 %v673
      %749 = vmatpush.bf16.msra.mxu0 %v672
      %750 = vmatpush.bf16.msra.mxu0 %v671
      %751 = vmatpush.bf16.msra.mxu0 %v670
      %752 = vmatpush.bf16.msra.mxu0 %v669
      %753 = vmatmul.bf16.gmra.mxu0 %v452
      %v754 = vpop.f32.mrf.mxu0
      %v755 = vadd.f32 %v741, %v754
      %v756 = vpop.f32.mrf.mxu0
      %v757 = vadd.f32 %v743, %v756
      %758 = vdwg.mxu0
      %759 = vmatpush.bf16.msra.mxu0 %v684
      %760 = vmatpush.bf16.msra.mxu0 %v683
      %761 = vmatpush.bf16.msra.mxu0 %v682
      %762 = vmatpush.bf16.msra.mxu0 %v681
      %763 = vmatpush.bf16.msra.mxu0 %v680
      %764 = vmatpush.bf16.msra.mxu0 %v679
      %765 = vmatpush.bf16.msra.mxu0 %v678
      %766 = vmatpush.bf16.msra.mxu0 %v677
      %767 = vmatmul.bf16.gmra.mxu0 %v453
      %v768 = vpop.f32.mrf.mxu0
      %v769 = vadd.f32 %v755, %v768
      %v770 = vpop.f32.mrf.mxu0
      %v771 = vadd.f32 %v757, %v770
      %772 = vdwg.mxu0
      %v773 = vld [vmem:[%s5] sm:$0x1]
      %v775 = vperm.slane %v773, 0
      %v777 = vmul.f32 %v769, %v775
      %v778 = vmul.f32 %v771, %v775
      %v779 = vld [vmem:[%s6] sm:$0x1]
      %v781 = vperm.slane %v779, 0
      %v783 = vadd.f32 %v777, %v781
      %v784 = vadd.f32 %v778, %v781
      %vm785 = vcmp.gt.f32.partialorder %v783, 0.0
      %vm786 = vcmp.gt.f32.partialorder %v784, 0.0
      %v787 = vmul.f32 %v783, 0.2
      %v788 = vmul.f32 %v784, 0.2
      %v789 = vsel %vm785, %v783, %v787
      %v790 = vsel %vm786, %v784, %v788
      %v791 = vld [vmem:[%s413] sm:$0x1]
      %v792 = vsel %vm456, %v789, -inf
      %v793 = vsel %vm456, %v790, -inf
      %v794 = vmax.f32 %v792, %v793
      %v795 = vrot.slane %v794, 4
      %v796 = vmax.f32 %v794, %v795
      %v797 = vrot.slane %v796, 2
      %v798 = vmax.f32 %v796, %v797
      %v799 = vrot.slane %v798, 1
      %v800 = vmax.f32 %v798, %v799
      %v801 = vmax.f32 %v791, %v800
      %vm802 = vcmask 516096
      %803 = vst.msk [vmem:[%s413] sm:$0x1] %vm802, %v801
      %p804 = scmp.lt.s32.totalorder %s22, 1
      %s805 = scalar_select %p804, %s22, 1
      %s806 = scalar_lea.vmem %s7, %s805
      // Predicated region
      $region53: #{dgcnn_cls_forward.10} parent=47 // pred_check
        %p807 = pneg %p223
      $region54: #{dgcnn_cls_forward.10} parent=47 // pred_check_branch
        %809 = sbr.rel (%p807) target = $region56
      $region55: #{dgcnn_cls_forward.10} parent=47 // pred_region
        _
      $region56: #{dgcnn_cls_forward.10} parent=47 // pred_fallthru
        _
    $region48: #{dgcnn_cls_forward.10} parent=5 // pred_fallthru
      _
    %p810 = scmp.le.s32.totalorder 2, %s13
    // Predicated region
    $region57: #{dgcnn_cls_forward.10} parent=5 // pred_check
      %p811 = pneg %p810
    $region58: #{dgcnn_cls_forward.10} parent=5 // pred_check_branch
      %813 = sbr.rel (%p811) target = $region60
    $region59: #{dgcnn_cls_forward.10} parent=5 // pred_region
      %s814 = ssub.s32 %s13, 2
      // Predicated region
      $region61: #{dgcnn_cls_forward.10} parent=59 // pred_check
        %p815 = pneg %p229
      $region62: #{dgcnn_cls_forward.10} parent=59 // pred_check_branch
        %817 = sbr.rel (%p815) target = $region64
      $region63: #{dgcnn_cls_forward.10} parent=59 // pred_region
        %p818 = scmp.lt.s32.totalorder %s24, 1
        %s819 = scalar_select %p818, %s24, 1
        %s820 = scalar_lea.vmem %s7, %s819
      $region64: #{dgcnn_cls_forward.10} parent=59 // pred_fallthru
        _
    $region60: #{dgcnn_cls_forward.10} parent=5 // pred_fallthru
      _
  $region6: #{dgcnn_cls_forward.10} parent=0 // loop_footer
    %s17 = sadd.s32 1, %s13
  $region7: #{dgcnn_cls_forward.10} parent=0 // loop_footer_branch
    %12 = sbr.rel target = $region3
  $region8: #{dgcnn_cls_forward.10} parent=0 // loop_exit
    _

// kernel: dgcnn_cls_forward.11
$region0: #{dgcnn_cls_forward.11}
  #allocation0 [shape = 'u32[]', space=smem, size = 0x4, offset = 0x4, fixed_abs, tag = 'smem constant byte address 0x4 - core index']
  #allocation1 [shape = 'u32[72,128]{1,0:T(1,128)}', space=vmem, size = 0x9000, scoped, tag = 'internal scratch']
  %s0 = inlined_call_operand.vmem [shape: bf16[2,16,64], index: 0, kind: input, shape index: {}]
  %s1 = inlined_call_operand.vmem [shape: bf16[2,16,64], index: 1, kind: input, shape index: {}]
  %s2 = inlined_call_operand.vmem [shape: bf16[2,16,128], index: 2, kind: input, shape index: {}]
  %s3 = inlined_call_operand.vmem [shape: bf16[2,16,256], index: 3, kind: input, shape index: {}]
  %s4 = inlined_call_operand.vmem [shape: f32[2,1,512], index: 4, kind: input, shape index: {}]
  %s5 = inlined_call_operand.hbm [shape: bf16[512,512], index: 5, kind: input, shape index: {}]
  %s6 = inlined_call_operand.vmem [shape: f32[1,512], index: 6, kind: input, shape index: {}]
  %s7 = inlined_call_operand.vmem [shape: f32[1,512], index: 7, kind: input, shape index: {}]
  %s8 = inlined_call_operand.vmem [shape: bf16[512,128], index: 8, kind: input, shape index: {}]
  %s9 = inlined_call_operand.vmem [shape: f32[1,128], index: 9, kind: input, shape index: {}]
  %s10 = inlined_call_operand.vmem [shape: f32[1,128], index: 10, kind: input, shape index: {}]
  %s11 = inlined_call_operand.vmem [shape: f32[2,16,128], index: 11, kind: output, shape index: {}]
  %s12 = sld [smem:[#allocation0]]
  $region81: #{dgcnn_cls_forward.11} parent=0
    _
  %s14 = ssub.s32 1, %s12
  %s15 = scalar_select 0, %s14, %s12
  $region1: #{dgcnn_cls_forward.11} parent=0
    #allocation2 [shape = 'u8[524288]{0}', space=vmem, size = 0x80000, scoped, tag = 'input window, operand 5, single buffered']
    #allocation3 [shape = 's32[2]{0}', space=sflag, size = 0x8, scoped, tag = 'scoped memory for dgcnn_cls_forward.11']
    %16 = vsyncpa [#allocation3], 0
    loop: start=0, step=1, limit=4
    $region2: #{dgcnn_cls_forward.11} parent=1 // loop_pre_header
      _
    $region3: #{dgcnn_cls_forward.11} parent=1 // loop_header
      %s18 = sphi 0, %s22
      %p19 = scmp.ge.s32.totalorder %s18, 4
      %s25 = sphi 0, %s37
      %s26 = sphi 0, %s33
      %s27 = sphi 0, %s25
      %s28 = sphi 0, %s26
      %s29 = sphi 0, %s27
      %s30 = sphi 0, %s28
      %s42 = sphi 0, %s44
      %s45 = sphi 0, %s42
      %s46 = sphi 0, %s45
      %s62 = sphi 0, %s46
      %s70 = sphi 0, %s72
      %s73 = sphi 0, %s70
      %s74 = sphi 0, %s73
      %s90 = sphi 0, %s74
      %s98 = sphi 0, %s100
      %s101 = sphi 0, %s98
      %s102 = sphi 0, %s101
      %s118 = sphi 0, %s102
      %s126 = sphi 0, %s128
      %s129 = sphi 0, %s126
      %s130 = sphi 0, %s129
      %s146 = sphi 0, %s130
      %s152 = sphi 0, %s154
      %s155 = sphi 0, %s152
      %s156 = sphi 0, %s155
      %s172 = sphi 0, %s156
      %s176 = sphi 0, %s176
      %s178 = sphi 0, %s176
      %s179 = sphi 0, %s178
      %s193 = sphi 0, %s179
      %s197 = sphi 0, %s197
      %s199 = sphi 0, %s197
      %s200 = sphi 0, %s199
      %s214 = sphi 0, %s200
      %s218 = sphi 0, %s218
      %s220 = sphi 0, %s218
      %s221 = sphi 0, %s220
      %s235 = sphi 0, %s221
      %s239 = sphi 0, %s239
      %s241 = sphi 0, %s239
      %s242 = sphi 0, %s241
      %s256 = sphi 0, %s242
      %s260 = sphi 0, %s260
      %s262 = sphi 0, %s260
      %s263 = sphi 0, %s262
      %s277 = sphi 0, %s263
      %s281 = sphi 0, %s281
      %s283 = sphi 0, %s281
      %s284 = sphi 0, %s283
      %s298 = sphi 0, %s284
      %s306 = sphi 0, %s308
      %s309 = sphi 0, %s306
      %s310 = sphi 0, %s309
      %s326 = sphi 0, %s310
    $region4: #{dgcnn_cls_forward.11} parent=1 // loop_header_branch
      %21 = sbr.rel (%p19) target = $region8
    $region5: #{dgcnn_cls_forward.11} parent=1 // loop_body
      %s23 = ssub.s32 %s18, 1
      %s24 = ssub.s32 %s18, 2
      %s31 = sadd.s32 1, %s26
      %p32 = scmp.ge.s32.totalorder %s31, 1
      %s33 = scalar_select %p32, 0, %s31
      %s34 = sadd.s32 1, %s25
      %s35 = scalar_select %p32, %s34, %s25
      %p36 = scmp.ge.s32.totalorder %s35, 2
      %s37 = scalar_select %p36, 0, %s35
      %s38 = ssub.s32 %s25, %s37
      %s39 = ssub.s32 %s26, %s33
      %s40 = sor.u32 %s38, %s39
      %p41 = scmp.eq.s32.totalorder %s40, 0
      %s43 = sadd.s32 %s42, 1
      %s44 = scalar_select %p41, %s42, %s43
      %p47 = pneg %p41
      %p48 = scmp.eq.s32.totalorder %s18, 1
      %p49 = por %p47, %p48
      %p50 = scmp.ne.s32.totalorder %s42, %s45
      %p51 = scmp.eq.s32.totalorder %s18, 0
      %p52 = por %p50, %p51
      %p53 = scmp.ne.s32.totalorder %s42, %s45
      %p54 = scmp.eq.s32.totalorder %s23, 1
      %p55 = por %p53, %p54
      %p56 = scmp.ne.s32.totalorder %s45, %s46
      %p57 = scmp.eq.s32.totalorder %s23, 0
      %p58 = por %p56, %p57
      %p59 = scmp.ne.s32.totalorder %s45, %s46
      %p60 = scmp.eq.s32.totalorder %s24, 1
      %p61 = por %p59, %p60
      %p63 = scmp.ne.s32.totalorder %s46, %s62
      %p64 = scmp.eq.s32.totalorder %s24, 0
      %p65 = por %p63, %p64
      %s66 = ssub.s32 %s25, %s37
      %s67 = ssub.s32 %s26, %s33
      %s68 = sor.u32 %s66, %s67
      %p69 = scmp.eq.s32.totalorder %s68, 0
      %s71 = sadd.s32 %s70, 1
      %s72 = scalar_select %p69, %s70, %s71
      %p75 = pneg %p69
      %p76 = scmp.eq.s32.totalorder %s18, 1
      %p77 = por %p75, %p76
      %p78 = scmp.ne.s32.totalorder %s70, %s73
      %p79 = scmp.eq.s32.totalorder %s18, 0
      %p80 = por %p78, %p79
      %p81 = scmp.ne.s32.totalorder %s70, %s73
      %p82 = scmp.eq.s32.totalorder %s23, 1
      %p83 = por %p81, %p82
      %p84 = scmp.ne.s32.totalorder %s73, %s74
      %p85 = scmp.eq.s32.totalorder %s23, 0
      %p86 = por %p84, %p85
      %p87 = scmp.ne.s32.totalorder %s73, %s74
      %p88 = scmp.eq.s32.totalorder %s24, 1
      %p89 = por %p87, %p88
      %p91 = scmp.ne.s32.totalorder %s74, %s90
      %p92 = scmp.eq.s32.totalorder %s24, 0
      %p93 = por %p91, %p92
      %s94 = ssub.s32 %s25, %s37
      %s95 = ssub.s32 %s26, %s33
      %s96 = sor.u32 %s94, %s95
      %p97 = scmp.eq.s32.totalorder %s96, 0
      %s99 = sadd.s32 %s98, 1
      %s100 = scalar_select %p97, %s98, %s99
      %p103 = pneg %p97
      %p104 = scmp.eq.s32.totalorder %s18, 1
      %p105 = por %p103, %p104
      %p106 = scmp.ne.s32.totalorder %s98, %s101
      %p107 = scmp.eq.s32.totalorder %s18, 0
      %p108 = por %p106, %p107
      %p109 = scmp.ne.s32.totalorder %s98, %s101
      %p110 = scmp.eq.s32.totalorder %s23, 1
      %p111 = por %p109, %p110
      %p112 = scmp.ne.s32.totalorder %s101, %s102
      %p113 = scmp.eq.s32.totalorder %s23, 0
      %p114 = por %p112, %p113
      %p115 = scmp.ne.s32.totalorder %s101, %s102
      %p116 = scmp.eq.s32.totalorder %s24, 1
      %p117 = por %p115, %p116
      %p119 = scmp.ne.s32.totalorder %s102, %s118
      %p120 = scmp.eq.s32.totalorder %s24, 0
      %p121 = por %p119, %p120
      %s122 = ssub.s32 %s25, %s37
      %s123 = ssub.s32 %s26, %s33
      %s124 = sor.u32 %s122, %s123
      %p125 = scmp.eq.s32.totalorder %s124, 0
      %s127 = sadd.s32 %s126, 1
      %s128 = scalar_select %p125, %s126, %s127
      %p131 = pneg %p125
      %p132 = scmp.eq.s32.totalorder %s18, 1
      %p133 = por %p131, %p132
      %p134 = scmp.ne.s32.totalorder %s126, %s129
      %p135 = scmp.eq.s32.totalorder %s18, 0
      %p136 = por %p134, %p135
      %p137 = scmp.ne.s32.totalorder %s126, %s129
      %p138 = scmp.eq.s32.totalorder %s23, 1
      %p139 = por %p137, %p138
      %p140 = scmp.ne.s32.totalorder %s129, %s130
      %p141 = scmp.eq.s32.totalorder %s23, 0
      %p142 = por %p140, %p141
      %p143 = scmp.ne.s32.totalorder %s129, %s130
      %p144 = scmp.eq.s32.totalorder %s24, 1
      %p145 = por %p143, %p144
      %p147 = scmp.ne.s32.totalorder %s130, %s146
      %p148 = scmp.eq.s32.totalorder %s24, 0
      %p149 = por %p147, %p148
      %s150 = ssub.s32 %s25, %s37
      %p151 = scmp.eq.s32.totalorder %s150, 0
      %s153 = sadd.s32 %s152, 1
      %s154 = scalar_select %p151, %s152, %s153
      %p157 = pneg %p151
      %p158 = scmp.eq.s32.totalorder %s18, 1
      %p159 = por %p157, %p158
      %p160 = scmp.ne.s32.totalorder %s152, %s155
      %p161 = scmp.eq.s32.totalorder %s18, 0
      %p162 = por %p160, %p161
      %p163 = scmp.ne.s32.totalorder %s152, %s155
      %p164 = scmp.eq.s32.totalorder %s23, 1
      %p165 = por %p163, %p164
      %p166 = scmp.ne.s32.totalorder %s155, %s156
      %p167 = scmp.eq.s32.totalorder %s23, 0
      %p168 = por %p166, %p167
      %p169 = scmp.ne.s32.totalorder %s155, %s156
      %p170 = scmp.eq.s32.totalorder %s24, 1
      %p171 = por %p169, %p170
      %p173 = scmp.ne.s32.totalorder %s156, %s172
      %p174 = scmp.eq.s32.totalorder %s24, 0
      %p175 = por %p173, %p174
      %s177 = sadd.s32 %s176, 1
      %p180 = scmp.eq.s32.totalorder %s18, 1
      %p181 = scmp.ne.s32.totalorder %s176, %s178
      %p182 = scmp.eq.s32.totalorder %s18, 0
      %p183 = por %p181, %p182
      %p184 = scmp.ne.s32.totalorder %s176, %s178
      %p185 = scmp.eq.s32.totalorder %s23, 1
      %p186 = por %p184, %p185
      %p187 = scmp.ne.s32.totalorder %s178, %s179
      %p188 = scmp.eq.s32.totalorder %s23, 0
      %p189 = por %p187, %p188
      %p190 = scmp.ne.s32.totalorder %s178, %s179
      %p191 = scmp.eq.s32.totalorder %s24, 1
      %p192 = por %p190, %p191
      %p194 = scmp.ne.s32.totalorder %s179, %s193
      %p195 = scmp.eq.s32.totalorder %s24, 0
      %p196 = por %p194, %p195
      %s198 = sadd.s32 %s197, 1
      %p201 = scmp.eq.s32.totalorder %s18, 1
      %p202 = scmp.ne.s32.totalorder %s197, %s199
      %p203 = scmp.eq.s32.totalorder %s18, 0
      %p204 = por %p202, %p203
      %p205 = scmp.ne.s32.totalorder %s197, %s199
      %p206 = scmp.eq.s32.totalorder %s23, 1
      %p207 = por %p205, %p206
      %p208 = scmp.ne.s32.totalorder %s199, %s200
      %p209 = scmp.eq.s32.totalorder %s23, 0
      %p210 = por %p208, %p209
      %p211 = scmp.ne.s32.totalorder %s199, %s200
      %p212 = scmp.eq.s32.totalorder %s24, 1
      %p213 = por %p211, %p212
      %p215 = scmp.ne.s32.totalorder %s200, %s214
      %p216 = scmp.eq.s32.totalorder %s24, 0
      %p217 = por %p215, %p216
      %s219 = sadd.s32 %s218, 1
      %p222 = scmp.eq.s32.totalorder %s18, 1
      %p223 = scmp.ne.s32.totalorder %s218, %s220
      %p224 = scmp.eq.s32.totalorder %s18, 0
      %p225 = por %p223, %p224
      %p226 = scmp.ne.s32.totalorder %s218, %s220
      %p227 = scmp.eq.s32.totalorder %s23, 1
      %p228 = por %p226, %p227
      %p229 = scmp.ne.s32.totalorder %s220, %s221
      %p230 = scmp.eq.s32.totalorder %s23, 0
      %p231 = por %p229, %p230
      %p232 = scmp.ne.s32.totalorder %s220, %s221
      %p233 = scmp.eq.s32.totalorder %s24, 1
      %p234 = por %p232, %p233
      %p236 = scmp.ne.s32.totalorder %s221, %s235
      %p237 = scmp.eq.s32.totalorder %s24, 0
      %p238 = por %p236, %p237
      %s240 = sadd.s32 %s239, 1
      %p243 = scmp.eq.s32.totalorder %s18, 1
      %p244 = scmp.ne.s32.totalorder %s239, %s241
      %p245 = scmp.eq.s32.totalorder %s18, 0
      %p246 = por %p244, %p245
      %p247 = scmp.ne.s32.totalorder %s239, %s241
      %p248 = scmp.eq.s32.totalorder %s23, 1
      %p249 = por %p247, %p248
      %p250 = scmp.ne.s32.totalorder %s241, %s242
      %p251 = scmp.eq.s32.totalorder %s23, 0
      %p252 = por %p250, %p251
      %p253 = scmp.ne.s32.totalorder %s241, %s242
      %p254 = scmp.eq.s32.totalorder %s24, 1
      %p255 = por %p253, %p254
      %p257 = scmp.ne.s32.totalorder %s242, %s256
      %p258 = scmp.eq.s32.totalorder %s24, 0
      %p259 = por %p257, %p258
      %s261 = sadd.s32 %s260, 1
      %p264 = scmp.eq.s32.totalorder %s18, 1
      %p265 = scmp.ne.s32.totalorder %s260, %s262
      %p266 = scmp.eq.s32.totalorder %s18, 0
      %p267 = por %p265, %p266
      %p268 = scmp.ne.s32.totalorder %s260, %s262
      %p269 = scmp.eq.s32.totalorder %s23, 1
      %p270 = por %p268, %p269
      %p271 = scmp.ne.s32.totalorder %s262, %s263
      %p272 = scmp.eq.s32.totalorder %s23, 0
      %p273 = por %p271, %p272
      %p274 = scmp.ne.s32.totalorder %s262, %s263
      %p275 = scmp.eq.s32.totalorder %s24, 1
      %p276 = por %p274, %p275
      %p278 = scmp.ne.s32.totalorder %s263, %s277
      %p279 = scmp.eq.s32.totalorder %s24, 0
      %p280 = por %p278, %p279
      %s282 = sadd.s32 %s281, 1
      %p285 = scmp.eq.s32.totalorder %s18, 1
      %p286 = scmp.ne.s32.totalorder %s281, %s283
      %p287 = scmp.eq.s32.totalorder %s18, 0
      %p288 = por %p286, %p287
      %p289 = scmp.ne.s32.totalorder %s281, %s283
      %p290 = scmp.eq.s32.totalorder %s23, 1
      %p291 = por %p289, %p290
      %p292 = scmp.ne.s32.totalorder %s283, %s284
      %p293 = scmp.eq.s32.totalorder %s23, 0
      %p294 = por %p292, %p293
      %p295 = scmp.ne.s32.totalorder %s283, %s284
      %p296 = scmp.eq.s32.totalorder %s24, 1
      %p297 = por %p295, %p296
      %p299 = scmp.ne.s32.totalorder %s284, %s298
      %p300 = scmp.eq.s32.totalorder %s24, 0
      %p301 = por %p299, %p300
      %s302 = ssub.s32 %s25, %s37
      %s303 = ssub.s32 %s26, %s33
      %s304 = sor.u32 %s302, %s303
      %p305 = scmp.eq.s32.totalorder %s304, 0
      %s307 = sadd.s32 %s306, 1
      %s308 = scalar_select %p305, %s306, %s307
      %p311 = pneg %p305
      %p312 = scmp.eq.s32.totalorder %s18, 1
      %p313 = por %p311, %p312
      %p314 = scmp.ne.s32.totalorder %s306, %s309
      %p315 = scmp.eq.s32.totalorder %s18, 0
      %p316 = por %p314, %p315
      %p317 = scmp.ne.s32.totalorder %s306, %s309
      %p318 = scmp.eq.s32.totalorder %s23, 1
      %p319 = por %p317, %p318
      %p320 = scmp.ne.s32.totalorder %s309, %s310
      %p321 = scmp.eq.s32.totalorder %s23, 0
      %p322 = por %p320, %p321
      %p323 = scmp.ne.s32.totalorder %s309, %s310
      %p324 = scmp.eq.s32.totalorder %s24, 1
      %p325 = por %p323, %p324
      %p327 = scmp.ne.s32.totalorder %s310, %s326
      %p328 = scmp.eq.s32.totalorder %s24, 0
      %p329 = por %p327, %p328
      %p330 = scmp.le.s32.totalorder 1, %s18
      %p331 = scmp.lt.s32.totalorder %s18, 3
      %p332 = pnand %p330, %p331
      %p333 = pneg %p332
      // Predicated region
      $region9: #{dgcnn_cls_forward.11} parent=5 // pred_check
        _
      $region10: #{dgcnn_cls_forward.11} parent=5 // pred_check_branch
        %335 = sbr.rel (%p332) target = $region12
      $region11: #{dgcnn_cls_forward.11} parent=5 // pred_region
        %s336 = ssub.s32 %s18, 1
        // Predicated region
        $region13: #{dgcnn_cls_forward.11} parent=11 // pred_check
          %p337 = pneg %p189
        $region14: #{dgcnn_cls_forward.11} parent=11 // pred_check_branch
          %339 = sbr.rel (%p337) target = $region16
        $region15: #{dgcnn_cls_forward.11} parent=11 // pred_region
          %341 = vsyncadd [#allocation3], 0
          %s342 = sshll.u32 %s5, 4
          %s343 = int_to_ptr.hbm [resolvable:$true] %s342
          %s344 = sshll.u32 [#allocation2], 4
          %s345 = int_to_ptr.vmem [resolvable:$true] %s344
          %350 = dma.hbm_to_vmem [thread:$0]  %s343, 16384, %s345, [#allocation3], 256, 256, 16
        $region16: #{dgcnn_cls_forward.11} parent=11 // pred_fallthru
          _
        // Predicated region
        $region17: #{dgcnn_cls_forward.11} parent=11 // pred_check
          %p351 = pneg %p210
        $region18: #{dgcnn_cls_forward.11} parent=11 // pred_check_branch
          %353 = sbr.rel (%p351) target = $region20
        $region19: #{dgcnn_cls_forward.11} parent=11 // pred_region
          _
        $region20: #{dgcnn_cls_forward.11} parent=11 // pred_fallthru
          _
        // Predicated region
        $region21: #{dgcnn_cls_forward.11} parent=11 // pred_check
          %p354 = pneg %p231
        $region22: #{dgcnn_cls_forward.11} parent=11 // pred_check_branch
          %356 = sbr.rel (%p354) target = $region24
        $region23: #{dgcnn_cls_forward.11} parent=11 // pred_region
          _
        $region24: #{dgcnn_cls_forward.11} parent=11 // pred_fallthru
          _
        // Predicated region
        $region25: #{dgcnn_cls_forward.11} parent=11 // pred_check
          %p357 = pneg %p252
        $region26: #{dgcnn_cls_forward.11} parent=11 // pred_check_branch
          %359 = sbr.rel (%p357) target = $region28
        $region27: #{dgcnn_cls_forward.11} parent=11 // pred_region
          _
        $region28: #{dgcnn_cls_forward.11} parent=11 // pred_fallthru
          _
        // Predicated region
        $region29: #{dgcnn_cls_forward.11} parent=11 // pred_check
          %p360 = pneg %p273
        $region30: #{dgcnn_cls_forward.11} parent=11 // pred_check_branch
          %362 = sbr.rel (%p360) target = $region32
        $region31: #{dgcnn_cls_forward.11} parent=11 // pred_region
          _
        $region32: #{dgcnn_cls_forward.11} parent=11 // pred_fallthru
          _
        // Predicated region
        $region33: #{dgcnn_cls_forward.11} parent=11 // pred_check
          %p363 = pneg %p294
        $region34: #{dgcnn_cls_forward.11} parent=11 // pred_check_branch
          %365 = sbr.rel (%p363) target = $region36
        $region35: #{dgcnn_cls_forward.11} parent=11 // pred_region
          _
        $region36: #{dgcnn_cls_forward.11} parent=11 // pred_fallthru
          _
      $region12: #{dgcnn_cls_forward.11} parent=5 // pred_fallthru
        _
      %p366 = scmp.lt.s32.totalorder %s18, 2
      // Predicated region
      $region37: #{dgcnn_cls_forward.11} parent=5 // pred_check
        %p367 = pneg %p366
      $region38: #{dgcnn_cls_forward.11} parent=5 // pred_check_branch
        %369 = sbr.rel (%p367) target = $region40
      $region39: #{dgcnn_cls_forward.11} parent=5 // pred_region
        // Predicated region
        $region41: #{dgcnn_cls_forward.11} parent=39 // pred_check
          %p370 = pneg %p52
        $region42: #{dgcnn_cls_forward.11} parent=39 // pred_check_branch
          %372 = sbr.rel (%p370) target = $region44
        $region43: #{dgcnn_cls_forward.11} parent=39 // pred_region
          %s373 = smul.u32 2, %s26
          %p374 = scmp.lt.s32.totalorder %s25, 1
          %s375 = scalar_select %p374, %s25, 1
          %p376 = scmp.lt.s32.totalorder %s373, 1
          %s377 = scalar_select %p376, %s373, 1
          %s378 = smul.addr %s375, 2
          %s379 = sadd.s32 %s377, %s378
          %s380 = smul.addr %s379, 4
          %s381 = scalar_lea.vmem %s0, %s380
          %s382 = smul.u32 2, %s26
        $region44: #{dgcnn_cls_forward.11} parent=39 // pred_fallthru
          _
        // Predicated region
        $region45: #{dgcnn_cls_forward.11} parent=39 // pred_check
          %p383 = pneg %p80
        $region46: #{dgcnn_cls_forward.11} parent=39 // pred_check_branch
          %385 = sbr.rel (%p383) target = $region48
        $region47: #{dgcnn_cls_forward.11} parent=39 // pred_region
          %s386 = smul.u32 2, %s26
          %p387 = scmp.lt.s32.totalorder %s25, 1
          %s388 = scalar_select %p387, %s25, 1
          %p389 = scmp.lt.s32.totalorder %s386, 1
          %s390 = scalar_select %p389, %s386, 1
          %s391 = smul.addr %s388, 2
          %s392 = sadd.s32 %s390, %s391
          %s393 = smul.addr %s392, 4
          %s394 = scalar_lea.vmem %s1, %s393
          %s395 = smul.u32 2, %s26
        $region48: #{dgcnn_cls_forward.11} parent=39 // pred_fallthru
          _
        // Predicated region
        $region49: #{dgcnn_cls_forward.11} parent=39 // pred_check
          %p396 = pneg %p108
        $region50: #{dgcnn_cls_forward.11} parent=39 // pred_check_branch
          %398 = sbr.rel (%p396) target = $region52
        $region51: #{dgcnn_cls_forward.11} parent=39 // pred_region
          %s399 = smul.u32 2, %s26
          %p400 = scmp.lt.s32.totalorder %s25, 1
          %s401 = scalar_select %p400, %s25, 1
          %p402 = scmp.lt.s32.totalorder %s399, 1
          %s403 = scalar_select %p402, %s399, 1
          %s404 = smul.addr %s401, 2
          %s405 = sadd.s32 %s403, %s404
          %s406 = smul.addr %s405, 4
          %s407 = scalar_lea.vmem %s2, %s406
          %s408 = smul.u32 2, %s26
        $region52: #{dgcnn_cls_forward.11} parent=39 // pred_fallthru
          _
        // Predicated region
        $region53: #{dgcnn_cls_forward.11} parent=39 // pred_check
          %p409 = pneg %p136
        $region54: #{dgcnn_cls_forward.11} parent=39 // pred_check_branch
          %411 = sbr.rel (%p409) target = $region56
        $region55: #{dgcnn_cls_forward.11} parent=39 // pred_region
          %s412 = smul.u32 2, %s26
          %p413 = scmp.lt.s32.totalorder %s25, 1
          %s414 = scalar_select %p413, %s25, 1
          %p415 = scmp.lt.s32.totalorder %s412, 1
          %s416 = scalar_select %p415, %s412, 1
          %s417 = smul.addr %s416, 2
          %s418 = smul.addr %s414, 4
          %s419 = sadd.s32 %s417, %s418
          %s420 = smul.addr %s419, 4
          %s421 = scalar_lea.vmem %s3, %s420
          %s422 = smul.u32 2, %s26
        $region56: #{dgcnn_cls_forward.11} parent=39 // pred_fallthru
          _
        // Predicated region
        $region57: #{dgcnn_cls_forward.11} parent=39 // pred_check
          %p423 = pneg %p162
        $region58: #{dgcnn_cls_forward.11} parent=39 // pred_check_branch
          %425 = sbr.rel (%p423) target = $region60
        $region59: #{dgcnn_cls_forward.11} parent=39 // pred_region
          %p426 = scmp.lt.s32.totalorder %s25, 1
          %s427 = scalar_select %p426, %s25, 1
          %s428 = smul.addr %s427, 4
          %s429 = scalar_lea.vmem %s4, %s428
        $region60: #{dgcnn_cls_forward.11} parent=39 // pred_fallthru
          _
      $region40: #{dgcnn_cls_forward.11} parent=5 // pred_fallthru
        _
      %p430 = scmp.le.s32.totalorder 1, %s18
      %p431 = scmp.lt.s32.totalorder %s18, 3
      %p432 = pnand %p430, %p431
      %p433 = pneg %p432
      // Predicated region
      $region61: #{dgcnn_cls_forward.11} parent=5 // pred_check
        _
      $region62: #{dgcnn_cls_forward.11} parent=5 // pred_check_branch
        %435 = sbr.rel (%p432) target = $region64
      $region63: #{dgcnn_cls_forward.11} parent=5 // pred_region
        %s436 = ssub.s32 %s18, 1
        // Predicated region
        $region65: #{dgcnn_cls_forward.11} parent=63 // pred_check
          %p437 = pneg %p189
        $region66: #{dgcnn_cls_forward.11} parent=63 // pred_check_branch
          %439 = sbr.rel (%p437) target = $region68
        $region67: #{dgcnn_cls_forward.11} parent=63 // pred_region
          %441 = dma.done [#allocation3], 16384
        $region68: #{dgcnn_cls_forward.11} parent=63 // pred_fallthru
          _
        %s442 = smul.u32 2, %s28
        %p443 = scmp.lt.s32.totalorder %s27, 1
        %s444 = scalar_select %p443, %s27, 1
        %p445 = scmp.lt.s32.totalorder %s442, 1
        %s446 = scalar_select %p445, %s442, 1
        %s447 = smul.addr %s444, 2
        %s448 = sadd.s32 %s446, %s447
        %s449 = smul.addr %s448, 4
        %s450 = scalar_lea.vmem %s0, %s449
        %p451 = pneg %p58
        %p452 = pneg %p55
        %s453 = smul.u32 2, %s28
        %p454 = scmp.lt.s32.totalorder %s27, 1
        %s455 = scalar_select %p454, %s27, 1
        %p456 = scmp.lt.s32.totalorder %s453, 1
        %s457 = scalar_select %p456, %s453, 1
        %s458 = smul.addr %s455, 2
        %s459 = sadd.s32 %s457, %s458
        %s460 = smul.addr %s459, 4
        %s461 = scalar_lea.vmem %s1, %s460
        %p462 = pneg %p86
        %p463 = pneg %p83
        %s464 = smul.u32 2, %s28
        %p465 = scmp.lt.s32.totalorder %s27, 1
        %s466 = scalar_select %p465, %s27, 1
        %p467 = scmp.lt.s32.totalorder %s464, 1
        %s468 = scalar_select %p467, %s464, 1
        %s469 = smul.addr %s466, 2
        %s470 = sadd.s32 %s468, %s469
        %s471 = smul.addr %s470, 4
        %s472 = scalar_lea.vmem %s2, %s471
        %p473 = pneg %p114
        %p474 = pneg %p111
        %s475 = smul.u32 2, %s28
        %p476 = scmp.lt.s32.totalorder %s27, 1
        %s477 = scalar_select %p476, %s27, 1
        %p478 = scmp.lt.s32.totalorder %s475, 1
        %s479 = scalar_select %p478, %s475, 1
        %s480 = smul.addr %s479, 2
        %s481 = smul.addr %s477, 4
        %s482 = sadd.s32 %s480, %s481
        %s483 = smul.addr %s482, 4
        %s484 = scalar_lea.vmem %s3, %s483
        %p485 = pneg %p142
        %p486 = pneg %p139
        %p487 = scmp.lt.s32.totalorder %s27, 1
        %s488 = scalar_select %p487, %s27, 1
        %s489 = smul.addr %s488, 4
        %s490 = scalar_lea.vmem %s4, %s489
        %p491 = pneg %p168
        %p492 = pneg %p165
        %p493 = pneg %p189
        %p494 = pneg %p186
        %p495 = pneg %p210
        %p496 = pneg %p207
        %p497 = pneg %p231
        %p498 = pneg %p228
        %p499 = pneg %p252
        %p500 = pneg %p249
        %p501 = pneg %p273
        %p502 = pneg %p270
        %p503 = pneg %p294
        %p504 = pneg %p291
        %p505 = pneg %p322
        %p506 = pneg %p319
        %s507 = smul.u32 2, %s28
        %p508 = scmp.lt.s32.totalorder %s27, 1
        %s509 = scalar_select %p508, %s27, 1
        %p510 = scmp.lt.s32.totalorder %s507, 1
        %s511 = scalar_select %p510, %s507, 1
        %s512 = smul.addr %s509, 2
        %s513 = sadd.s32 %s511, %s512
        %s514 = smul.addr %s513, 8
        %s515 = scalar_lea.vmem %s11, %s514
        %s516 = smul.u32 2, %s28
        %p517 = scmp.lt.s32.totalorder %s27, 1
        %s518 = scalar_select %p517, %s27, 1
        %p519 = scmp.lt.s32.totalorder %s516, 1
        %s520 = scalar_select %p519, %s516, 1
        %s521 = smul.addr %s518, 2
        %s522 = sadd.s32 %s520, %s521
        %s523 = smul.addr %s522, 4
        %s524 = scalar_lea.vmem %s0, %s523
        %s525 = smul.u32 2, %s28
        %s526 = smul.u32 2, %s28
        %p527 = scmp.lt.s32.totalorder %s27, 1
        %s528 = scalar_select %p527, %s27, 1
        %p529 = scmp.lt.s32.totalorder %s526, 1
        %s530 = scalar_select %p529, %s526, 1
        %s531 = smul.addr %s528, 2
        %s532 = sadd.s32 %s530, %s531
        %s533 = smul.addr %s532, 4
        %s534 = scalar_lea.vmem %s1, %s533
        %s535 = smul.u32 2, %s28
        %s536 = smul.u32 2, %s28
        %p537 = scmp.lt.s32.totalorder %s27, 1
        %s538 = scalar_select %p537, %s27, 1
        %p539 = scmp.lt.s32.totalorder %s536, 1
        %s540 = scalar_select %p539, %s536, 1
        %s541 = smul.addr %s538, 2
        %s542 = sadd.s32 %s540, %s541
        %s543 = smul.addr %s542, 4
        %s544 = scalar_lea.vmem %s2, %s543
        %s545 = smul.u32 2, %s28
        %s546 = smul.u32 2, %s28
        %p547 = scmp.lt.s32.totalorder %s27, 1
        %s548 = scalar_select %p547, %s27, 1
        %p549 = scmp.lt.s32.totalorder %s546, 1
        %s550 = scalar_select %p549, %s546, 1
        %s551 = smul.addr %s550, 2
        %s552 = smul.addr %s548, 4
        %s553 = sadd.s32 %s551, %s552
        %s554 = smul.addr %s553, 4
        %s555 = scalar_lea.vmem %s3, %s554
        %s556 = smul.u32 2, %s28
        %p557 = scmp.lt.s32.totalorder %s27, 1
        %s558 = scalar_select %p557, %s27, 1
        %s559 = smul.addr %s558, 4
        %s560 = scalar_lea.vmem %s4, %s559
        %s561 = smul.u32 2, %s28
        %p562 = scmp.lt.s32.totalorder %s27, 1
        %s563 = scalar_select %p562, %s27, 1
        %p564 = scmp.lt.s32.totalorder %s561, 1
        %s565 = scalar_select %p564, %s561, 1
        %s566 = smul.addr %s563, 2
        %s567 = sadd.s32 %s565, %s566
        %s568 = smul.addr %s567, 8
        %s569 = scalar_lea.vmem %s11, %s568
        %s570 = smul.u32 2, %s28
        %v571 = vld [vmem:[%s524] sm:$0xf]
        %v572 = vld [vmem:[%s524 + $0x4] sm:$0xf]
        %v573 = vld [vmem:[%s534] sm:$0xf]
        %v574 = vld [vmem:[%s534 + $0x4] sm:$0xf]
        %v575 = vld [vmem:[%s544] sm:$0xf]
        %v576 = vld [vmem:[%s544 + $0x4] sm:$0xf]
        %v577 = vld [vmem:[%s555] sm:$0xff]
        %v578 = vld [vmem:[%s555 + $0x8] sm:$0xff]
        %v581 = vunpack.c.l.b16 %v571
        %v582 = vunpack.c.l.b16 %v572
        %v583 = vpack.c.b16 %v582, %v581
        %v586 = vunpack.c.l.b16 %v573
        %v587 = vunpack.c.l.b16 %v574
        %v588 = vpack.c.b16 %v587, %v586
        %589 = vrot.lane.b32.xlu0 %v588, 64
        %v590 = vpop.permute.xlu0 %589
        %v593 = vunpack.c.l.b16 %v575
        %v594 = vunpack.c.l.b16 %v576
        %v595 = vpack.c.b16 %v594, %v593
        %v599 = vunpack.c.l.b16 %v577
        %v600 = vunpack.c.h.b16 %v577
        %v601 = vunpack.c.l.b16 %v578
        %v602 = vunpack.c.h.b16 %v578
        %v603 = vpack.c.b16 %v601, %v599
        %v604 = vpack.c.b16 %v602, %v600
        %vm607 = vcmask 523264
        %v610 = vsel %vm607, %v583, %v590
        %v612 = vld [vmem:[%s560] sm:$0xf]
        %v613 = vld [vmem:[#allocation2] sm:$0xff]
        %v614 = vld [vmem:[#allocation2 + $0x8] sm:$0xff]
        %v615 = vld [vmem:[#allocation2 + $0x10] sm:$0xff]
        %v616 = vld [vmem:[#allocation2 + $0x18] sm:$0xff]
        %v617 = vld [vmem:[#allocation2 + $0x20] sm:$0xff]
        %v618 = vld [vmem:[#allocation2 + $0x28] sm:$0xff]
        %v619 = vld [vmem:[#allocation2 + $0x30] sm:$0xff]
        %v620 = vld [vmem:[#allocation2 + $0x38] sm:$0xff]
        %v621 = vld [vmem:[#allocation2 + $0x40] sm:$0xff]
        %v622 = vld [vmem:[#allocation2 + $0x48] sm:$0xff]
        %v623 = vld [vmem:[#allocation2 + $0x50] sm:$0xff]
        %v624 = vld [vmem:[#allocation2 + $0x58] sm:$0xff]
        %v625 = vld [vmem:[#allocation2 + $0x60] sm:$0xff]
        %v626 = vld [vmem:[#allocation2 + $0x68] sm:$0xff]
        %v627 = vld [vmem:[#allocation2 + $0x70] sm:$0xff]
        %v628 = vld [vmem:[#allocation2 + $0x78] sm:$0xff]
        %v629 = vld [vmem:[#allocation2 + $0x80] sm:$0xff]
        %v630 = vld [vmem:[#allocation2 + $0x88] sm:$0xff]
        %v631 = vld [vmem:[#allocation2 + $0x90] sm:$0xff]
        %v632 = vld [vmem:[#allocation2 + $0x98] sm:$0xff]
        %v633 = vld [vmem:[#allocation2 + $0xa0] sm:$0xff]
        %v634 = vld [vmem:[#allocation2 + $0xa8] sm:$0xff]
        %v635 = vld [vmem:[#allocation2 + $0xb0] sm:$0xff]
        %v636 = vld [vmem:[#allocation2 + $0xb8] sm:$0xff]
        %v637 = vld [vmem:[#allocation2 + $0xc0] sm:$0xff]
        %v638 = vld [vmem:[#allocation2 + $0xc8] sm:$0xff]
        %v639 = vld [vmem:[#allocation2 + $0xd0] sm:$0xff]
        %v640 = vld [vmem:[#allocation2 + $0xd8] sm:$0xff]
        %v641 = vld [vmem:[#allocation2 + $0xe0] sm:$0xff]
        %v642 = vld [vmem:[#allocation2 + $0xe8] sm:$0xff]
        %v643 = vld [vmem:[#allocation2 + $0xf0] sm:$0xff]
        %v644 = vld [vmem:[#allocation2 + $0xf8] sm:$0xff]
        %v645 = vld [vmem:[#allocation2 + $0x100] sm:$0xff]
        %v646 = vld [vmem:[#allocation2 + $0x108] sm:$0xff]
        %v647 = vld [vmem:[#allocation2 + $0x110] sm:$0xff]
        %v648 = vld [vmem:[#allocation2 + $0x118] sm:$0xff]
        %v649 = vld [vmem:[#allocation2 + $0x120] sm:$0xff]
        %v650 = vld [vmem:[#allocation2 + $0x128] sm:$0xff]
        %v651 = vld [vmem:[#allocation2 + $0x130] sm:$0xff]
        %v652 = vld [vmem:[#allocation2 + $0x138] sm:$0xff]
        %v653 = vld [vmem:[#allocation2 + $0x140] sm:$0xff]
        %v654 = vld [vmem:[#allocation2 + $0x148] sm:$0xff]
        %v655 = vld [vmem:[#allocation2 + $0x150] sm:$0xff]
        %v656 = vld [vmem:[#allocation2 + $0x158] sm:$0xff]
        %v657 = vld [vmem:[#allocation2 + $0x160] sm:$0xff]
        %v658 = vld [vmem:[#allocation2 + $0x168] sm:$0xff]
        %v659 = vld [vmem:[#allocation2 + $0x170] sm:$0xff]
        %v660 = vld [vmem:[#allocation2 + $0x178] sm:$0xff]
        %v661 = vld [vmem:[#allocation2 + $0x180] sm:$0xff]
        %v662 = vld [vmem:[#allocation2 + $0x188] sm:$0xff]
        %v663 = vld [vmem:[#allocation2 + $0x190] sm:$0xff]
        %v664 = vld [vmem:[#allocation2 + $0x198] sm:$0xff]
        %v665 = vld [vmem:[#allocation2 + $0x1a0] sm:$0xff]
        %v666 = vld [vmem:[#allocation2 + $0x1a8] sm:$0xff]
        %v667 = vld [vmem:[#allocation2 + $0x1b0] sm:$0xff]
        %v668 = vld [vmem:[#allocation2 + $0x1b8] sm:$0xff]
        %v669 = vld [vmem:[#allocation2 + $0x1c0] sm:$0xff]
        %v670 = vld [vmem:[#allocation2 + $0x1c8] sm:$0xff]
        %v671 = vld [vmem:[#allocation2 + $0x1d0] sm:$0xff]
        %v672 = vld [vmem:[#allocation2 + $0x1d8] sm:$0xff]
        %v673 = vld [vmem:[#allocation2 + $0x1e0] sm:$0xff]
        %v674 = vld [vmem:[#allocation2 + $0x1e8] sm:$0xff]
        %v675 = vld [vmem:[#allocation2 + $0x1f0] sm:$0xff]
        %v676 = vld [vmem:[#allocation2 + $0x1f8] sm:$0xff]
        %v677 = vld [vmem:[#allocation2 + $0x200] sm:$0xff]
        %v678 = vld [vmem:[#allocation2 + $0x208] sm:$0xff]
        %v679 = vld [vmem:[#allocation2 + $0x210] sm:$0xff]
        %v680 = vld [vmem:[#allocation2 + $0x218] sm:$0xff]
        %v681 = vld [vmem:[#allocation2 + $0x220] sm:$0xff]
        %v682 = vld [vmem:[#allocation2 + $0x228] sm:$0xff]
        %v683 = vld [vmem:[#allocation2 + $0x230] sm:$0xff]
        %v684 = vld [vmem:[#allocation2 + $0x238] sm:$0xff]
        %v685 = vld [vmem:[#allocation2 + $0x240] sm:$0xff]
        %v686 = vld [vmem:[#allocation2 + $0x248] sm:$0xff]
        %v687 = vld [vmem:[#allocation2 + $0x250] sm:$0xff]
        %v688 = vld [vmem:[#allocation2 + $0x258] sm:$0xff]
        %v689 = vld [vmem:[#allocation2 + $0x260] sm:$0xff]
        %v690 = vld [vmem:[#allocation2 + $0x268] sm:$0xff]
        %v691 = vld [vmem:[#allocation2 + $0x270] sm:$0xff]
        %v692 = vld [vmem:[#allocation2 + $0x278] sm:$0xff]
        %v693 = vld [vmem:[#allocation2 + $0x280] sm:$0xff]
        %v694 = vld [vmem:[#allocation2 + $0x288] sm:$0xff]
        %v695 = vld [vmem:[#allocation2 + $0x290] sm:$0xff]
        %v696 = vld [vmem:[#allocation2 + $0x298] sm:$0xff]
        %v697 = vld [vmem:[#allocation2 + $0x2a0] sm:$0xff]
        %v698 = vld [vmem:[#allocation2 + $0x2a8] sm:$0xff]
        %v699 = vld [vmem:[#allocation2 + $0x2b0] sm:$0xff]
        %v700 = vld [vmem:[#allocation2 + $0x2b8] sm:$0xff]
        %v701 = vld [vmem:[#allocation2 + $0x2c0] sm:$0xff]
        %v702 = vld [vmem:[#allocation2 + $0x2c8] sm:$0xff]
        %v703 = vld [vmem:[#allocation2 + $0x2d0] sm:$0xff]
        %v704 = vld [vmem:[#allocation2 + $0x2d8] sm:$0xff]
        %v705 = vld [vmem:[#allocation2 + $0x2e0] sm:$0xff]
        %v706 = vld [vmem:[#allocation2 + $0x2e8] sm:$0xff]
        %v707 = vld [vmem:[#allocation2 + $0x2f0] sm:$0xff]
        %v708 = vld [vmem:[#allocation2 + $0x2f8] sm:$0xff]
        %v709 = vld [vmem:[#allocation2 + $0x300] sm:$0xff]
        %v710 = vld [vmem:[#allocation2 + $0x308] sm:$0xff]
        %v711 = vld [vmem:[#allocation2 + $0x310] sm:$0xff]
        %v712 = vld [vmem:[#allocation2 + $0x318] sm:$0xff]
        %v713 = vld [vmem:[#allocation2 + $0x320] sm:$0xff]
        %v714 = vld [vmem:[#allocation2 + $0x328] sm:$0xff]
        %v715 = vld [vmem:[#allocation2 + $0x330] sm:$0xff]
        %v716 = vld [vmem:[#allocation2 + $0x338] sm:$0xff]
        %v717 = vld [vmem:[#allocation2 + $0x340] sm:$0xff]
        %v718 = vld [vmem:[#allocation2 + $0x348] sm:$0xff]
        %v719 = vld [vmem:[#allocation2 + $0x350] sm:$0xff]
        %v720 = vld [vmem:[#allocation2 + $0x358] sm:$0xff]
        %v721 = vld [vmem:[#allocation2 + $0x360] sm:$0xff]
        %v722 = vld [vmem:[#allocation2 + $0x368] sm:$0xff]
        %v723 = vld [vmem:[#allocation2 + $0x370] sm:$0xff]
        %v724 = vld [vmem:[#allocation2 + $0x378] sm:$0xff]
        %v725 = vld [vmem:[#allocation2 + $0x380] sm:$0xff]
        %v726 = vld [vmem:[#allocation2 + $0x388] sm:$0xff]
        %v727 = vld [vmem:[#allocation2 + $0x390] sm:$0xff]
        %v728 = vld [vmem:[#allocation2 + $0x398] sm:$0xff]
        %v729 = vld [vmem:[#allocation2 + $0x3a0] sm:$0xff]
        %v730 = vld [vmem:[#allocation2 + $0x3a8] sm:$0xff]
        %v731 = vld [vmem:[#allocation2 + $0x3b0] sm:$0xff]
        %v732 = vld [vmem:[#allocation2 + $0x3b8] sm:$0xff]
        %v733 = vld [vmem:[#allocation2 + $0x3c0] sm:$0xff]
        %v734 = vld [vmem:[#allocation2 + $0x3c8] sm:$0xff]
        %v735 = vld [vmem:[#allocation2 + $0x3d0] sm:$0xff]
        %v736 = vld [vmem:[#allocation2 + $0x3d8] sm:$0xff]
        %v737 = vld [vmem:[#allocation2 + $0x3e0] sm:$0xff]
        %v738 = vld [vmem:[#allocation2 + $0x3e8] sm:$0xff]
        %v739 = vld [vmem:[#allocation2 + $0x3f0] sm:$0xff]
        %v740 = vld [vmem:[#allocation2 + $0x3f8] sm:$0xff]
        %v869 = vunpack.c.l.b16 %v613
        %v870 = vunpack.c.h.b16 %v613
        %v871 = vunpack.c.l.b16 %v614
        %v872 = vunpack.c.h.b16 %v614
        %v873 = vunpack.c.l.b16 %v615
        %v874 = vunpack.c.h.b16 %v615
        %v875 = vunpack.c.l.b16 %v616
        %v876 = vunpack.c.h.b16 %v616
        %v877 = vunpack.c.l.b16 %v617
        %v878 = vunpack.c.h.b16 %v617
        %v879 = vunpack.c.l.b16 %v618
        %v880 = vunpack.c.h.b16 %v618
        %v881 = vunpack.c.l.b16 %v619
        %v882 = vunpack.c.h.b16 %v619
        %v883 = vunpack.c.l.b16 %v620
        %v884 = vunpack.c.h.b16 %v620
        %v885 = vunpack.c.l.b16 %v621
        %v886 = vunpack.c.h.b16 %v621
        %v887 = vunpack.c.l.b16 %v622
        %v888 = vunpack.c.h.b16 %v622
        %v889 = vunpack.c.l.b16 %v623
        %v890 = vunpack.c.h.b16 %v623
        %v891 = vunpack.c.l.b16 %v624
        %v892 = vunpack.c.h.b16 %v624
        %v893 = vunpack.c.l.b16 %v625
        %v894 = vunpack.c.h.b16 %v625
        %v895 = vunpack.c.l.b16 %v626
        %v896 = vunpack.c.h.b16 %v626
        %v897 = vunpack.c.l.b16 %v627
        %v898 = vunpack.c.h.b16 %v627
        %v899 = vunpack.c.l.b16 %v628
        %v900 = vunpack.c.h.b16 %v628
        %v901 = vunpack.c.l.b16 %v629
        %v902 = vunpack.c.h.b16 %v629
        %v903 = vunpack.c.l.b16 %v630
        %v904 = vunpack.c.h.b16 %v630
        %v905 = vunpack.c.l.b16 %v631
        %v906 = vunpack.c.h.b16 %v631
        %v907 = vunpack.c.l.b16 %v632
        %v908 = vunpack.c.h.b16 %v632
        %v909 = vunpack.c.l.b16 %v633
        %v910 = vunpack.c.h.b16 %v633
        %v911 = vunpack.c.l.b16 %v634
        %v912 = vunpack.c.h.b16 %v634
        %v913 = vunpack.c.l.b16 %v635
        %v914 = vunpack.c.h.b16 %v635
        %v915 = vunpack.c.l.b16 %v636
        %v916 = vunpack.c.h.b16 %v636
        %v917 = vunpack.c.l.b16 %v637
        %v918 = vunpack.c.h.b16 %v637
        %v919 = vunpack.c.l.b16 %v638
        %v920 = vunpack.c.h.b16 %v638
        %v921 = vunpack.c.l.b16 %v639
        %v922 = vunpack.c.h.b16 %v639
        %v923 = vunpack.c.l.b16 %v640
        %v924 = vunpack.c.h.b16 %v640
        %v925 = vunpack.c.l.b16 %v641
        %v926 = vunpack.c.h.b16 %v641
        %v927 = vunpack.c.l.b16 %v642
        %v928 = vunpack.c.h.b16 %v642
        %v929 = vunpack.c.l.b16 %v643
        %v930 = vunpack.c.h.b16 %v643
        %v931 = vunpack.c.l.b16 %v644
        %v932 = vunpack.c.h.b16 %v644
        %v933 = vunpack.c.l.b16 %v645
        %v934 = vunpack.c.h.b16 %v645
        %v935 = vunpack.c.l.b16 %v646
        %v936 = vunpack.c.h.b16 %v646
        %v937 = vunpack.c.l.b16 %v647
        %v938 = vunpack.c.h.b16 %v647
        %v939 = vunpack.c.l.b16 %v648
        %v940 = vunpack.c.h.b16 %v648
        %v941 = vunpack.c.l.b16 %v649
        %v942 = vunpack.c.h.b16 %v649
        %v943 = vunpack.c.l.b16 %v650
        %v944 = vunpack.c.h.b16 %v650
        %v945 = vunpack.c.l.b16 %v651
        %v946 = vunpack.c.h.b16 %v651
        %v947 = vunpack.c.l.b16 %v652
        %v948 = vunpack.c.h.b16 %v652
        %v949 = vunpack.c.l.b16 %v653
        %v950 = vunpack.c.h.b16 %v653
        %v951 = vunpack.c.l.b16 %v654
        %v952 = vunpack.c.h.b16 %v654
        %v953 = vunpack.c.l.b16 %v655
        %v954 = vunpack.c.h.b16 %v655
        %v955 = vunpack.c.l.b16 %v656
        %v956 = vunpack.c.h.b16 %v656
        %v957 = vunpack.c.l.b16 %v657
        %v958 = vunpack.c.h.b16 %v657
        %v959 = vunpack.c.l.b16 %v658
        %v960 = vunpack.c.h.b16 %v658
        %v961 = vunpack.c.l.b16 %v659
        %v962 = vunpack.c.h.b16 %v659
        %v963 = vunpack.c.l.b16 %v660
        %v964 = vunpack.c.h.b16 %v660
        %v965 = vunpack.c.l.b16 %v661
        %v966 = vunpack.c.h.b16 %v661
        %v967 = vunpack.c.l.b16 %v662
        %v968 = vunpack.c.h.b16 %v662
        %v969 = vunpack.c.l.b16 %v663
        %v970 = vunpack.c.h.b16 %v663
        %v971 = vunpack.c.l.b16 %v664
        %v972 = vunpack.c.h.b16 %v664
        %v973 = vunpack.c.l.b16 %v665
        %v974 = vunpack.c.h.b16 %v665
        %v975 = vunpack.c.l.b16 %v666
        %v976 = vunpack.c.h.b16 %v666
        %v977 = vunpack.c.l.b16 %v667
        %v978 = vunpack.c.h.b16 %v667
        %v979 = vunpack.c.l.b16 %v668
        %v980 = vunpack.c.h.b16 %v668
        %v981 = vunpack.c.l.b16 %v669
        %v982 = vunpack.c.h.b16 %v669
        %v983 = vunpack.c.l.b16 %v670
        %v984 = vunpack.c.h.b16 %v670
        %v985 = vunpack.c.l.b16 %v671
        %v986 = vunpack.c.h.b16 %v671
        %v987 = vunpack.c.l.b16 %v672
        %v988 = vunpack.c.h.b16 %v672
        %v989 = vunpack.c.l.b16 %v673
        %v990 = vunpack.c.h.b16 %v673
        %v991 = vunpack.c.l.b16 %v674
        %v992 = vunpack.c.h.b16 %v674
        %v993 = vunpack.c.l.b16 %v675
        %v994 = vunpack.c.h.b16 %v675
        %v995 = vunpack.c.l.b16 %v676
        %v996 = vunpack.c.h.b16 %v676
        %v997 = vunpack.c.l.b16 %v677
        %v998 = vunpack.c.h.b16 %v677
        %v999 = vunpack.c.l.b16 %v678
        %v1000 = vunpack.c.h.b16 %v678
        %v1001 = vunpack.c.l.b16 %v679
        %v1002 = vunpack.c.h.b16 %v679
        %v1003 = vunpack.c.l.b16 %v680
        %v1004 = vunpack.c.h.b16 %v680
        %v1005 = vunpack.c.l.b16 %v681
        %v1006 = vunpack.c.h.b16 %v681
        %v1007 = vunpack.c.l.b16 %v682
        %v1008 = vunpack.c.h.b16 %v682
        %v1009 = vunpack.c.l.b16 %v683
        %v1010 = vunpack.c.h.b16 %v683
        %v1011 = vunpack.c.l.b16 %v684
        %v1012 = vunpack.c.h.b16 %v684
        %v1013 = vunpack.c.l.b16 %v685
        %v1014 = vunpack.c.h.b16 %v685
        %v1015 = vunpack.c.l.b16 %v686
        %v1016 = vunpack.c.h.b16 %v686
        %v1017 = vunpack.c.l.b16 %v687
        %v1018 = vunpack.c.h.b16 %v687
        %v1019 = vunpack.c.l.b16 %v688
        %v1020 = vunpack.c.h.b16 %v688
        %v1021 = vunpack.c.l.b16 %v689
        %v1022 = vunpack.c.h.b16 %v689
        %v1023 = vunpack.c.l.b16 %v690
        %v1024 = vunpack.c.h.b16 %v690
        %v1025 = vunpack.c.l.b16 %v691
        %v1026 = vunpack.c.h.b16 %v691
        %v1027 = vunpack.c.l.b16 %v692
        %v1028 = vunpack.c.h.b16 %v692
        %v1029 = vunpack.c.l.b16 %v693
        %v1030 = vunpack.c.h.b16 %v693
        %v1031 = vunpack.c.l.b16 %v694
        %v1032 = vunpack.c.h.b16 %v694
        %v1033 = vunpack.c.l.b16 %v695
        %v1034 = vunpack.c.h.b16 %v695
        %v1035 = vunpack.c.l.b16 %v696
        %v1036 = vunpack.c.h.b16 %v696
        %v1037 = vunpack.c.l.b16 %v697
        %v1038 = vunpack.c.h.b16 %v697
        %v1039 = vunpack.c.l.b16 %v698
        %v1040 = vunpack.c.h.b16 %v698
        %v1041 = vunpack.c.l.b16 %v699
        %v1042 = vunpack.c.h.b16 %v699
        %v1043 = vunpack.c.l.b16 %v700
        %v1044 = vunpack.c.h.b16 %v700
        %v1045 = vunpack.c.l.b16 %v701
        %v1046 = vunpack.c.h.b16 %v701
        %v1047 = vunpack.c.l.b16 %v702
        %v1048 = vunpack.c.h.b16 %v702
        %v1049 = vunpack.c.l.b16 %v703
        %v1050 = vunpack.c.h.b16 %v703
        %v1051 = vunpack.c.l.b16 %v704
        %v1052 = vunpack.c.h.b16 %v704
        %v1053 = vunpack.c.l.b16 %v705
        %v1054 = vunpack.c.h.b16 %v705
        %v1055 = vunpack.c.l.b16 %v706
        %v1056 = vunpack.c.h.b16 %v706
        %v1057 = vunpack.c.l.b16 %v707
        %v1058 = vunpack.c.h.b16 %v707
        %v1059 = vunpack.c.l.b16 %v708
        %v1060 = vunpack.c.h.b16 %v708
        %v1061 = vunpack.c.l.b16 %v709
        %v1062 = vunpack.c.h.b16 %v709
        %v1063 = vunpack.c.l.b16 %v710
        %v1064 = vunpack.c.h.b16 %v710
        %v1065 = vunpack.c.l.b16 %v711
        %v1066 = vunpack.c.h.b16 %v711
        %v1067 = vunpack.c.l.b16 %v712
        %v1068 = vunpack.c.h.b16 %v712
        %v1069 = vunpack.c.l.b16 %v713
        %v1070 = vunpack.c.h.b16 %v713
        %v1071 = vunpack.c.l.b16 %v714
        %v1072 = vunpack.c.h.b16 %v714
        %v1073 = vunpack.c.l.b16 %v715
        %v1074 = vunpack.c.h.b16 %v715
        %v1075 = vunpack.c.l.b16 %v716
        %v1076 = vunpack.c.h.b16 %v716
        %v1077 = vunpack.c.l.b16 %v717
        %v1078 = vunpack.c.h.b16 %v717
        %v1079 = vunpack.c.l.b16 %v718
        %v1080 = vunpack.c.h.b16 %v718
        %v1081 = vunpack.c.l.b16 %v719
        %v1082 = vunpack.c.h.b16 %v719
        %v1083 = vunpack.c.l.b16 %v720
        %v1084 = vunpack.c.h.b16 %v720
        %v1085 = vunpack.c.l.b16 %v721
        %v1086 = vunpack.c.h.b16 %v721
        %v1087 = vunpack.c.l.b16 %v722
        %v1088 = vunpack.c.h.b16 %v722
        %v1089 = vunpack.c.l.b16 %v723
        %v1090 = vunpack.c.h.b16 %v723
        %v1091 = vunpack.c.l.b16 %v724
        %v1092 = vunpack.c.h.b16 %v724
        %v1093 = vunpack.c.l.b16 %v725
        %v1094 = vunpack.c.h.b16 %v725
        %v1095 = vunpack.c.l.b16 %v726
        %v1096 = vunpack.c.h.b16 %v726
        %v1097 = vunpack.c.l.b16 %v727
        %v1098 = vunpack.c.h.b16 %v727
        %v1099 = vunpack.c.l.b16 %v728
        %v1100 = vunpack.c.h.b16 %v728
        %v1101 = vunpack.c.l.b16 %v729
        %v1102 = vunpack.c.h.b16 %v729
        %v1103 = vunpack.c.l.b16 %v730
        %v1104 = vunpack.c.h.b16 %v730
        %v1105 = vunpack.c.l.b16 %v731
        %v1106 = vunpack.c.h.b16 %v731
        %v1107 = vunpack.c.l.b16 %v732
        %v1108 = vunpack.c.h.b16 %v732
        %v1109 = vunpack.c.l.b16 %v733
        %v1110 = vunpack.c.h.b16 %v733
        %v1111 = vunpack.c.l.b16 %v734
        %v1112 = vunpack.c.h.b16 %v734
        %v1113 = vunpack.c.l.b16 %v735
        %v1114 = vunpack.c.h.b16 %v735
        %v1115 = vunpack.c.l.b16 %v736
        %v1116 = vunpack.c.h.b16 %v736
        %v1117 = vunpack.c.l.b16 %v737
        %v1118 = vunpack.c.h.b16 %v737
        %v1119 = vunpack.c.l.b16 %v738
        %v1120 = vunpack.c.h.b16 %v738
        %v1121 = vunpack.c.l.b16 %v739
        %v1122 = vunpack.c.h.b16 %v739
        %v1123 = vunpack.c.l.b16 %v740
        %v1124 = vunpack.c.h.b16 %v740
        %v1125 = vpack.c.b16 %v873, %v869
        %v1126 = vpack.c.b16 %v874, %v870
        %v1127 = vpack.c.b16 %v875, %v871
        %v1128 = vpack.c.b16 %v876, %v872
        %v1129 = vpack.c.b16 %v881, %v877
        %v1130 = vpack.c.b16 %v882, %v878
        %v1131 = vpack.c.b16 %v883, %v879
        %v1132 = vpack.c.b16 %v884, %v880
        %v1133 = vpack.c.b16 %v889, %v885
        %v1134 = vpack.c.b16 %v890, %v886
        %v1135 = vpack.c.b16 %v891, %v887
        %v1136 = vpack.c.b16 %v892, %v888
        %v1137 = vpack.c.b16 %v897, %v893
        %v1138 = vpack.c.b16 %v898, %v894
        %v1139 = vpack.c.b16 %v899, %v895
        %v1140 = vpack.c.b16 %v900, %v896
        %v1141 = vpack.c.b16 %v905, %v901
        %v1142 = vpack.c.b16 %v906, %v902
        %v1143 = vpack.c.b16 %v907, %v903
        %v1144 = vpack.c.b16 %v908, %v904
        %v1145 = vpack.c.b16 %v913, %v909
        %v1146 = vpack.c.b16 %v914, %v910
        %v1147 = vpack.c.b16 %v915, %v911
        %v1148 = vpack.c.b16 %v916, %v912
        %v1149 = vpack.c.b16 %v921, %v917
        %v1150 = vpack.c.b16 %v922, %v918
        %v1151 = vpack.c.b16 %v923, %v919
        %v1152 = vpack.c.b16 %v924, %v920
        %v1153 = vpack.c.b16 %v929, %v925
        %v1154 = vpack.c.b16 %v930, %v926
        %v1155 = vpack.c.b16 %v931, %v927
        %v1156 = vpack.c.b16 %v932, %v928
        %v1157 = vpack.c.b16 %v937, %v933
        %v1158 = vpack.c.b16 %v938, %v934
        %v1159 = vpack.c.b16 %v939, %v935
        %v1160 = vpack.c.b16 %v940, %v936
        %v1161 = vpack.c.b16 %v945, %v941
        %v1162 = vpack.c.b16 %v946, %v942
        %v1163 = vpack.c.b16 %v947, %v943
        %v1164 = vpack.c.b16 %v948, %v944
        %v1165 = vpack.c.b16 %v953, %v949
        %v1166 = vpack.c.b16 %v954, %v950
        %v1167 = vpack.c.b16 %v955, %v951
        %v1168 = vpack.c.b16 %v956, %v952
        %v1169 = vpack.c.b16 %v961, %v957
        %v1170 = vpack.c.b16 %v962, %v958
        %v1171 = vpack.c.b16 %v963, %v959
        %v1172 = vpack.c.b16 %v964, %v960
        %v1173 = vpack.c.b16 %v969, %v965
        %v1174 = vpack.c.b16 %v970, %v966
        %v1175 = vpack.c.b16 %v971, %v967
        %v1176 = vpack.c.b16 %v972, %v968
        %v1177 = vpack.c.b16 %v977, %v973
        %v1178 = vpack.c.b16 %v978, %v974
        %v1179 = vpack.c.b16 %v979, %v975
        %v1180 = vpack.c.b16 %v980, %v976
        %v1181 = vpack.c.b16 %v985, %v981
        %v1182 = vpack.c.b16 %v986, %v982
        %v1183 = vpack.c.b16 %v987, %v983
        %v1184 = vpack.c.b16 %v988, %v984
        %v1185 = vpack.c.b16 %v993, %v989
        %v1186 = vpack.c.b16 %v994, %v990
        %v1187 = vpack.c.b16 %v995, %v991
        %v1188 = vpack.c.b16 %v996, %v992
        %v1189 = vpack.c.b16 %v1001, %v997
        %v1190 = vpack.c.b16 %v1002, %v998
        %v1191 = vpack.c.b16 %v1003, %v999
        %v1192 = vpack.c.b16 %v1004, %v1000
        %v1193 = vpack.c.b16 %v1009, %v1005
        %v1194 = vpack.c.b16 %v1010, %v1006
        %v1195 = vpack.c.b16 %v1011, %v1007
        %v1196 = vpack.c.b16 %v1012, %v1008
        %v1197 = vpack.c.b16 %v1017, %v1013
        %v1198 = vpack.c.b16 %v1018, %v1014
        %v1199 = vpack.c.b16 %v1019, %v1015
        %v1200 = vpack.c.b16 %v1020, %v1016
        %v1201 = vpack.c.b16 %v1025, %v1021
        %v1202 = vpack.c.b16 %v1026, %v1022
        %v1203 = vpack.c.b16 %v1027, %v1023
        %v1204 = vpack.c.b16 %v1028, %v1024
        %v1205 = vpack.c.b16 %v1033, %v1029
        %v1206 = vpack.c.b16 %v1034, %v1030
        %v1207 = vpack.c.b16 %v1035, %v1031
        %v1208 = vpack.c.b16 %v1036, %v1032
        %v1209 = vpack.c.b16 %v1041, %v1037
        %v1210 = vpack.c.b16 %v1042, %v1038
        %v1211 = vpack.c.b16 %v1043, %v1039
        %v1212 = vpack.c.b16 %v1044, %v1040
        %v1213 = vpack.c.b16 %v1049, %v1045
        %v1214 = vpack.c.b16 %v1050, %v1046
        %v1215 = vpack.c.b16 %v1051, %v1047
        %v1216 = vpack.c.b16 %v1052, %v1048
        %v1217 = vpack.c.b16 %v1057, %v1053
        %v1218 = vpack.c.b16 %v1058, %v1054
        %v1219 = vpack.c.b16 %v1059, %v1055
        %v1220 = vpack.c.b16 %v1060, %v1056
        %v1221 = vpack.c.b16 %v1065, %v1061
        %v1222 = vpack.c.b16 %v1066, %v1062
        %v1223 = vpack.c.b16 %v1067, %v1063
        %v1224 = vpack.c.b16 %v1068, %v1064
        %v1225 = vpack.c.b16 %v1073, %v1069
        %v1226 = vpack.c.b16 %v1074, %v1070
        %v1227 = vpack.c.b16 %v1075, %v1071
        %v1228 = vpack.c.b16 %v1076, %v1072
        %v1229 = vpack.c.b16 %v1081, %v1077
        %v1230 = vpack.c.b16 %v1082, %v1078
        %v1231 = vpack.c.b16 %v1083, %v1079
        %v1232 = vpack.c.b16 %v1084, %v1080
        %v1233 = vpack.c.b16 %v1089, %v1085
        %v1234 = vpack.c.b16 %v1090, %v1086
        %v1235 = vpack.c.b16 %v1091, %v1087
        %v1236 = vpack.c.b16 %v1092, %v1088
        %v1237 = vpack.c.b16 %v1097, %v1093
        %v1238 = vpack.c.b16 %v1098, %v1094
        %v1239 = vpack.c.b16 %v1099, %v1095
        %v1240 = vpack.c.b16 %v1100, %v1096
        %v1241 = vpack.c.b16 %v1105, %v1101
        %v1242 = vpack.c.b16 %v1106, %v1102
        %v1243 = vpack.c.b16 %v1107, %v1103
        %v1244 = vpack.c.b16 %v1108, %v1104
        %v1245 = vpack.c.b16 %v1113, %v1109
        %v1246 = vpack.c.b16 %v1114, %v1110
        %v1247 = vpack.c.b16 %v1115, %v1111
        %v1248 = vpack.c.b16 %v1116, %v1112
        %v1249 = vpack.c.b16 %v1121, %v1117
        %v1250 = vpack.c.b16 %v1122, %v1118
        %v1251 = vpack.c.b16 %v1123, %v1119
        %v1252 = vpack.c.b16 %v1124, %v1120
        %1381 = vmatpush.bf16.msra.mxu0 %v1153
        %1382 = vmatpush.bf16.msra.mxu0 %v1149
        %1383 = vmatpush.bf16.msra.mxu0 %v1145
        %1384 = vmatpush.bf16.msra.mxu0 %v1141
        %1385 = vmatpush.bf16.msra.mxu0 %v1137
        %1386 = vmatpush.bf16.msra.mxu0 %v1133
        %1387 = vmatpush.bf16.msra.mxu0 %v1129
        %1388 = vmatpush.bf16.msra.mxu0 %v1125
        %1389 = vmatmul.bf16.gmra.mxu0 %v610
        %v1390 = vpop.f32.mrf.mxu0
        %v1391 = vadd.f32 0.0, %v1390
        %v1392 = vpop.f32.mrf.mxu0
        %v1393 = vadd.f32 0.0, %v1392
        %1394 = vdwg.mxu0
        %1395 = vmatpush.bf16.msra.mxu0 %v1185
        %1396 = vmatpush.bf16.msra.mxu0 %v1181
        %1397 = vmatpush.bf16.msra.mxu0 %v1177
        %1398 = vmatpush.bf16.msra.mxu0 %v1173
        %1399 = vmatpush.bf16.msra.mxu0 %v1169
        %1400 = vmatpush.bf16.msra.mxu0 %v1165
        %1401 = vmatpush.bf16.msra.mxu0 %v1161
        %1402 = vmatpush.bf16.msra.mxu0 %v1157
        %1403 = vmatmul.bf16.gmra.mxu0 %v595
        %v1404 = vpop.f32.mrf.mxu0
        %v1405 = vadd.f32 %v1391, %v1404
        %v1406 = vpop.f32.mrf.mxu0
        %v1407 = vadd.f32 %v1393, %v1406
        %1408 = vdwg.mxu0
        %1409 = vmatpush.bf16.msra.mxu0 %v1217
        %1410 = vmatpush.bf16.msra.mxu0 %v1213
        %1411 = vmatpush.bf16.msra.mxu0 %v1209
        %1412 = vmatpush.bf16.msra.mxu0 %v1205
        %1413 = vmatpush.bf16.msra.mxu0 %v1201
        %1414 = vmatpush.bf16.msra.mxu0 %v1197
        %1415 = vmatpush.bf16.msra.mxu0 %v1193
        %1416 = vmatpush.bf16.msra.mxu0 %v1189
        %1417 = vmatmul.bf16.gmra.mxu0 %v603
        %v1418 = vpop.f32.mrf.mxu0
        %v1419 = vadd.f32 %v1405, %v1418
        %v1420 = vpop.f32.mrf.mxu0
        %v1421 = vadd.f32 %v1407, %v1420
        %1422 = vdwg.mxu0
        %1423 = vmatpush.bf16.msra.mxu0 %v1249
        %1424 = vmatpush.bf16.msra.mxu0 %v1245
        %1425 = vmatpush.bf16.msra.mxu0 %v1241
        %1426 = vmatpush.bf16.msra.mxu0 %v1237
        %1427 = vmatpush.bf16.msra.mxu0 %v1233
        %1428 = vmatpush.bf16.msra.mxu0 %v1229
        %1429 = vmatpush.bf16.msra.mxu0 %v1225
        %1430 = vmatpush.bf16.msra.mxu0 %v1221
        %1431 = vmatmul.bf16.gmra.mxu0 %v604
        %v1432 = vpop.f32.mrf.mxu0
        %v1433 = vadd.f32 %v1419, %v1432
        %v1434 = vpop.f32.mrf.mxu0
        %v1435 = vadd.f32 %v1421, %v1434
        %1436 = vdwg.mxu0
        %1437 = vmatpush.bf16.msra.mxu0 %v1154
        %1438 = vmatpush.bf16.msra.mxu0 %v1150
        %1439 = vmatpush.bf16.msra.mxu0 %v1146
        %1440 = vmatpush.bf16.msra.mxu0 %v1142
        %1441 = vmatpush.bf16.msra.mxu0 %v1138
        %1442 = vmatpush.bf16.msra.mxu0 %v1134
        %1443 = vmatpush.bf16.msra.mxu0 %v1130
        %1444 = vmatpush.bf16.msra.mxu0 %v1126
        %1445 = vmatmul.bf16.gmra.mxu0 %v610
        %v1446 = vpop.f32.mrf.mxu0
        %v1447 = vadd.f32 0.0, %v1446
        %v1448 = vpop.f32.mrf.mxu0
        %v1449 = vadd.f32 0.0, %v1448
        %1450 = vdwg.mxu0
        %1451 = vmatpush.bf16.msra.mxu0 %v1186
        %1452 = vmatpush.bf16.msra.mxu0 %v1182
        %1453 = vmatpush.bf16.msra.mxu0 %v1178
        %1454 = vmatpush.bf16.msra.mxu0 %v1174
        %1455 = vmatpush.bf16.msra.mxu0 %v1170
        %1456 = vmatpush.bf16.msra.mxu0 %v1166
        %1457 = vmatpush.bf16.msra.mxu0 %v1162
        %1458 = vmatpush.bf16.msra.mxu0 %v1158
        %1459 = vmatmul.bf16.gmra.mxu0 %v595
        %v1460 = vpop.f32.mrf.mxu0
        %v1461 = vadd.f32 %v1447, %v1460
        %v1462 = vpop.f32.mrf.mxu0
        %v1463 = vadd.f32 %v1449, %v1462
        %1464 = vdwg.mxu0
        %1465 = vmatpush.bf16.msra.mxu0 %v1218
        %1466 = vmatpush.bf16.msra.mxu0 %v1214
        %1467 = vmatpush.bf16.msra.mxu0 %v1210
        %1468 = vmatpush.bf16.msra.mxu0 %v1206
        %1469 = vmatpush.bf16.msra.mxu0 %v1202
        %1470 = vmatpush.bf16.msra.mxu0 %v1198
        %1471 = vmatpush.bf16.msra.mxu0 %v1194
        %1472 = vmatpush.bf16.msra.mxu0 %v1190
        %1473 = vmatmul.bf16.gmra.mxu0 %v603
        %v1474 = vpop.f32.mrf.mxu0
        %v1475 = vadd.f32 %v1461, %v1474
        %v1476 = vpop.f32.mrf.mxu0
        %v1477 = vadd.f32 %v1463, %v1476
        %1478 = vdwg.mxu0
        %1479 = vmatpush.bf16.msra.mxu0 %v1250
        %1480 = vmatpush.bf16.msra.mxu0 %v1246
        %1481 = vmatpush.bf16.msra.mxu0 %v1242
        %1482 = vmatpush.bf16.msra.mxu0 %v1238
        %1483 = vmatpush.bf16.msra.mxu0 %v1234
        %1484 = vmatpush.bf16.msra.mxu0 %v1230
        %1485 = vmatpush.bf16.msra.mxu0 %v1226
        %1486 = vmatpush.bf16.msra.mxu0 %v1222
        %1487 = vmatmul.bf16.gmra.mxu0 %v604
        %v1488 = vpop.f32.mrf.mxu0
        %v1489 = vadd.f32 %v1475, %v1488
        %v1490 = vpop.f32.mrf.mxu0
        %v1491 = vadd.f32 %v1477, %v1490
        %1492 = vdwg.mxu0
        %1493 = vmatpush.bf16.msra.mxu0 %v1155
        %1494 = vmatpush.bf16.msra.mxu0 %v1151
        %1495 = vmatpush.bf16.msra.mxu0 %v1147
        %1496 = vmatpush.bf16.msra.mxu0 %v1143
        %1497 = vmatpush.bf16.msra.mxu0 %v1139
        %1498 = vmatpush.bf16.msra.mxu0 %v1135
        %1499 = vmatpush.bf16.msra.mxu0 %v1131
        %1500 = vmatpush.bf16.msra.mxu0 %v1127
        %1501 = vmatmul.bf16.gmra.mxu0 %v610
        %v1502 = vpop.f32.mrf.mxu0
        %v1503 = vadd.f32 0.0, %v1502
        %v1504 = vpop.f32.mrf.mxu0
        %v1505 = vadd.f32 0.0, %v1504
        %1506 = vdwg.mxu0
        %1507 = vmatpush.bf16.msra.mxu0 %v1187
        %1508 = vmatpush.bf16.msra.mxu0 %v1183
        %1509 = vmatpush.bf16.msra.mxu0 %v1179
        %1510 = vmatpush.bf16.msra.mxu0 %v1175
        %1511 = vmatpush.bf16.msra.mxu0 %v1171
        %1512 = vmatpush.bf16.msra.mxu0 %v1167
        %1513 = vmatpush.bf16.msra.mxu0 %v1163
        %1514 = vmatpush.bf16.msra.mxu0 %v1159
        %1515 = vmatmul.bf16.gmra.mxu0 %v595
        %v1516 = vpop.f32.mrf.mxu0
        %v1517 = vadd.f32 %v1503, %v1516
        %v1518 = vpop.f32.mrf.mxu0
        %v1519 = vadd.f32 %v1505, %v1518
        %1520 = vdwg.mxu0
        %1521 = vmatpush.bf16.msra.mxu0 %v1219
        %1522 = vmatpush.bf16.msra.mxu0 %v1215
        %1523 = vmatpush.bf16.msra.mxu0 %v1211
        %1524 = vmatpush.bf16.msra.mxu0 %v1207
        %1525 = vmatpush.bf16.msra.mxu0 %v1203
        %1526 = vmatpush.bf16.msra.mxu0 %v1199
        %1527 = vmatpush.bf16.msra.mxu0 %v1195
        %1528 = vmatpush.bf16.msra.mxu0 %v1191
        %1529 = vmatmul.bf16.gmra.mxu0 %v603
        %v1530 = vpop.f32.mrf.mxu0
        %v1531 = vadd.f32 %v1517, %v1530
        %v1532 = vpop.f32.mrf.mxu0
        %v1533 = vadd.f32 %v1519, %v1532
        %1534 = vdwg.mxu0
        %1535 = vmatpush.bf16.msra.mxu0 %v1251
        %1536 = vmatpush.bf16.msra.mxu0 %v1247
        %1537 = vmatpush.bf16.msra.mxu0 %v1243
        %1538 = vmatpush.bf16.msra.mxu0 %v1239
        %1539 = vmatpush.bf16.msra.mxu0 %v1235
        %1540 = vmatpush.bf16.msra.mxu0 %v1231
        %1541 = vmatpush.bf16.msra.mxu0 %v1227
        %1542 = vmatpush.bf16.msra.mxu0 %v1223
        %1543 = vmatmul.bf16.gmra.mxu0 %v604
        %v1544 = vpop.f32.mrf.mxu0
        %v1545 = vadd.f32 %v1531, %v1544
        %v1546 = vpop.f32.mrf.mxu0
        %v1547 = vadd.f32 %v1533, %v1546
        %1548 = vdwg.mxu0
        %1549 = vmatpush.bf16.msra.mxu0 %v1156
        %1550 = vmatpush.bf16.msra.mxu0 %v1152
        %1551 = vmatpush.bf16.msra.mxu0 %v1148
        %1552 = vmatpush.bf16.msra.mxu0 %v1144
        %1553 = vmatpush.bf16.msra.mxu0 %v1140
        %1554 = vmatpush.bf16.msra.mxu0 %v1136
        %1555 = vmatpush.bf16.msra.mxu0 %v1132
        %1556 = vmatpush.bf16.msra.mxu0 %v1128
        %1557 = vmatmul.bf16.gmra.mxu0 %v610
        %v1558 = vpop.f32.mrf.mxu0
        %v1559 = vadd.f32 0.0, %v1558
        %v1560 = vpop.f32.mrf.mxu0
        %v1561 = vadd.f32 0.0, %v1560
        %1562 = vdwg.mxu0
        %1563 = vmatpush.bf16.msra.mxu0 %v1188
        %1564 = vmatpush.bf16.msra.mxu0 %v1184
        %1565 = vmatpush.bf16.msra.mxu0 %v1180
        %1566 = vmatpush.bf16.msra.mxu0 %v1176
        %1567 = vmatpush.bf16.msra.mxu0 %v1172
        %1568 = vmatpush.bf16.msra.mxu0 %v1168
        %1569 = vmatpush.bf16.msra.mxu0 %v1164
        %1570 = vmatpush.bf16.msra.mxu0 %v1160
        %1571 = vmatmul.bf16.gmra.mxu0 %v595
        %v1572 = vpop.f32.mrf.mxu0
        %v1573 = vadd.f32 %v1559, %v1572
        %v1574 = vpop.f32.mrf.mxu0
        %v1575 = vadd.f32 %v1561, %v1574
        %1576 = vdwg.mxu0
        %1577 = vmatpush.bf16.msra.mxu0 %v1220
        %1578 = vmatpush.bf16.msra.mxu0 %v1216
        %1579 = vmatpush.bf16.msra.mxu0 %v1212
        %1580 = vmatpush.bf16.msra.mxu0 %v1208
        %1581 = vmatpush.bf16.msra.mxu0 %v1204
        %1582 = vmatpush.bf16.msra.mxu0 %v1200
        %1583 = vmatpush.bf16.msra.mxu0 %v1196
        %1584 = vmatpush.bf16.msra.mxu0 %v1192
        %1585 = vmatmul.bf16.gmra.mxu0 %v603
        %v1586 = vpop.f32.mrf.mxu0
        %v1587 = vadd.f32 %v1573, %v1586
        %v1588 = vpop.f32.mrf.mxu0
        %v1589 = vadd.f32 %v1575, %v1588
        %1590 = vdwg.mxu0
        %1591 = vmatpush.bf16.msra.mxu0 %v1252
        %1592 = vmatpush.bf16.msra.mxu0 %v1248
        %1593 = vmatpush.bf16.msra.mxu0 %v1244
        %1594 = vmatpush.bf16.msra.mxu0 %v1240
        %1595 = vmatpush.bf16.msra.mxu0 %v1236
        %1596 = vmatpush.bf16.msra.mxu0 %v1232
        %1597 = vmatpush.bf16.msra.mxu0 %v1228
        %1598 = vmatpush.bf16.msra.mxu0 %v1224
        %1599 = vmatmul.bf16.gmra.mxu0 %v604
        %v1600 = vpop.f32.mrf.mxu0
        %v1601 = vadd.f32 %v1587, %v1600
        %v1602 = vpop.f32.mrf.mxu0
        %v1603 = vadd.f32 %v1589, %v1602
        %1604 = vdwg.mxu0
        %v1606 = vperm.slane %v612, 0
        %v1607 = vperm.slane %v612, 1
        %v1608 = vperm.slane %v612, 2
        %v1609 = vperm.slane %v612, 3
        %v1614 = vadd.f32 %v1606, %v1433
        %v1615 = vadd.f32 %v1607, %v1489
        %v1616 = vadd.f32 %v1608, %v1545
        %v1617 = vadd.f32 %v1609, %v1601
        %v1618 = vadd.f32 %v1606, %v1435
        %v1619 = vadd.f32 %v1607, %v1491
        %v1620 = vadd.f32 %v1608, %v1547
        %v1621 = vadd.f32 %v1609, %v1603
        %v1622 = vld [vmem:[%s6] sm:$0xf]
        %v1624 = vperm.slane %v1622, 0
        %v1625 = vperm.slane %v1622, 1
        %v1626 = vperm.slane %v1622, 2
        %v1627 = vperm.slane %v1622, 3
        %v1632 = vmul.f32 %v1614, %v1624
        %v1633 = vmul.f32 %v1615, %v1625
        %v1634 = vmul.f32 %v1616, %v1626
        %v1635 = vmul.f32 %v1617, %v1627
        %v1636 = vmul.f32 %v1618, %v1624
        %v1637 = vmul.f32 %v1619, %v1625
        %v1638 = vmul.f32 %v1620, %v1626
        %v1639 = vmul.f32 %v1621, %v1627
        %v1640 = vld [vmem:[%s7] sm:$0xf]
        %v1642 = vperm.slane %v1640, 0
        %v1643 = vperm.slane %v1640, 1
        %v1644 = vperm.slane %v1640, 2
        %v1645 = vperm.slane %v1640, 3
        %v1650 = vadd.f32 %v1632, %v1642
        %v1651 = vadd.f32 %v1633, %v1643
        %v1652 = vadd.f32 %v1634, %v1644
        %v1653 = vadd.f32 %v1635, %v1645
        %v1654 = vadd.f32 %v1636, %v1642
        %v1655 = vadd.f32 %v1637, %v1643
        %v1656 = vadd.f32 %v1638, %v1644
        %v1657 = vadd.f32 %v1639, %v1645
        %vm1658 = vcmp.gt.f32.partialorder %v1650, 0.0
        %vm1659 = vcmp.gt.f32.partialorder %v1651, 0.0
        %vm1660 = vcmp.gt.f32.partialorder %v1652, 0.0
        %vm1661 = vcmp.gt.f32.partialorder %v1653, 0.0
        %vm1662 = vcmp.gt.f32.partialorder %v1654, 0.0
        %vm1663 = vcmp.gt.f32.partialorder %v1655, 0.0
        %vm1664 = vcmp.gt.f32.partialorder %v1656, 0.0
        %vm1665 = vcmp.gt.f32.partialorder %v1657, 0.0
        %v1666 = vmul.f32 %v1650, 0.2
        %v1667 = vmul.f32 %v1651, 0.2
        %v1668 = vmul.f32 %v1652, 0.2
        %v1669 = vmul.f32 %v1653, 0.2
        %v1670 = vmul.f32 %v1654, 0.2
        %v1671 = vmul.f32 %v1655, 0.2
        %v1672 = vmul.f32 %v1656, 0.2
        %v1673 = vmul.f32 %v1657, 0.2
        %v1674 = vsel %vm1658, %v1650, %v1666
        %v1675 = vsel %vm1659, %v1651, %v1667
        %v1676 = vsel %vm1660, %v1652, %v1668
        %v1677 = vsel %vm1661, %v1653, %v1669
        %v1678 = vsel %vm1662, %v1654, %v1670
        %v1679 = vsel %vm1663, %v1655, %v1671
        %v1680 = vsel %vm1664, %v1656, %v1672
        %v1681 = vsel %vm1665, %v1657, %v1673
        %v1682 = vpack.c.bf16 %v1678, %v1674
        %v1683 = vpack.c.bf16 %v1679, %v1675
        %v1684 = vpack.c.bf16 %v1680, %v1676
        %v1685 = vpack.c.bf16 %v1681, %v1677
        %v1686 = vld [vmem:[%s8] sm:$0xf]
        %v1687 = vld [vmem:[%s8 + $0x4] sm:$0xf]
        %v1688 = vld [vmem:[%s8 + $0x8] sm:$0xf]
        %v1689 = vld [vmem:[%s8 + $0xc] sm:$0xf]
        %v1690 = vld [vmem:[%s8 + $0x10] sm:$0xf]
        %v1691 = vld [vmem:[%s8 + $0x14] sm:$0xf]
        %v1692 = vld [vmem:[%s8 + $0x18] sm:$0xf]
        %v1693 = vld [vmem:[%s8 + $0x1c] sm:$0xf]
        %v1694 = vld [vmem:[%s8 + $0x20] sm:$0xf]
        %v1695 = vld [vmem:[%s8 + $0x24] sm:$0xf]
        %v1696 = vld [vmem:[%s8 + $0x28] sm:$0xf]
        %v1697 = vld [vmem:[%s8 + $0x2c] sm:$0xf]
        %v1698 = vld [vmem:[%s8 + $0x30] sm:$0xf]
        %v1699 = vld [vmem:[%s8 + $0x34] sm:$0xf]
        %v1700 = vld [vmem:[%s8 + $0x38] sm:$0xf]
        %v1701 = vld [vmem:[%s8 + $0x3c] sm:$0xf]
        %v1702 = vld [vmem:[%s8 + $0x40] sm:$0xf]
        %v1703 = vld [vmem:[%s8 + $0x44] sm:$0xf]
        %v1704 = vld [vmem:[%s8 + $0x48] sm:$0xf]
        %v1705 = vld [vmem:[%s8 + $0x4c] sm:$0xf]
        %v1706 = vld [vmem:[%s8 + $0x50] sm:$0xf]
        %v1707 = vld [vmem:[%s8 + $0x54] sm:$0xf]
        %v1708 = vld [vmem:[%s8 + $0x58] sm:$0xf]
        %v1709 = vld [vmem:[%s8 + $0x5c] sm:$0xf]
        %v1710 = vld [vmem:[%s8 + $0x60] sm:$0xf]
        %v1711 = vld [vmem:[%s8 + $0x64] sm:$0xf]
        %v1712 = vld [vmem:[%s8 + $0x68] sm:$0xf]
        %v1713 = vld [vmem:[%s8 + $0x6c] sm:$0xf]
        %v1714 = vld [vmem:[%s8 + $0x70] sm:$0xf]
        %v1715 = vld [vmem:[%s8 + $0x74] sm:$0xf]
        %v1716 = vld [vmem:[%s8 + $0x78] sm:$0xf]
        %v1717 = vld [vmem:[%s8 + $0x7c] sm:$0xf]
        %v1718 = vld [vmem:[%s8 + $0x80] sm:$0xf]
        %v1719 = vld [vmem:[%s8 + $0x84] sm:$0xf]
        %v1720 = vld [vmem:[%s8 + $0x88] sm:$0xf]
        %v1721 = vld [vmem:[%s8 + $0x8c] sm:$0xf]
        %v1722 = vld [vmem:[%s8 + $0x90] sm:$0xf]
        %v1723 = vld [vmem:[%s8 + $0x94] sm:$0xf]
        %v1724 = vld [vmem:[%s8 + $0x98] sm:$0xf]
        %v1725 = vld [vmem:[%s8 + $0x9c] sm:$0xf]
        %v1726 = vld [vmem:[%s8 + $0xa0] sm:$0xf]
        %v1727 = vld [vmem:[%s8 + $0xa4] sm:$0xf]
        %v1728 = vld [vmem:[%s8 + $0xa8] sm:$0xf]
        %v1729 = vld [vmem:[%s8 + $0xac] sm:$0xf]
        %v1730 = vld [vmem:[%s8 + $0xb0] sm:$0xf]
        %v1731 = vld [vmem:[%s8 + $0xb4] sm:$0xf]
        %v1732 = vld [vmem:[%s8 + $0xb8] sm:$0xf]
        %v1733 = vld [vmem:[%s8 + $0xbc] sm:$0xf]
        %v1734 = vld [vmem:[%s8 + $0xc0] sm:$0xf]
        %v1735 = vld [vmem:[%s8 + $0xc4] sm:$0xf]
        %v1736 = vld [vmem:[%s8 + $0xc8] sm:$0xf]
        %v1737 = vld [vmem:[%s8 + $0xcc] sm:$0xf]
        %v1738 = vld [vmem:[%s8 + $0xd0] sm:$0xf]
        %v1739 = vld [vmem:[%s8 + $0xd4] sm:$0xf]
        %v1740 = vld [vmem:[%s8 + $0xd8] sm:$0xf]
        %v1741 = vld [vmem:[%s8 + $0xdc] sm:$0xf]
        %v1742 = vld [vmem:[%s8 + $0xe0] sm:$0xf]
        %v1743 = vld [vmem:[%s8 + $0xe4] sm:$0xf]
        %v1744 = vld [vmem:[%s8 + $0xe8] sm:$0xf]
        %v1745 = vld [vmem:[%s8 + $0xec] sm:$0xf]
        %v1746 = vld [vmem:[%s8 + $0xf0] sm:$0xf]
        %v1747 = vld [vmem:[%s8 + $0xf4] sm:$0xf]
        %v1748 = vld [vmem:[%s8 + $0xf8] sm:$0xf]
        %v1749 = vld [vmem:[%s8 + $0xfc] sm:$0xf]
        %v1814 = vunpack.c.l.b16 %v1686
        %v1815 = vunpack.c.l.b16 %v1687
        %v1816 = vunpack.c.l.b16 %v1688
        %v1817 = vunpack.c.l.b16 %v1689
        %v1818 = vunpack.c.l.b16 %v1690
        %v1819 = vunpack.c.l.b16 %v1691
        %v1820 = vunpack.c.l.b16 %v1692
        %v1821 = vunpack.c.l.b16 %v1693
        %v1822 = vunpack.c.l.b16 %v1694
        %v1823 = vunpack.c.l.b16 %v1695
        %v1824 = vunpack.c.l.b16 %v1696
        %v1825 = vunpack.c.l.b16 %v1697
        %v1826 = vunpack.c.l.b16 %v1698
        %v1827 = vunpack.c.l.b16 %v1699
        %v1828 = vunpack.c.l.b16 %v1700
        %v1829 = vunpack.c.l.b16 %v1701
        %v1830 = vunpack.c.l.b16 %v1702
        %v1831 = vunpack.c.l.b16 %v1703
        %v1832 = vunpack.c.l.b16 %v1704
        %v1833 = vunpack.c.l.b16 %v1705
        %v1834 = vunpack.c.l.b16 %v1706
        %v1835 = vunpack.c.l.b16 %v1707
        %v1836 = vunpack.c.l.b16 %v1708
        %v1837 = vunpack.c.l.b16 %v1709
        %v1838 = vunpack.c.l.b16 %v1710
        %v1839 = vunpack.c.l.b16 %v1711
        %v1840 = vunpack.c.l.b16 %v1712
        %v1841 = vunpack.c.l.b16 %v1713
        %v1842 = vunpack.c.l.b16 %v1714
        %v1843 = vunpack.c.l.b16 %v1715
        %v1844 = vunpack.c.l.b16 %v1716
        %v1845 = vunpack.c.l.b16 %v1717
        %v1846 = vunpack.c.l.b16 %v1718
        %v1847 = vunpack.c.l.b16 %v1719
        %v1848 = vunpack.c.l.b16 %v1720
        %v1849 = vunpack.c.l.b16 %v1721
        %v1850 = vunpack.c.l.b16 %v1722
        %v1851 = vunpack.c.l.b16 %v1723
        %v1852 = vunpack.c.l.b16 %v1724
        %v1853 = vunpack.c.l.b16 %v1725
        %v1854 = vunpack.c.l.b16 %v1726
        %v1855 = vunpack.c.l.b16 %v1727
        %v1856 = vunpack.c.l.b16 %v1728
        %v1857 = vunpack.c.l.b16 %v1729
        %v1858 = vunpack.c.l.b16 %v1730
        %v1859 = vunpack.c.l.b16 %v1731
        %v1860 = vunpack.c.l.b16 %v1732
        %v1861 = vunpack.c.l.b16 %v1733
        %v1862 = vunpack.c.l.b16 %v1734
        %v1863 = vunpack.c.l.b16 %v1735
        %v1864 = vunpack.c.l.b16 %v1736
        %v1865 = vunpack.c.l.b16 %v1737
        %v1866 = vunpack.c.l.b16 %v1738
        %v1867 = vunpack.c.l.b16 %v1739
        %v1868 = vunpack.c.l.b16 %v1740
        %v1869 = vunpack.c.l.b16 %v1741
        %v1870 = vunpack.c.l.b16 %v1742
        %v1871 = vunpack.c.l.b16 %v1743
        %v1872 = vunpack.c.l.b16 %v1744
        %v1873 = vunpack.c.l.b16 %v1745
        %v1874 = vunpack.c.l.b16 %v1746
        %v1875 = vunpack.c.l.b16 %v1747
        %v1876 = vunpack.c.l.b16 %v1748
        %v1877 = vunpack.c.l.b16 %v1749
        %v1878 = vpack.c.b16 %v1815, %v1814
        %v1879 = vpack.c.b16 %v1817, %v1816
        %v1880 = vpack.c.b16 %v1819, %v1818
        %v1881 = vpack.c.b16 %v1821, %v1820
        %v1882 = vpack.c.b16 %v1823, %v1822
        %v1883 = vpack.c.b16 %v1825, %v1824
        %v1884 = vpack.c.b16 %v1827, %v1826
        %v1885 = vpack.c.b16 %v1829, %v1828
        %v1886 = vpack.c.b16 %v1831, %v1830
        %v1887 = vpack.c.b16 %v1833, %v1832
        %v1888 = vpack.c.b16 %v1835, %v1834
        %v1889 = vpack.c.b16 %v1837, %v1836
        %v1890 = vpack.c.b16 %v1839, %v1838
        %v1891 = vpack.c.b16 %v1841, %v1840
        %v1892 = vpack.c.b16 %v1843, %v1842
        %v1893 = vpack.c.b16 %v1845, %v1844
        %v1894 = vpack.c.b16 %v1847, %v1846
        %v1895 = vpack.c.b16 %v1849, %v1848
        %v1896 = vpack.c.b16 %v1851, %v1850
        %v1897 = vpack.c.b16 %v1853, %v1852
        %v1898 = vpack.c.b16 %v1855, %v1854
        %v1899 = vpack.c.b16 %v1857, %v1856
        %v1900 = vpack.c.b16 %v1859, %v1858
        %v1901 = vpack.c.b16 %v1861, %v1860
        %v1902 = vpack.c.b16 %v1863, %v1862
        %v1903 = vpack.c.b16 %v1865, %v1864
        %v1904 = vpack.c.b16 %v1867, %v1866
        %v1905 = vpack.c.b16 %v1869, %v1868
        %v1906 = vpack.c.b16 %v1871, %v1870
        %v1907 = vpack.c.b16 %v1873, %v1872
        %v1908 = vpack.c.b16 %v1875, %v1874
        %v1909 = vpack.c.b16 %v1877, %v1876
        %1942 = vmatpush.bf16.msra.mxu0 %v1885
        %1943 = vmatpush.bf16.msra.mxu0 %v1884
        %1944 = vmatpush.bf16.msra.mxu0 %v1883
        %1945 = vmatpush.bf16.msra.mxu0 %v1882
        %1946 = vmatpush.bf16.msra.mxu0 %v1881
        %1947 = vmatpush.bf16.msra.mxu0 %v1880
        %1948 = vmatpush.bf16.msra.mxu0 %v1879
        %1949 = vmatpush.bf16.msra.mxu0 %v1878
        %1950 = vmatmul.bf16.gmra.mxu0 %v1682
        %v1951 = vpop.f32.mrf.mxu0
        %v1952 = vadd.f32 0.0, %v1951
        %v1953 = vpop.f32.mrf.mxu0
        %v1954 = vadd.f32 0.0, %v1953
        %1955 = vdwg.mxu0
        %1956 = vmatpush.bf16.msra.mxu0 %v1893
        %1957 = vmatpush.bf16.msra.mxu0 %v1892
        %1958 = vmatpush.bf16.msra.mxu0 %v1891
        %1959 = vmatpush.bf16.msra.mxu0 %v1890
        %1960 = vmatpush.bf16.msra.mxu0 %v1889
        %1961 = vmatpush.bf16.msra.mxu0 %v1888
        %1962 = vmatpush.bf16.msra.mxu0 %v1887
        %1963 = vmatpush.bf16.msra.mxu0 %v1886
        %1964 = vmatmul.bf16.gmra.mxu0 %v1683
        %v1965 = vpop.f32.mrf.mxu0
        %v1966 = vadd.f32 %v1952, %v1965
        %v1967 = vpop.f32.mrf.mxu0
        %v1968 = vadd.f32 %v1954, %v1967
        %1969 = vdwg.mxu0
        %1970 = vmatpush.bf16.msra.mxu0 %v1901
        %1971 = vmatpush.bf16.msra.mxu0 %v1900
        %1972 = vmatpush.bf16.msra.mxu0 %v1899
        %1973 = vmatpush.bf16.msra.mxu0 %v1898
        %1974 = vmatpush.bf16.msra.mxu0 %v1897
        %1975 = vmatpush.bf16.msra.mxu0 %v1896
        %1976 = vmatpush.bf16.msra.mxu0 %v1895
        %1977 = vmatpush.bf16.msra.mxu0 %v1894
        %1978 = vmatmul.bf16.gmra.mxu0 %v1684
        %v1979 = vpop.f32.mrf.mxu0
        %v1980 = vadd.f32 %v1966, %v1979
        %v1981 = vpop.f32.mrf.mxu0
        %v1982 = vadd.f32 %v1968, %v1981
        %1983 = vdwg.mxu0
        %1984 = vmatpush.bf16.msra.mxu0 %v1909
        %1985 = vmatpush.bf16.msra.mxu0 %v1908
        %1986 = vmatpush.bf16.msra.mxu0 %v1907
        %1987 = vmatpush.bf16.msra.mxu0 %v1906
        %1988 = vmatpush.bf16.msra.mxu0 %v1905
        %1989 = vmatpush.bf16.msra.mxu0 %v1904
        %1990 = vmatpush.bf16.msra.mxu0 %v1903
        %1991 = vmatpush.bf16.msra.mxu0 %v1902
        %1992 = vmatmul.bf16.gmra.mxu0 %v1685
        %v1993 = vpop.f32.mrf.mxu0
        %v1994 = vadd.f32 %v1980, %v1993
        %v1995 = vpop.f32.mrf.mxu0
        %v1996 = vadd.f32 %v1982, %v1995
        %1997 = vdwg.mxu0
        %v1998 = vld [vmem:[%s9] sm:$0x1]
        %v2000 = vperm.slane %v1998, 0
        %v2002 = vmul.f32 %v1994, %v2000
        %v2003 = vmul.f32 %v1996, %v2000
        %v2004 = vld [vmem:[%s10] sm:$0x1]
        %v2006 = vperm.slane %v2004, 0
        %v2008 = vadd.f32 %v2002, %v2006
        %v2009 = vadd.f32 %v2003, %v2006
        %vm2010 = vcmp.gt.f32.partialorder %v2008, 0.0
        %vm2011 = vcmp.gt.f32.partialorder %v2009, 0.0
        %v2012 = vmul.f32 %v2008, 0.2
        %v2013 = vmul.f32 %v2009, 0.2
        %v2014 = vsel %vm2010, %v2008, %v2012
        %v2015 = vsel %vm2011, %v2009, %v2013
        %2016 = vst [vmem:[%s569] sm:$0xff] %v2014
        %2017 = vst [vmem:[%s569 + $0x8] sm:$0xff] %v2015
        %s2018 = smul.u32 2, %s28
        %p2019 = scmp.lt.s32.totalorder %s27, 1
        %s2020 = scalar_select %p2019, %s27, 1
        %p2021 = scmp.lt.s32.totalorder %s2018, 1
        %s2022 = scalar_select %p2021, %s2018, 1
        %s2023 = smul.addr %s2020, 2
        %s2024 = sadd.s32 %s2022, %s2023
        %s2025 = smul.addr %s2024, 8
        %s2026 = scalar_lea.vmem %s11, %s2025
        // Predicated region
        $region69: #{dgcnn_cls_forward.11} parent=63 // pred_check
          %p2027 = pneg %p319
        $region70: #{dgcnn_cls_forward.11} parent=63 // pred_check_branch
          %2029 = sbr.rel (%p2027) target = $region72
        $region71: #{dgcnn_cls_forward.11} parent=63 // pred_region
          %s2030 = smul.u32 2, %s28
        $region72: #{dgcnn_cls_forward.11} parent=63 // pred_fallthru
          _
      $region64: #{dgcnn_cls_forward.11} parent=5 // pred_fallthru
        _
      %p2031 = scmp.le.s32.totalorder 2, %s18
      // Predicated region
      $region73: #{dgcnn_cls_forward.11} parent=5 // pred_check
        %p2032 = pneg %p2031
      $region74: #{dgcnn_cls_forward.11} parent=5 // pred_check_branch
        %2034 = sbr.rel (%p2032) target = $region76
      $region75: #{dgcnn_cls_forward.11} parent=5 // pred_region
        %s2035 = ssub.s32 %s18, 2
        // Predicated region
        $region77: #{dgcnn_cls_forward.11} parent=75 // pred_check
          %p2036 = pneg %p325
        $region78: #{dgcnn_cls_forward.11} parent=75 // pred_check_branch
          %2038 = sbr.rel (%p2036) target = $region80
        $region79: #{dgcnn_cls_forward.11} parent=75 // pred_region
          %s2039 = smul.u32 2, %s30
          %p2040 = scmp.lt.s32.totalorder %s29, 1
          %s2041 = scalar_select %p2040, %s29, 1
          %p2042 = scmp.lt.s32.totalorder %s2039, 1
          %s2043 = scalar_select %p2042, %s2039, 1
          %s2044 = smul.addr %s2041, 2
          %s2045 = sadd.s32 %s2043, %s2044
          %s2046 = smul.addr %s2045, 8
          %s2047 = scalar_lea.vmem %s11, %s2046
        $region80: #{dgcnn_cls_forward.11} parent=75 // pred_fallthru
          _
      $region76: #{dgcnn_cls_forward.11} parent=5 // pred_fallthru
        _
    $region6: #{dgcnn_cls_forward.11} parent=1 // loop_footer
      %s22 = sadd.s32 1, %s18
    $region7: #{dgcnn_cls_forward.11} parent=1 // loop_footer_branch
      %17 = sbr.rel target = $region3
    $region8: #{dgcnn_cls_forward.11} parent=1 // loop_exit
      _
    %2048 = vsyncpa [#allocation3], 1
    %s2049 = scalar_lea.sflag [#allocation3], 1
    %2050 = vsyncpa %s2049, 1

</llo_original>
